<compile_context>
chip_gen: v7x
topology: tpu7x:2x2x1
jax: 0.10.0
libtpu: 0.0.40
codegen_flags: <defaults>
</compile_context>

<pallas_src>
import functools

import jax
import jax.numpy as jnp
from jax import lax
from jax.experimental import pallas as pl
from jax.experimental.pallas import tpu as pltpu

LANE = 128      # TPU lane width      (last-dim alignment)
SUBLANE = 8     # TPU sublane width   (second-to-last-dim alignment)
SOS_TOKEN = 2   # <sos> id, matches the reference model


def _round_up(x, m):
    return (x + m - 1) // m * m


def _pad_to(x, shape):
    return jnp.pad(x, [(0, s - d) for d, s in zip(x.shape, shape)])


# ------------------------------ fused seq2seq kernel ----------------------------- #

def chat_kernel(tf_ref,                                  # SMEM [max_len] int32
                enc_x_ref,                               # [S*Bp, Ep] encoder inputs (time-major)
                enc_w_ih_ref, enc_w_hh_ref, enc_b_ref,   # encoder LSTM (pre-T, gate-padded)
                emb_ref,                                 # [Vp, Ep] embedding table
                dec_w_ih_ref, dec_w_hh_ref, dec_b_ref,   # decoder LSTM (pre-T, gate-padded)
                w_out_ref, b_out_ref,                    # output projection (pre-T)
                tgt_oh_ref,                              # [max_len, Bp, Vp] teacher one-hots
                sos_ref,                                 # [Bp, Vp] <sos> one-hot
                logits_ref,                              # out: [max_len, Bp, Vp]
                gx_ref,                                  # scratch [S*Bp, 4*Hp]
                h_sc, c_sc, x_sc,                        # scratch carries
                *, n_batch, v_real):
    n_b = n_batch
    s_len = enc_x_ref.shape[0] // n_b
    h_pad = h_sc.shape[-1]
    v_pad = x_sc.shape[-1]
    max_len = logits_ref.shape[0]

    def lstm_update(gates, c):
        """gates:[Bp,4*Hp] (gate blocks at H_pad lane boundaries), c:[Bp,Hp]."""
        i = jax.nn.sigmoid(gates[:, 0 * h_pad:1 * h_pad])
        f = jax.nn.sigmoid(gates[:, 1 * h_pad:2 * h_pad])
        g = jnp.tanh(gates[:, 2 * h_pad:3 * h_pad])
        o = jax.nn.sigmoid(gates[:, 3 * h_pad:4 * h_pad])
        c_new = f * c + i * g
        h_new = o * jnp.tanh(c_new)
        return h_new, c_new

    # ------------------------------- encoder -------------------------------
    # Whole-sequence input projection as ONE matmul (hoisted out of the recurrence).
    gx_ref[...] = jnp.dot(enc_x_ref[...], enc_w_ih_ref[...],
                          preferred_element_type=jnp.float32)

    h_sc[...] = jnp.zeros_like(h_sc)
    c_sc[...] = jnp.zeros_like(c_sc)

    @pl.loop(0, s_len, unroll=True)
    def _enc_step(t):
        gates = (gx_ref[pl.ds(t * n_b, n_b), :]
                 + jnp.dot(h_sc[...], enc_w_hh_ref[...],
                           preferred_element_type=jnp.float32)
                 + enc_b_ref[...])
        h_new, c_new = lstm_update(gates, c_sc[...])
        h_sc[...] = h_new
        c_sc[...] = c_new

    # ------------------------------- decoder -------------------------------
    x_sc[...] = sos_ref[...]
    lane = lax.broadcasted_iota(jnp.int32, (n_b, v_pad), 1)   # hoisted constant

    @pl.loop(0, max_len, unroll=True)
    def _dec_step(t):
        # Embedding lookup as one-hot @ table (single-pass MXU "gather").
        x = jnp.dot(x_sc[...], emb_ref[...], preferred_element_type=jnp.float32)

        gates = (jnp.dot(x, dec_w_ih_ref[...], preferred_element_type=jnp.float32)
                 + jnp.dot(h_sc[...], dec_w_hh_ref[...],
                           preferred_element_type=jnp.float32)
                 + dec_b_ref[...])
        h_new, c_new = lstm_update(gates, c_sc[...])
        h_sc[...] = h_new
        c_sc[...] = c_new

        logits = (jnp.dot(h_new, w_out_ref[...], preferred_element_type=jnp.float32)
                  + b_out_ref[...])                           # [Bp, Vp]
        logits_ref[t] = logits

        tf = tf_ref[t]

        @pl.when(tf == 0)
        def _():
            # Greedy token over the real vocab lanes (first-max tie-break), as one-hot.
            masked = jnp.where(lane < v_real, logits, jnp.float32(-1e30))
            mx = jnp.max(masked, axis=-1, keepdims=True)
            cand = jnp.where(masked == mx, lane, v_pad)
            idx = jnp.min(cand, axis=-1, keepdims=True)
            x_sc[...] = (lane == idx).astype(jnp.float32)

        @pl.when(tf != 0)
        def _():
            x_sc[...] = tgt_oh_ref[t]


def run_chat_kernel(tf_i32, enc_x, enc_w_ih, enc_w_hh, enc_b, emb,
                    dec_w_ih, dec_w_hh, dec_b, w_out, b_out,
                    tgt_oh, sos_oh, *, v_real):
    max_len, b_pad, v_pad = tgt_oh.shape
    h_pad = enc_w_hh.shape[0]

    vmem = pl.BlockSpec(memory_space=pltpu.MemorySpace.VMEM)
    smem = pl.BlockSpec(memory_space=pltpu.MemorySpace.SMEM)

    kernel = functools.partial(chat_kernel, n_batch=b_pad, v_real=v_real)
    return pl.pallas_call(
        kernel,
        out_shape=jax.ShapeDtypeStruct((max_len, b_pad, v_pad), jnp.float32),
        in_specs=[smem] + [vmem] * 12,
        out_specs=vmem,
        scratch_shapes=[
            pltpu.VMEM((enc_x.shape[0], 4 * h_pad), jnp.float32),   # encoder gx
            pltpu.VMEM((b_pad, h_pad), jnp.float32),                # h carry
            pltpu.VMEM((b_pad, h_pad), jnp.float32),                # c carry
            pltpu.VMEM((b_pad, v_pad), jnp.float32),                # next-input one-hot
        ],
    )(tf_i32, enc_x, enc_w_ih, enc_w_hh, enc_b, emb,
      dec_w_ih, dec_w_hh, dec_b, w_out, b_out, tgt_oh, sos_oh)


# ----------------------- one-time parameter padding / packing --------------------- #

def _pack_gate_matrix(w, h, h_pad, in_dim, in_pad):
    """torch-layout [4H, in_dim] -> transposed, gate-block-padded [in_pad, 4*H_pad]."""
    out = jnp.zeros((in_pad, 4 * h_pad), jnp.float32)
    for g in range(4):
        blk = w[g * h:(g + 1) * h, :].T                 # [in_dim, H]
        out = out.at[:in_dim, g * h_pad:g * h_pad + h].set(blk)
    return out


def _pack_gate_bias(b, h, h_pad):
    """[1, 4H] -> [1, 4*H_pad] with each gate block padded to H_pad lanes."""
    out = jnp.zeros((1, 4 * h_pad), jnp.float32)
    for g in range(4):
        out = out.at[:, g * h_pad:g * h_pad + h].set(b[:, g * h:(g + 1) * h])
    return out


def prepare_params(params, batch_size):
    """Pad / pre-transpose parameters once (outside the jitted forward)."""
    emb_table = params["embedding"]
    V, E = emb_table.shape
    H = params["enc_w_hh"].shape[1]

    v_pad = _round_up(V, LANE)
    e_pad = _round_up(E, LANE)
    h_pad = _round_up(H, LANE)
    b_pad = _round_up(batch_size, SUBLANE)

    packed = {
        "emb": _pad_to(emb_table, (v_pad, e_pad)),
        "enc_w_ih": _pack_gate_matrix(params["enc_w_ih"], H, h_pad, E, e_pad),
        "enc_w_hh": _pack_gate_matrix(params["enc_w_hh"], H, h_pad, H, h_pad),
        "enc_b": jnp.tile(_pack_gate_bias(params["enc_b"], H, h_pad), (b_pad, 1)),
        "dec_w_ih": _pack_gate_matrix(params["dec_w_ih"], H, h_pad, E, e_pad),
        "dec_w_hh": _pack_gate_matrix(params["dec_w_hh"], H, h_pad, H, h_pad),
        "dec_b": jnp.tile(_pack_gate_bias(params["dec_b"], H, h_pad), (b_pad, 1)),
        "out_w": _pad_to(params["out_w"].T, (h_pad, v_pad)),          # [H, V] pre-T
        "out_b": jnp.tile(_pad_to(params["out_b"], (1, v_pad)), (b_pad, 1)),
        "sos_oh": jax.nn.one_hot(jnp.full((b_pad,), SOS_TOKEN, jnp.int32),
                                 v_pad, dtype=jnp.float32),
    }
    dims = {"V": V, "E": E, "H": H,
            "v_pad": v_pad, "e_pad": e_pad, "h_pad": h_pad, "b_pad": b_pad}
    return packed, dims


# --------------------------------- full forward -------------------------------- #

def chat_model_forward(packed, src, tgt, tf_decisions, *, dims):
    """src, tgt: int32 [B, S]; tf_decisions: bool [max_len]. Returns [B, max_len, V]."""
    B, S = src.shape
    max_len = tgt.shape[1]
    b_pad, e_pad, v_pad, V = dims["b_pad"], dims["e_pad"], dims["v_pad"], dims["V"]

    # Encoder inputs: embedding gather, time-major, batch-padded, flattened [S*Bp, Ep].
    emb_src = jnp.take(packed["emb"], src.astype(jnp.int32), axis=0)    # [B, S, Ep]
    enc_x = jnp.transpose(emb_src, (1, 0, 2))                           # [S, B, Ep]
    enc_x = jnp.pad(enc_x, ((0, 0), (0, b_pad - B), (0, 0)))
    enc_x = enc_x.reshape(S * b_pad, e_pad)

    # Teacher-forcing one-hots, time-major, batch-padded.
    tgt_tm = jnp.pad(jnp.transpose(tgt.astype(jnp.int32), (1, 0)),
                     ((0, 0), (0, b_pad - B)))                          # [max_len, Bp]
    tgt_oh = jax.nn.one_hot(tgt_tm, v_pad, dtype=jnp.float32)
    tf_i32 = tf_decisions.astype(jnp.int32)

    logits_all = run_chat_kernel(
        tf_i32, enc_x,
        packed["enc_w_ih"], packed["enc_w_hh"], packed["enc_b"],
        packed["emb"],
        packed["dec_w_ih"], packed["dec_w_hh"], packed["dec_b"],
        packed["out_w"], packed["out_b"],
        tgt_oh, packed["sos_oh"],
        v_real=V)                                                       # [max_len, Bp, Vp]

    return jnp.transpose(logits_all, (1, 0, 2))[:B, :, :V]              # [B, max_len, V]


# ---------------------------------- param setup --------------------------------- #

def init_params(key, vocab_size, embedding_dim, hidden_size):
    ks = jax.random.split(key, 8)
    H, E, V = hidden_size, embedding_dim, vocab_size
    scale = 0.1
    return {
        "embedding": scale * jax.random.normal(ks[0], (V, E), jnp.float32),
        "enc_w_ih": scale * jax.random.normal(ks[1], (4 * H, E), jnp.float32),
        "enc_w_hh": scale * jax.random.normal(ks[2], (4 * H, H), jnp.float32),
        # b_ih + b_hh combined, kept as a [1, 4H] row.
        "enc_b": scale * jax.random.normal(ks[3], (1, 4 * H), jnp.float32),
        "dec_w_ih": scale * jax.random.normal(ks[4], (4 * H, E), jnp.float32),
        "dec_w_hh": scale * jax.random.normal(ks[5], (4 * H, H), jnp.float32),
        "dec_b": scale * jax.random.normal(ks[6], (1, 4 * H), jnp.float32),
        "out_w": scale * jax.random.normal(ks[7], (V, H), jnp.float32),
        "out_b": jnp.zeros((1, V), jnp.float32),
    }


# -------------------------------------- main ------------------------------------- #

if __name__ == "__main__":
    vocab_size = 64
    embedding_dim = 32
    hidden_size = 32
    batch_size = 2
    seq_len = 8
    teacher_forcing_ratio = 0.5

    key = jax.random.PRNGKey(0)
    k_src, k_tgt, k_tf, k_param = jax.random.split(key, 4)

    src = jax.random.randint(k_src, (batch_size, seq_len), 0, vocab_size,
                             dtype=jnp.int32)
    tgt = jax.random.randint(k_tgt, (batch_size, seq_len), 0, vocab_size,
                             dtype=jnp.int32)
    # Deterministic stand-in for the per-step torch.rand(1).item() < ratio draws.
    tf_decisions = jax.random.uniform(k_tf, (seq_len,)) < teacher_forcing_ratio

    params = init_params(k_param, vocab_size, embedding_dim, hidden_size)
    packed, dims = prepare_params(params, batch_size)          # one-time packing

    forward = jax.jit(functools.partial(chat_model_forward, dims=dims))
    outputs = forward(packed, src, tgt, tf_decisions)
    outputs = jax.block_until_ready(outputs)

    assert outputs.shape == (batch_size, seq_len, vocab_size)
    assert outputs.dtype == jnp.float32
    print("KERNEL_OK")
</pallas_src>

<mosaic_0001>
module attributes {stable_mosaic.version = 11 : i64} {
  func.func @chat_kernel(%arg0: memref<8xi32, #tpu.memory_space<smem>>, %arg1: memref<64x128xf32, #tpu.memory_space<vmem>>, %arg2: memref<128x512xf32, #tpu.memory_space<vmem>>, %arg3: memref<128x512xf32, #tpu.memory_space<vmem>>, %arg4: memref<8x512xf32, #tpu.memory_space<vmem>>, %arg5: memref<128x128xf32, #tpu.memory_space<vmem>>, %arg6: memref<128x512xf32, #tpu.memory_space<vmem>>, %arg7: memref<128x512xf32, #tpu.memory_space<vmem>>, %arg8: memref<8x512xf32, #tpu.memory_space<vmem>>, %arg9: memref<128x128xf32, #tpu.memory_space<vmem>>, %arg10: memref<8x128xf32, #tpu.memory_space<vmem>>, %arg11: memref<8x8x128xf32, #tpu.memory_space<vmem>>, %arg12: memref<8x128xf32, #tpu.memory_space<vmem>>, %arg13: memref<8x8x128xf32, #tpu.memory_space<vmem>>, %arg14: memref<64x512xf32, #tpu.memory_space<vmem>>, %arg15: memref<8x128xf32, #tpu.memory_space<vmem>>, %arg16: memref<8x128xf32, #tpu.memory_space<vmem>>, %arg17: memref<8x128xf32, #tpu.memory_space<vmem>>) attributes {dimension_semantics = [], scalar_prefetch = 0 : i64, scratch_operands = 4 : i64, tpu.core_type = #tpu.core_type<tc>} {
    %c0 = arith.constant 0 : index
    %c0_0 = arith.constant 0 : index
    %0 = vector.load %arg1[%c0, %c0_0] : memref<64x128xf32, #tpu.memory_space<vmem>>, vector<64x128xf32>
    %c0_1 = arith.constant 0 : index
    %c0_2 = arith.constant 0 : index
    %1 = vector.load %arg2[%c0_1, %c0_2] : memref<128x512xf32, #tpu.memory_space<vmem>>, vector<128x512xf32>
    %cst = arith.constant dense<0.000000e+00> : vector<64x512xf32>
    %2 = tpu.matmul %0, %1, %cst {dimension_numbers = #tpu.dot_dimension_numbers<[1], [0], [0], [1], [0, 0, 1, 1], [], []>} : vector<64x128xf32>, vector<128x512xf32>, vector<64x512xf32> -> vector<64x512xf32>
    %c0_3 = arith.constant 0 : index
    %c0_4 = arith.constant 0 : index
    %3 = vector.load %arg14[%c0_3, %c0_4] : memref<64x512xf32, #tpu.memory_space<vmem>>, vector<64x512xf32>
    tpu.vector_store %arg14[%c0_3, %c0_4], %2 {strides = array<i32>} : memref<64x512xf32, #tpu.memory_space<vmem>>, vector<64x512xf32>,
    %cst_5 = arith.constant 0.000000e+00 : f32
    %4 = vector.broadcast %cst_5 : f32 to vector<8x128xf32>
    %c0_6 = arith.constant 0 : index
    %c0_7 = arith.constant 0 : index
    %5 = vector.load %arg15[%c0_6, %c0_7] : memref<8x128xf32, #tpu.memory_space<vmem>>, vector<8x128xf32>
    tpu.vector_store %arg15[%c0_6, %c0_7], %4 {strides = array<i32>} : memref<8x128xf32, #tpu.memory_space<vmem>>, vector<8x128xf32>,
    %cst_8 = arith.constant 0.000000e+00 : f32
    %6 = vector.broadcast %cst_8 : f32 to vector<8x128xf32>
    %c0_9 = arith.constant 0 : index
    %c0_10 = arith.constant 0 : index
    %7 = vector.load %arg16[%c0_9, %c0_10] : memref<8x128xf32, #tpu.memory_space<vmem>>, vector<8x128xf32>
    tpu.vector_store %arg16[%c0_9, %c0_10], %6 {strides = array<i32>} : memref<8x128xf32, #tpu.memory_space<vmem>>, vector<8x128xf32>,
    %c0_i32 = arith.constant 0 : i32
    %c1_i32 = arith.constant 1 : i32
    %8 = arith.muli %c0_i32, %c1_i32 : i32
    %c0_i32_11 = arith.constant 0 : i32
    %9 = arith.addi %c0_i32_11, %8 : i32
    %c8_i32 = arith.constant 8 : i32
    %10 = arith.muli %9, %c8_i32 : i32
    %11 = arith.index_cast %10 : i32 to index
    %c0_12 = arith.constant 0 : index
    %12 = vector.load %arg14[%11, %c0_12] : memref<64x512xf32, #tpu.memory_space<vmem>>, vector<8x512xf32>
    %c0_13 = arith.constant 0 : index
    %c0_14 = arith.constant 0 : index
    %13 = vector.load %arg15[%c0_13, %c0_14] : memref<8x128xf32, #tpu.memory_space<vmem>>, vector<8x128xf32>
    %c0_15 = arith.constant 0 : index
    %c0_16 = arith.constant 0 : index
    %14 = vector.load %arg3[%c0_15, %c0_16] : memref<128x512xf32, #tpu.memory_space<vmem>>, vector<128x512xf32>
    %cst_17 = arith.constant dense<0.000000e+00> : vector<8x512xf32>
    %15 = tpu.matmul %13, %14, %cst_17 {dimension_numbers = #tpu.dot_dimension_numbers<[1], [0], [0], [1], [0, 0, 1, 1], [], []>} : vector<8x128xf32>, vector<128x512xf32>, vector<8x512xf32> -> vector<8x512xf32>
    %16 = arith.addf %12, %15 : vector<8x512xf32>
    %c0_18 = arith.constant 0 : index
    %c0_19 = arith.constant 0 : index
    %17 = vector.load %arg4[%c0_18, %c0_19] : memref<8x512xf32, #tpu.memory_space<vmem>>, vector<8x512xf32>
    %18 = arith.addf %16, %17 : vector<8x512xf32>
    %c0_20 = arith.constant 0 : index
    %c0_21 = arith.constant 0 : index
    %19 = vector.load %arg16[%c0_20, %c0_21] : memref<8x128xf32, #tpu.memory_space<vmem>>, vector<8x128xf32>
    %20 = vector.extract_strided_slice %18 {offsets = [0, 0], sizes = [8, 128], strides = [1, 1]} : vector<8x512xf32> to vector<8x128xf32>
    %21 = arith.negf %20 : vector<8x128xf32>
    %22 = math.exp %21 : vector<8x128xf32>
    %cst_22 = arith.constant 1.000000e+00 : f32
    %23 = vector.broadcast %cst_22 : f32 to vector<8x128xf32>
    %24 = arith.addf %23, %22 : vector<8x128xf32>
    %25 = arith.divf %23, %24 : vector<8x128xf32>
    %26 = vector.extract_strided_slice %18 {offsets = [0, 128], sizes = [8, 128], strides = [1, 1]} : vector<8x512xf32> to vector<8x128xf32>
    %27 = arith.negf %26 : vector<8x128xf32>
    %28 = math.exp %27 : vector<8x128xf32>
    %cst_23 = arith.constant 1.000000e+00 : f32
    %29 = vector.broadcast %cst_23 : f32 to vector<8x128xf32>
    %30 = arith.addf %29, %28 : vector<8x128xf32>
    %31 = arith.divf %29, %30 : vector<8x128xf32>
    %32 = vector.extract_strided_slice %18 {offsets = [0, 256], sizes = [8, 128], strides = [1, 1]} : vector<8x512xf32> to vector<8x128xf32>
    %33 = math.tanh %32 : vector<8x128xf32>
    %34 = vector.extract_strided_slice %18 {offsets = [0, 384], sizes = [8, 128], strides = [1, 1]} : vector<8x512xf32> to vector<8x128xf32>
    %35 = arith.negf %34 : vector<8x128xf32>
    %36 = math.exp %35 : vector<8x128xf32>
    %cst_24 = arith.constant 1.000000e+00 : f32
    %37 = vector.broadcast %cst_24 : f32 to vector<8x128xf32>
    %38 = arith.addf %37, %36 : vector<8x128xf32>
    %39 = arith.divf %37, %38 : vector<8x128xf32>
    %40 = arith.mulf %31, %19 : vector<8x128xf32>
    %41 = arith.mulf %25, %33 : vector<8x128xf32>
    %42 = arith.addf %40, %41 : vector<8x128xf32>
    %43 = math.tanh %42 : vector<8x128xf32>
    %44 = arith.mulf %39, %43 : vector<8x128xf32>
    %c0_25 = arith.constant 0 : index
    %c0_26 = arith.constant 0 : index
    %45 = vector.load %arg15[%c0_25, %c0_26] : memref<8x128xf32, #tpu.memory_space<vmem>>, vector<8x128xf32>
    tpu.vector_store %arg15[%c0_25, %c0_26], %44 {strides = array<i32>} : memref<8x128xf32, #tpu.memory_space<vmem>>, vector<8x128xf32>,
    %c0_27 = arith.constant 0 : index
    %c0_28 = arith.constant 0 : index
    %46 = vector.load %arg16[%c0_27, %c0_28] : memref<8x128xf32, #tpu.memory_space<vmem>>, vector<8x128xf32>
    tpu.vector_store %arg16[%c0_27, %c0_28], %42 {strides = array<i32>} : memref<8x128xf32, #tpu.memory_space<vmem>>, vector<8x128xf32>,
    %c1_i32_29 = arith.constant 1 : i32
    %c1_i32_30 = arith.constant 1 : i32
    %47 = arith.muli %c1_i32_29, %c1_i32_30 : i32
    %c0_i32_31 = arith.constant 0 : i32
    %48 = arith.addi %c0_i32_31, %47 : i32
    %c8_i32_32 = arith.constant 8 : i32
    %49 = arith.muli %48, %c8_i32_32 : i32
    %50 = arith.index_cast %49 : i32 to index
    %c0_33 = arith.constant 0 : index
    %51 = vector.load %arg14[%50, %c0_33] : memref<64x512xf32, #tpu.memory_space<vmem>>, vector<8x512xf32>
    %c0_34 = arith.constant 0 : index
    %c0_35 = arith.constant 0 : index
    %52 = vector.load %arg15[%c0_34, %c0_35] : memref<8x128xf32, #tpu.memory_space<vmem>>, vector<8x128xf32>
    %c0_36 = arith.constant 0 : index
    %c0_37 = arith.constant 0 : index
    %53 = vector.load %arg3[%c0_36, %c0_37] : memref<128x512xf32, #tpu.memory_space<vmem>>, vector<128x512xf32>
    %cst_38 = arith.constant dense<0.000000e+00> : vector<8x512xf32>
    %54 = tpu.matmul %52, %53, %cst_38 {dimension_numbers = #tpu.dot_dimension_numbers<[1], [0], [0], [1], [0, 0, 1, 1], [], []>} : vector<8x128xf32>, vector<128x512xf32>, vector<8x512xf32> -> vector<8x512xf32>
    %55 = arith.addf %51, %54 : vector<8x512xf32>
    %c0_39 = arith.constant 0 : index
    %c0_40 = arith.constant 0 : index
    %56 = vector.load %arg4[%c0_39, %c0_40] : memref<8x512xf32, #tpu.memory_space<vmem>>, vector<8x512xf32>
    %57 = arith.addf %55, %56 : vector<8x512xf32>
    %c0_41 = arith.constant 0 : index
    %c0_42 = arith.constant 0 : index
    %58 = vector.load %arg16[%c0_41, %c0_42] : memref<8x128xf32, #tpu.memory_space<vmem>>, vector<8x128xf32>
    %59 = vector.extract_strided_slice %57 {offsets = [0, 0], sizes = [8, 128], strides = [1, 1]} : vector<8x512xf32> to vector<8x128xf32>
    %60 = arith.negf %59 : vector<8x128xf32>
    %61 = math.exp %60 : vector<8x128xf32>
    %cst_43 = arith.constant 1.000000e+00 : f32
    %62 = vector.broadcast %cst_43 : f32 to vector<8x128xf32>
    %63 = arith.addf %62, %61 : vector<8x128xf32>
    %64 = arith.divf %62, %63 : vector<8x128xf32>
    %65 = vector.extract_strided_slice %57 {offsets = [0, 128], sizes = [8, 128], strides = [1, 1]} : vector<8x512xf32> to vector<8x128xf32>
    %66 = arith.negf %65 : vector<8x128xf32>
    %67 = math.exp %66 : vector<8x128xf32>
    %cst_44 = arith.constant 1.000000e+00 : f32
    %68 = vector.broadcast %cst_44 : f32 to vector<8x128xf32>
    %69 = arith.addf %68, %67 : vector<8x128xf32>
    %70 = arith.divf %68, %69 : vector<8x128xf32>
    %71 = vector.extract_strided_slice %57 {offsets = [0, 256], sizes = [8, 128], strides = [1, 1]} : vector<8x512xf32> to vector<8x128xf32>
    %72 = math.tanh %71 : vector<8x128xf32>
    %73 = vector.extract_strided_slice %57 {offsets = [0, 384], sizes = [8, 128], strides = [1, 1]} : vector<8x512xf32> to vector<8x128xf32>
    %74 = arith.negf %73 : vector<8x128xf32>
    %75 = math.exp %74 : vector<8x128xf32>
    %cst_45 = arith.constant 1.000000e+00 : f32
    %76 = vector.broadcast %cst_45 : f32 to vector<8x128xf32>
    %77 = arith.addf %76, %75 : vector<8x128xf32>
    %78 = arith.divf %76, %77 : vector<8x128xf32>
    %79 = arith.mulf %70, %58 : vector<8x128xf32>
    %80 = arith.mulf %64, %72 : vector<8x128xf32>
    %81 = arith.addf %79, %80 : vector<8x128xf32>
    %82 = math.tanh %81 : vector<8x128xf32>
    %83 = arith.mulf %78, %82 : vector<8x128xf32>
    %c0_46 = arith.constant 0 : index
    %c0_47 = arith.constant 0 : index
    %84 = vector.load %arg15[%c0_46, %c0_47] : memref<8x128xf32, #tpu.memory_space<vmem>>, vector<8x128xf32>
    tpu.vector_store %arg15[%c0_46, %c0_47], %83 {strides = array<i32>} : memref<8x128xf32, #tpu.memory_space<vmem>>, vector<8x128xf32>,
    %c0_48 = arith.constant 0 : index
    %c0_49 = arith.constant 0 : index
    %85 = vector.load %arg16[%c0_48, %c0_49] : memref<8x128xf32, #tpu.memory_space<vmem>>, vector<8x128xf32>
    tpu.vector_store %arg16[%c0_48, %c0_49], %81 {strides = array<i32>} : memref<8x128xf32, #tpu.memory_space<vmem>>, vector<8x128xf32>,
    %c2_i32 = arith.constant 2 : i32
    %c1_i32_50 = arith.constant 1 : i32
    %86 = arith.muli %c2_i32, %c1_i32_50 : i32
    %c0_i32_51 = arith.constant 0 : i32
    %87 = arith.addi %c0_i32_51, %86 : i32
    %c8_i32_52 = arith.constant 8 : i32
    %88 = arith.muli %87, %c8_i32_52 : i32
    %89 = arith.index_cast %88 : i32 to index
    %c0_53 = arith.constant 0 : index
    %90 = vector.load %arg14[%89, %c0_53] : memref<64x512xf32, #tpu.memory_space<vmem>>, vector<8x512xf32>
    %c0_54 = arith.constant 0 : index
    %c0_55 = arith.constant 0 : index
    %91 = vector.load %arg15[%c0_54, %c0_55] : memref<8x128xf32, #tpu.memory_space<vmem>>, vector<8x128xf32>
    %c0_56 = arith.constant 0 : index
    %c0_57 = arith.constant 0 : index
    %92 = vector.load %arg3[%c0_56, %c0_57] : memref<128x512xf32, #tpu.memory_space<vmem>>, vector<128x512xf32>
    %cst_58 = arith.constant dense<0.000000e+00> : vector<8x512xf32>
    %93 = tpu.matmul %91, %92, %cst_58 {dimension_numbers = #tpu.dot_dimension_numbers<[1], [0], [0], [1], [0, 0, 1, 1], [], []>} : vector<8x128xf32>, vector<128x512xf32>, vector<8x512xf32> -> vector<8x512xf32>
    %94 = arith.addf %90, %93 : vector<8x512xf32>
    %c0_59 = arith.constant 0 : index
    %c0_60 = arith.constant 0 : index
    %95 = vector.load %arg4[%c0_59, %c0_60] : memref<8x512xf32, #tpu.memory_space<vmem>>, vector<8x512xf32>
    %96 = arith.addf %94, %95 : vector<8x512xf32>
    %c0_61 = arith.constant 0 : index
    %c0_62 = arith.constant 0 : index
    %97 = vector.load %arg16[%c0_61, %c0_62] : memref<8x128xf32, #tpu.memory_space<vmem>>, vector<8x128xf32>
    %98 = vector.extract_strided_slice %96 {offsets = [0, 0], sizes = [8, 128], strides = [1, 1]} : vector<8x512xf32> to vector<8x128xf32>
    %99 = arith.negf %98 : vector<8x128xf32>
    %100 = math.exp %99 : vector<8x128xf32>
    %cst_63 = arith.constant 1.000000e+00 : f32
    %101 = vector.broadcast %cst_63 : f32 to vector<8x128xf32>
    %102 = arith.addf %101, %100 : vector<8x128xf32>
    %103 = arith.divf %101, %102 : vector<8x128xf32>
    %104 = vector.extract_strided_slice %96 {offsets = [0, 128], sizes = [8, 128], strides = [1, 1]} : vector<8x512xf32> to vector<8x128xf32>
    %105 = arith.negf %104 : vector<8x128xf32>
    %106 = math.exp %105 : vector<8x128xf32>
    %cst_64 = arith.constant 1.000000e+00 : f32
    %107 = vector.broadcast %cst_64 : f32 to vector<8x128xf32>
    %108 = arith.addf %107, %106 : vector<8x128xf32>
    %109 = arith.divf %107, %108 : vector<8x128xf32>
    %110 = vector.extract_strided_slice %96 {offsets = [0, 256], sizes = [8, 128], strides = [1, 1]} : vector<8x512xf32> to vector<8x128xf32>
    %111 = math.tanh %110 : vector<8x128xf32>
    %112 = vector.extract_strided_slice %96 {offsets = [0, 384], sizes = [8, 128], strides = [1, 1]} : vector<8x512xf32> to vector<8x128xf32>
    %113 = arith.negf %112 : vector<8x128xf32>
    %114 = math.exp %113 : vector<8x128xf32>
    %cst_65 = arith.constant 1.000000e+00 : f32
    %115 = vector.broadcast %cst_65 : f32 to vector<8x128xf32>
    %116 = arith.addf %115, %114 : vector<8x128xf32>
    %117 = arith.divf %115, %116 : vector<8x128xf32>
    %118 = arith.mulf %109, %97 : vector<8x128xf32>
    %119 = arith.mulf %103, %111 : vector<8x128xf32>
    %120 = arith.addf %118, %119 : vector<8x128xf32>
    %121 = math.tanh %120 : vector<8x128xf32>
    %122 = arith.mulf %117, %121 : vector<8x128xf32>
    %c0_66 = arith.constant 0 : index
    %c0_67 = arith.constant 0 : index
    %123 = vector.load %arg15[%c0_66, %c0_67] : memref<8x128xf32, #tpu.memory_space<vmem>>, vector<8x128xf32>
    tpu.vector_store %arg15[%c0_66, %c0_67], %122 {strides = array<i32>} : memref<8x128xf32, #tpu.memory_space<vmem>>, vector<8x128xf32>,
    %c0_68 = arith.constant 0 : index
    %c0_69 = arith.constant 0 : index
    %124 = vector.load %arg16[%c0_68, %c0_69] : memref<8x128xf32, #tpu.memory_space<vmem>>, vector<8x128xf32>
    tpu.vector_store %arg16[%c0_68, %c0_69], %120 {strides = array<i32>} : memref<8x128xf32, #tpu.memory_space<vmem>>, vector<8x128xf32>,
    %c3_i32 = arith.constant 3 : i32
    %c1_i32_70 = arith.constant 1 : i32
    %125 = arith.muli %c3_i32, %c1_i32_70 : i32
    %c0_i32_71 = arith.constant 0 : i32
    %126 = arith.addi %c0_i32_71, %125 : i32
    %c8_i32_72 = arith.constant 8 : i32
    %127 = arith.muli %126, %c8_i32_72 : i32
    %128 = arith.index_cast %127 : i32 to index
    %c0_73 = arith.constant 0 : index
    %129 = vector.load %arg14[%128, %c0_73] : memref<64x512xf32, #tpu.memory_space<vmem>>, vector<8x512xf32>
    %c0_74 = arith.constant 0 : index
    %c0_75 = arith.constant 0 : index
    %130 = vector.load %arg15[%c0_74, %c0_75] : memref<8x128xf32, #tpu.memory_space<vmem>>, vector<8x128xf32>
    %c0_76 = arith.constant 0 : index
    %c0_77 = arith.constant 0 : index
    %131 = vector.load %arg3[%c0_76, %c0_77] : memref<128x512xf32, #tpu.memory_space<vmem>>, vector<128x512xf32>
    %cst_78 = arith.constant dense<0.000000e+00> : vector<8x512xf32>
    %132 = tpu.matmul %130, %131, %cst_78 {dimension_numbers = #tpu.dot_dimension_numbers<[1], [0], [0], [1], [0, 0, 1, 1], [], []>} : vector<8x128xf32>, vector<128x512xf32>, vector<8x512xf32> -> vector<8x512xf32>
    %133 = arith.addf %129, %132 : vector<8x512xf32>
    %c0_79 = arith.constant 0 : index
    %c0_80 = arith.constant 0 : index
    %134 = vector.load %arg4[%c0_79, %c0_80] : memref<8x512xf32, #tpu.memory_space<vmem>>, vector<8x512xf32>
    %135 = arith.addf %133, %134 : vector<8x512xf32>
    %c0_81 = arith.constant 0 : index
    %c0_82 = arith.constant 0 : index
    %136 = vector.load %arg16[%c0_81, %c0_82] : memref<8x128xf32, #tpu.memory_space<vmem>>, vector<8x128xf32>
    %137 = vector.extract_strided_slice %135 {offsets = [0, 0], sizes = [8, 128], strides = [1, 1]} : vector<8x512xf32> to vector<8x128xf32>
    %138 = arith.negf %137 : vector<8x128xf32>
    %139 = math.exp %138 : vector<8x128xf32>
    %cst_83 = arith.constant 1.000000e+00 : f32
    %140 = vector.broadcast %cst_83 : f32 to vector<8x128xf32>
    %141 = arith.addf %140, %139 : vector<8x128xf32>
    %142 = arith.divf %140, %141 : vector<8x128xf32>
    %143 = vector.extract_strided_slice %135 {offsets = [0, 128], sizes = [8, 128], strides = [1, 1]} : vector<8x512xf32> to vector<8x128xf32>
    %144 = arith.negf %143 : vector<8x128xf32>
    %145 = math.exp %144 : vector<8x128xf32>
    %cst_84 = arith.constant 1.000000e+00 : f32
    %146 = vector.broadcast %cst_84 : f32 to vector<8x128xf32>
    %147 = arith.addf %146, %145 : vector<8x128xf32>
    %148 = arith.divf %146, %147 : vector<8x128xf32>
    %149 = vector.extract_strided_slice %135 {offsets = [0, 256], sizes = [8, 128], strides = [1, 1]} : vector<8x512xf32> to vector<8x128xf32>
    %150 = math.tanh %149 : vector<8x128xf32>
    %151 = vector.extract_strided_slice %135 {offsets = [0, 384], sizes = [8, 128], strides = [1, 1]} : vector<8x512xf32> to vector<8x128xf32>
    %152 = arith.negf %151 : vector<8x128xf32>
    %153 = math.exp %152 : vector<8x128xf32>
    %cst_85 = arith.constant 1.000000e+00 : f32
    %154 = vector.broadcast %cst_85 : f32 to vector<8x128xf32>
    %155 = arith.addf %154, %153 : vector<8x128xf32>
    %156 = arith.divf %154, %155 : vector<8x128xf32>
    %157 = arith.mulf %148, %136 : vector<8x128xf32>
    %158 = arith.mulf %142, %150 : vector<8x128xf32>
    %159 = arith.addf %157, %158 : vector<8x128xf32>
    %160 = math.tanh %159 : vector<8x128xf32>
    %161 = arith.mulf %156, %160 : vector<8x128xf32>
    %c0_86 = arith.constant 0 : index
    %c0_87 = arith.constant 0 : index
    %162 = vector.load %arg15[%c0_86, %c0_87] : memref<8x128xf32, #tpu.memory_space<vmem>>, vector<8x128xf32>
    tpu.vector_store %arg15[%c0_86, %c0_87], %161 {strides = array<i32>} : memref<8x128xf32, #tpu.memory_space<vmem>>, vector<8x128xf32>,
    %c0_88 = arith.constant 0 : index
    %c0_89 = arith.constant 0 : index
    %163 = vector.load %arg16[%c0_88, %c0_89] : memref<8x128xf32, #tpu.memory_space<vmem>>, vector<8x128xf32>
    tpu.vector_store %arg16[%c0_88, %c0_89], %159 {strides = array<i32>} : memref<8x128xf32, #tpu.memory_space<vmem>>, vector<8x128xf32>,
    %c4_i32 = arith.constant 4 : i32
    %c1_i32_90 = arith.constant 1 : i32
    %164 = arith.muli %c4_i32, %c1_i32_90 : i32
    %c0_i32_91 = arith.constant 0 : i32
    %165 = arith.addi %c0_i32_91, %164 : i32
    %c8_i32_92 = arith.constant 8 : i32
    %166 = arith.muli %165, %c8_i32_92 : i32
    %167 = arith.index_cast %166 : i32 to index
    %c0_93 = arith.constant 0 : index
    %168 = vector.load %arg14[%167, %c0_93] : memref<64x512xf32, #tpu.memory_space<vmem>>, vector<8x512xf32>
    %c0_94 = arith.constant 0 : index
    %c0_95 = arith.constant 0 : index
    %169 = vector.load %arg15[%c0_94, %c0_95] : memref<8x128xf32, #tpu.memory_space<vmem>>, vector<8x128xf32>
    %c0_96 = arith.constant 0 : index
    %c0_97 = arith.constant 0 : index
    %170 = vector.load %arg3[%c0_96, %c0_97] : memref<128x512xf32, #tpu.memory_space<vmem>>, vector<128x512xf32>
    %cst_98 = arith.constant dense<0.000000e+00> : vector<8x512xf32>
    %171 = tpu.matmul %169, %170, %cst_98 {dimension_numbers = #tpu.dot_dimension_numbers<[1], [0], [0], [1], [0, 0, 1, 1], [], []>} : vector<8x128xf32>, vector<128x512xf32>, vector<8x512xf32> -> vector<8x512xf32>
    %172 = arith.addf %168, %171 : vector<8x512xf32>
    %c0_99 = arith.constant 0 : index
    %c0_100 = arith.constant 0 : index
    %173 = vector.load %arg4[%c0_99, %c0_100] : memref<8x512xf32, #tpu.memory_space<vmem>>, vector<8x512xf32>
    %174 = arith.addf %172, %173 : vector<8x512xf32>
    %c0_101 = arith.constant 0 : index
    %c0_102 = arith.constant 0 : index
    %175 = vector.load %arg16[%c0_101, %c0_102] : memref<8x128xf32, #tpu.memory_space<vmem>>, vector<8x128xf32>
    %176 = vector.extract_strided_slice %174 {offsets = [0, 0], sizes = [8, 128], strides = [1, 1]} : vector<8x512xf32> to vector<8x128xf32>
    %177 = arith.negf %176 : vector<8x128xf32>
    %178 = math.exp %177 : vector<8x128xf32>
    %cst_103 = arith.constant 1.000000e+00 : f32
    %179 = vector.broadcast %cst_103 : f32 to vector<8x128xf32>
    %180 = arith.addf %179, %178 : vector<8x128xf32>
    %181 = arith.divf %179, %180 : vector<8x128xf32>
    %182 = vector.extract_strided_slice %174 {offsets = [0, 128], sizes = [8, 128], strides = [1, 1]} : vector<8x512xf32> to vector<8x128xf32>
    %183 = arith.negf %182 : vector<8x128xf32>
    %184 = math.exp %183 : vector<8x128xf32>
    %cst_104 = arith.constant 1.000000e+00 : f32
    %185 = vector.broadcast %cst_104 : f32 to vector<8x128xf32>
    %186 = arith.addf %185, %184 : vector<8x128xf32>
    %187 = arith.divf %185, %186 : vector<8x128xf32>
    %188 = vector.extract_strided_slice %174 {offsets = [0, 256], sizes = [8, 128], strides = [1, 1]} : vector<8x512xf32> to vector<8x128xf32>
    %189 = math.tanh %188 : vector<8x128xf32>
    %190 = vector.extract_strided_slice %174 {offsets = [0, 384], sizes = [8, 128], strides = [1, 1]} : vector<8x512xf32> to vector<8x128xf32>
    %191 = arith.negf %190 : vector<8x128xf32>
    %192 = math.exp %191 : vector<8x128xf32>
    %cst_105 = arith.constant 1.000000e+00 : f32
    %193 = vector.broadcast %cst_105 : f32 to vector<8x128xf32>
    %194 = arith.addf %193, %192 : vector<8x128xf32>
    %195 = arith.divf %193, %194 : vector<8x128xf32>
    %196 = arith.mulf %187, %175 : vector<8x128xf32>
    %197 = arith.mulf %181, %189 : vector<8x128xf32>
    %198 = arith.addf %196, %197 : vector<8x128xf32>
    %199 = math.tanh %198 : vector<8x128xf32>
    %200 = arith.mulf %195, %199 : vector<8x128xf32>
    %c0_106 = arith.constant 0 : index
    %c0_107 = arith.constant 0 : index
    %201 = vector.load %arg15[%c0_106, %c0_107] : memref<8x128xf32, #tpu.memory_space<vmem>>, vector<8x128xf32>
    tpu.vector_store %arg15[%c0_106, %c0_107], %200 {strides = array<i32>} : memref<8x128xf32, #tpu.memory_space<vmem>>, vector<8x128xf32>,
    %c0_108 = arith.constant 0 : index
    %c0_109 = arith.constant 0 : index
    %202 = vector.load %arg16[%c0_108, %c0_109] : memref<8x128xf32, #tpu.memory_space<vmem>>, vector<8x128xf32>
    tpu.vector_store %arg16[%c0_108, %c0_109], %198 {strides = array<i32>} : memref<8x128xf32, #tpu.memory_space<vmem>>, vector<8x128xf32>,
    %c5_i32 = arith.constant 5 : i32
    %c1_i32_110 = arith.constant 1 : i32
    %203 = arith.muli %c5_i32, %c1_i32_110 : i32
    %c0_i32_111 = arith.constant 0 : i32
    %204 = arith.addi %c0_i32_111, %203 : i32
    %c8_i32_112 = arith.constant 8 : i32
    %205 = arith.muli %204, %c8_i32_112 : i32
    %206 = arith.index_cast %205 : i32 to index
    %c0_113 = arith.constant 0 : index
    %207 = vector.load %arg14[%206, %c0_113] : memref<64x512xf32, #tpu.memory_space<vmem>>, vector<8x512xf32>
    %c0_114 = arith.constant 0 : index
    %c0_115 = arith.constant 0 : index
    %208 = vector.load %arg15[%c0_114, %c0_115] : memref<8x128xf32, #tpu.memory_space<vmem>>, vector<8x128xf32>
    %c0_116 = arith.constant 0 : index
    %c0_117 = arith.constant 0 : index
    %209 = vector.load %arg3[%c0_116, %c0_117] : memref<128x512xf32, #tpu.memory_space<vmem>>, vector<128x512xf32>
    %cst_118 = arith.constant dense<0.000000e+00> : vector<8x512xf32>
    %210 = tpu.matmul %208, %209, %cst_118 {dimension_numbers = #tpu.dot_dimension_numbers<[1], [0], [0], [1], [0, 0, 1, 1], [], []>} : vector<8x128xf32>, vector<128x512xf32>, vector<8x512xf32> -> vector<8x512xf32>
    %211 = arith.addf %207, %210 : vector<8x512xf32>
    %c0_119 = arith.constant 0 : index
    %c0_120 = arith.constant 0 : index
    %212 = vector.load %arg4[%c0_119, %c0_120] : memref<8x512xf32, #tpu.memory_space<vmem>>, vector<8x512xf32>
    %213 = arith.addf %211, %212 : vector<8x512xf32>
    %c0_121 = arith.constant 0 : index
    %c0_122 = arith.constant 0 : index
    %214 = vector.load %arg16[%c0_121, %c0_122] : memref<8x128xf32, #tpu.memory_space<vmem>>, vector<8x128xf32>
    %215 = vector.extract_strided_slice %213 {offsets = [0, 0], sizes = [8, 128], strides = [1, 1]} : vector<8x512xf32> to vector<8x128xf32>
    %216 = arith.negf %215 : vector<8x128xf32>
    %217 = math.exp %216 : vector<8x128xf32>
    %cst_123 = arith.constant 1.000000e+00 : f32
    %218 = vector.broadcast %cst_123 : f32 to vector<8x128xf32>
    %219 = arith.addf %218, %217 : vector<8x128xf32>
    %220 = arith.divf %218, %219 : vector<8x128xf32>
    %221 = vector.extract_strided_slice %213 {offsets = [0, 128], sizes = [8, 128], strides = [1, 1]} : vector<8x512xf32> to vector<8x128xf32>
    %222 = arith.negf %221 : vector<8x128xf32>
    %223 = math.exp %222 : vector<8x128xf32>
    %cst_124 = arith.constant 1.000000e+00 : f32
    %224 = vector.broadcast %cst_124 : f32 to vector<8x128xf32>
    %225 = arith.addf %224, %223 : vector<8x128xf32>
    %226 = arith.divf %224, %225 : vector<8x128xf32>
    %227 = vector.extract_strided_slice %213 {offsets = [0, 256], sizes = [8, 128], strides = [1, 1]} : vector<8x512xf32> to vector<8x128xf32>
    %228 = math.tanh %227 : vector<8x128xf32>
    %229 = vector.extract_strided_slice %213 {offsets = [0, 384], sizes = [8, 128], strides = [1, 1]} : vector<8x512xf32> to vector<8x128xf32>
    %230 = arith.negf %229 : vector<8x128xf32>
    %231 = math.exp %230 : vector<8x128xf32>
    %cst_125 = arith.constant 1.000000e+00 : f32
    %232 = vector.broadcast %cst_125 : f32 to vector<8x128xf32>
    %233 = arith.addf %232, %231 : vector<8x128xf32>
    %234 = arith.divf %232, %233 : vector<8x128xf32>
    %235 = arith.mulf %226, %214 : vector<8x128xf32>
    %236 = arith.mulf %220, %228 : vector<8x128xf32>
    %237 = arith.addf %235, %236 : vector<8x128xf32>
    %238 = math.tanh %237 : vector<8x128xf32>
    %239 = arith.mulf %234, %238 : vector<8x128xf32>
    %c0_126 = arith.constant 0 : index
    %c0_127 = arith.constant 0 : index
    %240 = vector.load %arg15[%c0_126, %c0_127] : memref<8x128xf32, #tpu.memory_space<vmem>>, vector<8x128xf32>
    tpu.vector_store %arg15[%c0_126, %c0_127], %239 {strides = array<i32>} : memref<8x128xf32, #tpu.memory_space<vmem>>, vector<8x128xf32>,
    %c0_128 = arith.constant 0 : index
    %c0_129 = arith.constant 0 : index
    %241 = vector.load %arg16[%c0_128, %c0_129] : memref<8x128xf32, #tpu.memory_space<vmem>>, vector<8x128xf32>
    tpu.vector_store %arg16[%c0_128, %c0_129], %237 {strides = array<i32>} : memref<8x128xf32, #tpu.memory_space<vmem>>, vector<8x128xf32>,
    %c6_i32 = arith.constant 6 : i32
    %c1_i32_130 = arith.constant 1 : i32
    %242 = arith.muli %c6_i32, %c1_i32_130 : i32
    %c0_i32_131 = arith.constant 0 : i32
    %243 = arith.addi %c0_i32_131, %242 : i32
    %c8_i32_132 = arith.constant 8 : i32
    %244 = arith.muli %243, %c8_i32_132 : i32
    %245 = arith.index_cast %244 : i32 to index
    %c0_133 = arith.constant 0 : index
    %246 = vector.load %arg14[%245, %c0_133] : memref<64x512xf32, #tpu.memory_space<vmem>>, vector<8x512xf32>
    %c0_134 = arith.constant 0 : index
    %c0_135 = arith.constant 0 : index
    %247 = vector.load %arg15[%c0_134, %c0_135] : memref<8x128xf32, #tpu.memory_space<vmem>>, vector<8x128xf32>
    %c0_136 = arith.constant 0 : index
    %c0_137 = arith.constant 0 : index
    %248 = vector.load %arg3[%c0_136, %c0_137] : memref<128x512xf32, #tpu.memory_space<vmem>>, vector<128x512xf32>
    %cst_138 = arith.constant dense<0.000000e+00> : vector<8x512xf32>
    %249 = tpu.matmul %247, %248, %cst_138 {dimension_numbers = #tpu.dot_dimension_numbers<[1], [0], [0], [1], [0, 0, 1, 1], [], []>} : vector<8x128xf32>, vector<128x512xf32>, vector<8x512xf32> -> vector<8x512xf32>
    %250 = arith.addf %246, %249 : vector<8x512xf32>
    %c0_139 = arith.constant 0 : index
    %c0_140 = arith.constant 0 : index
    %251 = vector.load %arg4[%c0_139, %c0_140] : memref<8x512xf32, #tpu.memory_space<vmem>>, vector<8x512xf32>
    %252 = arith.addf %250, %251 : vector<8x512xf32>
    %c0_141 = arith.constant 0 : index
    %c0_142 = arith.constant 0 : index
    %253 = vector.load %arg16[%c0_141, %c0_142] : memref<8x128xf32, #tpu.memory_space<vmem>>, vector<8x128xf32>
    %254 = vector.extract_strided_slice %252 {offsets = [0, 0], sizes = [8, 128], strides = [1, 1]} : vector<8x512xf32> to vector<8x128xf32>
    %255 = arith.negf %254 : vector<8x128xf32>
    %256 = math.exp %255 : vector<8x128xf32>
    %cst_143 = arith.constant 1.000000e+00 : f32
    %257 = vector.broadcast %cst_143 : f32 to vector<8x128xf32>
    %258 = arith.addf %257, %256 : vector<8x128xf32>
    %259 = arith.divf %257, %258 : vector<8x128xf32>
    %260 = vector.extract_strided_slice %252 {offsets = [0, 128], sizes = [8, 128], strides = [1, 1]} : vector<8x512xf32> to vector<8x128xf32>
    %261 = arith.negf %260 : vector<8x128xf32>
    %262 = math.exp %261 : vector<8x128xf32>
    %cst_144 = arith.constant 1.000000e+00 : f32
    %263 = vector.broadcast %cst_144 : f32 to vector<8x128xf32>
    %264 = arith.addf %263, %262 : vector<8x128xf32>
    %265 = arith.divf %263, %264 : vector<8x128xf32>
    %266 = vector.extract_strided_slice %252 {offsets = [0, 256], sizes = [8, 128], strides = [1, 1]} : vector<8x512xf32> to vector<8x128xf32>
    %267 = math.tanh %266 : vector<8x128xf32>
    %268 = vector.extract_strided_slice %252 {offsets = [0, 384], sizes = [8, 128], strides = [1, 1]} : vector<8x512xf32> to vector<8x128xf32>
    %269 = arith.negf %268 : vector<8x128xf32>
    %270 = math.exp %269 : vector<8x128xf32>
    %cst_145 = arith.constant 1.000000e+00 : f32
    %271 = vector.broadcast %cst_145 : f32 to vector<8x128xf32>
    %272 = arith.addf %271, %270 : vector<8x128xf32>
    %273 = arith.divf %271, %272 : vector<8x128xf32>
    %274 = arith.mulf %265, %253 : vector<8x128xf32>
    %275 = arith.mulf %259, %267 : vector<8x128xf32>
    %276 = arith.addf %274, %275 : vector<8x128xf32>
    %277 = math.tanh %276 : vector<8x128xf32>
    %278 = arith.mulf %273, %277 : vector<8x128xf32>
    %c0_146 = arith.constant 0 : index
    %c0_147 = arith.constant 0 : index
    %279 = vector.load %arg15[%c0_146, %c0_147] : memref<8x128xf32, #tpu.memory_space<vmem>>, vector<8x128xf32>
    tpu.vector_store %arg15[%c0_146, %c0_147], %278 {strides = array<i32>} : memref<8x128xf32, #tpu.memory_space<vmem>>, vector<8x128xf32>,
    %c0_148 = arith.constant 0 : index
    %c0_149 = arith.constant 0 : index
    %280 = vector.load %arg16[%c0_148, %c0_149] : memref<8x128xf32, #tpu.memory_space<vmem>>, vector<8x128xf32>
    tpu.vector_store %arg16[%c0_148, %c0_149], %276 {strides = array<i32>} : memref<8x128xf32, #tpu.memory_space<vmem>>, vector<8x128xf32>,
    %c7_i32 = arith.constant 7 : i32
    %c1_i32_150 = arith.constant 1 : i32
    %281 = arith.muli %c7_i32, %c1_i32_150 : i32
    %c0_i32_151 = arith.constant 0 : i32
    %282 = arith.addi %c0_i32_151, %281 : i32
    %c8_i32_152 = arith.constant 8 : i32
    %283 = arith.muli %282, %c8_i32_152 : i32
    %284 = arith.index_cast %283 : i32 to index
    %c0_153 = arith.constant 0 : index
    %285 = vector.load %arg14[%284, %c0_153] : memref<64x512xf32, #tpu.memory_space<vmem>>, vector<8x512xf32>
    %c0_154 = arith.constant 0 : index
    %c0_155 = arith.constant 0 : index
    %286 = vector.load %arg15[%c0_154, %c0_155] : memref<8x128xf32, #tpu.memory_space<vmem>>, vector<8x128xf32>
    %c0_156 = arith.constant 0 : index
    %c0_157 = arith.constant 0 : index
    %287 = vector.load %arg3[%c0_156, %c0_157] : memref<128x512xf32, #tpu.memory_space<vmem>>, vector<128x512xf32>
    %cst_158 = arith.constant dense<0.000000e+00> : vector<8x512xf32>
    %288 = tpu.matmul %286, %287, %cst_158 {dimension_numbers = #tpu.dot_dimension_numbers<[1], [0], [0], [1], [0, 0, 1, 1], [], []>} : vector<8x128xf32>, vector<128x512xf32>, vector<8x512xf32> -> vector<8x512xf32>
    %289 = arith.addf %285, %288 : vector<8x512xf32>
    %c0_159 = arith.constant 0 : index
    %c0_160 = arith.constant 0 : index
    %290 = vector.load %arg4[%c0_159, %c0_160] : memref<8x512xf32, #tpu.memory_space<vmem>>, vector<8x512xf32>
    %291 = arith.addf %289, %290 : vector<8x512xf32>
    %c0_161 = arith.constant 0 : index
    %c0_162 = arith.constant 0 : index
    %292 = vector.load %arg16[%c0_161, %c0_162] : memref<8x128xf32, #tpu.memory_space<vmem>>, vector<8x128xf32>
    %293 = vector.extract_strided_slice %291 {offsets = [0, 0], sizes = [8, 128], strides = [1, 1]} : vector<8x512xf32> to vector<8x128xf32>
    %294 = arith.negf %293 : vector<8x128xf32>
    %295 = math.exp %294 : vector<8x128xf32>
    %cst_163 = arith.constant 1.000000e+00 : f32
    %296 = vector.broadcast %cst_163 : f32 to vector<8x128xf32>
    %297 = arith.addf %296, %295 : vector<8x128xf32>
    %298 = arith.divf %296, %297 : vector<8x128xf32>
    %299 = vector.extract_strided_slice %291 {offsets = [0, 128], sizes = [8, 128], strides = [1, 1]} : vector<8x512xf32> to vector<8x128xf32>
    %300 = arith.negf %299 : vector<8x128xf32>
    %301 = math.exp %300 : vector<8x128xf32>
    %cst_164 = arith.constant 1.000000e+00 : f32
    %302 = vector.broadcast %cst_164 : f32 to vector<8x128xf32>
    %303 = arith.addf %302, %301 : vector<8x128xf32>
    %304 = arith.divf %302, %303 : vector<8x128xf32>
    %305 = vector.extract_strided_slice %291 {offsets = [0, 256], sizes = [8, 128], strides = [1, 1]} : vector<8x512xf32> to vector<8x128xf32>
    %306 = math.tanh %305 : vector<8x128xf32>
    %307 = vector.extract_strided_slice %291 {offsets = [0, 384], sizes = [8, 128], strides = [1, 1]} : vector<8x512xf32> to vector<8x128xf32>
    %308 = arith.negf %307 : vector<8x128xf32>
    %309 = math.exp %308 : vector<8x128xf32>
    %cst_165 = arith.constant 1.000000e+00 : f32
    %310 = vector.broadcast %cst_165 : f32 to vector<8x128xf32>
    %311 = arith.addf %310, %309 : vector<8x128xf32>
    %312 = arith.divf %310, %311 : vector<8x128xf32>
    %313 = arith.mulf %304, %292 : vector<8x128xf32>
    %314 = arith.mulf %298, %306 : vector<8x128xf32>
    %315 = arith.addf %313, %314 : vector<8x128xf32>
    %316 = math.tanh %315 : vector<8x128xf32>
    %317 = arith.mulf %312, %316 : vector<8x128xf32>
    %c0_166 = arith.constant 0 : index
    %c0_167 = arith.constant 0 : index
    %318 = vector.load %arg15[%c0_166, %c0_167] : memref<8x128xf32, #tpu.memory_space<vmem>>, vector<8x128xf32>
    tpu.vector_store %arg15[%c0_166, %c0_167], %317 {strides = array<i32>} : memref<8x128xf32, #tpu.memory_space<vmem>>, vector<8x128xf32>,
    %c0_168 = arith.constant 0 : index
    %c0_169 = arith.constant 0 : index
    %319 = vector.load %arg16[%c0_168, %c0_169] : memref<8x128xf32, #tpu.memory_space<vmem>>, vector<8x128xf32>
    tpu.vector_store %arg16[%c0_168, %c0_169], %315 {strides = array<i32>} : memref<8x128xf32, #tpu.memory_space<vmem>>, vector<8x128xf32>,
    %c8_i32_170 = arith.constant 8 : i32
    %c0_171 = arith.constant 0 : index
    %c0_172 = arith.constant 0 : index
    %320 = vector.load %arg12[%c0_171, %c0_172] : memref<8x128xf32, #tpu.memory_space<vmem>>, vector<8x128xf32>
    %c0_173 = arith.constant 0 : index
    %c0_174 = arith.constant 0 : index
    %321 = vector.load %arg17[%c0_173, %c0_174] : memref<8x128xf32, #tpu.memory_space<vmem>>, vector<8x128xf32>
    tpu.vector_store %arg17[%c0_173, %c0_174], %320 {strides = array<i32>} : memref<8x128xf32, #tpu.memory_space<vmem>>, vector<8x128xf32>,
    %322 = tpu.iota {dimensions = array<i32: 1>} : vector<8x128xi32>
    %c0_i32_175 = arith.constant 0 : i32
    %c1_i32_176 = arith.constant 1 : i32
    %323 = arith.muli %c0_i32_175, %c1_i32_176 : i32
    %c0_i32_177 = arith.constant 0 : i32
    %324 = arith.addi %c0_i32_177, %323 : i32
    %c0_178 = arith.constant 0 : index
    %c0_179 = arith.constant 0 : index
    %325 = vector.load %arg17[%c0_178, %c0_179] : memref<8x128xf32, #tpu.memory_space<vmem>>, vector<8x128xf32>
    %c0_180 = arith.constant 0 : index
    %c0_181 = arith.constant 0 : index
    %326 = vector.load %arg5[%c0_180, %c0_181] : memref<128x128xf32, #tpu.memory_space<vmem>>, vector<128x128xf32>
    %cst_182 = arith.constant dense<0.000000e+00> : vector<8x128xf32>
    %327 = tpu.matmul %325, %326, %cst_182 {dimension_numbers = #tpu.dot_dimension_numbers<[1], [0], [0], [1], [0, 0, 1, 1], [], []>} : vector<8x128xf32>, vector<128x128xf32>, vector<8x128xf32> -> vector<8x128xf32>
    %c0_183 = arith.constant 0 : index
    %c0_184 = arith.constant 0 : index
    %328 = vector.load %arg6[%c0_183, %c0_184] : memref<128x512xf32, #tpu.memory_space<vmem>>, vector<128x512xf32>
    %cst_185 = arith.constant dense<0.000000e+00> : vector<8x512xf32>
    %329 = tpu.matmul %327, %328, %cst_185 {dimension_numbers = #tpu.dot_dimension_numbers<[1], [0], [0], [1], [0, 0, 1, 1], [], []>} : vector<8x128xf32>, vector<128x512xf32>, vector<8x512xf32> -> vector<8x512xf32>
    %c0_186 = arith.constant 0 : index
    %c0_187 = arith.constant 0 : index
    %330 = vector.load %arg15[%c0_186, %c0_187] : memref<8x128xf32, #tpu.memory_space<vmem>>, vector<8x128xf32>
    %c0_188 = arith.constant 0 : index
    %c0_189 = arith.constant 0 : index
    %331 = vector.load %arg7[%c0_188, %c0_189] : memref<128x512xf32, #tpu.memory_space<vmem>>, vector<128x512xf32>
    %cst_190 = arith.constant dense<0.000000e+00> : vector<8x512xf32>
    %332 = tpu.matmul %330, %331, %cst_190 {dimension_numbers = #tpu.dot_dimension_numbers<[1], [0], [0], [1], [0, 0, 1, 1], [], []>} : vector<8x128xf32>, vector<128x512xf32>, vector<8x512xf32> -> vector<8x512xf32>
    %333 = arith.addf %329, %332 : vector<8x512xf32>
    %c0_191 = arith.constant 0 : index
    %c0_192 = arith.constant 0 : index
    %334 = vector.load %arg8[%c0_191, %c0_192] : memref<8x512xf32, #tpu.memory_space<vmem>>, vector<8x512xf32>
    %335 = arith.addf %333, %334 : vector<8x512xf32>
    %c0_193 = arith.constant 0 : index
    %c0_194 = arith.constant 0 : index
    %336 = vector.load %arg16[%c0_193, %c0_194] : memref<8x128xf32, #tpu.memory_space<vmem>>, vector<8x128xf32>
    %337 = vector.extract_strided_slice %335 {offsets = [0, 0], sizes = [8, 128], strides = [1, 1]} : vector<8x512xf32> to vector<8x128xf32>
    %338 = arith.negf %337 : vector<8x128xf32>
    %339 = math.exp %338 : vector<8x128xf32>
    %cst_195 = arith.constant 1.000000e+00 : f32
    %340 = vector.broadcast %cst_195 : f32 to vector<8x128xf32>
    %341 = arith.addf %340, %339 : vector<8x128xf32>
    %342 = arith.divf %340, %341 : vector<8x128xf32>
    %343 = vector.extract_strided_slice %335 {offsets = [0, 128], sizes = [8, 128], strides = [1, 1]} : vector<8x512xf32> to vector<8x128xf32>
    %344 = arith.negf %343 : vector<8x128xf32>
    %345 = math.exp %344 : vector<8x128xf32>
    %cst_196 = arith.constant 1.000000e+00 : f32
    %346 = vector.broadcast %cst_196 : f32 to vector<8x128xf32>
    %347 = arith.addf %346, %345 : vector<8x128xf32>
    %348 = arith.divf %346, %347 : vector<8x128xf32>
    %349 = vector.extract_strided_slice %335 {offsets = [0, 256], sizes = [8, 128], strides = [1, 1]} : vector<8x512xf32> to vector<8x128xf32>
    %350 = math.tanh %349 : vector<8x128xf32>
    %351 = vector.extract_strided_slice %335 {offsets = [0, 384], sizes = [8, 128], strides = [1, 1]} : vector<8x512xf32> to vector<8x128xf32>
    %352 = arith.negf %351 : vector<8x128xf32>
    %353 = math.exp %352 : vector<8x128xf32>
    %cst_197 = arith.constant 1.000000e+00 : f32
    %354 = vector.broadcast %cst_197 : f32 to vector<8x128xf32>
    %355 = arith.addf %354, %353 : vector<8x128xf32>
    %356 = arith.divf %354, %355 : vector<8x128xf32>
    %357 = arith.mulf %348, %336 : vector<8x128xf32>
    %358 = arith.mulf %342, %350 : vector<8x128xf32>
    %359 = arith.addf %357, %358 : vector<8x128xf32>
    %360 = math.tanh %359 : vector<8x128xf32>
    %361 = arith.mulf %356, %360 : vector<8x128xf32>
    %c0_198 = arith.constant 0 : index
    %c0_199 = arith.constant 0 : index
    %362 = vector.load %arg15[%c0_198, %c0_199] : memref<8x128xf32, #tpu.memory_space<vmem>>, vector<8x128xf32>
    tpu.vector_store %arg15[%c0_198, %c0_199], %361 {strides = array<i32>} : memref<8x128xf32, #tpu.memory_space<vmem>>, vector<8x128xf32>,
    %c0_200 = arith.constant 0 : index
    %c0_201 = arith.constant 0 : index
    %363 = vector.load %arg16[%c0_200, %c0_201] : memref<8x128xf32, #tpu.memory_space<vmem>>, vector<8x128xf32>
    tpu.vector_store %arg16[%c0_200, %c0_201], %359 {strides = array<i32>} : memref<8x128xf32, #tpu.memory_space<vmem>>, vector<8x128xf32>,
    %c0_202 = arith.constant 0 : index
    %c0_203 = arith.constant 0 : index
    %364 = vector.load %arg9[%c0_202, %c0_203] : memref<128x128xf32, #tpu.memory_space<vmem>>, vector<128x128xf32>
    %cst_204 = arith.constant dense<0.000000e+00> : vector<8x128xf32>
    %365 = tpu.matmul %361, %364, %cst_204 {dimension_numbers = #tpu.dot_dimension_numbers<[1], [0], [0], [1], [0, 0, 1, 1], [], []>} : vector<8x128xf32>, vector<128x128xf32>, vector<8x128xf32> -> vector<8x128xf32>
    %c0_205 = arith.constant 0 : index
    %c0_206 = arith.constant 0 : index
    %366 = vector.load %arg10[%c0_205, %c0_206] : memref<8x128xf32, #tpu.memory_space<vmem>>, vector<8x128xf32>
    %367 = arith.addf %365, %366 : vector<8x128xf32>
    %368 = arith.index_cast %324 : i32 to index
    %c0_207 = arith.constant 0 : index
    %c0_208 = arith.constant 0 : index
    %369 = vector.load %arg13[%368, %c0_207, %c0_208] : memref<8x8x128xf32, #tpu.memory_space<vmem>>, vector<1x8x128xf32>
    %370 = vector.shape_cast %369 : vector<1x8x128xf32> to vector<8x128xf32>
    %371 = vector.shape_cast %367 : vector<8x128xf32> to vector<1x8x128xf32>
    tpu.vector_store %arg13[%368, %c0_207, %c0_208], %371 {strides = array<i32>} : memref<8x8x128xf32, #tpu.memory_space<vmem>>, vector<1x8x128xf32>,
    %372 = arith.index_cast %324 : i32 to index
    %373 = memref.load %arg0[%372] : memref<8xi32, #tpu.memory_space<smem>>
    %c0_i32_209 = arith.constant 0 : i32
    %374 = arith.cmpi eq, %373, %c0_i32_209 : i32
    %375 = arith.extui %374 : i1 to i32
    %c0_i32_210 = arith.constant 0 : i32
    %376 = arith.cmpi ne, %375, %c0_i32_210 : i32
    scf.if %376 {
      %c64_i32 = arith.constant 64 : i32
      %779 = vector.broadcast %c64_i32 : i32 to vector<8x128xi32>
      %780 = arith.cmpi slt, %322, %779 : vector<8x128xi32>
      %cst_480 = arith.constant -1.000000e+30 : f32
      %781 = vector.broadcast %cst_480 : f32 to vector<8x128xf32>
      %782 = arith.select %780, %367, %781 : vector<8x128xi1>, vector<8x128xf32>
      %cst_481 = arith.constant dense<0xFF800000> : vector<8xf32>
      %783 = vector.multi_reduction <maximumf>, %782, %cst_481 [1] : vector<8x128xf32> to vector<8xf32>
      %784 = vector.shape_cast %783 : vector<8xf32> to vector<8x1xf32>
      %785 = vector.broadcast %784 : vector<8x1xf32> to vector<8x128xf32>
      %786 = arith.cmpf oeq, %782, %785 : vector<8x128xf32>
      %c128_i32 = arith.constant 128 : i32
      %787 = vector.broadcast %c128_i32 : i32 to vector<8x128xi32>
      %788 = arith.select %786, %322, %787 : vector<8x128xi1>, vector<8x128xi32>
      %cst_482 = arith.constant dense<2147483647> : vector<8xi32>
      %789 = vector.multi_reduction <minsi>, %788, %cst_482 [1] : vector<8x128xi32> to vector<8xi32>
      %790 = vector.shape_cast %789 : vector<8xi32> to vector<8x1xi32>
      %791 = vector.broadcast %790 : vector<8x1xi32> to vector<8x128xi32>
      %792 = arith.cmpi eq, %322, %791 : vector<8x128xi32>
      %793 = arith.extui %792 : vector<8x128xi1> to vector<8x128xi32>
      %794 = arith.sitofp %793 : vector<8x128xi32> to vector<8x128xf32>
      %c0_483 = arith.constant 0 : index
      %c0_484 = arith.constant 0 : index
      %795 = vector.load %arg17[%c0_483, %c0_484] : memref<8x128xf32, #tpu.memory_space<vmem>>, vector<8x128xf32>
      tpu.vector_store %arg17[%c0_483, %c0_484], %794 {strides = array<i32>} : memref<8x128xf32, #tpu.memory_space<vmem>>, vector<8x128xf32>,
    } else {
    }
    %c0_i32_211 = arith.constant 0 : i32
    %377 = arith.cmpi ne, %373, %c0_i32_211 : i32
    %378 = arith.extui %377 : i1 to i32
    %c0_i32_212 = arith.constant 0 : i32
    %379 = arith.cmpi ne, %378, %c0_i32_212 : i32
    scf.if %379 {
      %779 = arith.index_cast %324 : i32 to index
      %c0_480 = arith.constant 0 : index
      %c0_481 = arith.constant 0 : index
      %780 = vector.load %arg11[%779, %c0_480, %c0_481] : memref<8x8x128xf32, #tpu.memory_space<vmem>>, vector<1x8x128xf32>
      %781 = vector.shape_cast %780 : vector<1x8x128xf32> to vector<8x128xf32>
      %c0_482 = arith.constant 0 : index
      %c0_483 = arith.constant 0 : index
      %782 = vector.load %arg17[%c0_482, %c0_483] : memref<8x128xf32, #tpu.memory_space<vmem>>, vector<8x128xf32>
      tpu.vector_store %arg17[%c0_482, %c0_483], %781 {strides = array<i32>} : memref<8x128xf32, #tpu.memory_space<vmem>>, vector<8x128xf32>,
    } else {
    }
    %c1_i32_213 = arith.constant 1 : i32
    %c1_i32_214 = arith.constant 1 : i32
    %380 = arith.muli %c1_i32_213, %c1_i32_214 : i32
    %c0_i32_215 = arith.constant 0 : i32
    %381 = arith.addi %c0_i32_215, %380 : i32
    %c0_216 = arith.constant 0 : index
    %c0_217 = arith.constant 0 : index
    %382 = vector.load %arg17[%c0_216, %c0_217] : memref<8x128xf32, #tpu.memory_space<vmem>>, vector<8x128xf32>
    %c0_218 = arith.constant 0 : index
    %c0_219 = arith.constant 0 : index
    %383 = vector.load %arg5[%c0_218, %c0_219] : memref<128x128xf32, #tpu.memory_space<vmem>>, vector<128x128xf32>
    %cst_220 = arith.constant dense<0.000000e+00> : vector<8x128xf32>
    %384 = tpu.matmul %382, %383, %cst_220 {dimension_numbers = #tpu.dot_dimension_numbers<[1], [0], [0], [1], [0, 0, 1, 1], [], []>} : vector<8x128xf32>, vector<128x128xf32>, vector<8x128xf32> -> vector<8x128xf32>
    %c0_221 = arith.constant 0 : index
    %c0_222 = arith.constant 0 : index
    %385 = vector.load %arg6[%c0_221, %c0_222] : memref<128x512xf32, #tpu.memory_space<vmem>>, vector<128x512xf32>
    %cst_223 = arith.constant dense<0.000000e+00> : vector<8x512xf32>
    %386 = tpu.matmul %384, %385, %cst_223 {dimension_numbers = #tpu.dot_dimension_numbers<[1], [0], [0], [1], [0, 0, 1, 1], [], []>} : vector<8x128xf32>, vector<128x512xf32>, vector<8x512xf32> -> vector<8x512xf32>
    %c0_224 = arith.constant 0 : index
    %c0_225 = arith.constant 0 : index
    %387 = vector.load %arg15[%c0_224, %c0_225] : memref<8x128xf32, #tpu.memory_space<vmem>>, vector<8x128xf32>
    %c0_226 = arith.constant 0 : index
    %c0_227 = arith.constant 0 : index
    %388 = vector.load %arg7[%c0_226, %c0_227] : memref<128x512xf32, #tpu.memory_space<vmem>>, vector<128x512xf32>
    %cst_228 = arith.constant dense<0.000000e+00> : vector<8x512xf32>
    %389 = tpu.matmul %387, %388, %cst_228 {dimension_numbers = #tpu.dot_dimension_numbers<[1], [0], [0], [1], [0, 0, 1, 1], [], []>} : vector<8x128xf32>, vector<128x512xf32>, vector<8x512xf32> -> vector<8x512xf32>
    %390 = arith.addf %386, %389 : vector<8x512xf32>
    %c0_229 = arith.constant 0 : index
    %c0_230 = arith.constant 0 : index
    %391 = vector.load %arg8[%c0_229, %c0_230] : memref<8x512xf32, #tpu.memory_space<vmem>>, vector<8x512xf32>
    %392 = arith.addf %390, %391 : vector<8x512xf32>
    %c0_231 = arith.constant 0 : index
    %c0_232 = arith.constant 0 : index
    %393 = vector.load %arg16[%c0_231, %c0_232] : memref<8x128xf32, #tpu.memory_space<vmem>>, vector<8x128xf32>
    %394 = vector.extract_strided_slice %392 {offsets = [0, 0], sizes = [8, 128], strides = [1, 1]} : vector<8x512xf32> to vector<8x128xf32>
    %395 = arith.negf %394 : vector<8x128xf32>
    %396 = math.exp %395 : vector<8x128xf32>
    %cst_233 = arith.constant 1.000000e+00 : f32
    %397 = vector.broadcast %cst_233 : f32 to vector<8x128xf32>
    %398 = arith.addf %397, %396 : vector<8x128xf32>
    %399 = arith.divf %397, %398 : vector<8x128xf32>
    %400 = vector.extract_strided_slice %392 {offsets = [0, 128], sizes = [8, 128], strides = [1, 1]} : vector<8x512xf32> to vector<8x128xf32>
    %401 = arith.negf %400 : vector<8x128xf32>
    %402 = math.exp %401 : vector<8x128xf32>
    %cst_234 = arith.constant 1.000000e+00 : f32
    %403 = vector.broadcast %cst_234 : f32 to vector<8x128xf32>
    %404 = arith.addf %403, %402 : vector<8x128xf32>
    %405 = arith.divf %403, %404 : vector<8x128xf32>
    %406 = vector.extract_strided_slice %392 {offsets = [0, 256], sizes = [8, 128], strides = [1, 1]} : vector<8x512xf32> to vector<8x128xf32>
    %407 = math.tanh %406 : vector<8x128xf32>
    %408 = vector.extract_strided_slice %392 {offsets = [0, 384], sizes = [8, 128], strides = [1, 1]} : vector<8x512xf32> to vector<8x128xf32>
    %409 = arith.negf %408 : vector<8x128xf32>
    %410 = math.exp %409 : vector<8x128xf32>
    %cst_235 = arith.constant 1.000000e+00 : f32
    %411 = vector.broadcast %cst_235 : f32 to vector<8x128xf32>
    %412 = arith.addf %411, %410 : vector<8x128xf32>
    %413 = arith.divf %411, %412 : vector<8x128xf32>
    %414 = arith.mulf %405, %393 : vector<8x128xf32>
    %415 = arith.mulf %399, %407 : vector<8x128xf32>
    %416 = arith.addf %414, %415 : vector<8x128xf32>
    %417 = math.tanh %416 : vector<8x128xf32>
    %418 = arith.mulf %413, %417 : vector<8x128xf32>
    %c0_236 = arith.constant 0 : index
    %c0_237 = arith.constant 0 : index
    %419 = vector.load %arg15[%c0_236, %c0_237] : memref<8x128xf32, #tpu.memory_space<vmem>>, vector<8x128xf32>
    tpu.vector_store %arg15[%c0_236, %c0_237], %418 {strides = array<i32>} : memref<8x128xf32, #tpu.memory_space<vmem>>, vector<8x128xf32>,
    %c0_238 = arith.constant 0 : index
    %c0_239 = arith.constant 0 : index
    %420 = vector.load %arg16[%c0_238, %c0_239] : memref<8x128xf32, #tpu.memory_space<vmem>>, vector<8x128xf32>
    tpu.vector_store %arg16[%c0_238, %c0_239], %416 {strides = array<i32>} : memref<8x128xf32, #tpu.memory_space<vmem>>, vector<8x128xf32>,
    %c0_240 = arith.constant 0 : index
    %c0_241 = arith.constant 0 : index
    %421 = vector.load %arg9[%c0_240, %c0_241] : memref<128x128xf32, #tpu.memory_space<vmem>>, vector<128x128xf32>
    %cst_242 = arith.constant dense<0.000000e+00> : vector<8x128xf32>
    %422 = tpu.matmul %418, %421, %cst_242 {dimension_numbers = #tpu.dot_dimension_numbers<[1], [0], [0], [1], [0, 0, 1, 1], [], []>} : vector<8x128xf32>, vector<128x128xf32>, vector<8x128xf32> -> vector<8x128xf32>
    %c0_243 = arith.constant 0 : index
    %c0_244 = arith.constant 0 : index
    %423 = vector.load %arg10[%c0_243, %c0_244] : memref<8x128xf32, #tpu.memory_space<vmem>>, vector<8x128xf32>
    %424 = arith.addf %422, %423 : vector<8x128xf32>
    %425 = arith.index_cast %381 : i32 to index
    %c0_245 = arith.constant 0 : index
    %c0_246 = arith.constant 0 : index
    %426 = vector.load %arg13[%425, %c0_245, %c0_246] : memref<8x8x128xf32, #tpu.memory_space<vmem>>, vector<1x8x128xf32>
    %427 = vector.shape_cast %426 : vector<1x8x128xf32> to vector<8x128xf32>
    %428 = vector.shape_cast %424 : vector<8x128xf32> to vector<1x8x128xf32>
    tpu.vector_store %arg13[%425, %c0_245, %c0_246], %428 {strides = array<i32>} : memref<8x8x128xf32, #tpu.memory_space<vmem>>, vector<1x8x128xf32>,
    %429 = arith.index_cast %381 : i32 to index
    %430 = memref.load %arg0[%429] : memref<8xi32, #tpu.memory_space<smem>>
    %c0_i32_247 = arith.constant 0 : i32
    %431 = arith.cmpi eq, %430, %c0_i32_247 : i32
    %432 = arith.extui %431 : i1 to i32
    %c0_i32_248 = arith.constant 0 : i32
    %433 = arith.cmpi ne, %432, %c0_i32_248 : i32
    scf.if %433 {
      %c64_i32 = arith.constant 64 : i32
      %779 = vector.broadcast %c64_i32 : i32 to vector<8x128xi32>
      %780 = arith.cmpi slt, %322, %779 : vector<8x128xi32>
      %cst_480 = arith.constant -1.000000e+30 : f32
      %781 = vector.broadcast %cst_480 : f32 to vector<8x128xf32>
      %782 = arith.select %780, %424, %781 : vector<8x128xi1>, vector<8x128xf32>
      %cst_481 = arith.constant dense<0xFF800000> : vector<8xf32>
      %783 = vector.multi_reduction <maximumf>, %782, %cst_481 [1] : vector<8x128xf32> to vector<8xf32>
      %784 = vector.shape_cast %783 : vector<8xf32> to vector<8x1xf32>
      %785 = vector.broadcast %784 : vector<8x1xf32> to vector<8x128xf32>
      %786 = arith.cmpf oeq, %782, %785 : vector<8x128xf32>
      %c128_i32 = arith.constant 128 : i32
      %787 = vector.broadcast %c128_i32 : i32 to vector<8x128xi32>
      %788 = arith.select %786, %322, %787 : vector<8x128xi1>, vector<8x128xi32>
      %cst_482 = arith.constant dense<2147483647> : vector<8xi32>
      %789 = vector.multi_reduction <minsi>, %788, %cst_482 [1] : vector<8x128xi32> to vector<8xi32>
      %790 = vector.shape_cast %789 : vector<8xi32> to vector<8x1xi32>
      %791 = vector.broadcast %790 : vector<8x1xi32> to vector<8x128xi32>
      %792 = arith.cmpi eq, %322, %791 : vector<8x128xi32>
      %793 = arith.extui %792 : vector<8x128xi1> to vector<8x128xi32>
      %794 = arith.sitofp %793 : vector<8x128xi32> to vector<8x128xf32>
      %c0_483 = arith.constant 0 : index
      %c0_484 = arith.constant 0 : index
      %795 = vector.load %arg17[%c0_483, %c0_484] : memref<8x128xf32, #tpu.memory_space<vmem>>, vector<8x128xf32>
      tpu.vector_store %arg17[%c0_483, %c0_484], %794 {strides = array<i32>} : memref<8x128xf32, #tpu.memory_space<vmem>>, vector<8x128xf32>,
    } else {
    }
    %c0_i32_249 = arith.constant 0 : i32
    %434 = arith.cmpi ne, %430, %c0_i32_249 : i32
    %435 = arith.extui %434 : i1 to i32
    %c0_i32_250 = arith.constant 0 : i32
    %436 = arith.cmpi ne, %435, %c0_i32_250 : i32
    scf.if %436 {
      %779 = arith.index_cast %381 : i32 to index
      %c0_480 = arith.constant 0 : index
      %c0_481 = arith.constant 0 : index
      %780 = vector.load %arg11[%779, %c0_480, %c0_481] : memref<8x8x128xf32, #tpu.memory_space<vmem>>, vector<1x8x128xf32>
      %781 = vector.shape_cast %780 : vector<1x8x128xf32> to vector<8x128xf32>
      %c0_482 = arith.constant 0 : index
      %c0_483 = arith.constant 0 : index
      %782 = vector.load %arg17[%c0_482, %c0_483] : memref<8x128xf32, #tpu.memory_space<vmem>>, vector<8x128xf32>
      tpu.vector_store %arg17[%c0_482, %c0_483], %781 {strides = array<i32>} : memref<8x128xf32, #tpu.memory_space<vmem>>, vector<8x128xf32>,
    } else {
    }
    %c2_i32_251 = arith.constant 2 : i32
    %c1_i32_252 = arith.constant 1 : i32
    %437 = arith.muli %c2_i32_251, %c1_i32_252 : i32
    %c0_i32_253 = arith.constant 0 : i32
    %438 = arith.addi %c0_i32_253, %437 : i32
    %c0_254 = arith.constant 0 : index
    %c0_255 = arith.constant 0 : index
    %439 = vector.load %arg17[%c0_254, %c0_255] : memref<8x128xf32, #tpu.memory_space<vmem>>, vector<8x128xf32>
    %c0_256 = arith.constant 0 : index
    %c0_257 = arith.constant 0 : index
    %440 = vector.load %arg5[%c0_256, %c0_257] : memref<128x128xf32, #tpu.memory_space<vmem>>, vector<128x128xf32>
    %cst_258 = arith.constant dense<0.000000e+00> : vector<8x128xf32>
    %441 = tpu.matmul %439, %440, %cst_258 {dimension_numbers = #tpu.dot_dimension_numbers<[1], [0], [0], [1], [0, 0, 1, 1], [], []>} : vector<8x128xf32>, vector<128x128xf32>, vector<8x128xf32> -> vector<8x128xf32>
    %c0_259 = arith.constant 0 : index
    %c0_260 = arith.constant 0 : index
    %442 = vector.load %arg6[%c0_259, %c0_260] : memref<128x512xf32, #tpu.memory_space<vmem>>, vector<128x512xf32>
    %cst_261 = arith.constant dense<0.000000e+00> : vector<8x512xf32>
    %443 = tpu.matmul %441, %442, %cst_261 {dimension_numbers = #tpu.dot_dimension_numbers<[1], [0], [0], [1], [0, 0, 1, 1], [], []>} : vector<8x128xf32>, vector<128x512xf32>, vector<8x512xf32> -> vector<8x512xf32>
    %c0_262 = arith.constant 0 : index
    %c0_263 = arith.constant 0 : index
    %444 = vector.load %arg15[%c0_262, %c0_263] : memref<8x128xf32, #tpu.memory_space<vmem>>, vector<8x128xf32>
    %c0_264 = arith.constant 0 : index
    %c0_265 = arith.constant 0 : index
    %445 = vector.load %arg7[%c0_264, %c0_265] : memref<128x512xf32, #tpu.memory_space<vmem>>, vector<128x512xf32>
    %cst_266 = arith.constant dense<0.000000e+00> : vector<8x512xf32>
    %446 = tpu.matmul %444, %445, %cst_266 {dimension_numbers = #tpu.dot_dimension_numbers<[1], [0], [0], [1], [0, 0, 1, 1], [], []>} : vector<8x128xf32>, vector<128x512xf32>, vector<8x512xf32> -> vector<8x512xf32>
    %447 = arith.addf %443, %446 : vector<8x512xf32>
    %c0_267 = arith.constant 0 : index
    %c0_268 = arith.constant 0 : index
    %448 = vector.load %arg8[%c0_267, %c0_268] : memref<8x512xf32, #tpu.memory_space<vmem>>, vector<8x512xf32>
    %449 = arith.addf %447, %448 : vector<8x512xf32>
    %c0_269 = arith.constant 0 : index
    %c0_270 = arith.constant 0 : index
    %450 = vector.load %arg16[%c0_269, %c0_270] : memref<8x128xf32, #tpu.memory_space<vmem>>, vector<8x128xf32>
    %451 = vector.extract_strided_slice %449 {offsets = [0, 0], sizes = [8, 128], strides = [1, 1]} : vector<8x512xf32> to vector<8x128xf32>
    %452 = arith.negf %451 : vector<8x128xf32>
    %453 = math.exp %452 : vector<8x128xf32>
    %cst_271 = arith.constant 1.000000e+00 : f32
    %454 = vector.broadcast %cst_271 : f32 to vector<8x128xf32>
    %455 = arith.addf %454, %453 : vector<8x128xf32>
    %456 = arith.divf %454, %455 : vector<8x128xf32>
    %457 = vector.extract_strided_slice %449 {offsets = [0, 128], sizes = [8, 128], strides = [1, 1]} : vector<8x512xf32> to vector<8x128xf32>
    %458 = arith.negf %457 : vector<8x128xf32>
    %459 = math.exp %458 : vector<8x128xf32>
    %cst_272 = arith.constant 1.000000e+00 : f32
    %460 = vector.broadcast %cst_272 : f32 to vector<8x128xf32>
    %461 = arith.addf %460, %459 : vector<8x128xf32>
    %462 = arith.divf %460, %461 : vector<8x128xf32>
    %463 = vector.extract_strided_slice %449 {offsets = [0, 256], sizes = [8, 128], strides = [1, 1]} : vector<8x512xf32> to vector<8x128xf32>
    %464 = math.tanh %463 : vector<8x128xf32>
    %465 = vector.extract_strided_slice %449 {offsets = [0, 384], sizes = [8, 128], strides = [1, 1]} : vector<8x512xf32> to vector<8x128xf32>
    %466 = arith.negf %465 : vector<8x128xf32>
    %467 = math.exp %466 : vector<8x128xf32>
    %cst_273 = arith.constant 1.000000e+00 : f32
    %468 = vector.broadcast %cst_273 : f32 to vector<8x128xf32>
    %469 = arith.addf %468, %467 : vector<8x128xf32>
    %470 = arith.divf %468, %469 : vector<8x128xf32>
    %471 = arith.mulf %462, %450 : vector<8x128xf32>
    %472 = arith.mulf %456, %464 : vector<8x128xf32>
    %473 = arith.addf %471, %472 : vector<8x128xf32>
    %474 = math.tanh %473 : vector<8x128xf32>
    %475 = arith.mulf %470, %474 : vector<8x128xf32>
    %c0_274 = arith.constant 0 : index
    %c0_275 = arith.constant 0 : index
    %476 = vector.load %arg15[%c0_274, %c0_275] : memref<8x128xf32, #tpu.memory_space<vmem>>, vector<8x128xf32>
    tpu.vector_store %arg15[%c0_274, %c0_275], %475 {strides = array<i32>} : memref<8x128xf32, #tpu.memory_space<vmem>>, vector<8x128xf32>,
    %c0_276 = arith.constant 0 : index
    %c0_277 = arith.constant 0 : index
    %477 = vector.load %arg16[%c0_276, %c0_277] : memref<8x128xf32, #tpu.memory_space<vmem>>, vector<8x128xf32>
    tpu.vector_store %arg16[%c0_276, %c0_277], %473 {strides = array<i32>} : memref<8x128xf32, #tpu.memory_space<vmem>>, vector<8x128xf32>,
    %c0_278 = arith.constant 0 : index
    %c0_279 = arith.constant 0 : index
    %478 = vector.load %arg9[%c0_278, %c0_279] : memref<128x128xf32, #tpu.memory_space<vmem>>, vector<128x128xf32>
    %cst_280 = arith.constant dense<0.000000e+00> : vector<8x128xf32>
    %479 = tpu.matmul %475, %478, %cst_280 {dimension_numbers = #tpu.dot_dimension_numbers<[1], [0], [0], [1], [0, 0, 1, 1], [], []>} : vector<8x128xf32>, vector<128x128xf32>, vector<8x128xf32> -> vector<8x128xf32>
    %c0_281 = arith.constant 0 : index
    %c0_282 = arith.constant 0 : index
    %480 = vector.load %arg10[%c0_281, %c0_282] : memref<8x128xf32, #tpu.memory_space<vmem>>, vector<8x128xf32>
    %481 = arith.addf %479, %480 : vector<8x128xf32>
    %482 = arith.index_cast %438 : i32 to index
    %c0_283 = arith.constant 0 : index
    %c0_284 = arith.constant 0 : index
    %483 = vector.load %arg13[%482, %c0_283, %c0_284] : memref<8x8x128xf32, #tpu.memory_space<vmem>>, vector<1x8x128xf32>
    %484 = vector.shape_cast %483 : vector<1x8x128xf32> to vector<8x128xf32>
    %485 = vector.shape_cast %481 : vector<8x128xf32> to vector<1x8x128xf32>
    tpu.vector_store %arg13[%482, %c0_283, %c0_284], %485 {strides = array<i32>} : memref<8x8x128xf32, #tpu.memory_space<vmem>>, vector<1x8x128xf32>,
    %486 = arith.index_cast %438 : i32 to index
    %487 = memref.load %arg0[%486] : memref<8xi32, #tpu.memory_space<smem>>
    %c0_i32_285 = arith.constant 0 : i32
    %488 = arith.cmpi eq, %487, %c0_i32_285 : i32
    %489 = arith.extui %488 : i1 to i32
    %c0_i32_286 = arith.constant 0 : i32
    %490 = arith.cmpi ne, %489, %c0_i32_286 : i32
    scf.if %490 {
      %c64_i32 = arith.constant 64 : i32
      %779 = vector.broadcast %c64_i32 : i32 to vector<8x128xi32>
      %780 = arith.cmpi slt, %322, %779 : vector<8x128xi32>
      %cst_480 = arith.constant -1.000000e+30 : f32
      %781 = vector.broadcast %cst_480 : f32 to vector<8x128xf32>
      %782 = arith.select %780, %481, %781 : vector<8x128xi1>, vector<8x128xf32>
      %cst_481 = arith.constant dense<0xFF800000> : vector<8xf32>
      %783 = vector.multi_reduction <maximumf>, %782, %cst_481 [1] : vector<8x128xf32> to vector<8xf32>
      %784 = vector.shape_cast %783 : vector<8xf32> to vector<8x1xf32>
      %785 = vector.broadcast %784 : vector<8x1xf32> to vector<8x128xf32>
      %786 = arith.cmpf oeq, %782, %785 : vector<8x128xf32>
      %c128_i32 = arith.constant 128 : i32
      %787 = vector.broadcast %c128_i32 : i32 to vector<8x128xi32>
      %788 = arith.select %786, %322, %787 : vector<8x128xi1>, vector<8x128xi32>
      %cst_482 = arith.constant dense<2147483647> : vector<8xi32>
      %789 = vector.multi_reduction <minsi>, %788, %cst_482 [1] : vector<8x128xi32> to vector<8xi32>
      %790 = vector.shape_cast %789 : vector<8xi32> to vector<8x1xi32>
      %791 = vector.broadcast %790 : vector<8x1xi32> to vector<8x128xi32>
      %792 = arith.cmpi eq, %322, %791 : vector<8x128xi32>
      %793 = arith.extui %792 : vector<8x128xi1> to vector<8x128xi32>
      %794 = arith.sitofp %793 : vector<8x128xi32> to vector<8x128xf32>
      %c0_483 = arith.constant 0 : index
      %c0_484 = arith.constant 0 : index
      %795 = vector.load %arg17[%c0_483, %c0_484] : memref<8x128xf32, #tpu.memory_space<vmem>>, vector<8x128xf32>
      tpu.vector_store %arg17[%c0_483, %c0_484], %794 {strides = array<i32>} : memref<8x128xf32, #tpu.memory_space<vmem>>, vector<8x128xf32>,
    } else {
    }
    %c0_i32_287 = arith.constant 0 : i32
    %491 = arith.cmpi ne, %487, %c0_i32_287 : i32
    %492 = arith.extui %491 : i1 to i32
    %c0_i32_288 = arith.constant 0 : i32
    %493 = arith.cmpi ne, %492, %c0_i32_288 : i32
    scf.if %493 {
      %779 = arith.index_cast %438 : i32 to index
      %c0_480 = arith.constant 0 : index
      %c0_481 = arith.constant 0 : index
      %780 = vector.load %arg11[%779, %c0_480, %c0_481] : memref<8x8x128xf32, #tpu.memory_space<vmem>>, vector<1x8x128xf32>
      %781 = vector.shape_cast %780 : vector<1x8x128xf32> to vector<8x128xf32>
      %c0_482 = arith.constant 0 : index
      %c0_483 = arith.constant 0 : index
      %782 = vector.load %arg17[%c0_482, %c0_483] : memref<8x128xf32, #tpu.memory_space<vmem>>, vector<8x128xf32>
      tpu.vector_store %arg17[%c0_482, %c0_483], %781 {strides = array<i32>} : memref<8x128xf32, #tpu.memory_space<vmem>>, vector<8x128xf32>,
    } else {
    }
    %c3_i32_289 = arith.constant 3 : i32
    %c1_i32_290 = arith.constant 1 : i32
    %494 = arith.muli %c3_i32_289, %c1_i32_290 : i32
    %c0_i32_291 = arith.constant 0 : i32
    %495 = arith.addi %c0_i32_291, %494 : i32
    %c0_292 = arith.constant 0 : index
    %c0_293 = arith.constant 0 : index
    %496 = vector.load %arg17[%c0_292, %c0_293] : memref<8x128xf32, #tpu.memory_space<vmem>>, vector<8x128xf32>
    %c0_294 = arith.constant 0 : index
    %c0_295 = arith.constant 0 : index
    %497 = vector.load %arg5[%c0_294, %c0_295] : memref<128x128xf32, #tpu.memory_space<vmem>>, vector<128x128xf32>
    %cst_296 = arith.constant dense<0.000000e+00> : vector<8x128xf32>
    %498 = tpu.matmul %496, %497, %cst_296 {dimension_numbers = #tpu.dot_dimension_numbers<[1], [0], [0], [1], [0, 0, 1, 1], [], []>} : vector<8x128xf32>, vector<128x128xf32>, vector<8x128xf32> -> vector<8x128xf32>
    %c0_297 = arith.constant 0 : index
    %c0_298 = arith.constant 0 : index
    %499 = vector.load %arg6[%c0_297, %c0_298] : memref<128x512xf32, #tpu.memory_space<vmem>>, vector<128x512xf32>
    %cst_299 = arith.constant dense<0.000000e+00> : vector<8x512xf32>
    %500 = tpu.matmul %498, %499, %cst_299 {dimension_numbers = #tpu.dot_dimension_numbers<[1], [0], [0], [1], [0, 0, 1, 1], [], []>} : vector<8x128xf32>, vector<128x512xf32>, vector<8x512xf32> -> vector<8x512xf32>
    %c0_300 = arith.constant 0 : index
    %c0_301 = arith.constant 0 : index
    %501 = vector.load %arg15[%c0_300, %c0_301] : memref<8x128xf32, #tpu.memory_space<vmem>>, vector<8x128xf32>
    %c0_302 = arith.constant 0 : index
    %c0_303 = arith.constant 0 : index
    %502 = vector.load %arg7[%c0_302, %c0_303] : memref<128x512xf32, #tpu.memory_space<vmem>>, vector<128x512xf32>
    %cst_304 = arith.constant dense<0.000000e+00> : vector<8x512xf32>
    %503 = tpu.matmul %501, %502, %cst_304 {dimension_numbers = #tpu.dot_dimension_numbers<[1], [0], [0], [1], [0, 0, 1, 1], [], []>} : vector<8x128xf32>, vector<128x512xf32>, vector<8x512xf32> -> vector<8x512xf32>
    %504 = arith.addf %500, %503 : vector<8x512xf32>
    %c0_305 = arith.constant 0 : index
    %c0_306 = arith.constant 0 : index
    %505 = vector.load %arg8[%c0_305, %c0_306] : memref<8x512xf32, #tpu.memory_space<vmem>>, vector<8x512xf32>
    %506 = arith.addf %504, %505 : vector<8x512xf32>
    %c0_307 = arith.constant 0 : index
    %c0_308 = arith.constant 0 : index
    %507 = vector.load %arg16[%c0_307, %c0_308] : memref<8x128xf32, #tpu.memory_space<vmem>>, vector<8x128xf32>
    %508 = vector.extract_strided_slice %506 {offsets = [0, 0], sizes = [8, 128], strides = [1, 1]} : vector<8x512xf32> to vector<8x128xf32>
    %509 = arith.negf %508 : vector<8x128xf32>
    %510 = math.exp %509 : vector<8x128xf32>
    %cst_309 = arith.constant 1.000000e+00 : f32
    %511 = vector.broadcast %cst_309 : f32 to vector<8x128xf32>
    %512 = arith.addf %511, %510 : vector<8x128xf32>
    %513 = arith.divf %511, %512 : vector<8x128xf32>
    %514 = vector.extract_strided_slice %506 {offsets = [0, 128], sizes = [8, 128], strides = [1, 1]} : vector<8x512xf32> to vector<8x128xf32>
    %515 = arith.negf %514 : vector<8x128xf32>
    %516 = math.exp %515 : vector<8x128xf32>
    %cst_310 = arith.constant 1.000000e+00 : f32
    %517 = vector.broadcast %cst_310 : f32 to vector<8x128xf32>
    %518 = arith.addf %517, %516 : vector<8x128xf32>
    %519 = arith.divf %517, %518 : vector<8x128xf32>
    %520 = vector.extract_strided_slice %506 {offsets = [0, 256], sizes = [8, 128], strides = [1, 1]} : vector<8x512xf32> to vector<8x128xf32>
    %521 = math.tanh %520 : vector<8x128xf32>
    %522 = vector.extract_strided_slice %506 {offsets = [0, 384], sizes = [8, 128], strides = [1, 1]} : vector<8x512xf32> to vector<8x128xf32>
    %523 = arith.negf %522 : vector<8x128xf32>
    %524 = math.exp %523 : vector<8x128xf32>
    %cst_311 = arith.constant 1.000000e+00 : f32
    %525 = vector.broadcast %cst_311 : f32 to vector<8x128xf32>
    %526 = arith.addf %525, %524 : vector<8x128xf32>
    %527 = arith.divf %525, %526 : vector<8x128xf32>
    %528 = arith.mulf %519, %507 : vector<8x128xf32>
    %529 = arith.mulf %513, %521 : vector<8x128xf32>
    %530 = arith.addf %528, %529 : vector<8x128xf32>
    %531 = math.tanh %530 : vector<8x128xf32>
    %532 = arith.mulf %527, %531 : vector<8x128xf32>
    %c0_312 = arith.constant 0 : index
    %c0_313 = arith.constant 0 : index
    %533 = vector.load %arg15[%c0_312, %c0_313] : memref<8x128xf32, #tpu.memory_space<vmem>>, vector<8x128xf32>
    tpu.vector_store %arg15[%c0_312, %c0_313], %532 {strides = array<i32>} : memref<8x128xf32, #tpu.memory_space<vmem>>, vector<8x128xf32>,
    %c0_314 = arith.constant 0 : index
    %c0_315 = arith.constant 0 : index
    %534 = vector.load %arg16[%c0_314, %c0_315] : memref<8x128xf32, #tpu.memory_space<vmem>>, vector<8x128xf32>
    tpu.vector_store %arg16[%c0_314, %c0_315], %530 {strides = array<i32>} : memref<8x128xf32, #tpu.memory_space<vmem>>, vector<8x128xf32>,
    %c0_316 = arith.constant 0 : index
    %c0_317 = arith.constant 0 : index
    %535 = vector.load %arg9[%c0_316, %c0_317] : memref<128x128xf32, #tpu.memory_space<vmem>>, vector<128x128xf32>
    %cst_318 = arith.constant dense<0.000000e+00> : vector<8x128xf32>
    %536 = tpu.matmul %532, %535, %cst_318 {dimension_numbers = #tpu.dot_dimension_numbers<[1], [0], [0], [1], [0, 0, 1, 1], [], []>} : vector<8x128xf32>, vector<128x128xf32>, vector<8x128xf32> -> vector<8x128xf32>
    %c0_319 = arith.constant 0 : index
    %c0_320 = arith.constant 0 : index
    %537 = vector.load %arg10[%c0_319, %c0_320] : memref<8x128xf32, #tpu.memory_space<vmem>>, vector<8x128xf32>
    %538 = arith.addf %536, %537 : vector<8x128xf32>
    %539 = arith.index_cast %495 : i32 to index
    %c0_321 = arith.constant 0 : index
    %c0_322 = arith.constant 0 : index
    %540 = vector.load %arg13[%539, %c0_321, %c0_322] : memref<8x8x128xf32, #tpu.memory_space<vmem>>, vector<1x8x128xf32>
    %541 = vector.shape_cast %540 : vector<1x8x128xf32> to vector<8x128xf32>
    %542 = vector.shape_cast %538 : vector<8x128xf32> to vector<1x8x128xf32>
    tpu.vector_store %arg13[%539, %c0_321, %c0_322], %542 {strides = array<i32>} : memref<8x8x128xf32, #tpu.memory_space<vmem>>, vector<1x8x128xf32>,
    %543 = arith.index_cast %495 : i32 to index
    %544 = memref.load %arg0[%543] : memref<8xi32, #tpu.memory_space<smem>>
    %c0_i32_323 = arith.constant 0 : i32
    %545 = arith.cmpi eq, %544, %c0_i32_323 : i32
    %546 = arith.extui %545 : i1 to i32
    %c0_i32_324 = arith.constant 0 : i32
    %547 = arith.cmpi ne, %546, %c0_i32_324 : i32
    scf.if %547 {
      %c64_i32 = arith.constant 64 : i32
      %779 = vector.broadcast %c64_i32 : i32 to vector<8x128xi32>
      %780 = arith.cmpi slt, %322, %779 : vector<8x128xi32>
      %cst_480 = arith.constant -1.000000e+30 : f32
      %781 = vector.broadcast %cst_480 : f32 to vector<8x128xf32>
      %782 = arith.select %780, %538, %781 : vector<8x128xi1>, vector<8x128xf32>
      %cst_481 = arith.constant dense<0xFF800000> : vector<8xf32>
      %783 = vector.multi_reduction <maximumf>, %782, %cst_481 [1] : vector<8x128xf32> to vector<8xf32>
      %784 = vector.shape_cast %783 : vector<8xf32> to vector<8x1xf32>
      %785 = vector.broadcast %784 : vector<8x1xf32> to vector<8x128xf32>
      %786 = arith.cmpf oeq, %782, %785 : vector<8x128xf32>
      %c128_i32 = arith.constant 128 : i32
      %787 = vector.broadcast %c128_i32 : i32 to vector<8x128xi32>
      %788 = arith.select %786, %322, %787 : vector<8x128xi1>, vector<8x128xi32>
      %cst_482 = arith.constant dense<2147483647> : vector<8xi32>
      %789 = vector.multi_reduction <minsi>, %788, %cst_482 [1] : vector<8x128xi32> to vector<8xi32>
      %790 = vector.shape_cast %789 : vector<8xi32> to vector<8x1xi32>
      %791 = vector.broadcast %790 : vector<8x1xi32> to vector<8x128xi32>
      %792 = arith.cmpi eq, %322, %791 : vector<8x128xi32>
      %793 = arith.extui %792 : vector<8x128xi1> to vector<8x128xi32>
      %794 = arith.sitofp %793 : vector<8x128xi32> to vector<8x128xf32>
      %c0_483 = arith.constant 0 : index
      %c0_484 = arith.constant 0 : index
      %795 = vector.load %arg17[%c0_483, %c0_484] : memref<8x128xf32, #tpu.memory_space<vmem>>, vector<8x128xf32>
      tpu.vector_store %arg17[%c0_483, %c0_484], %794 {strides = array<i32>} : memref<8x128xf32, #tpu.memory_space<vmem>>, vector<8x128xf32>,
    } else {
    }
    %c0_i32_325 = arith.constant 0 : i32
    %548 = arith.cmpi ne, %544, %c0_i32_325 : i32
    %549 = arith.extui %548 : i1 to i32
    %c0_i32_326 = arith.constant 0 : i32
    %550 = arith.cmpi ne, %549, %c0_i32_326 : i32
    scf.if %550 {
      %779 = arith.index_cast %495 : i32 to index
      %c0_480 = arith.constant 0 : index
      %c0_481 = arith.constant 0 : index
      %780 = vector.load %arg11[%779, %c0_480, %c0_481] : memref<8x8x128xf32, #tpu.memory_space<vmem>>, vector<1x8x128xf32>
      %781 = vector.shape_cast %780 : vector<1x8x128xf32> to vector<8x128xf32>
      %c0_482 = arith.constant 0 : index
      %c0_483 = arith.constant 0 : index
      %782 = vector.load %arg17[%c0_482, %c0_483] : memref<8x128xf32, #tpu.memory_space<vmem>>, vector<8x128xf32>
      tpu.vector_store %arg17[%c0_482, %c0_483], %781 {strides = array<i32>} : memref<8x128xf32, #tpu.memory_space<vmem>>, vector<8x128xf32>,
    } else {
    }
    %c4_i32_327 = arith.constant 4 : i32
    %c1_i32_328 = arith.constant 1 : i32
    %551 = arith.muli %c4_i32_327, %c1_i32_328 : i32
    %c0_i32_329 = arith.constant 0 : i32
    %552 = arith.addi %c0_i32_329, %551 : i32
    %c0_330 = arith.constant 0 : index
    %c0_331 = arith.constant 0 : index
    %553 = vector.load %arg17[%c0_330, %c0_331] : memref<8x128xf32, #tpu.memory_space<vmem>>, vector<8x128xf32>
    %c0_332 = arith.constant 0 : index
    %c0_333 = arith.constant 0 : index
    %554 = vector.load %arg5[%c0_332, %c0_333] : memref<128x128xf32, #tpu.memory_space<vmem>>, vector<128x128xf32>
    %cst_334 = arith.constant dense<0.000000e+00> : vector<8x128xf32>
    %555 = tpu.matmul %553, %554, %cst_334 {dimension_numbers = #tpu.dot_dimension_numbers<[1], [0], [0], [1], [0, 0, 1, 1], [], []>} : vector<8x128xf32>, vector<128x128xf32>, vector<8x128xf32> -> vector<8x128xf32>
    %c0_335 = arith.constant 0 : index
    %c0_336 = arith.constant 0 : index
    %556 = vector.load %arg6[%c0_335, %c0_336] : memref<128x512xf32, #tpu.memory_space<vmem>>, vector<128x512xf32>
    %cst_337 = arith.constant dense<0.000000e+00> : vector<8x512xf32>
    %557 = tpu.matmul %555, %556, %cst_337 {dimension_numbers = #tpu.dot_dimension_numbers<[1], [0], [0], [1], [0, 0, 1, 1], [], []>} : vector<8x128xf32>, vector<128x512xf32>, vector<8x512xf32> -> vector<8x512xf32>
    %c0_338 = arith.constant 0 : index
    %c0_339 = arith.constant 0 : index
    %558 = vector.load %arg15[%c0_338, %c0_339] : memref<8x128xf32, #tpu.memory_space<vmem>>, vector<8x128xf32>
    %c0_340 = arith.constant 0 : index
    %c0_341 = arith.constant 0 : index
    %559 = vector.load %arg7[%c0_340, %c0_341] : memref<128x512xf32, #tpu.memory_space<vmem>>, vector<128x512xf32>
    %cst_342 = arith.constant dense<0.000000e+00> : vector<8x512xf32>
    %560 = tpu.matmul %558, %559, %cst_342 {dimension_numbers = #tpu.dot_dimension_numbers<[1], [0], [0], [1], [0, 0, 1, 1], [], []>} : vector<8x128xf32>, vector<128x512xf32>, vector<8x512xf32> -> vector<8x512xf32>
    %561 = arith.addf %557, %560 : vector<8x512xf32>
    %c0_343 = arith.constant 0 : index
    %c0_344 = arith.constant 0 : index
    %562 = vector.load %arg8[%c0_343, %c0_344] : memref<8x512xf32, #tpu.memory_space<vmem>>, vector<8x512xf32>
    %563 = arith.addf %561, %562 : vector<8x512xf32>
    %c0_345 = arith.constant 0 : index
    %c0_346 = arith.constant 0 : index
    %564 = vector.load %arg16[%c0_345, %c0_346] : memref<8x128xf32, #tpu.memory_space<vmem>>, vector<8x128xf32>
    %565 = vector.extract_strided_slice %563 {offsets = [0, 0], sizes = [8, 128], strides = [1, 1]} : vector<8x512xf32> to vector<8x128xf32>
    %566 = arith.negf %565 : vector<8x128xf32>
    %567 = math.exp %566 : vector<8x128xf32>
    %cst_347 = arith.constant 1.000000e+00 : f32
    %568 = vector.broadcast %cst_347 : f32 to vector<8x128xf32>
    %569 = arith.addf %568, %567 : vector<8x128xf32>
    %570 = arith.divf %568, %569 : vector<8x128xf32>
    %571 = vector.extract_strided_slice %563 {offsets = [0, 128], sizes = [8, 128], strides = [1, 1]} : vector<8x512xf32> to vector<8x128xf32>
    %572 = arith.negf %571 : vector<8x128xf32>
    %573 = math.exp %572 : vector<8x128xf32>
    %cst_348 = arith.constant 1.000000e+00 : f32
    %574 = vector.broadcast %cst_348 : f32 to vector<8x128xf32>
    %575 = arith.addf %574, %573 : vector<8x128xf32>
    %576 = arith.divf %574, %575 : vector<8x128xf32>
    %577 = vector.extract_strided_slice %563 {offsets = [0, 256], sizes = [8, 128], strides = [1, 1]} : vector<8x512xf32> to vector<8x128xf32>
    %578 = math.tanh %577 : vector<8x128xf32>
    %579 = vector.extract_strided_slice %563 {offsets = [0, 384], sizes = [8, 128], strides = [1, 1]} : vector<8x512xf32> to vector<8x128xf32>
    %580 = arith.negf %579 : vector<8x128xf32>
    %581 = math.exp %580 : vector<8x128xf32>
    %cst_349 = arith.constant 1.000000e+00 : f32
    %582 = vector.broadcast %cst_349 : f32 to vector<8x128xf32>
    %583 = arith.addf %582, %581 : vector<8x128xf32>
    %584 = arith.divf %582, %583 : vector<8x128xf32>
    %585 = arith.mulf %576, %564 : vector<8x128xf32>
    %586 = arith.mulf %570, %578 : vector<8x128xf32>
    %587 = arith.addf %585, %586 : vector<8x128xf32>
    %588 = math.tanh %587 : vector<8x128xf32>
    %589 = arith.mulf %584, %588 : vector<8x128xf32>
    %c0_350 = arith.constant 0 : index
    %c0_351 = arith.constant 0 : index
    %590 = vector.load %arg15[%c0_350, %c0_351] : memref<8x128xf32, #tpu.memory_space<vmem>>, vector<8x128xf32>
    tpu.vector_store %arg15[%c0_350, %c0_351], %589 {strides = array<i32>} : memref<8x128xf32, #tpu.memory_space<vmem>>, vector<8x128xf32>,
    %c0_352 = arith.constant 0 : index
    %c0_353 = arith.constant 0 : index
    %591 = vector.load %arg16[%c0_352, %c0_353] : memref<8x128xf32, #tpu.memory_space<vmem>>, vector<8x128xf32>
    tpu.vector_store %arg16[%c0_352, %c0_353], %587 {strides = array<i32>} : memref<8x128xf32, #tpu.memory_space<vmem>>, vector<8x128xf32>,
    %c0_354 = arith.constant 0 : index
    %c0_355 = arith.constant 0 : index
    %592 = vector.load %arg9[%c0_354, %c0_355] : memref<128x128xf32, #tpu.memory_space<vmem>>, vector<128x128xf32>
    %cst_356 = arith.constant dense<0.000000e+00> : vector<8x128xf32>
    %593 = tpu.matmul %589, %592, %cst_356 {dimension_numbers = #tpu.dot_dimension_numbers<[1], [0], [0], [1], [0, 0, 1, 1], [], []>} : vector<8x128xf32>, vector<128x128xf32>, vector<8x128xf32> -> vector<8x128xf32>
    %c0_357 = arith.constant 0 : index
    %c0_358 = arith.constant 0 : index
    %594 = vector.load %arg10[%c0_357, %c0_358] : memref<8x128xf32, #tpu.memory_space<vmem>>, vector<8x128xf32>
    %595 = arith.addf %593, %594 : vector<8x128xf32>
    %596 = arith.index_cast %552 : i32 to index
    %c0_359 = arith.constant 0 : index
    %c0_360 = arith.constant 0 : index
    %597 = vector.load %arg13[%596, %c0_359, %c0_360] : memref<8x8x128xf32, #tpu.memory_space<vmem>>, vector<1x8x128xf32>
    %598 = vector.shape_cast %597 : vector<1x8x128xf32> to vector<8x128xf32>
    %599 = vector.shape_cast %595 : vector<8x128xf32> to vector<1x8x128xf32>
    tpu.vector_store %arg13[%596, %c0_359, %c0_360], %599 {strides = array<i32>} : memref<8x8x128xf32, #tpu.memory_space<vmem>>, vector<1x8x128xf32>,
    %600 = arith.index_cast %552 : i32 to index
    %601 = memref.load %arg0[%600] : memref<8xi32, #tpu.memory_space<smem>>
    %c0_i32_361 = arith.constant 0 : i32
    %602 = arith.cmpi eq, %601, %c0_i32_361 : i32
    %603 = arith.extui %602 : i1 to i32
    %c0_i32_362 = arith.constant 0 : i32
    %604 = arith.cmpi ne, %603, %c0_i32_362 : i32
    scf.if %604 {
      %c64_i32 = arith.constant 64 : i32
      %779 = vector.broadcast %c64_i32 : i32 to vector<8x128xi32>
      %780 = arith.cmpi slt, %322, %779 : vector<8x128xi32>
      %cst_480 = arith.constant -1.000000e+30 : f32
      %781 = vector.broadcast %cst_480 : f32 to vector<8x128xf32>
      %782 = arith.select %780, %595, %781 : vector<8x128xi1>, vector<8x128xf32>
      %cst_481 = arith.constant dense<0xFF800000> : vector<8xf32>
      %783 = vector.multi_reduction <maximumf>, %782, %cst_481 [1] : vector<8x128xf32> to vector<8xf32>
      %784 = vector.shape_cast %783 : vector<8xf32> to vector<8x1xf32>
      %785 = vector.broadcast %784 : vector<8x1xf32> to vector<8x128xf32>
      %786 = arith.cmpf oeq, %782, %785 : vector<8x128xf32>
      %c128_i32 = arith.constant 128 : i32
      %787 = vector.broadcast %c128_i32 : i32 to vector<8x128xi32>
      %788 = arith.select %786, %322, %787 : vector<8x128xi1>, vector<8x128xi32>
      %cst_482 = arith.constant dense<2147483647> : vector<8xi32>
      %789 = vector.multi_reduction <minsi>, %788, %cst_482 [1] : vector<8x128xi32> to vector<8xi32>
      %790 = vector.shape_cast %789 : vector<8xi32> to vector<8x1xi32>
      %791 = vector.broadcast %790 : vector<8x1xi32> to vector<8x128xi32>
      %792 = arith.cmpi eq, %322, %791 : vector<8x128xi32>
      %793 = arith.extui %792 : vector<8x128xi1> to vector<8x128xi32>
      %794 = arith.sitofp %793 : vector<8x128xi32> to vector<8x128xf32>
      %c0_483 = arith.constant 0 : index
      %c0_484 = arith.constant 0 : index
      %795 = vector.load %arg17[%c0_483, %c0_484] : memref<8x128xf32, #tpu.memory_space<vmem>>, vector<8x128xf32>
      tpu.vector_store %arg17[%c0_483, %c0_484], %794 {strides = array<i32>} : memref<8x128xf32, #tpu.memory_space<vmem>>, vector<8x128xf32>,
    } else {
    }
    %c0_i32_363 = arith.constant 0 : i32
    %605 = arith.cmpi ne, %601, %c0_i32_363 : i32
    %606 = arith.extui %605 : i1 to i32
    %c0_i32_364 = arith.constant 0 : i32
    %607 = arith.cmpi ne, %606, %c0_i32_364 : i32
    scf.if %607 {
      %779 = arith.index_cast %552 : i32 to index
      %c0_480 = arith.constant 0 : index
      %c0_481 = arith.constant 0 : index
      %780 = vector.load %arg11[%779, %c0_480, %c0_481] : memref<8x8x128xf32, #tpu.memory_space<vmem>>, vector<1x8x128xf32>
      %781 = vector.shape_cast %780 : vector<1x8x128xf32> to vector<8x128xf32>
      %c0_482 = arith.constant 0 : index
      %c0_483 = arith.constant 0 : index
      %782 = vector.load %arg17[%c0_482, %c0_483] : memref<8x128xf32, #tpu.memory_space<vmem>>, vector<8x128xf32>
      tpu.vector_store %arg17[%c0_482, %c0_483], %781 {strides = array<i32>} : memref<8x128xf32, #tpu.memory_space<vmem>>, vector<8x128xf32>,
    } else {
    }
    %c5_i32_365 = arith.constant 5 : i32
    %c1_i32_366 = arith.constant 1 : i32
    %608 = arith.muli %c5_i32_365, %c1_i32_366 : i32
    %c0_i32_367 = arith.constant 0 : i32
    %609 = arith.addi %c0_i32_367, %608 : i32
    %c0_368 = arith.constant 0 : index
    %c0_369 = arith.constant 0 : index
    %610 = vector.load %arg17[%c0_368, %c0_369] : memref<8x128xf32, #tpu.memory_space<vmem>>, vector<8x128xf32>
    %c0_370 = arith.constant 0 : index
    %c0_371 = arith.constant 0 : index
    %611 = vector.load %arg5[%c0_370, %c0_371] : memref<128x128xf32, #tpu.memory_space<vmem>>, vector<128x128xf32>
    %cst_372 = arith.constant dense<0.000000e+00> : vector<8x128xf32>
    %612 = tpu.matmul %610, %611, %cst_372 {dimension_numbers = #tpu.dot_dimension_numbers<[1], [0], [0], [1], [0, 0, 1, 1], [], []>} : vector<8x128xf32>, vector<128x128xf32>, vector<8x128xf32> -> vector<8x128xf32>
    %c0_373 = arith.constant 0 : index
    %c0_374 = arith.constant 0 : index
    %613 = vector.load %arg6[%c0_373, %c0_374] : memref<128x512xf32, #tpu.memory_space<vmem>>, vector<128x512xf32>
    %cst_375 = arith.constant dense<0.000000e+00> : vector<8x512xf32>
    %614 = tpu.matmul %612, %613, %cst_375 {dimension_numbers = #tpu.dot_dimension_numbers<[1], [0], [0], [1], [0, 0, 1, 1], [], []>} : vector<8x128xf32>, vector<128x512xf32>, vector<8x512xf32> -> vector<8x512xf32>
    %c0_376 = arith.constant 0 : index
    %c0_377 = arith.constant 0 : index
    %615 = vector.load %arg15[%c0_376, %c0_377] : memref<8x128xf32, #tpu.memory_space<vmem>>, vector<8x128xf32>
    %c0_378 = arith.constant 0 : index
    %c0_379 = arith.constant 0 : index
    %616 = vector.load %arg7[%c0_378, %c0_379] : memref<128x512xf32, #tpu.memory_space<vmem>>, vector<128x512xf32>
    %cst_380 = arith.constant dense<0.000000e+00> : vector<8x512xf32>
    %617 = tpu.matmul %615, %616, %cst_380 {dimension_numbers = #tpu.dot_dimension_numbers<[1], [0], [0], [1], [0, 0, 1, 1], [], []>} : vector<8x128xf32>, vector<128x512xf32>, vector<8x512xf32> -> vector<8x512xf32>
    %618 = arith.addf %614, %617 : vector<8x512xf32>
    %c0_381 = arith.constant 0 : index
    %c0_382 = arith.constant 0 : index
    %619 = vector.load %arg8[%c0_381, %c0_382] : memref<8x512xf32, #tpu.memory_space<vmem>>, vector<8x512xf32>
    %620 = arith.addf %618, %619 : vector<8x512xf32>
    %c0_383 = arith.constant 0 : index
    %c0_384 = arith.constant 0 : index
    %621 = vector.load %arg16[%c0_383, %c0_384] : memref<8x128xf32, #tpu.memory_space<vmem>>, vector<8x128xf32>
    %622 = vector.extract_strided_slice %620 {offsets = [0, 0], sizes = [8, 128], strides = [1, 1]} : vector<8x512xf32> to vector<8x128xf32>
    %623 = arith.negf %622 : vector<8x128xf32>
    %624 = math.exp %623 : vector<8x128xf32>
    %cst_385 = arith.constant 1.000000e+00 : f32
    %625 = vector.broadcast %cst_385 : f32 to vector<8x128xf32>
    %626 = arith.addf %625, %624 : vector<8x128xf32>
    %627 = arith.divf %625, %626 : vector<8x128xf32>
    %628 = vector.extract_strided_slice %620 {offsets = [0, 128], sizes = [8, 128], strides = [1, 1]} : vector<8x512xf32> to vector<8x128xf32>
    %629 = arith.negf %628 : vector<8x128xf32>
    %630 = math.exp %629 : vector<8x128xf32>
    %cst_386 = arith.constant 1.000000e+00 : f32
    %631 = vector.broadcast %cst_386 : f32 to vector<8x128xf32>
    %632 = arith.addf %631, %630 : vector<8x128xf32>
    %633 = arith.divf %631, %632 : vector<8x128xf32>
    %634 = vector.extract_strided_slice %620 {offsets = [0, 256], sizes = [8, 128], strides = [1, 1]} : vector<8x512xf32> to vector<8x128xf32>
    %635 = math.tanh %634 : vector<8x128xf32>
    %636 = vector.extract_strided_slice %620 {offsets = [0, 384], sizes = [8, 128], strides = [1, 1]} : vector<8x512xf32> to vector<8x128xf32>
    %637 = arith.negf %636 : vector<8x128xf32>
    %638 = math.exp %637 : vector<8x128xf32>
    %cst_387 = arith.constant 1.000000e+00 : f32
    %639 = vector.broadcast %cst_387 : f32 to vector<8x128xf32>
    %640 = arith.addf %639, %638 : vector<8x128xf32>
    %641 = arith.divf %639, %640 : vector<8x128xf32>
    %642 = arith.mulf %633, %621 : vector<8x128xf32>
    %643 = arith.mulf %627, %635 : vector<8x128xf32>
    %644 = arith.addf %642, %643 : vector<8x128xf32>
    %645 = math.tanh %644 : vector<8x128xf32>
    %646 = arith.mulf %641, %645 : vector<8x128xf32>
    %c0_388 = arith.constant 0 : index
    %c0_389 = arith.constant 0 : index
    %647 = vector.load %arg15[%c0_388, %c0_389] : memref<8x128xf32, #tpu.memory_space<vmem>>, vector<8x128xf32>
    tpu.vector_store %arg15[%c0_388, %c0_389], %646 {strides = array<i32>} : memref<8x128xf32, #tpu.memory_space<vmem>>, vector<8x128xf32>,
    %c0_390 = arith.constant 0 : index
    %c0_391 = arith.constant 0 : index
    %648 = vector.load %arg16[%c0_390, %c0_391] : memref<8x128xf32, #tpu.memory_space<vmem>>, vector<8x128xf32>
    tpu.vector_store %arg16[%c0_390, %c0_391], %644 {strides = array<i32>} : memref<8x128xf32, #tpu.memory_space<vmem>>, vector<8x128xf32>,
    %c0_392 = arith.constant 0 : index
    %c0_393 = arith.constant 0 : index
    %649 = vector.load %arg9[%c0_392, %c0_393] : memref<128x128xf32, #tpu.memory_space<vmem>>, vector<128x128xf32>
    %cst_394 = arith.constant dense<0.000000e+00> : vector<8x128xf32>
    %650 = tpu.matmul %646, %649, %cst_394 {dimension_numbers = #tpu.dot_dimension_numbers<[1], [0], [0], [1], [0, 0, 1, 1], [], []>} : vector<8x128xf32>, vector<128x128xf32>, vector<8x128xf32> -> vector<8x128xf32>
    %c0_395 = arith.constant 0 : index
    %c0_396 = arith.constant 0 : index
    %651 = vector.load %arg10[%c0_395, %c0_396] : memref<8x128xf32, #tpu.memory_space<vmem>>, vector<8x128xf32>
    %652 = arith.addf %650, %651 : vector<8x128xf32>
    %653 = arith.index_cast %609 : i32 to index
    %c0_397 = arith.constant 0 : index
    %c0_398 = arith.constant 0 : index
    %654 = vector.load %arg13[%653, %c0_397, %c0_398] : memref<8x8x128xf32, #tpu.memory_space<vmem>>, vector<1x8x128xf32>
    %655 = vector.shape_cast %654 : vector<1x8x128xf32> to vector<8x128xf32>
    %656 = vector.shape_cast %652 : vector<8x128xf32> to vector<1x8x128xf32>
    tpu.vector_store %arg13[%653, %c0_397, %c0_398], %656 {strides = array<i32>} : memref<8x8x128xf32, #tpu.memory_space<vmem>>, vector<1x8x128xf32>,
    %657 = arith.index_cast %609 : i32 to index
    %658 = memref.load %arg0[%657] : memref<8xi32, #tpu.memory_space<smem>>
    %c0_i32_399 = arith.constant 0 : i32
    %659 = arith.cmpi eq, %658, %c0_i32_399 : i32
    %660 = arith.extui %659 : i1 to i32
    %c0_i32_400 = arith.constant 0 : i32
    %661 = arith.cmpi ne, %660, %c0_i32_400 : i32
    scf.if %661 {
      %c64_i32 = arith.constant 64 : i32
      %779 = vector.broadcast %c64_i32 : i32 to vector<8x128xi32>
      %780 = arith.cmpi slt, %322, %779 : vector<8x128xi32>
      %cst_480 = arith.constant -1.000000e+30 : f32
      %781 = vector.broadcast %cst_480 : f32 to vector<8x128xf32>
      %782 = arith.select %780, %652, %781 : vector<8x128xi1>, vector<8x128xf32>
      %cst_481 = arith.constant dense<0xFF800000> : vector<8xf32>
      %783 = vector.multi_reduction <maximumf>, %782, %cst_481 [1] : vector<8x128xf32> to vector<8xf32>
      %784 = vector.shape_cast %783 : vector<8xf32> to vector<8x1xf32>
      %785 = vector.broadcast %784 : vector<8x1xf32> to vector<8x128xf32>
      %786 = arith.cmpf oeq, %782, %785 : vector<8x128xf32>
      %c128_i32 = arith.constant 128 : i32
      %787 = vector.broadcast %c128_i32 : i32 to vector<8x128xi32>
      %788 = arith.select %786, %322, %787 : vector<8x128xi1>, vector<8x128xi32>
      %cst_482 = arith.constant dense<2147483647> : vector<8xi32>
      %789 = vector.multi_reduction <minsi>, %788, %cst_482 [1] : vector<8x128xi32> to vector<8xi32>
      %790 = vector.shape_cast %789 : vector<8xi32> to vector<8x1xi32>
      %791 = vector.broadcast %790 : vector<8x1xi32> to vector<8x128xi32>
      %792 = arith.cmpi eq, %322, %791 : vector<8x128xi32>
      %793 = arith.extui %792 : vector<8x128xi1> to vector<8x128xi32>
      %794 = arith.sitofp %793 : vector<8x128xi32> to vector<8x128xf32>
      %c0_483 = arith.constant 0 : index
      %c0_484 = arith.constant 0 : index
      %795 = vector.load %arg17[%c0_483, %c0_484] : memref<8x128xf32, #tpu.memory_space<vmem>>, vector<8x128xf32>
      tpu.vector_store %arg17[%c0_483, %c0_484], %794 {strides = array<i32>} : memref<8x128xf32, #tpu.memory_space<vmem>>, vector<8x128xf32>,
    } else {
    }
    %c0_i32_401 = arith.constant 0 : i32
    %662 = arith.cmpi ne, %658, %c0_i32_401 : i32
    %663 = arith.extui %662 : i1 to i32
    %c0_i32_402 = arith.constant 0 : i32
    %664 = arith.cmpi ne, %663, %c0_i32_402 : i32
    scf.if %664 {
      %779 = arith.index_cast %609 : i32 to index
      %c0_480 = arith.constant 0 : index
      %c0_481 = arith.constant 0 : index
      %780 = vector.load %arg11[%779, %c0_480, %c0_481] : memref<8x8x128xf32, #tpu.memory_space<vmem>>, vector<1x8x128xf32>
      %781 = vector.shape_cast %780 : vector<1x8x128xf32> to vector<8x128xf32>
      %c0_482 = arith.constant 0 : index
      %c0_483 = arith.constant 0 : index
      %782 = vector.load %arg17[%c0_482, %c0_483] : memref<8x128xf32, #tpu.memory_space<vmem>>, vector<8x128xf32>
      tpu.vector_store %arg17[%c0_482, %c0_483], %781 {strides = array<i32>} : memref<8x128xf32, #tpu.memory_space<vmem>>, vector<8x128xf32>,
    } else {
    }
    %c6_i32_403 = arith.constant 6 : i32
    %c1_i32_404 = arith.constant 1 : i32
    %665 = arith.muli %c6_i32_403, %c1_i32_404 : i32
    %c0_i32_405 = arith.constant 0 : i32
    %666 = arith.addi %c0_i32_405, %665 : i32
    %c0_406 = arith.constant 0 : index
    %c0_407 = arith.constant 0 : index
    %667 = vector.load %arg17[%c0_406, %c0_407] : memref<8x128xf32, #tpu.memory_space<vmem>>, vector<8x128xf32>
    %c0_408 = arith.constant 0 : index
    %c0_409 = arith.constant 0 : index
    %668 = vector.load %arg5[%c0_408, %c0_409] : memref<128x128xf32, #tpu.memory_space<vmem>>, vector<128x128xf32>
    %cst_410 = arith.constant dense<0.000000e+00> : vector<8x128xf32>
    %669 = tpu.matmul %667, %668, %cst_410 {dimension_numbers = #tpu.dot_dimension_numbers<[1], [0], [0], [1], [0, 0, 1, 1], [], []>} : vector<8x128xf32>, vector<128x128xf32>, vector<8x128xf32> -> vector<8x128xf32>
    %c0_411 = arith.constant 0 : index
    %c0_412 = arith.constant 0 : index
    %670 = vector.load %arg6[%c0_411, %c0_412] : memref<128x512xf32, #tpu.memory_space<vmem>>, vector<128x512xf32>
    %cst_413 = arith.constant dense<0.000000e+00> : vector<8x512xf32>
    %671 = tpu.matmul %669, %670, %cst_413 {dimension_numbers = #tpu.dot_dimension_numbers<[1], [0], [0], [1], [0, 0, 1, 1], [], []>} : vector<8x128xf32>, vector<128x512xf32>, vector<8x512xf32> -> vector<8x512xf32>
    %c0_414 = arith.constant 0 : index
    %c0_415 = arith.constant 0 : index
    %672 = vector.load %arg15[%c0_414, %c0_415] : memref<8x128xf32, #tpu.memory_space<vmem>>, vector<8x128xf32>
    %c0_416 = arith.constant 0 : index
    %c0_417 = arith.constant 0 : index
    %673 = vector.load %arg7[%c0_416, %c0_417] : memref<128x512xf32, #tpu.memory_space<vmem>>, vector<128x512xf32>
    %cst_418 = arith.constant dense<0.000000e+00> : vector<8x512xf32>
    %674 = tpu.matmul %672, %673, %cst_418 {dimension_numbers = #tpu.dot_dimension_numbers<[1], [0], [0], [1], [0, 0, 1, 1], [], []>} : vector<8x128xf32>, vector<128x512xf32>, vector<8x512xf32> -> vector<8x512xf32>
    %675 = arith.addf %671, %674 : vector<8x512xf32>
    %c0_419 = arith.constant 0 : index
    %c0_420 = arith.constant 0 : index
    %676 = vector.load %arg8[%c0_419, %c0_420] : memref<8x512xf32, #tpu.memory_space<vmem>>, vector<8x512xf32>
    %677 = arith.addf %675, %676 : vector<8x512xf32>
    %c0_421 = arith.constant 0 : index
    %c0_422 = arith.constant 0 : index
    %678 = vector.load %arg16[%c0_421, %c0_422] : memref<8x128xf32, #tpu.memory_space<vmem>>, vector<8x128xf32>
    %679 = vector.extract_strided_slice %677 {offsets = [0, 0], sizes = [8, 128], strides = [1, 1]} : vector<8x512xf32> to vector<8x128xf32>
    %680 = arith.negf %679 : vector<8x128xf32>
    %681 = math.exp %680 : vector<8x128xf32>
    %cst_423 = arith.constant 1.000000e+00 : f32
    %682 = vector.broadcast %cst_423 : f32 to vector<8x128xf32>
    %683 = arith.addf %682, %681 : vector<8x128xf32>
    %684 = arith.divf %682, %683 : vector<8x128xf32>
    %685 = vector.extract_strided_slice %677 {offsets = [0, 128], sizes = [8, 128], strides = [1, 1]} : vector<8x512xf32> to vector<8x128xf32>
    %686 = arith.negf %685 : vector<8x128xf32>
    %687 = math.exp %686 : vector<8x128xf32>
    %cst_424 = arith.constant 1.000000e+00 : f32
    %688 = vector.broadcast %cst_424 : f32 to vector<8x128xf32>
    %689 = arith.addf %688, %687 : vector<8x128xf32>
    %690 = arith.divf %688, %689 : vector<8x128xf32>
    %691 = vector.extract_strided_slice %677 {offsets = [0, 256], sizes = [8, 128], strides = [1, 1]} : vector<8x512xf32> to vector<8x128xf32>
    %692 = math.tanh %691 : vector<8x128xf32>
    %693 = vector.extract_strided_slice %677 {offsets = [0, 384], sizes = [8, 128], strides = [1, 1]} : vector<8x512xf32> to vector<8x128xf32>
    %694 = arith.negf %693 : vector<8x128xf32>
    %695 = math.exp %694 : vector<8x128xf32>
    %cst_425 = arith.constant 1.000000e+00 : f32
    %696 = vector.broadcast %cst_425 : f32 to vector<8x128xf32>
    %697 = arith.addf %696, %695 : vector<8x128xf32>
    %698 = arith.divf %696, %697 : vector<8x128xf32>
    %699 = arith.mulf %690, %678 : vector<8x128xf32>
    %700 = arith.mulf %684, %692 : vector<8x128xf32>
    %701 = arith.addf %699, %700 : vector<8x128xf32>
    %702 = math.tanh %701 : vector<8x128xf32>
    %703 = arith.mulf %698, %702 : vector<8x128xf32>
    %c0_426 = arith.constant 0 : index
    %c0_427 = arith.constant 0 : index
    %704 = vector.load %arg15[%c0_426, %c0_427] : memref<8x128xf32, #tpu.memory_space<vmem>>, vector<8x128xf32>
    tpu.vector_store %arg15[%c0_426, %c0_427], %703 {strides = array<i32>} : memref<8x128xf32, #tpu.memory_space<vmem>>, vector<8x128xf32>,
    %c0_428 = arith.constant 0 : index
    %c0_429 = arith.constant 0 : index
    %705 = vector.load %arg16[%c0_428, %c0_429] : memref<8x128xf32, #tpu.memory_space<vmem>>, vector<8x128xf32>
    tpu.vector_store %arg16[%c0_428, %c0_429], %701 {strides = array<i32>} : memref<8x128xf32, #tpu.memory_space<vmem>>, vector<8x128xf32>,
    %c0_430 = arith.constant 0 : index
    %c0_431 = arith.constant 0 : index
    %706 = vector.load %arg9[%c0_430, %c0_431] : memref<128x128xf32, #tpu.memory_space<vmem>>, vector<128x128xf32>
    %cst_432 = arith.constant dense<0.000000e+00> : vector<8x128xf32>
    %707 = tpu.matmul %703, %706, %cst_432 {dimension_numbers = #tpu.dot_dimension_numbers<[1], [0], [0], [1], [0, 0, 1, 1], [], []>} : vector<8x128xf32>, vector<128x128xf32>, vector<8x128xf32> -> vector<8x128xf32>
    %c0_433 = arith.constant 0 : index
    %c0_434 = arith.constant 0 : index
    %708 = vector.load %arg10[%c0_433, %c0_434] : memref<8x128xf32, #tpu.memory_space<vmem>>, vector<8x128xf32>
    %709 = arith.addf %707, %708 : vector<8x128xf32>
    %710 = arith.index_cast %666 : i32 to index
    %c0_435 = arith.constant 0 : index
    %c0_436 = arith.constant 0 : index
    %711 = vector.load %arg13[%710, %c0_435, %c0_436] : memref<8x8x128xf32, #tpu.memory_space<vmem>>, vector<1x8x128xf32>
    %712 = vector.shape_cast %711 : vector<1x8x128xf32> to vector<8x128xf32>
    %713 = vector.shape_cast %709 : vector<8x128xf32> to vector<1x8x128xf32>
    tpu.vector_store %arg13[%710, %c0_435, %c0_436], %713 {strides = array<i32>} : memref<8x8x128xf32, #tpu.memory_space<vmem>>, vector<1x8x128xf32>,
    %714 = arith.index_cast %666 : i32 to index
    %715 = memref.load %arg0[%714] : memref<8xi32, #tpu.memory_space<smem>>
    %c0_i32_437 = arith.constant 0 : i32
    %716 = arith.cmpi eq, %715, %c0_i32_437 : i32
    %717 = arith.extui %716 : i1 to i32
    %c0_i32_438 = arith.constant 0 : i32
    %718 = arith.cmpi ne, %717, %c0_i32_438 : i32
    scf.if %718 {
      %c64_i32 = arith.constant 64 : i32
      %779 = vector.broadcast %c64_i32 : i32 to vector<8x128xi32>
      %780 = arith.cmpi slt, %322, %779 : vector<8x128xi32>
      %cst_480 = arith.constant -1.000000e+30 : f32
      %781 = vector.broadcast %cst_480 : f32 to vector<8x128xf32>
      %782 = arith.select %780, %709, %781 : vector<8x128xi1>, vector<8x128xf32>
      %cst_481 = arith.constant dense<0xFF800000> : vector<8xf32>
      %783 = vector.multi_reduction <maximumf>, %782, %cst_481 [1] : vector<8x128xf32> to vector<8xf32>
      %784 = vector.shape_cast %783 : vector<8xf32> to vector<8x1xf32>
      %785 = vector.broadcast %784 : vector<8x1xf32> to vector<8x128xf32>
      %786 = arith.cmpf oeq, %782, %785 : vector<8x128xf32>
      %c128_i32 = arith.constant 128 : i32
      %787 = vector.broadcast %c128_i32 : i32 to vector<8x128xi32>
      %788 = arith.select %786, %322, %787 : vector<8x128xi1>, vector<8x128xi32>
      %cst_482 = arith.constant dense<2147483647> : vector<8xi32>
      %789 = vector.multi_reduction <minsi>, %788, %cst_482 [1] : vector<8x128xi32> to vector<8xi32>
      %790 = vector.shape_cast %789 : vector<8xi32> to vector<8x1xi32>
      %791 = vector.broadcast %790 : vector<8x1xi32> to vector<8x128xi32>
      %792 = arith.cmpi eq, %322, %791 : vector<8x128xi32>
      %793 = arith.extui %792 : vector<8x128xi1> to vector<8x128xi32>
      %794 = arith.sitofp %793 : vector<8x128xi32> to vector<8x128xf32>
      %c0_483 = arith.constant 0 : index
      %c0_484 = arith.constant 0 : index
      %795 = vector.load %arg17[%c0_483, %c0_484] : memref<8x128xf32, #tpu.memory_space<vmem>>, vector<8x128xf32>
      tpu.vector_store %arg17[%c0_483, %c0_484], %794 {strides = array<i32>} : memref<8x128xf32, #tpu.memory_space<vmem>>, vector<8x128xf32>,
    } else {
    }
    %c0_i32_439 = arith.constant 0 : i32
    %719 = arith.cmpi ne, %715, %c0_i32_439 : i32
    %720 = arith.extui %719 : i1 to i32
    %c0_i32_440 = arith.constant 0 : i32
    %721 = arith.cmpi ne, %720, %c0_i32_440 : i32
    scf.if %721 {
      %779 = arith.index_cast %666 : i32 to index
      %c0_480 = arith.constant 0 : index
      %c0_481 = arith.constant 0 : index
      %780 = vector.load %arg11[%779, %c0_480, %c0_481] : memref<8x8x128xf32, #tpu.memory_space<vmem>>, vector<1x8x128xf32>
      %781 = vector.shape_cast %780 : vector<1x8x128xf32> to vector<8x128xf32>
      %c0_482 = arith.constant 0 : index
      %c0_483 = arith.constant 0 : index
      %782 = vector.load %arg17[%c0_482, %c0_483] : memref<8x128xf32, #tpu.memory_space<vmem>>, vector<8x128xf32>
      tpu.vector_store %arg17[%c0_482, %c0_483], %781 {strides = array<i32>} : memref<8x128xf32, #tpu.memory_space<vmem>>, vector<8x128xf32>,
    } else {
    }
    %c7_i32_441 = arith.constant 7 : i32
    %c1_i32_442 = arith.constant 1 : i32
    %722 = arith.muli %c7_i32_441, %c1_i32_442 : i32
    %c0_i32_443 = arith.constant 0 : i32
    %723 = arith.addi %c0_i32_443, %722 : i32
    %c0_444 = arith.constant 0 : index
    %c0_445 = arith.constant 0 : index
    %724 = vector.load %arg17[%c0_444, %c0_445] : memref<8x128xf32, #tpu.memory_space<vmem>>, vector<8x128xf32>
    %c0_446 = arith.constant 0 : index
    %c0_447 = arith.constant 0 : index
    %725 = vector.load %arg5[%c0_446, %c0_447] : memref<128x128xf32, #tpu.memory_space<vmem>>, vector<128x128xf32>
    %cst_448 = arith.constant dense<0.000000e+00> : vector<8x128xf32>
    %726 = tpu.matmul %724, %725, %cst_448 {dimension_numbers = #tpu.dot_dimension_numbers<[1], [0], [0], [1], [0, 0, 1, 1], [], []>} : vector<8x128xf32>, vector<128x128xf32>, vector<8x128xf32> -> vector<8x128xf32>
    %c0_449 = arith.constant 0 : index
    %c0_450 = arith.constant 0 : index
    %727 = vector.load %arg6[%c0_449, %c0_450] : memref<128x512xf32, #tpu.memory_space<vmem>>, vector<128x512xf32>
    %cst_451 = arith.constant dense<0.000000e+00> : vector<8x512xf32>
    %728 = tpu.matmul %726, %727, %cst_451 {dimension_numbers = #tpu.dot_dimension_numbers<[1], [0], [0], [1], [0, 0, 1, 1], [], []>} : vector<8x128xf32>, vector<128x512xf32>, vector<8x512xf32> -> vector<8x512xf32>
    %c0_452 = arith.constant 0 : index
    %c0_453 = arith.constant 0 : index
    %729 = vector.load %arg15[%c0_452, %c0_453] : memref<8x128xf32, #tpu.memory_space<vmem>>, vector<8x128xf32>
    %c0_454 = arith.constant 0 : index
    %c0_455 = arith.constant 0 : index
    %730 = vector.load %arg7[%c0_454, %c0_455] : memref<128x512xf32, #tpu.memory_space<vmem>>, vector<128x512xf32>
    %cst_456 = arith.constant dense<0.000000e+00> : vector<8x512xf32>
    %731 = tpu.matmul %729, %730, %cst_456 {dimension_numbers = #tpu.dot_dimension_numbers<[1], [0], [0], [1], [0, 0, 1, 1], [], []>} : vector<8x128xf32>, vector<128x512xf32>, vector<8x512xf32> -> vector<8x512xf32>
    %732 = arith.addf %728, %731 : vector<8x512xf32>
    %c0_457 = arith.constant 0 : index
    %c0_458 = arith.constant 0 : index
    %733 = vector.load %arg8[%c0_457, %c0_458] : memref<8x512xf32, #tpu.memory_space<vmem>>, vector<8x512xf32>
    %734 = arith.addf %732, %733 : vector<8x512xf32>
    %c0_459 = arith.constant 0 : index
    %c0_460 = arith.constant 0 : index
    %735 = vector.load %arg16[%c0_459, %c0_460] : memref<8x128xf32, #tpu.memory_space<vmem>>, vector<8x128xf32>
    %736 = vector.extract_strided_slice %734 {offsets = [0, 0], sizes = [8, 128], strides = [1, 1]} : vector<8x512xf32> to vector<8x128xf32>
    %737 = arith.negf %736 : vector<8x128xf32>
    %738 = math.exp %737 : vector<8x128xf32>
    %cst_461 = arith.constant 1.000000e+00 : f32
    %739 = vector.broadcast %cst_461 : f32 to vector<8x128xf32>
    %740 = arith.addf %739, %738 : vector<8x128xf32>
    %741 = arith.divf %739, %740 : vector<8x128xf32>
    %742 = vector.extract_strided_slice %734 {offsets = [0, 128], sizes = [8, 128], strides = [1, 1]} : vector<8x512xf32> to vector<8x128xf32>
    %743 = arith.negf %742 : vector<8x128xf32>
    %744 = math.exp %743 : vector<8x128xf32>
    %cst_462 = arith.constant 1.000000e+00 : f32
    %745 = vector.broadcast %cst_462 : f32 to vector<8x128xf32>
    %746 = arith.addf %745, %744 : vector<8x128xf32>
    %747 = arith.divf %745, %746 : vector<8x128xf32>
    %748 = vector.extract_strided_slice %734 {offsets = [0, 256], sizes = [8, 128], strides = [1, 1]} : vector<8x512xf32> to vector<8x128xf32>
    %749 = math.tanh %748 : vector<8x128xf32>
    %750 = vector.extract_strided_slice %734 {offsets = [0, 384], sizes = [8, 128], strides = [1, 1]} : vector<8x512xf32> to vector<8x128xf32>
    %751 = arith.negf %750 : vector<8x128xf32>
    %752 = math.exp %751 : vector<8x128xf32>
    %cst_463 = arith.constant 1.000000e+00 : f32
    %753 = vector.broadcast %cst_463 : f32 to vector<8x128xf32>
    %754 = arith.addf %753, %752 : vector<8x128xf32>
    %755 = arith.divf %753, %754 : vector<8x128xf32>
    %756 = arith.mulf %747, %735 : vector<8x128xf32>
    %757 = arith.mulf %741, %749 : vector<8x128xf32>
    %758 = arith.addf %756, %757 : vector<8x128xf32>
    %759 = math.tanh %758 : vector<8x128xf32>
    %760 = arith.mulf %755, %759 : vector<8x128xf32>
    %c0_464 = arith.constant 0 : index
    %c0_465 = arith.constant 0 : index
    %761 = vector.load %arg15[%c0_464, %c0_465] : memref<8x128xf32, #tpu.memory_space<vmem>>, vector<8x128xf32>
    tpu.vector_store %arg15[%c0_464, %c0_465], %760 {strides = array<i32>} : memref<8x128xf32, #tpu.memory_space<vmem>>, vector<8x128xf32>,
    %c0_466 = arith.constant 0 : index
    %c0_467 = arith.constant 0 : index
    %762 = vector.load %arg16[%c0_466, %c0_467] : memref<8x128xf32, #tpu.memory_space<vmem>>, vector<8x128xf32>
    tpu.vector_store %arg16[%c0_466, %c0_467], %758 {strides = array<i32>} : memref<8x128xf32, #tpu.memory_space<vmem>>, vector<8x128xf32>,
    %c0_468 = arith.constant 0 : index
    %c0_469 = arith.constant 0 : index
    %763 = vector.load %arg9[%c0_468, %c0_469] : memref<128x128xf32, #tpu.memory_space<vmem>>, vector<128x128xf32>
    %cst_470 = arith.constant dense<0.000000e+00> : vector<8x128xf32>
    %764 = tpu.matmul %760, %763, %cst_470 {dimension_numbers = #tpu.dot_dimension_numbers<[1], [0], [0], [1], [0, 0, 1, 1], [], []>} : vector<8x128xf32>, vector<128x128xf32>, vector<8x128xf32> -> vector<8x128xf32>
    %c0_471 = arith.constant 0 : index
    %c0_472 = arith.constant 0 : index
    %765 = vector.load %arg10[%c0_471, %c0_472] : memref<8x128xf32, #tpu.memory_space<vmem>>, vector<8x128xf32>
    %766 = arith.addf %764, %765 : vector<8x128xf32>
    %767 = arith.index_cast %723 : i32 to index
    %c0_473 = arith.constant 0 : index
    %c0_474 = arith.constant 0 : index
    %768 = vector.load %arg13[%767, %c0_473, %c0_474] : memref<8x8x128xf32, #tpu.memory_space<vmem>>, vector<1x8x128xf32>
    %769 = vector.shape_cast %768 : vector<1x8x128xf32> to vector<8x128xf32>
    %770 = vector.shape_cast %766 : vector<8x128xf32> to vector<1x8x128xf32>
    tpu.vector_store %arg13[%767, %c0_473, %c0_474], %770 {strides = array<i32>} : memref<8x8x128xf32, #tpu.memory_space<vmem>>, vector<1x8x128xf32>,
    %771 = arith.index_cast %723 : i32 to index
    %772 = memref.load %arg0[%771] : memref<8xi32, #tpu.memory_space<smem>>
    %c0_i32_475 = arith.constant 0 : i32
    %773 = arith.cmpi eq, %772, %c0_i32_475 : i32
    %774 = arith.extui %773 : i1 to i32
    %c0_i32_476 = arith.constant 0 : i32
    %775 = arith.cmpi ne, %774, %c0_i32_476 : i32
    scf.if %775 {
      %c64_i32 = arith.constant 64 : i32
      %779 = vector.broadcast %c64_i32 : i32 to vector<8x128xi32>
      %780 = arith.cmpi slt, %322, %779 : vector<8x128xi32>
      %cst_480 = arith.constant -1.000000e+30 : f32
      %781 = vector.broadcast %cst_480 : f32 to vector<8x128xf32>
      %782 = arith.select %780, %766, %781 : vector<8x128xi1>, vector<8x128xf32>
      %cst_481 = arith.constant dense<0xFF800000> : vector<8xf32>
      %783 = vector.multi_reduction <maximumf>, %782, %cst_481 [1] : vector<8x128xf32> to vector<8xf32>
      %784 = vector.shape_cast %783 : vector<8xf32> to vector<8x1xf32>
      %785 = vector.broadcast %784 : vector<8x1xf32> to vector<8x128xf32>
      %786 = arith.cmpf oeq, %782, %785 : vector<8x128xf32>
      %c128_i32 = arith.constant 128 : i32
      %787 = vector.broadcast %c128_i32 : i32 to vector<8x128xi32>
      %788 = arith.select %786, %322, %787 : vector<8x128xi1>, vector<8x128xi32>
      %cst_482 = arith.constant dense<2147483647> : vector<8xi32>
      %789 = vector.multi_reduction <minsi>, %788, %cst_482 [1] : vector<8x128xi32> to vector<8xi32>
      %790 = vector.shape_cast %789 : vector<8xi32> to vector<8x1xi32>
      %791 = vector.broadcast %790 : vector<8x1xi32> to vector<8x128xi32>
      %792 = arith.cmpi eq, %322, %791 : vector<8x128xi32>
      %793 = arith.extui %792 : vector<8x128xi1> to vector<8x128xi32>
      %794 = arith.sitofp %793 : vector<8x128xi32> to vector<8x128xf32>
      %c0_483 = arith.constant 0 : index
      %c0_484 = arith.constant 0 : index
      %795 = vector.load %arg17[%c0_483, %c0_484] : memref<8x128xf32, #tpu.memory_space<vmem>>, vector<8x128xf32>
      tpu.vector_store %arg17[%c0_483, %c0_484], %794 {strides = array<i32>} : memref<8x128xf32, #tpu.memory_space<vmem>>, vector<8x128xf32>,
    } else {
    }
    %c0_i32_477 = arith.constant 0 : i32
    %776 = arith.cmpi ne, %772, %c0_i32_477 : i32
    %777 = arith.extui %776 : i1 to i32
    %c0_i32_478 = arith.constant 0 : i32
    %778 = arith.cmpi ne, %777, %c0_i32_478 : i32
    scf.if %778 {
      %779 = arith.index_cast %723 : i32 to index
      %c0_480 = arith.constant 0 : index
      %c0_481 = arith.constant 0 : index
      %780 = vector.load %arg11[%779, %c0_480, %c0_481] : memref<8x8x128xf32, #tpu.memory_space<vmem>>, vector<1x8x128xf32>
      %781 = vector.shape_cast %780 : vector<1x8x128xf32> to vector<8x128xf32>
      %c0_482 = arith.constant 0 : index
      %c0_483 = arith.constant 0 : index
      %782 = vector.load %arg17[%c0_482, %c0_483] : memref<8x128xf32, #tpu.memory_space<vmem>>, vector<8x128xf32>
      tpu.vector_store %arg17[%c0_482, %c0_483], %781 {strides = array<i32>} : memref<8x128xf32, #tpu.memory_space<vmem>>, vector<8x128xf32>,
    } else {
    }
    %c8_i32_479 = arith.constant 8 : i32
    return
  }
}

</mosaic_0001>

<llo_original>
// kernel: chat_model_forward.1
$region0: #{chat_model_forward.1}
  #allocation0 [shape = 'u32[]', space=smem, size = 0x4, offset = 0x4, fixed_abs, tag = 'smem constant byte address 0x4 - core index']
  #allocation1 [shape = 'u32[144,128]{1,0:T(1,128)}', space=vmem, size = 0x12000, scoped, tag = 'internal scratch']
  #allocation2 [shape = 'f32[64,512]{1,0:T(8,128)}', space=vmem, size = 0x20000, scoped, tag = 'scratch operand']
  #allocation3 [shape = 'f32[8,128]{1,0:T(8,128)}', space=vmem, size = 0x1000, scoped, tag = 'scratch operand']
  #allocation4 [shape = 'f32[8,128]{1,0:T(8,128)}', space=vmem, size = 0x1000, scoped, tag = 'scratch operand']
  #allocation5 [shape = 'f32[8,128]{1,0:T(8,128)}', space=vmem, size = 0x1000, scoped, tag = 'scratch operand']
  %s0 = inlined_call_operand.vmem [shape: s32[8], index: 0, kind: input, shape index: {}]
  %s1 = inlined_call_operand.vmem [shape: f32[64,128], index: 1, kind: input, shape index: {}]
  %s2 = inlined_call_operand.hbm [shape: f32[128,512], index: 2, kind: input, shape index: {}]
  %s3 = inlined_call_operand.hbm [shape: f32[128,512], index: 3, kind: input, shape index: {}]
  %s4 = inlined_call_operand.vmem [shape: f32[8,512], index: 4, kind: input, shape index: {}]
  %s5 = inlined_call_operand.vmem [shape: f32[128,128], index: 5, kind: input, shape index: {}]
  %s6 = inlined_call_operand.hbm [shape: f32[128,512], index: 6, kind: input, shape index: {}]
  %s7 = inlined_call_operand.hbm [shape: f32[128,512], index: 7, kind: input, shape index: {}]
  %s8 = inlined_call_operand.vmem [shape: f32[8,512], index: 8, kind: input, shape index: {}]
  %s9 = inlined_call_operand.vmem [shape: f32[128,128], index: 9, kind: input, shape index: {}]
  %s10 = inlined_call_operand.vmem [shape: f32[8,128], index: 10, kind: input, shape index: {}]
  %s11 = inlined_call_operand.vmem [shape: f32[8,8,128], index: 11, kind: input, shape index: {}]
  %s12 = inlined_call_operand.vmem [shape: f32[8,128], index: 12, kind: input, shape index: {}]
  %s13 = inlined_call_operand.vmem [shape: f32[8,8,128], index: 13, kind: output, shape index: {}]
  %s14 = sld [smem:[#allocation0]]
  $region146: #{chat_model_forward.1} parent=0
    _
  %s16 = ssub.s32 1, %s14
  %s17 = scalar_select 0, %s16, %s14
  $region1: #{chat_model_forward.1} parent=0
    #allocation6 [shape = 'u8[512]{0}', space=smem, size = 0x200, scoped, tag = 'input window, operand 0, single buffered']
    #allocation7 [shape = 's32[1]{0}', space=sflag, size = 0x4, scoped, tag = 'scoped memory for chat_model_forward.1']
    #allocation8 [shape = 's32[1]{0}', space=sflag, size = 0x4, scoped, tag = 'scoped memory for chat_model_forward.1']
    #allocation9 [shape = 'u8[262144]{0}', space=vmem, size = 0x40000, scoped, tag = 'input window, operand 2, single buffered']
    #allocation10 [shape = 'u8[262144]{0}', space=vmem, size = 0x40000, scoped, tag = 'input window, operand 3, single buffered']
    #allocation11 [shape = 's32[1]{0}', space=sflag, size = 0x4, scoped, tag = 'scoped memory for chat_model_forward.1']
    #allocation12 [shape = 'u8[262144]{0}', space=vmem, size = 0x40000, scoped, tag = 'input window, operand 6, single buffered']
    #allocation13 [shape = 'u8[262144]{0}', space=vmem, size = 0x40000, scoped, tag = 'input window, operand 7, single buffered']
    #allocation14 [shape = 's32[1]{0}', space=sflag, size = 0x4, scoped, tag = 'scoped memory for chat_model_forward.1']
    %18 = vsyncpa [#allocation8], 0
    %19 = vsyncpa [#allocation7], 0
    %20 = vsyncpa [#allocation11], 0
    %21 = vsyncpa [#allocation14], 0
    // Predicated region
    $region2: #{chat_model_forward.1} parent=1 // pred_check
      _
    $region3: #{chat_model_forward.1} parent=1 // pred_check_branch
      %23 = sbr.rel (0) target = $region5
    $region4: #{chat_model_forward.1} parent=1 // pred_region
      %s25 = ssub.s32 16, 16
      %26 = vsyncadd [#allocation8], %s25
      %s28 = sshll.u32 %s0, 4
      %s29 = int_to_ptr.vmem [resolvable:$true] %s28
      %31 = dma.vmem_to_smem %s29, 16, [#allocation6], [#allocation8]
    $region5: #{chat_model_forward.1} parent=1 // pred_fallthru
      _
    // Predicated region
    $region6: #{chat_model_forward.1} parent=1 // pred_check
      _
    $region7: #{chat_model_forward.1} parent=1 // pred_check_branch
      %33 = sbr.rel (0) target = $region9
    $region8: #{chat_model_forward.1} parent=1 // pred_region
      _
    $region9: #{chat_model_forward.1} parent=1 // pred_fallthru
      _
    // Predicated region
    $region10: #{chat_model_forward.1} parent=1 // pred_check
      _
    $region11: #{chat_model_forward.1} parent=1 // pred_check_branch
      %35 = sbr.rel (0) target = $region13
    $region12: #{chat_model_forward.1} parent=1 // pred_region
      %s37 = ssub.s32 8192, 8192
      %38 = vsyncadd [#allocation7], %s37
      %s39 = sshll.u32 [#allocation9], 4
      %s40 = int_to_ptr.vmem [resolvable:$true] %s39
      %45 = dma.hbm_to_vmem [thread:$0]  %s2, 8192, %s40, [#allocation7], 512, 512, 32
    $region13: #{chat_model_forward.1} parent=1 // pred_fallthru
      _
    // Predicated region
    $region14: #{chat_model_forward.1} parent=1 // pred_check
      _
    $region15: #{chat_model_forward.1} parent=1 // pred_check_branch
      %47 = sbr.rel (0) target = $region17
    $region16: #{chat_model_forward.1} parent=1 // pred_region
      %s49 = ssub.s32 8192, 8192
      %50 = vsyncadd [#allocation11], %s49
      %s51 = sshll.u32 [#allocation10], 4
      %s52 = int_to_ptr.vmem [resolvable:$true] %s51
      %57 = dma.hbm_to_vmem [thread:$0]  %s3, 8192, %s52, [#allocation11], 512, 512, 32
    $region17: #{chat_model_forward.1} parent=1 // pred_fallthru
      _
    // Predicated region
    $region18: #{chat_model_forward.1} parent=1 // pred_check
      _
    $region19: #{chat_model_forward.1} parent=1 // pred_check_branch
      %59 = sbr.rel (0) target = $region21
    $region20: #{chat_model_forward.1} parent=1 // pred_region
      _
    $region21: #{chat_model_forward.1} parent=1 // pred_fallthru
      _
    // Predicated region
    $region22: #{chat_model_forward.1} parent=1 // pred_check
      _
    $region23: #{chat_model_forward.1} parent=1 // pred_check_branch
      %61 = sbr.rel (0) target = $region25
    $region24: #{chat_model_forward.1} parent=1 // pred_region
      _
    $region25: #{chat_model_forward.1} parent=1 // pred_fallthru
      _
    // Predicated region
    $region26: #{chat_model_forward.1} parent=1 // pred_check
      _
    $region27: #{chat_model_forward.1} parent=1 // pred_check_branch
      %63 = sbr.rel (0) target = $region29
    $region28: #{chat_model_forward.1} parent=1 // pred_region
      %s65 = ssub.s32 8192, 8192
      %66 = vsyncadd [#allocation11], %s65
      %s67 = sshll.u32 [#allocation12], 4
      %s68 = int_to_ptr.vmem [resolvable:$true] %s67
      %73 = dma.hbm_to_vmem [thread:$0]  %s6, 8192, %s68, [#allocation11], 512, 512, 32
    $region29: #{chat_model_forward.1} parent=1 // pred_fallthru
      _
    // Predicated region
    $region30: #{chat_model_forward.1} parent=1 // pred_check
      _
    $region31: #{chat_model_forward.1} parent=1 // pred_check_branch
      %75 = sbr.rel (0) target = $region33
    $region32: #{chat_model_forward.1} parent=1 // pred_region
      %s77 = ssub.s32 8192, 8192
      %78 = vsyncadd [#allocation14], %s77
      %s79 = sshll.u32 [#allocation13], 4
      %s80 = int_to_ptr.vmem [resolvable:$true] %s79
      %85 = dma.hbm_to_vmem [thread:$0]  %s7, 8192, %s80, [#allocation14], 512, 512, 32
    $region33: #{chat_model_forward.1} parent=1 // pred_fallthru
      _
    // Predicated region
    $region34: #{chat_model_forward.1} parent=1 // pred_check
      _
    $region35: #{chat_model_forward.1} parent=1 // pred_check_branch
      %87 = sbr.rel (0) target = $region37
    $region36: #{chat_model_forward.1} parent=1 // pred_region
      _
    $region37: #{chat_model_forward.1} parent=1 // pred_fallthru
      _
    // Predicated region
    $region38: #{chat_model_forward.1} parent=1 // pred_check
      _
    $region39: #{chat_model_forward.1} parent=1 // pred_check_branch
      %89 = sbr.rel (0) target = $region41
    $region40: #{chat_model_forward.1} parent=1 // pred_region
      _
    $region41: #{chat_model_forward.1} parent=1 // pred_fallthru
      _
    // Predicated region
    $region42: #{chat_model_forward.1} parent=1 // pred_check
      _
    $region43: #{chat_model_forward.1} parent=1 // pred_check_branch
      %91 = sbr.rel (0) target = $region45
    $region44: #{chat_model_forward.1} parent=1 // pred_region
      _
    $region45: #{chat_model_forward.1} parent=1 // pred_fallthru
      _
    // Predicated region
    $region46: #{chat_model_forward.1} parent=1 // pred_check
      _
    $region47: #{chat_model_forward.1} parent=1 // pred_check_branch
      %93 = sbr.rel (0) target = $region49
    $region48: #{chat_model_forward.1} parent=1 // pred_region
      _
    $region49: #{chat_model_forward.1} parent=1 // pred_fallthru
      _
    // Predicated region
    $region50: #{chat_model_forward.1} parent=1 // pred_check
      _
    $region51: #{chat_model_forward.1} parent=1 // pred_check_branch
      %95 = sbr.rel (0) target = $region53
    $region52: #{chat_model_forward.1} parent=1 // pred_region
      _
    $region53: #{chat_model_forward.1} parent=1 // pred_fallthru
      _
    // Predicated region
    $region54: #{chat_model_forward.1} parent=1 // pred_check
      _
    $region55: #{chat_model_forward.1} parent=1 // pred_check_branch
      %97 = sbr.rel (0) target = $region57
    $region56: #{chat_model_forward.1} parent=1 // pred_region
      %98 = dma.done [#allocation8], 16
    $region57: #{chat_model_forward.1} parent=1 // pred_fallthru
      _
    // Predicated region
    $region58: #{chat_model_forward.1} parent=1 // pred_check
      _
    $region59: #{chat_model_forward.1} parent=1 // pred_check_branch
      %100 = sbr.rel (0) target = $region61
    $region60: #{chat_model_forward.1} parent=1 // pred_region
      %101 = dma.done [#allocation7], 8192
    $region61: #{chat_model_forward.1} parent=1 // pred_fallthru
      _
    // Predicated region
    $region62: #{chat_model_forward.1} parent=1 // pred_check
      _
    $region63: #{chat_model_forward.1} parent=1 // pred_check_branch
      %103 = sbr.rel (0) target = $region65
    $region64: #{chat_model_forward.1} parent=1 // pred_region
      %104 = dma.done [#allocation11], 8192
    $region65: #{chat_model_forward.1} parent=1 // pred_fallthru
      _
    // Predicated region
    $region66: #{chat_model_forward.1} parent=1 // pred_check
      _
    $region67: #{chat_model_forward.1} parent=1 // pred_check_branch
      %106 = sbr.rel (0) target = $region69
    $region68: #{chat_model_forward.1} parent=1 // pred_region
      %107 = dma.done [#allocation11], 8192
    $region69: #{chat_model_forward.1} parent=1 // pred_fallthru
      _
    // Predicated region
    $region70: #{chat_model_forward.1} parent=1 // pred_check
      _
    $region71: #{chat_model_forward.1} parent=1 // pred_check_branch
      %109 = sbr.rel (0) target = $region73
    $region72: #{chat_model_forward.1} parent=1 // pred_region
      %110 = dma.done [#allocation14], 8192
    $region73: #{chat_model_forward.1} parent=1 // pred_fallthru
      _
    %111 = sfence
    %v112 = vld [vmem:[%s1] sm:$0xff]
    %v113 = vld [vmem:[%s1 + $0x8] sm:$0xff]
    %v114 = vld [vmem:[%s1 + $0x10] sm:$0xff]
    %v115 = vld [vmem:[%s1 + $0x18] sm:$0xff]
    %v116 = vld [vmem:[%s1 + $0x20] sm:$0xff]
    %v117 = vld [vmem:[%s1 + $0x28] sm:$0xff]
    %v118 = vld [vmem:[%s1 + $0x30] sm:$0xff]
    %v119 = vld [vmem:[%s1 + $0x38] sm:$0xff]
    %v120 = vld [vmem:[#allocation9] sm:$0xff]
    %v121 = vld [vmem:[#allocation9 + $0x8] sm:$0xff]
    %v122 = vld [vmem:[#allocation9 + $0x10] sm:$0xff]
    %v123 = vld [vmem:[#allocation9 + $0x18] sm:$0xff]
    %v124 = vld [vmem:[#allocation9 + $0x20] sm:$0xff]
    %v125 = vld [vmem:[#allocation9 + $0x28] sm:$0xff]
    %v126 = vld [vmem:[#allocation9 + $0x30] sm:$0xff]
    %v127 = vld [vmem:[#allocation9 + $0x38] sm:$0xff]
    %v128 = vld [vmem:[#allocation9 + $0x40] sm:$0xff]
    %v129 = vld [vmem:[#allocation9 + $0x48] sm:$0xff]
    %v130 = vld [vmem:[#allocation9 + $0x50] sm:$0xff]
    %v131 = vld [vmem:[#allocation9 + $0x58] sm:$0xff]
    %v132 = vld [vmem:[#allocation9 + $0x60] sm:$0xff]
    %v133 = vld [vmem:[#allocation9 + $0x68] sm:$0xff]
    %v134 = vld [vmem:[#allocation9 + $0x70] sm:$0xff]
    %v135 = vld [vmem:[#allocation9 + $0x78] sm:$0xff]
    %v136 = vld [vmem:[#allocation9 + $0x80] sm:$0xff]
    %v137 = vld [vmem:[#allocation9 + $0x88] sm:$0xff]
    %v138 = vld [vmem:[#allocation9 + $0x90] sm:$0xff]
    %v139 = vld [vmem:[#allocation9 + $0x98] sm:$0xff]
    %v140 = vld [vmem:[#allocation9 + $0xa0] sm:$0xff]
    %v141 = vld [vmem:[#allocation9 + $0xa8] sm:$0xff]
    %v142 = vld [vmem:[#allocation9 + $0xb0] sm:$0xff]
    %v143 = vld [vmem:[#allocation9 + $0xb8] sm:$0xff]
    %v144 = vld [vmem:[#allocation9 + $0xc0] sm:$0xff]
    %v145 = vld [vmem:[#allocation9 + $0xc8] sm:$0xff]
    %v146 = vld [vmem:[#allocation9 + $0xd0] sm:$0xff]
    %v147 = vld [vmem:[#allocation9 + $0xd8] sm:$0xff]
    %v148 = vld [vmem:[#allocation9 + $0xe0] sm:$0xff]
    %v149 = vld [vmem:[#allocation9 + $0xe8] sm:$0xff]
    %v150 = vld [vmem:[#allocation9 + $0xf0] sm:$0xff]
    %v151 = vld [vmem:[#allocation9 + $0xf8] sm:$0xff]
    %v152 = vld [vmem:[#allocation9 + $0x100] sm:$0xff]
    %v153 = vld [vmem:[#allocation9 + $0x108] sm:$0xff]
    %v154 = vld [vmem:[#allocation9 + $0x110] sm:$0xff]
    %v155 = vld [vmem:[#allocation9 + $0x118] sm:$0xff]
    %v156 = vld [vmem:[#allocation9 + $0x120] sm:$0xff]
    %v157 = vld [vmem:[#allocation9 + $0x128] sm:$0xff]
    %v158 = vld [vmem:[#allocation9 + $0x130] sm:$0xff]
    %v159 = vld [vmem:[#allocation9 + $0x138] sm:$0xff]
    %v160 = vld [vmem:[#allocation9 + $0x140] sm:$0xff]
    %v161 = vld [vmem:[#allocation9 + $0x148] sm:$0xff]
    %v162 = vld [vmem:[#allocation9 + $0x150] sm:$0xff]
    %v163 = vld [vmem:[#allocation9 + $0x158] sm:$0xff]
    %v164 = vld [vmem:[#allocation9 + $0x160] sm:$0xff]
    %v165 = vld [vmem:[#allocation9 + $0x168] sm:$0xff]
    %v166 = vld [vmem:[#allocation9 + $0x170] sm:$0xff]
    %v167 = vld [vmem:[#allocation9 + $0x178] sm:$0xff]
    %v168 = vld [vmem:[#allocation9 + $0x180] sm:$0xff]
    %v169 = vld [vmem:[#allocation9 + $0x188] sm:$0xff]
    %v170 = vld [vmem:[#allocation9 + $0x190] sm:$0xff]
    %v171 = vld [vmem:[#allocation9 + $0x198] sm:$0xff]
    %v172 = vld [vmem:[#allocation9 + $0x1a0] sm:$0xff]
    %v173 = vld [vmem:[#allocation9 + $0x1a8] sm:$0xff]
    %v174 = vld [vmem:[#allocation9 + $0x1b0] sm:$0xff]
    %v175 = vld [vmem:[#allocation9 + $0x1b8] sm:$0xff]
    %v176 = vld [vmem:[#allocation9 + $0x1c0] sm:$0xff]
    %v177 = vld [vmem:[#allocation9 + $0x1c8] sm:$0xff]
    %v178 = vld [vmem:[#allocation9 + $0x1d0] sm:$0xff]
    %v179 = vld [vmem:[#allocation9 + $0x1d8] sm:$0xff]
    %v180 = vld [vmem:[#allocation9 + $0x1e0] sm:$0xff]
    %v181 = vld [vmem:[#allocation9 + $0x1e8] sm:$0xff]
    %v182 = vld [vmem:[#allocation9 + $0x1f0] sm:$0xff]
    %v183 = vld [vmem:[#allocation9 + $0x1f8] sm:$0xff]
    %184 = vmatprep.subr.mxu0 %v121
    %185 = vmatpush1.msra.mxu0 %v120
    %186 = vmatprep.subr.mxu0 %v125
    %187 = vmatpush1.msra.mxu0 %v124
    %188 = vmatprep.subr.mxu0 %v129
    %189 = vmatpush1.msra.mxu0 %v128
    %190 = vmatprep.subr.mxu0 %v133
    %191 = vmatpush1.msra.mxu0 %v132
    %192 = vmatprep.subr.mxu0 %v137
    %193 = vmatpush1.msra.mxu0 %v136
    %194 = vmatprep.subr.mxu0 %v141
    %195 = vmatpush1.msra.mxu0 %v140
    %196 = vmatprep.subr.mxu0 %v145
    %197 = vmatpush1.msra.mxu0 %v144
    %198 = vmatprep.subr.mxu0 %v149
    %199 = vmatpush1.msra.mxu0 %v148
    %200 = vmatprep.subr.mxu0 %v153
    %201 = vmatpush1.msra.mxu0 %v152
    %202 = vmatprep.subr.mxu0 %v157
    %203 = vmatpush1.msra.mxu0 %v156
    %204 = vmatprep.subr.mxu0 %v161
    %205 = vmatpush1.msra.mxu0 %v160
    %206 = vmatprep.subr.mxu0 %v165
    %207 = vmatpush1.msra.mxu0 %v164
    %208 = vmatprep.subr.mxu0 %v169
    %209 = vmatpush1.msra.mxu0 %v168
    %210 = vmatprep.subr.mxu0 %v173
    %211 = vmatpush1.msra.mxu0 %v172
    %212 = vmatprep.subr.mxu0 %v177
    %213 = vmatpush1.msra.mxu0 %v176
    %214 = vmatprep.subr.mxu0 %v181
    %215 = vmatpush1.msra.mxu0 %v180
    %216 = vmatprep.subr.mxu0 0.0
    %217 = vmatpush1.msra.mxu0 0.0
    %218 = vmatprep.subr.mxu0 0.0
    %219 = vmatpush1.msra.mxu0 0.0
    %220 = vmatprep.subr.mxu0 0.0
    %221 = vmatpush1.msra.mxu0 0.0
    %222 = vmatprep.subr.mxu0 0.0
    %223 = vmatpush1.msra.mxu0 0.0
    %224 = vmatprep.subr.mxu0 0.0
    %225 = vmatpush1.msra.mxu0 0.0
    %226 = vmatprep.subr.mxu0 0.0
    %227 = vmatpush1.msra.mxu0 0.0
    %228 = vmatprep.subr.mxu0 0.0
    %229 = vmatpush1.msra.mxu0 0.0
    %230 = vmatprep.subr.mxu0 0.0
    %231 = vmatpush1.msra.mxu0 0.0
    %232 = vmatprep.subr.mxu0 0.0
    %233 = vmatpush1.msra.mxu0 0.0
    %234 = vmatprep.subr.mxu0 0.0
    %235 = vmatpush1.msra.mxu0 0.0
    %236 = vmatprep.subr.mxu0 0.0
    %237 = vmatpush1.msra.mxu0 0.0
    %238 = vmatprep.subr.mxu0 0.0
    %239 = vmatpush1.msra.mxu0 0.0
    %240 = vmatprep.subr.mxu0 0.0
    %241 = vmatpush1.msra.mxu0 0.0
    %242 = vmatprep.subr.mxu0 0.0
    %243 = vmatpush1.msra.mxu0 0.0
    %244 = vmatprep.subr.mxu0 0.0
    %245 = vmatpush1.msra.mxu0 0.0
    %246 = vmatprep.subr.mxu0 0.0
    %247 = vmatpush1.msra.mxu0 0.0
    %248 = vmatprep.mubr.f32.mxu0 0.0
    %249 = vmatmul.mubr.f32.gmra.mrb[0].mxu0 %v112
    %v250 = vpop.f32.mrb[0].mxu0
    %v251 = vadd.f32 0.0, %v250
    %v252 = vpop.f32.mrb[0].mxu0
    %v253 = vadd.f32 0.0, %v252
    %254 = vmatprep.mubr.f32.mxu0 0.0
    %255 = vmatmul.mubr.f32.gmra.mrb[0].mxu0 %v113
    %v256 = vpop.f32.mrb[0].mxu0
    %v257 = vadd.f32 0.0, %v256
    %v258 = vpop.f32.mrb[0].mxu0
    %v259 = vadd.f32 0.0, %v258
    %260 = vmatprep.mubr.f32.mxu0 0.0
    %261 = vmatmul.mubr.f32.gmra.mrb[0].mxu0 %v114
    %v262 = vpop.f32.mrb[0].mxu0
    %v263 = vadd.f32 0.0, %v262
    %v264 = vpop.f32.mrb[0].mxu0
    %v265 = vadd.f32 0.0, %v264
    %266 = vmatprep.mubr.f32.mxu0 0.0
    %267 = vmatmul.mubr.f32.gmra.mrb[0].mxu0 %v115
    %v268 = vpop.f32.mrb[0].mxu0
    %v269 = vadd.f32 0.0, %v268
    %v270 = vpop.f32.mrb[0].mxu0
    %v271 = vadd.f32 0.0, %v270
    %272 = vmatprep.mubr.f32.mxu0 0.0
    %273 = vmatmul.mubr.f32.gmra.mrb[0].mxu0 %v116
    %v274 = vpop.f32.mrb[0].mxu0
    %v275 = vadd.f32 0.0, %v274
    %v276 = vpop.f32.mrb[0].mxu0
    %v277 = vadd.f32 0.0, %v276
    %278 = vmatprep.mubr.f32.mxu0 0.0
    %279 = vmatmul.mubr.f32.gmra.mrb[0].mxu0 %v117
    %v280 = vpop.f32.mrb[0].mxu0
    %v281 = vadd.f32 0.0, %v280
    %v282 = vpop.f32.mrb[0].mxu0
    %v283 = vadd.f32 0.0, %v282
    %284 = vmatprep.mubr.f32.mxu0 0.0
    %285 = vmatmul.mubr.f32.gmra.mrb[0].mxu0 %v118
    %v286 = vpop.f32.mrb[0].mxu0
    %v287 = vadd.f32 0.0, %v286
    %v288 = vpop.f32.mrb[0].mxu0
    %v289 = vadd.f32 0.0, %v288
    %290 = vmatprep.mubr.f32.mxu0 0.0
    %291 = vmatmul.mubr.f32.gmra.mrb[0].mxu0 %v119
    %v292 = vpop.f32.mrb[0].mxu0
    %v293 = vadd.f32 0.0, %v292
    %v294 = vpop.f32.mrb[0].mxu0
    %v295 = vadd.f32 0.0, %v294
    %296 = vdwg.mxu0
    %297 = vmatprep.subr.mxu0 %v123
    %298 = vmatpush1.msra.mxu0 %v122
    %299 = vmatprep.subr.mxu0 %v127
    %300 = vmatpush1.msra.mxu0 %v126
    %301 = vmatprep.subr.mxu0 %v131
    %302 = vmatpush1.msra.mxu0 %v130
    %303 = vmatprep.subr.mxu0 %v135
    %304 = vmatpush1.msra.mxu0 %v134
    %305 = vmatprep.subr.mxu0 %v139
    %306 = vmatpush1.msra.mxu0 %v138
    %307 = vmatprep.subr.mxu0 %v143
    %308 = vmatpush1.msra.mxu0 %v142
    %309 = vmatprep.subr.mxu0 %v147
    %310 = vmatpush1.msra.mxu0 %v146
    %311 = vmatprep.subr.mxu0 %v151
    %312 = vmatpush1.msra.mxu0 %v150
    %313 = vmatprep.subr.mxu0 %v155
    %314 = vmatpush1.msra.mxu0 %v154
    %315 = vmatprep.subr.mxu0 %v159
    %316 = vmatpush1.msra.mxu0 %v158
    %317 = vmatprep.subr.mxu0 %v163
    %318 = vmatpush1.msra.mxu0 %v162
    %319 = vmatprep.subr.mxu0 %v167
    %320 = vmatpush1.msra.mxu0 %v166
    %321 = vmatprep.subr.mxu0 %v171
    %322 = vmatpush1.msra.mxu0 %v170
    %323 = vmatprep.subr.mxu0 %v175
    %324 = vmatpush1.msra.mxu0 %v174
    %325 = vmatprep.subr.mxu0 %v179
    %326 = vmatpush1.msra.mxu0 %v178
    %327 = vmatprep.subr.mxu0 %v183
    %328 = vmatpush1.msra.mxu0 %v182
    %329 = vmatprep.subr.mxu0 0.0
    %330 = vmatpush1.msra.mxu0 0.0
    %331 = vmatprep.subr.mxu0 0.0
    %332 = vmatpush1.msra.mxu0 0.0
    %333 = vmatprep.subr.mxu0 0.0
    %334 = vmatpush1.msra.mxu0 0.0
    %335 = vmatprep.subr.mxu0 0.0
    %336 = vmatpush1.msra.mxu0 0.0
    %337 = vmatprep.subr.mxu0 0.0
    %338 = vmatpush1.msra.mxu0 0.0
    %339 = vmatprep.subr.mxu0 0.0
    %340 = vmatpush1.msra.mxu0 0.0
    %341 = vmatprep.subr.mxu0 0.0
    %342 = vmatpush1.msra.mxu0 0.0
    %343 = vmatprep.subr.mxu0 0.0
    %344 = vmatpush1.msra.mxu0 0.0
    %345 = vmatprep.subr.mxu0 0.0
    %346 = vmatpush1.msra.mxu0 0.0
    %347 = vmatprep.subr.mxu0 0.0
    %348 = vmatpush1.msra.mxu0 0.0
    %349 = vmatprep.subr.mxu0 0.0
    %350 = vmatpush1.msra.mxu0 0.0
    %351 = vmatprep.subr.mxu0 0.0
    %352 = vmatpush1.msra.mxu0 0.0
    %353 = vmatprep.subr.mxu0 0.0
    %354 = vmatpush1.msra.mxu0 0.0
    %355 = vmatprep.subr.mxu0 0.0
    %356 = vmatpush1.msra.mxu0 0.0
    %357 = vmatprep.subr.mxu0 0.0
    %358 = vmatpush1.msra.mxu0 0.0
    %359 = vmatprep.subr.mxu0 0.0
    %360 = vmatpush1.msra.mxu0 0.0
    %361 = vmatprep.mubr.f32.mxu0 0.0
    %362 = vmatmul.mubr.f32.gmra.mrb[0].mxu0 %v112
    %v363 = vpop.f32.mrb[0].mxu0
    %v364 = vadd.f32 0.0, %v363
    %v365 = vpop.f32.mrb[0].mxu0
    %v366 = vadd.f32 0.0, %v365
    %367 = vmatprep.mubr.f32.mxu0 0.0
    %368 = vmatmul.mubr.f32.gmra.mrb[0].mxu0 %v113
    %v369 = vpop.f32.mrb[0].mxu0
    %v370 = vadd.f32 0.0, %v369
    %v371 = vpop.f32.mrb[0].mxu0
    %v372 = vadd.f32 0.0, %v371
    %373 = vmatprep.mubr.f32.mxu0 0.0
    %374 = vmatmul.mubr.f32.gmra.mrb[0].mxu0 %v114
    %v375 = vpop.f32.mrb[0].mxu0
    %v376 = vadd.f32 0.0, %v375
    %v377 = vpop.f32.mrb[0].mxu0
    %v378 = vadd.f32 0.0, %v377
    %379 = vmatprep.mubr.f32.mxu0 0.0
    %380 = vmatmul.mubr.f32.gmra.mrb[0].mxu0 %v115
    %v381 = vpop.f32.mrb[0].mxu0
    %v382 = vadd.f32 0.0, %v381
    %v383 = vpop.f32.mrb[0].mxu0
    %v384 = vadd.f32 0.0, %v383
    %385 = vmatprep.mubr.f32.mxu0 0.0
    %386 = vmatmul.mubr.f32.gmra.mrb[0].mxu0 %v116
    %v387 = vpop.f32.mrb[0].mxu0
    %v388 = vadd.f32 0.0, %v387
    %v389 = vpop.f32.mrb[0].mxu0
    %v390 = vadd.f32 0.0, %v389
    %391 = vmatprep.mubr.f32.mxu0 0.0
    %392 = vmatmul.mubr.f32.gmra.mrb[0].mxu0 %v117
    %v393 = vpop.f32.mrb[0].mxu0
    %v394 = vadd.f32 0.0, %v393
    %v395 = vpop.f32.mrb[0].mxu0
    %v396 = vadd.f32 0.0, %v395
    %397 = vmatprep.mubr.f32.mxu0 0.0
    %398 = vmatmul.mubr.f32.gmra.mrb[0].mxu0 %v118
    %v399 = vpop.f32.mrb[0].mxu0
    %v400 = vadd.f32 0.0, %v399
    %v401 = vpop.f32.mrb[0].mxu0
    %v402 = vadd.f32 0.0, %v401
    %403 = vmatprep.mubr.f32.mxu0 0.0
    %404 = vmatmul.mubr.f32.gmra.mrb[0].mxu0 %v119
    %v405 = vpop.f32.mrb[0].mxu0
    %v406 = vadd.f32 0.0, %v405
    %v407 = vpop.f32.mrb[0].mxu0
    %v408 = vadd.f32 0.0, %v407
    %409 = vdwg.mxu0
    %410 = vst [vmem:[#allocation2] sm:$0xff] %v251
    %411 = vst [vmem:[#allocation2 + $0x8] sm:$0xff] %v253
    %412 = vst [vmem:[#allocation2 + $0x10] sm:$0xff] %v364
    %413 = vst [vmem:[#allocation2 + $0x18] sm:$0xff] %v366
    %414 = vst [vmem:[#allocation2 + $0x20] sm:$0xff] %v257
    %415 = vst [vmem:[#allocation2 + $0x28] sm:$0xff] %v259
    %416 = vst [vmem:[#allocation2 + $0x30] sm:$0xff] %v370
    %417 = vst [vmem:[#allocation2 + $0x38] sm:$0xff] %v372
    %418 = vst [vmem:[#allocation2 + $0x40] sm:$0xff] %v263
    %419 = vst [vmem:[#allocation2 + $0x48] sm:$0xff] %v265
    %420 = vst [vmem:[#allocation2 + $0x50] sm:$0xff] %v376
    %421 = vst [vmem:[#allocation2 + $0x58] sm:$0xff] %v378
    %422 = vst [vmem:[#allocation2 + $0x60] sm:$0xff] %v269
    %423 = vst [vmem:[#allocation2 + $0x68] sm:$0xff] %v271
    %424 = vst [vmem:[#allocation2 + $0x70] sm:$0xff] %v382
    %425 = vst [vmem:[#allocation2 + $0x78] sm:$0xff] %v384
    %426 = vst [vmem:[#allocation2 + $0x80] sm:$0xff] %v275
    %427 = vst [vmem:[#allocation2 + $0x88] sm:$0xff] %v277
    %428 = vst [vmem:[#allocation2 + $0x90] sm:$0xff] %v388
    %429 = vst [vmem:[#allocation2 + $0x98] sm:$0xff] %v390
    %430 = vst [vmem:[#allocation2 + $0xa0] sm:$0xff] %v281
    %431 = vst [vmem:[#allocation2 + $0xa8] sm:$0xff] %v283
    %432 = vst [vmem:[#allocation2 + $0xb0] sm:$0xff] %v394
    %433 = vst [vmem:[#allocation2 + $0xb8] sm:$0xff] %v396
    %434 = vst [vmem:[#allocation2 + $0xc0] sm:$0xff] %v287
    %435 = vst [vmem:[#allocation2 + $0xc8] sm:$0xff] %v289
    %436 = vst [vmem:[#allocation2 + $0xd0] sm:$0xff] %v400
    %437 = vst [vmem:[#allocation2 + $0xd8] sm:$0xff] %v402
    %438 = vst [vmem:[#allocation2 + $0xe0] sm:$0xff] %v293
    %439 = vst [vmem:[#allocation2 + $0xe8] sm:$0xff] %v295
    %440 = vst [vmem:[#allocation2 + $0xf0] sm:$0xff] %v406
    %441 = vst [vmem:[#allocation2 + $0xf8] sm:$0xff] %v408
    %442 = vst [vmem:[#allocation3] sm:$0xff] 0.0
    %443 = vst [vmem:[#allocation4] sm:$0xff] 0.0
    %v444 = vld [vmem:[#allocation2] sm:$0xff]
    %v445 = vld [vmem:[#allocation2 + $0x8] sm:$0xff]
    %v446 = vld [vmem:[#allocation2 + $0x10] sm:$0xff]
    %v447 = vld [vmem:[#allocation2 + $0x18] sm:$0xff]
    %v448 = vld [vmem:[#allocation3] sm:$0xff]
    %v449 = vld [vmem:[#allocation10] sm:$0xff]
    %v450 = vld [vmem:[#allocation10 + $0x8] sm:$0xff]
    %v451 = vld [vmem:[#allocation10 + $0x10] sm:$0xff]
    %v452 = vld [vmem:[#allocation10 + $0x18] sm:$0xff]
    %v453 = vld [vmem:[#allocation10 + $0x20] sm:$0xff]
    %v454 = vld [vmem:[#allocation10 + $0x28] sm:$0xff]
    %v455 = vld [vmem:[#allocation10 + $0x30] sm:$0xff]
    %v456 = vld [vmem:[#allocation10 + $0x38] sm:$0xff]
    %v457 = vld [vmem:[#allocation10 + $0x40] sm:$0xff]
    %v458 = vld [vmem:[#allocation10 + $0x48] sm:$0xff]
    %v459 = vld [vmem:[#allocation10 + $0x50] sm:$0xff]
    %v460 = vld [vmem:[#allocation10 + $0x58] sm:$0xff]
    %v461 = vld [vmem:[#allocation10 + $0x60] sm:$0xff]
    %v462 = vld [vmem:[#allocation10 + $0x68] sm:$0xff]
    %v463 = vld [vmem:[#allocation10 + $0x70] sm:$0xff]
    %v464 = vld [vmem:[#allocation10 + $0x78] sm:$0xff]
    %v465 = vld [vmem:[#allocation10 + $0x80] sm:$0xff]
    %v466 = vld [vmem:[#allocation10 + $0x88] sm:$0xff]
    %v467 = vld [vmem:[#allocation10 + $0x90] sm:$0xff]
    %v468 = vld [vmem:[#allocation10 + $0x98] sm:$0xff]
    %v469 = vld [vmem:[#allocation10 + $0xa0] sm:$0xff]
    %v470 = vld [vmem:[#allocation10 + $0xa8] sm:$0xff]
    %v471 = vld [vmem:[#allocation10 + $0xb0] sm:$0xff]
    %v472 = vld [vmem:[#allocation10 + $0xb8] sm:$0xff]
    %v473 = vld [vmem:[#allocation10 + $0xc0] sm:$0xff]
    %v474 = vld [vmem:[#allocation10 + $0xc8] sm:$0xff]
    %v475 = vld [vmem:[#allocation10 + $0xd0] sm:$0xff]
    %v476 = vld [vmem:[#allocation10 + $0xd8] sm:$0xff]
    %v477 = vld [vmem:[#allocation10 + $0xe0] sm:$0xff]
    %v478 = vld [vmem:[#allocation10 + $0xe8] sm:$0xff]
    %v479 = vld [vmem:[#allocation10 + $0xf0] sm:$0xff]
    %v480 = vld [vmem:[#allocation10 + $0xf8] sm:$0xff]
    %v481 = vld [vmem:[#allocation10 + $0x100] sm:$0xff]
    %v482 = vld [vmem:[#allocation10 + $0x108] sm:$0xff]
    %v483 = vld [vmem:[#allocation10 + $0x110] sm:$0xff]
    %v484 = vld [vmem:[#allocation10 + $0x118] sm:$0xff]
    %v485 = vld [vmem:[#allocation10 + $0x120] sm:$0xff]
    %v486 = vld [vmem:[#allocation10 + $0x128] sm:$0xff]
    %v487 = vld [vmem:[#allocation10 + $0x130] sm:$0xff]
    %v488 = vld [vmem:[#allocation10 + $0x138] sm:$0xff]
    %v489 = vld [vmem:[#allocation10 + $0x140] sm:$0xff]
    %v490 = vld [vmem:[#allocation10 + $0x148] sm:$0xff]
    %v491 = vld [vmem:[#allocation10 + $0x150] sm:$0xff]
    %v492 = vld [vmem:[#allocation10 + $0x158] sm:$0xff]
    %v493 = vld [vmem:[#allocation10 + $0x160] sm:$0xff]
    %v494 = vld [vmem:[#allocation10 + $0x168] sm:$0xff]
    %v495 = vld [vmem:[#allocation10 + $0x170] sm:$0xff]
    %v496 = vld [vmem:[#allocation10 + $0x178] sm:$0xff]
    %v497 = vld [vmem:[#allocation10 + $0x180] sm:$0xff]
    %v498 = vld [vmem:[#allocation10 + $0x188] sm:$0xff]
    %v499 = vld [vmem:[#allocation10 + $0x190] sm:$0xff]
    %v500 = vld [vmem:[#allocation10 + $0x198] sm:$0xff]
    %v501 = vld [vmem:[#allocation10 + $0x1a0] sm:$0xff]
    %v502 = vld [vmem:[#allocation10 + $0x1a8] sm:$0xff]
    %v503 = vld [vmem:[#allocation10 + $0x1b0] sm:$0xff]
    %v504 = vld [vmem:[#allocation10 + $0x1b8] sm:$0xff]
    %v505 = vld [vmem:[#allocation10 + $0x1c0] sm:$0xff]
    %v506 = vld [vmem:[#allocation10 + $0x1c8] sm:$0xff]
    %v507 = vld [vmem:[#allocation10 + $0x1d0] sm:$0xff]
    %v508 = vld [vmem:[#allocation10 + $0x1d8] sm:$0xff]
    %v509 = vld [vmem:[#allocation10 + $0x1e0] sm:$0xff]
    %v510 = vld [vmem:[#allocation10 + $0x1e8] sm:$0xff]
    %v511 = vld [vmem:[#allocation10 + $0x1f0] sm:$0xff]
    %v512 = vld [vmem:[#allocation10 + $0x1f8] sm:$0xff]
    %513 = vmatprep.subr.mxu0 %v450
    %514 = vmatpush1.msra.mxu0 %v449
    %515 = vmatprep.subr.mxu0 %v454
    %516 = vmatpush1.msra.mxu0 %v453
    %517 = vmatprep.subr.mxu0 %v458
    %518 = vmatpush1.msra.mxu0 %v457
    %519 = vmatprep.subr.mxu0 %v462
    %520 = vmatpush1.msra.mxu0 %v461
    %521 = vmatprep.subr.mxu0 %v466
    %522 = vmatpush1.msra.mxu0 %v465
    %523 = vmatprep.subr.mxu0 %v470
    %524 = vmatpush1.msra.mxu0 %v469
    %525 = vmatprep.subr.mxu0 %v474
    %526 = vmatpush1.msra.mxu0 %v473
    %527 = vmatprep.subr.mxu0 %v478
    %528 = vmatpush1.msra.mxu0 %v477
    %529 = vmatprep.subr.mxu0 %v482
    %530 = vmatpush1.msra.mxu0 %v481
    %531 = vmatprep.subr.mxu0 %v486
    %532 = vmatpush1.msra.mxu0 %v485
    %533 = vmatprep.subr.mxu0 %v490
    %534 = vmatpush1.msra.mxu0 %v489
    %535 = vmatprep.subr.mxu0 %v494
    %536 = vmatpush1.msra.mxu0 %v493
    %537 = vmatprep.subr.mxu0 %v498
    %538 = vmatpush1.msra.mxu0 %v497
    %539 = vmatprep.subr.mxu0 %v502
    %540 = vmatpush1.msra.mxu0 %v501
    %541 = vmatprep.subr.mxu0 %v506
    %542 = vmatpush1.msra.mxu0 %v505
    %543 = vmatprep.subr.mxu0 %v510
    %544 = vmatpush1.msra.mxu0 %v509
    %545 = vmatprep.subr.mxu0 0.0
    %546 = vmatpush1.msra.mxu0 0.0
    %547 = vmatprep.subr.mxu0 0.0
    %548 = vmatpush1.msra.mxu0 0.0
    %549 = vmatprep.subr.mxu0 0.0
    %550 = vmatpush1.msra.mxu0 0.0
    %551 = vmatprep.subr.mxu0 0.0
    %552 = vmatpush1.msra.mxu0 0.0
    %553 = vmatprep.subr.mxu0 0.0
    %554 = vmatpush1.msra.mxu0 0.0
    %555 = vmatprep.subr.mxu0 0.0
    %556 = vmatpush1.msra.mxu0 0.0
    %557 = vmatprep.subr.mxu0 0.0
    %558 = vmatpush1.msra.mxu0 0.0
    %559 = vmatprep.subr.mxu0 0.0
    %560 = vmatpush1.msra.mxu0 0.0
    %561 = vmatprep.subr.mxu0 0.0
    %562 = vmatpush1.msra.mxu0 0.0
    %563 = vmatprep.subr.mxu0 0.0
    %564 = vmatpush1.msra.mxu0 0.0
    %565 = vmatprep.subr.mxu0 0.0
    %566 = vmatpush1.msra.mxu0 0.0
    %567 = vmatprep.subr.mxu0 0.0
    %568 = vmatpush1.msra.mxu0 0.0
    %569 = vmatprep.subr.mxu0 0.0
    %570 = vmatpush1.msra.mxu0 0.0
    %571 = vmatprep.subr.mxu0 0.0
    %572 = vmatpush1.msra.mxu0 0.0
    %573 = vmatprep.subr.mxu0 0.0
    %574 = vmatpush1.msra.mxu0 0.0
    %575 = vmatprep.subr.mxu0 0.0
    %576 = vmatpush1.msra.mxu0 0.0
    %577 = vmatprep.mubr.f32.mxu0 0.0
    %578 = vmatmul.mubr.f32.gmra.mrb[0].mxu0 %v448
    %v579 = vpop.f32.mrb[0].mxu0
    %v580 = vadd.f32 0.0, %v579
    %v581 = vpop.f32.mrb[0].mxu0
    %v582 = vadd.f32 0.0, %v581
    %583 = vdwg.mxu0
    %584 = vmatprep.subr.mxu0 %v452
    %585 = vmatpush1.msra.mxu0 %v451
    %586 = vmatprep.subr.mxu0 %v456
    %587 = vmatpush1.msra.mxu0 %v455
    %588 = vmatprep.subr.mxu0 %v460
    %589 = vmatpush1.msra.mxu0 %v459
    %590 = vmatprep.subr.mxu0 %v464
    %591 = vmatpush1.msra.mxu0 %v463
    %592 = vmatprep.subr.mxu0 %v468
    %593 = vmatpush1.msra.mxu0 %v467
    %594 = vmatprep.subr.mxu0 %v472
    %595 = vmatpush1.msra.mxu0 %v471
    %596 = vmatprep.subr.mxu0 %v476
    %597 = vmatpush1.msra.mxu0 %v475
    %598 = vmatprep.subr.mxu0 %v480
    %599 = vmatpush1.msra.mxu0 %v479
    %600 = vmatprep.subr.mxu0 %v484
    %601 = vmatpush1.msra.mxu0 %v483
    %602 = vmatprep.subr.mxu0 %v488
    %603 = vmatpush1.msra.mxu0 %v487
    %604 = vmatprep.subr.mxu0 %v492
    %605 = vmatpush1.msra.mxu0 %v491
    %606 = vmatprep.subr.mxu0 %v496
    %607 = vmatpush1.msra.mxu0 %v495
    %608 = vmatprep.subr.mxu0 %v500
    %609 = vmatpush1.msra.mxu0 %v499
    %610 = vmatprep.subr.mxu0 %v504
    %611 = vmatpush1.msra.mxu0 %v503
    %612 = vmatprep.subr.mxu0 %v508
    %613 = vmatpush1.msra.mxu0 %v507
    %614 = vmatprep.subr.mxu0 %v512
    %615 = vmatpush1.msra.mxu0 %v511
    %616 = vmatprep.subr.mxu0 0.0
    %617 = vmatpush1.msra.mxu0 0.0
    %618 = vmatprep.subr.mxu0 0.0
    %619 = vmatpush1.msra.mxu0 0.0
    %620 = vmatprep.subr.mxu0 0.0
    %621 = vmatpush1.msra.mxu0 0.0
    %622 = vmatprep.subr.mxu0 0.0
    %623 = vmatpush1.msra.mxu0 0.0
    %624 = vmatprep.subr.mxu0 0.0
    %625 = vmatpush1.msra.mxu0 0.0
    %626 = vmatprep.subr.mxu0 0.0
    %627 = vmatpush1.msra.mxu0 0.0
    %628 = vmatprep.subr.mxu0 0.0
    %629 = vmatpush1.msra.mxu0 0.0
    %630 = vmatprep.subr.mxu0 0.0
    %631 = vmatpush1.msra.mxu0 0.0
    %632 = vmatprep.subr.mxu0 0.0
    %633 = vmatpush1.msra.mxu0 0.0
    %634 = vmatprep.subr.mxu0 0.0
    %635 = vmatpush1.msra.mxu0 0.0
    %636 = vmatprep.subr.mxu0 0.0
    %637 = vmatpush1.msra.mxu0 0.0
    %638 = vmatprep.subr.mxu0 0.0
    %639 = vmatpush1.msra.mxu0 0.0
    %640 = vmatprep.subr.mxu0 0.0
    %641 = vmatpush1.msra.mxu0 0.0
    %642 = vmatprep.subr.mxu0 0.0
    %643 = vmatpush1.msra.mxu0 0.0
    %644 = vmatprep.subr.mxu0 0.0
    %645 = vmatpush1.msra.mxu0 0.0
    %646 = vmatprep.subr.mxu0 0.0
    %647 = vmatpush1.msra.mxu0 0.0
    %648 = vmatprep.mubr.f32.mxu0 0.0
    %649 = vmatmul.mubr.f32.gmra.mrb[0].mxu0 %v448
    %v650 = vpop.f32.mrb[0].mxu0
    %v651 = vadd.f32 0.0, %v650
    %v652 = vpop.f32.mrb[0].mxu0
    %v653 = vadd.f32 0.0, %v652
    %654 = vdwg.mxu0
    %v655 = vadd.f32 %v444, %v580
    %v656 = vadd.f32 %v445, %v582
    %v657 = vadd.f32 %v446, %v651
    %v658 = vadd.f32 %v447, %v653
    %v659 = vld [vmem:[%s4] sm:$0xff]
    %v660 = vld [vmem:[%s4 + $0x8] sm:$0xff]
    %v661 = vld [vmem:[%s4 + $0x10] sm:$0xff]
    %v662 = vld [vmem:[%s4 + $0x18] sm:$0xff]
    %v663 = vadd.f32 %v655, %v659
    %v664 = vadd.f32 %v656, %v660
    %v665 = vadd.f32 %v657, %v661
    %v666 = vadd.f32 %v658, %v662
    %v667 = vld [vmem:[#allocation4] sm:$0xff]
    %v668 = vxor.u32 %v663, 2147483648
    %v669 = vmul.f32 %v668, 1.442695
    %v670 = vpow.pop %v669
    %v671 = vadd.f32 %v670, 1.0
    %v672 = vrcp.pop %v671
    %v673 = vmul.f32 1.0, %v672
    %v674 = vxor.u32 %v664, 2147483648
    %v675 = vmul.f32 %v674, 1.442695
    %v676 = vpow.pop %v675
    %v677 = vadd.f32 %v676, 1.0
    %v678 = vrcp.pop %v677
    %v679 = vmul.f32 1.0, %v678
    %v680 = vtanh.pop %v665
    %v681 = vxor.u32 %v666, 2147483648
    %v682 = vmul.f32 %v681, 1.442695
    %v683 = vpow.pop %v682
    %v684 = vadd.f32 %v683, 1.0
    %v685 = vrcp.pop %v684
    %v686 = vmul.f32 1.0, %v685
    %v687 = vmul.f32 %v679, %v667
    %v688 = vmul.f32 %v673, %v680
    %v689 = vadd.f32 %v687, %v688
    %v690 = vtanh.pop %v689
    %v691 = vmul.f32 %v686, %v690
    %692 = vst [vmem:[#allocation3] sm:$0xff] %v691
    %693 = vst [vmem:[#allocation4] sm:$0xff] %v689
    %v694 = vld [vmem:[#allocation2 + $0x20] sm:$0xff]
    %v695 = vld [vmem:[#allocation2 + $0x28] sm:$0xff]
    %v696 = vld [vmem:[#allocation2 + $0x30] sm:$0xff]
    %v697 = vld [vmem:[#allocation2 + $0x38] sm:$0xff]
    %v698 = vld [vmem:[#allocation3] sm:$0xff]
    %v699 = vld [vmem:[#allocation10] sm:$0xff]
    %v700 = vld [vmem:[#allocation10 + $0x8] sm:$0xff]
    %v701 = vld [vmem:[#allocation10 + $0x10] sm:$0xff]
    %v702 = vld [vmem:[#allocation10 + $0x18] sm:$0xff]
    %v703 = vld [vmem:[#allocation10 + $0x20] sm:$0xff]
    %v704 = vld [vmem:[#allocation10 + $0x28] sm:$0xff]
    %v705 = vld [vmem:[#allocation10 + $0x30] sm:$0xff]
    %v706 = vld [vmem:[#allocation10 + $0x38] sm:$0xff]
    %v707 = vld [vmem:[#allocation10 + $0x40] sm:$0xff]
    %v708 = vld [vmem:[#allocation10 + $0x48] sm:$0xff]
    %v709 = vld [vmem:[#allocation10 + $0x50] sm:$0xff]
    %v710 = vld [vmem:[#allocation10 + $0x58] sm:$0xff]
    %v711 = vld [vmem:[#allocation10 + $0x60] sm:$0xff]
    %v712 = vld [vmem:[#allocation10 + $0x68] sm:$0xff]
    %v713 = vld [vmem:[#allocation10 + $0x70] sm:$0xff]
    %v714 = vld [vmem:[#allocation10 + $0x78] sm:$0xff]
    %v715 = vld [vmem:[#allocation10 + $0x80] sm:$0xff]
    %v716 = vld [vmem:[#allocation10 + $0x88] sm:$0xff]
    %v717 = vld [vmem:[#allocation10 + $0x90] sm:$0xff]
    %v718 = vld [vmem:[#allocation10 + $0x98] sm:$0xff]
    %v719 = vld [vmem:[#allocation10 + $0xa0] sm:$0xff]
    %v720 = vld [vmem:[#allocation10 + $0xa8] sm:$0xff]
    %v721 = vld [vmem:[#allocation10 + $0xb0] sm:$0xff]
    %v722 = vld [vmem:[#allocation10 + $0xb8] sm:$0xff]
    %v723 = vld [vmem:[#allocation10 + $0xc0] sm:$0xff]
    %v724 = vld [vmem:[#allocation10 + $0xc8] sm:$0xff]
    %v725 = vld [vmem:[#allocation10 + $0xd0] sm:$0xff]
    %v726 = vld [vmem:[#allocation10 + $0xd8] sm:$0xff]
    %v727 = vld [vmem:[#allocation10 + $0xe0] sm:$0xff]
    %v728 = vld [vmem:[#allocation10 + $0xe8] sm:$0xff]
    %v729 = vld [vmem:[#allocation10 + $0xf0] sm:$0xff]
    %v730 = vld [vmem:[#allocation10 + $0xf8] sm:$0xff]
    %v731 = vld [vmem:[#allocation10 + $0x100] sm:$0xff]
    %v732 = vld [vmem:[#allocation10 + $0x108] sm:$0xff]
    %v733 = vld [vmem:[#allocation10 + $0x110] sm:$0xff]
    %v734 = vld [vmem:[#allocation10 + $0x118] sm:$0xff]
    %v735 = vld [vmem:[#allocation10 + $0x120] sm:$0xff]
    %v736 = vld [vmem:[#allocation10 + $0x128] sm:$0xff]
    %v737 = vld [vmem:[#allocation10 + $0x130] sm:$0xff]
    %v738 = vld [vmem:[#allocation10 + $0x138] sm:$0xff]
    %v739 = vld [vmem:[#allocation10 + $0x140] sm:$0xff]
    %v740 = vld [vmem:[#allocation10 + $0x148] sm:$0xff]
    %v741 = vld [vmem:[#allocation10 + $0x150] sm:$0xff]
    %v742 = vld [vmem:[#allocation10 + $0x158] sm:$0xff]
    %v743 = vld [vmem:[#allocation10 + $0x160] sm:$0xff]
    %v744 = vld [vmem:[#allocation10 + $0x168] sm:$0xff]
    %v745 = vld [vmem:[#allocation10 + $0x170] sm:$0xff]
    %v746 = vld [vmem:[#allocation10 + $0x178] sm:$0xff]
    %v747 = vld [vmem:[#allocation10 + $0x180] sm:$0xff]
    %v748 = vld [vmem:[#allocation10 + $0x188] sm:$0xff]
    %v749 = vld [vmem:[#allocation10 + $0x190] sm:$0xff]
    %v750 = vld [vmem:[#allocation10 + $0x198] sm:$0xff]
    %v751 = vld [vmem:[#allocation10 + $0x1a0] sm:$0xff]
    %v752 = vld [vmem:[#allocation10 + $0x1a8] sm:$0xff]
    %v753 = vld [vmem:[#allocation10 + $0x1b0] sm:$0xff]
    %v754 = vld [vmem:[#allocation10 + $0x1b8] sm:$0xff]
    %v755 = vld [vmem:[#allocation10 + $0x1c0] sm:$0xff]
    %v756 = vld [vmem:[#allocation10 + $0x1c8] sm:$0xff]
    %v757 = vld [vmem:[#allocation10 + $0x1d0] sm:$0xff]
    %v758 = vld [vmem:[#allocation10 + $0x1d8] sm:$0xff]
    %v759 = vld [vmem:[#allocation10 + $0x1e0] sm:$0xff]
    %v760 = vld [vmem:[#allocation10 + $0x1e8] sm:$0xff]
    %v761 = vld [vmem:[#allocation10 + $0x1f0] sm:$0xff]
    %v762 = vld [vmem:[#allocation10 + $0x1f8] sm:$0xff]
    %763 = vmatprep.subr.mxu0 %v700
    %764 = vmatpush1.msra.mxu0 %v699
    %765 = vmatprep.subr.mxu0 %v704
    %766 = vmatpush1.msra.mxu0 %v703
    %767 = vmatprep.subr.mxu0 %v708
    %768 = vmatpush1.msra.mxu0 %v707
    %769 = vmatprep.subr.mxu0 %v712
    %770 = vmatpush1.msra.mxu0 %v711
    %771 = vmatprep.subr.mxu0 %v716
    %772 = vmatpush1.msra.mxu0 %v715
    %773 = vmatprep.subr.mxu0 %v720
    %774 = vmatpush1.msra.mxu0 %v719
    %775 = vmatprep.subr.mxu0 %v724
    %776 = vmatpush1.msra.mxu0 %v723
    %777 = vmatprep.subr.mxu0 %v728
    %778 = vmatpush1.msra.mxu0 %v727
    %779 = vmatprep.subr.mxu0 %v732
    %780 = vmatpush1.msra.mxu0 %v731
    %781 = vmatprep.subr.mxu0 %v736
    %782 = vmatpush1.msra.mxu0 %v735
    %783 = vmatprep.subr.mxu0 %v740
    %784 = vmatpush1.msra.mxu0 %v739
    %785 = vmatprep.subr.mxu0 %v744
    %786 = vmatpush1.msra.mxu0 %v743
    %787 = vmatprep.subr.mxu0 %v748
    %788 = vmatpush1.msra.mxu0 %v747
    %789 = vmatprep.subr.mxu0 %v752
    %790 = vmatpush1.msra.mxu0 %v751
    %791 = vmatprep.subr.mxu0 %v756
    %792 = vmatpush1.msra.mxu0 %v755
    %793 = vmatprep.subr.mxu0 %v760
    %794 = vmatpush1.msra.mxu0 %v759
    %795 = vmatprep.subr.mxu0 0.0
    %796 = vmatpush1.msra.mxu0 0.0
    %797 = vmatprep.subr.mxu0 0.0
    %798 = vmatpush1.msra.mxu0 0.0
    %799 = vmatprep.subr.mxu0 0.0
    %800 = vmatpush1.msra.mxu0 0.0
    %801 = vmatprep.subr.mxu0 0.0
    %802 = vmatpush1.msra.mxu0 0.0
    %803 = vmatprep.subr.mxu0 0.0
    %804 = vmatpush1.msra.mxu0 0.0
    %805 = vmatprep.subr.mxu0 0.0
    %806 = vmatpush1.msra.mxu0 0.0
    %807 = vmatprep.subr.mxu0 0.0
    %808 = vmatpush1.msra.mxu0 0.0
    %809 = vmatprep.subr.mxu0 0.0
    %810 = vmatpush1.msra.mxu0 0.0
    %811 = vmatprep.subr.mxu0 0.0
    %812 = vmatpush1.msra.mxu0 0.0
    %813 = vmatprep.subr.mxu0 0.0
    %814 = vmatpush1.msra.mxu0 0.0
    %815 = vmatprep.subr.mxu0 0.0
    %816 = vmatpush1.msra.mxu0 0.0
    %817 = vmatprep.subr.mxu0 0.0
    %818 = vmatpush1.msra.mxu0 0.0
    %819 = vmatprep.subr.mxu0 0.0
    %820 = vmatpush1.msra.mxu0 0.0
    %821 = vmatprep.subr.mxu0 0.0
    %822 = vmatpush1.msra.mxu0 0.0
    %823 = vmatprep.subr.mxu0 0.0
    %824 = vmatpush1.msra.mxu0 0.0
    %825 = vmatprep.subr.mxu0 0.0
    %826 = vmatpush1.msra.mxu0 0.0
    %827 = vmatprep.mubr.f32.mxu0 0.0
    %828 = vmatmul.mubr.f32.gmra.mrb[0].mxu0 %v698
    %v829 = vpop.f32.mrb[0].mxu0
    %v830 = vadd.f32 0.0, %v829
    %v831 = vpop.f32.mrb[0].mxu0
    %v832 = vadd.f32 0.0, %v831
    %833 = vdwg.mxu0
    %834 = vmatprep.subr.mxu0 %v702
    %835 = vmatpush1.msra.mxu0 %v701
    %836 = vmatprep.subr.mxu0 %v706
    %837 = vmatpush1.msra.mxu0 %v705
    %838 = vmatprep.subr.mxu0 %v710
    %839 = vmatpush1.msra.mxu0 %v709
    %840 = vmatprep.subr.mxu0 %v714
    %841 = vmatpush1.msra.mxu0 %v713
    %842 = vmatprep.subr.mxu0 %v718
    %843 = vmatpush1.msra.mxu0 %v717
    %844 = vmatprep.subr.mxu0 %v722
    %845 = vmatpush1.msra.mxu0 %v721
    %846 = vmatprep.subr.mxu0 %v726
    %847 = vmatpush1.msra.mxu0 %v725
    %848 = vmatprep.subr.mxu0 %v730
    %849 = vmatpush1.msra.mxu0 %v729
    %850 = vmatprep.subr.mxu0 %v734
    %851 = vmatpush1.msra.mxu0 %v733
    %852 = vmatprep.subr.mxu0 %v738
    %853 = vmatpush1.msra.mxu0 %v737
    %854 = vmatprep.subr.mxu0 %v742
    %855 = vmatpush1.msra.mxu0 %v741
    %856 = vmatprep.subr.mxu0 %v746
    %857 = vmatpush1.msra.mxu0 %v745
    %858 = vmatprep.subr.mxu0 %v750
    %859 = vmatpush1.msra.mxu0 %v749
    %860 = vmatprep.subr.mxu0 %v754
    %861 = vmatpush1.msra.mxu0 %v753
    %862 = vmatprep.subr.mxu0 %v758
    %863 = vmatpush1.msra.mxu0 %v757
    %864 = vmatprep.subr.mxu0 %v762
    %865 = vmatpush1.msra.mxu0 %v761
    %866 = vmatprep.subr.mxu0 0.0
    %867 = vmatpush1.msra.mxu0 0.0
    %868 = vmatprep.subr.mxu0 0.0
    %869 = vmatpush1.msra.mxu0 0.0
    %870 = vmatprep.subr.mxu0 0.0
    %871 = vmatpush1.msra.mxu0 0.0
    %872 = vmatprep.subr.mxu0 0.0
    %873 = vmatpush1.msra.mxu0 0.0
    %874 = vmatprep.subr.mxu0 0.0
    %875 = vmatpush1.msra.mxu0 0.0
    %876 = vmatprep.subr.mxu0 0.0
    %877 = vmatpush1.msra.mxu0 0.0
    %878 = vmatprep.subr.mxu0 0.0
    %879 = vmatpush1.msra.mxu0 0.0
    %880 = vmatprep.subr.mxu0 0.0
    %881 = vmatpush1.msra.mxu0 0.0
    %882 = vmatprep.subr.mxu0 0.0
    %883 = vmatpush1.msra.mxu0 0.0
    %884 = vmatprep.subr.mxu0 0.0
    %885 = vmatpush1.msra.mxu0 0.0
    %886 = vmatprep.subr.mxu0 0.0
    %887 = vmatpush1.msra.mxu0 0.0
    %888 = vmatprep.subr.mxu0 0.0
    %889 = vmatpush1.msra.mxu0 0.0
    %890 = vmatprep.subr.mxu0 0.0
    %891 = vmatpush1.msra.mxu0 0.0
    %892 = vmatprep.subr.mxu0 0.0
    %893 = vmatpush1.msra.mxu0 0.0
    %894 = vmatprep.subr.mxu0 0.0
    %895 = vmatpush1.msra.mxu0 0.0
    %896 = vmatprep.subr.mxu0 0.0
    %897 = vmatpush1.msra.mxu0 0.0
    %898 = vmatprep.mubr.f32.mxu0 0.0
    %899 = vmatmul.mubr.f32.gmra.mrb[0].mxu0 %v698
    %v900 = vpop.f32.mrb[0].mxu0
    %v901 = vadd.f32 0.0, %v900
    %v902 = vpop.f32.mrb[0].mxu0
    %v903 = vadd.f32 0.0, %v902
    %904 = vdwg.mxu0
    %v905 = vadd.f32 %v694, %v830
    %v906 = vadd.f32 %v695, %v832
    %v907 = vadd.f32 %v696, %v901
    %v908 = vadd.f32 %v697, %v903
    %v909 = vld [vmem:[%s4] sm:$0xff]
    %v910 = vld [vmem:[%s4 + $0x8] sm:$0xff]
    %v911 = vld [vmem:[%s4 + $0x10] sm:$0xff]
    %v912 = vld [vmem:[%s4 + $0x18] sm:$0xff]
    %v913 = vadd.f32 %v905, %v909
    %v914 = vadd.f32 %v906, %v910
    %v915 = vadd.f32 %v907, %v911
    %v916 = vadd.f32 %v908, %v912
    %v917 = vld [vmem:[#allocation4] sm:$0xff]
    %v918 = vxor.u32 %v913, 2147483648
    %v919 = vmul.f32 %v918, 1.442695
    %v920 = vpow.pop %v919
    %v921 = vadd.f32 %v920, 1.0
    %v922 = vrcp.pop %v921
    %v923 = vmul.f32 1.0, %v922
    %v924 = vxor.u32 %v914, 2147483648
    %v925 = vmul.f32 %v924, 1.442695
    %v926 = vpow.pop %v925
    %v927 = vadd.f32 %v926, 1.0
    %v928 = vrcp.pop %v927
    %v929 = vmul.f32 1.0, %v928
    %v930 = vtanh.pop %v915
    %v931 = vxor.u32 %v916, 2147483648
    %v932 = vmul.f32 %v931, 1.442695
    %v933 = vpow.pop %v932
    %v934 = vadd.f32 %v933, 1.0
    %v935 = vrcp.pop %v934
    %v936 = vmul.f32 1.0, %v935
    %v937 = vmul.f32 %v929, %v917
    %v938 = vmul.f32 %v923, %v930
    %v939 = vadd.f32 %v937, %v938
    %v940 = vtanh.pop %v939
    %v941 = vmul.f32 %v936, %v940
    %942 = vst [vmem:[#allocation3] sm:$0xff] %v941
    %943 = vst [vmem:[#allocation4] sm:$0xff] %v939
    %v944 = vld [vmem:[#allocation2 + $0x40] sm:$0xff]
    %v945 = vld [vmem:[#allocation2 + $0x48] sm:$0xff]
    %v946 = vld [vmem:[#allocation2 + $0x50] sm:$0xff]
    %v947 = vld [vmem:[#allocation2 + $0x58] sm:$0xff]
    %v948 = vld [vmem:[#allocation3] sm:$0xff]
    %v949 = vld [vmem:[#allocation10] sm:$0xff]
    %v950 = vld [vmem:[#allocation10 + $0x8] sm:$0xff]
    %v951 = vld [vmem:[#allocation10 + $0x10] sm:$0xff]
    %v952 = vld [vmem:[#allocation10 + $0x18] sm:$0xff]
    %v953 = vld [vmem:[#allocation10 + $0x20] sm:$0xff]
    %v954 = vld [vmem:[#allocation10 + $0x28] sm:$0xff]
    %v955 = vld [vmem:[#allocation10 + $0x30] sm:$0xff]
    %v956 = vld [vmem:[#allocation10 + $0x38] sm:$0xff]
    %v957 = vld [vmem:[#allocation10 + $0x40] sm:$0xff]
    %v958 = vld [vmem:[#allocation10 + $0x48] sm:$0xff]
    %v959 = vld [vmem:[#allocation10 + $0x50] sm:$0xff]
    %v960 = vld [vmem:[#allocation10 + $0x58] sm:$0xff]
    %v961 = vld [vmem:[#allocation10 + $0x60] sm:$0xff]
    %v962 = vld [vmem:[#allocation10 + $0x68] sm:$0xff]
    %v963 = vld [vmem:[#allocation10 + $0x70] sm:$0xff]
    %v964 = vld [vmem:[#allocation10 + $0x78] sm:$0xff]
    %v965 = vld [vmem:[#allocation10 + $0x80] sm:$0xff]
    %v966 = vld [vmem:[#allocation10 + $0x88] sm:$0xff]
    %v967 = vld [vmem:[#allocation10 + $0x90] sm:$0xff]
    %v968 = vld [vmem:[#allocation10 + $0x98] sm:$0xff]
    %v969 = vld [vmem:[#allocation10 + $0xa0] sm:$0xff]
    %v970 = vld [vmem:[#allocation10 + $0xa8] sm:$0xff]
    %v971 = vld [vmem:[#allocation10 + $0xb0] sm:$0xff]
    %v972 = vld [vmem:[#allocation10 + $0xb8] sm:$0xff]
    %v973 = vld [vmem:[#allocation10 + $0xc0] sm:$0xff]
    %v974 = vld [vmem:[#allocation10 + $0xc8] sm:$0xff]
    %v975 = vld [vmem:[#allocation10 + $0xd0] sm:$0xff]
    %v976 = vld [vmem:[#allocation10 + $0xd8] sm:$0xff]
    %v977 = vld [vmem:[#allocation10 + $0xe0] sm:$0xff]
    %v978 = vld [vmem:[#allocation10 + $0xe8] sm:$0xff]
    %v979 = vld [vmem:[#allocation10 + $0xf0] sm:$0xff]
    %v980 = vld [vmem:[#allocation10 + $0xf8] sm:$0xff]
    %v981 = vld [vmem:[#allocation10 + $0x100] sm:$0xff]
    %v982 = vld [vmem:[#allocation10 + $0x108] sm:$0xff]
    %v983 = vld [vmem:[#allocation10 + $0x110] sm:$0xff]
    %v984 = vld [vmem:[#allocation10 + $0x118] sm:$0xff]
    %v985 = vld [vmem:[#allocation10 + $0x120] sm:$0xff]
    %v986 = vld [vmem:[#allocation10 + $0x128] sm:$0xff]
    %v987 = vld [vmem:[#allocation10 + $0x130] sm:$0xff]
    %v988 = vld [vmem:[#allocation10 + $0x138] sm:$0xff]
    %v989 = vld [vmem:[#allocation10 + $0x140] sm:$0xff]
    %v990 = vld [vmem:[#allocation10 + $0x148] sm:$0xff]
    %v991 = vld [vmem:[#allocation10 + $0x150] sm:$0xff]
    %v992 = vld [vmem:[#allocation10 + $0x158] sm:$0xff]
    %v993 = vld [vmem:[#allocation10 + $0x160] sm:$0xff]
    %v994 = vld [vmem:[#allocation10 + $0x168] sm:$0xff]
    %v995 = vld [vmem:[#allocation10 + $0x170] sm:$0xff]
    %v996 = vld [vmem:[#allocation10 + $0x178] sm:$0xff]
    %v997 = vld [vmem:[#allocation10 + $0x180] sm:$0xff]
    %v998 = vld [vmem:[#allocation10 + $0x188] sm:$0xff]
    %v999 = vld [vmem:[#allocation10 + $0x190] sm:$0xff]
    %v1000 = vld [vmem:[#allocation10 + $0x198] sm:$0xff]
    %v1001 = vld [vmem:[#allocation10 + $0x1a0] sm:$0xff]
    %v1002 = vld [vmem:[#allocation10 + $0x1a8] sm:$0xff]
    %v1003 = vld [vmem:[#allocation10 + $0x1b0] sm:$0xff]
    %v1004 = vld [vmem:[#allocation10 + $0x1b8] sm:$0xff]
    %v1005 = vld [vmem:[#allocation10 + $0x1c0] sm:$0xff]
    %v1006 = vld [vmem:[#allocation10 + $0x1c8] sm:$0xff]
    %v1007 = vld [vmem:[#allocation10 + $0x1d0] sm:$0xff]
    %v1008 = vld [vmem:[#allocation10 + $0x1d8] sm:$0xff]
    %v1009 = vld [vmem:[#allocation10 + $0x1e0] sm:$0xff]
    %v1010 = vld [vmem:[#allocation10 + $0x1e8] sm:$0xff]
    %v1011 = vld [vmem:[#allocation10 + $0x1f0] sm:$0xff]
    %v1012 = vld [vmem:[#allocation10 + $0x1f8] sm:$0xff]
    %1013 = vmatprep.subr.mxu0 %v950
    %1014 = vmatpush1.msra.mxu0 %v949
    %1015 = vmatprep.subr.mxu0 %v954
    %1016 = vmatpush1.msra.mxu0 %v953
    %1017 = vmatprep.subr.mxu0 %v958
    %1018 = vmatpush1.msra.mxu0 %v957
    %1019 = vmatprep.subr.mxu0 %v962
    %1020 = vmatpush1.msra.mxu0 %v961
    %1021 = vmatprep.subr.mxu0 %v966
    %1022 = vmatpush1.msra.mxu0 %v965
    %1023 = vmatprep.subr.mxu0 %v970
    %1024 = vmatpush1.msra.mxu0 %v969
    %1025 = vmatprep.subr.mxu0 %v974
    %1026 = vmatpush1.msra.mxu0 %v973
    %1027 = vmatprep.subr.mxu0 %v978
    %1028 = vmatpush1.msra.mxu0 %v977
    %1029 = vmatprep.subr.mxu0 %v982
    %1030 = vmatpush1.msra.mxu0 %v981
    %1031 = vmatprep.subr.mxu0 %v986
    %1032 = vmatpush1.msra.mxu0 %v985
    %1033 = vmatprep.subr.mxu0 %v990
    %1034 = vmatpush1.msra.mxu0 %v989
    %1035 = vmatprep.subr.mxu0 %v994
    %1036 = vmatpush1.msra.mxu0 %v993
    %1037 = vmatprep.subr.mxu0 %v998
    %1038 = vmatpush1.msra.mxu0 %v997
    %1039 = vmatprep.subr.mxu0 %v1002
    %1040 = vmatpush1.msra.mxu0 %v1001
    %1041 = vmatprep.subr.mxu0 %v1006
    %1042 = vmatpush1.msra.mxu0 %v1005
    %1043 = vmatprep.subr.mxu0 %v1010
    %1044 = vmatpush1.msra.mxu0 %v1009
    %1045 = vmatprep.subr.mxu0 0.0
    %1046 = vmatpush1.msra.mxu0 0.0
    %1047 = vmatprep.subr.mxu0 0.0
    %1048 = vmatpush1.msra.mxu0 0.0
    %1049 = vmatprep.subr.mxu0 0.0
    %1050 = vmatpush1.msra.mxu0 0.0
    %1051 = vmatprep.subr.mxu0 0.0
    %1052 = vmatpush1.msra.mxu0 0.0
    %1053 = vmatprep.subr.mxu0 0.0
    %1054 = vmatpush1.msra.mxu0 0.0
    %1055 = vmatprep.subr.mxu0 0.0
    %1056 = vmatpush1.msra.mxu0 0.0
    %1057 = vmatprep.subr.mxu0 0.0
    %1058 = vmatpush1.msra.mxu0 0.0
    %1059 = vmatprep.subr.mxu0 0.0
    %1060 = vmatpush1.msra.mxu0 0.0
    %1061 = vmatprep.subr.mxu0 0.0
    %1062 = vmatpush1.msra.mxu0 0.0
    %1063 = vmatprep.subr.mxu0 0.0
    %1064 = vmatpush1.msra.mxu0 0.0
    %1065 = vmatprep.subr.mxu0 0.0
    %1066 = vmatpush1.msra.mxu0 0.0
    %1067 = vmatprep.subr.mxu0 0.0
    %1068 = vmatpush1.msra.mxu0 0.0
    %1069 = vmatprep.subr.mxu0 0.0
    %1070 = vmatpush1.msra.mxu0 0.0
    %1071 = vmatprep.subr.mxu0 0.0
    %1072 = vmatpush1.msra.mxu0 0.0
    %1073 = vmatprep.subr.mxu0 0.0
    %1074 = vmatpush1.msra.mxu0 0.0
    %1075 = vmatprep.subr.mxu0 0.0
    %1076 = vmatpush1.msra.mxu0 0.0
    %1077 = vmatprep.mubr.f32.mxu0 0.0
    %1078 = vmatmul.mubr.f32.gmra.mrb[0].mxu0 %v948
    %v1079 = vpop.f32.mrb[0].mxu0
    %v1080 = vadd.f32 0.0, %v1079
    %v1081 = vpop.f32.mrb[0].mxu0
    %v1082 = vadd.f32 0.0, %v1081
    %1083 = vdwg.mxu0
    %1084 = vmatprep.subr.mxu0 %v952
    %1085 = vmatpush1.msra.mxu0 %v951
    %1086 = vmatprep.subr.mxu0 %v956
    %1087 = vmatpush1.msra.mxu0 %v955
    %1088 = vmatprep.subr.mxu0 %v960
    %1089 = vmatpush1.msra.mxu0 %v959
    %1090 = vmatprep.subr.mxu0 %v964
    %1091 = vmatpush1.msra.mxu0 %v963
    %1092 = vmatprep.subr.mxu0 %v968
    %1093 = vmatpush1.msra.mxu0 %v967
    %1094 = vmatprep.subr.mxu0 %v972
    %1095 = vmatpush1.msra.mxu0 %v971
    %1096 = vmatprep.subr.mxu0 %v976
    %1097 = vmatpush1.msra.mxu0 %v975
    %1098 = vmatprep.subr.mxu0 %v980
    %1099 = vmatpush1.msra.mxu0 %v979
    %1100 = vmatprep.subr.mxu0 %v984
    %1101 = vmatpush1.msra.mxu0 %v983
    %1102 = vmatprep.subr.mxu0 %v988
    %1103 = vmatpush1.msra.mxu0 %v987
    %1104 = vmatprep.subr.mxu0 %v992
    %1105 = vmatpush1.msra.mxu0 %v991
    %1106 = vmatprep.subr.mxu0 %v996
    %1107 = vmatpush1.msra.mxu0 %v995
    %1108 = vmatprep.subr.mxu0 %v1000
    %1109 = vmatpush1.msra.mxu0 %v999
    %1110 = vmatprep.subr.mxu0 %v1004
    %1111 = vmatpush1.msra.mxu0 %v1003
    %1112 = vmatprep.subr.mxu0 %v1008
    %1113 = vmatpush1.msra.mxu0 %v1007
    %1114 = vmatprep.subr.mxu0 %v1012
    %1115 = vmatpush1.msra.mxu0 %v1011
    %1116 = vmatprep.subr.mxu0 0.0
    %1117 = vmatpush1.msra.mxu0 0.0
    %1118 = vmatprep.subr.mxu0 0.0
    %1119 = vmatpush1.msra.mxu0 0.0
    %1120 = vmatprep.subr.mxu0 0.0
    %1121 = vmatpush1.msra.mxu0 0.0
    %1122 = vmatprep.subr.mxu0 0.0
    %1123 = vmatpush1.msra.mxu0 0.0
    %1124 = vmatprep.subr.mxu0 0.0
    %1125 = vmatpush1.msra.mxu0 0.0
    %1126 = vmatprep.subr.mxu0 0.0
    %1127 = vmatpush1.msra.mxu0 0.0
    %1128 = vmatprep.subr.mxu0 0.0
    %1129 = vmatpush1.msra.mxu0 0.0
    %1130 = vmatprep.subr.mxu0 0.0
    %1131 = vmatpush1.msra.mxu0 0.0
    %1132 = vmatprep.subr.mxu0 0.0
    %1133 = vmatpush1.msra.mxu0 0.0
    %1134 = vmatprep.subr.mxu0 0.0
    %1135 = vmatpush1.msra.mxu0 0.0
    %1136 = vmatprep.subr.mxu0 0.0
    %1137 = vmatpush1.msra.mxu0 0.0
    %1138 = vmatprep.subr.mxu0 0.0
    %1139 = vmatpush1.msra.mxu0 0.0
    %1140 = vmatprep.subr.mxu0 0.0
    %1141 = vmatpush1.msra.mxu0 0.0
    %1142 = vmatprep.subr.mxu0 0.0
    %1143 = vmatpush1.msra.mxu0 0.0
    %1144 = vmatprep.subr.mxu0 0.0
    %1145 = vmatpush1.msra.mxu0 0.0
    %1146 = vmatprep.subr.mxu0 0.0
    %1147 = vmatpush1.msra.mxu0 0.0
    %1148 = vmatprep.mubr.f32.mxu0 0.0
    %1149 = vmatmul.mubr.f32.gmra.mrb[0].mxu0 %v948
    %v1150 = vpop.f32.mrb[0].mxu0
    %v1151 = vadd.f32 0.0, %v1150
    %v1152 = vpop.f32.mrb[0].mxu0
    %v1153 = vadd.f32 0.0, %v1152
    %1154 = vdwg.mxu0
    %v1155 = vadd.f32 %v944, %v1080
    %v1156 = vadd.f32 %v945, %v1082
    %v1157 = vadd.f32 %v946, %v1151
    %v1158 = vadd.f32 %v947, %v1153
    %v1159 = vld [vmem:[%s4] sm:$0xff]
    %v1160 = vld [vmem:[%s4 + $0x8] sm:$0xff]
    %v1161 = vld [vmem:[%s4 + $0x10] sm:$0xff]
    %v1162 = vld [vmem:[%s4 + $0x18] sm:$0xff]
    %v1163 = vadd.f32 %v1155, %v1159
    %v1164 = vadd.f32 %v1156, %v1160
    %v1165 = vadd.f32 %v1157, %v1161
    %v1166 = vadd.f32 %v1158, %v1162
    %v1167 = vld [vmem:[#allocation4] sm:$0xff]
    %v1168 = vxor.u32 %v1163, 2147483648
    %v1169 = vmul.f32 %v1168, 1.442695
    %v1170 = vpow.pop %v1169
    %v1171 = vadd.f32 %v1170, 1.0
    %v1172 = vrcp.pop %v1171
    %v1173 = vmul.f32 1.0, %v1172
    %v1174 = vxor.u32 %v1164, 2147483648
    %v1175 = vmul.f32 %v1174, 1.442695
    %v1176 = vpow.pop %v1175
    %v1177 = vadd.f32 %v1176, 1.0
    %v1178 = vrcp.pop %v1177
    %v1179 = vmul.f32 1.0, %v1178
    %v1180 = vtanh.pop %v1165
    %v1181 = vxor.u32 %v1166, 2147483648
    %v1182 = vmul.f32 %v1181, 1.442695
    %v1183 = vpow.pop %v1182
    %v1184 = vadd.f32 %v1183, 1.0
    %v1185 = vrcp.pop %v1184
    %v1186 = vmul.f32 1.0, %v1185
    %v1187 = vmul.f32 %v1179, %v1167
    %v1188 = vmul.f32 %v1173, %v1180
    %v1189 = vadd.f32 %v1187, %v1188
    %v1190 = vtanh.pop %v1189
    %v1191 = vmul.f32 %v1186, %v1190
    %1192 = vst [vmem:[#allocation3] sm:$0xff] %v1191
    %1193 = vst [vmem:[#allocation4] sm:$0xff] %v1189
    %v1194 = vld [vmem:[#allocation2 + $0x60] sm:$0xff]
    %v1195 = vld [vmem:[#allocation2 + $0x68] sm:$0xff]
    %v1196 = vld [vmem:[#allocation2 + $0x70] sm:$0xff]
    %v1197 = vld [vmem:[#allocation2 + $0x78] sm:$0xff]
    %v1198 = vld [vmem:[#allocation3] sm:$0xff]
    %v1199 = vld [vmem:[#allocation10] sm:$0xff]
    %v1200 = vld [vmem:[#allocation10 + $0x8] sm:$0xff]
    %v1201 = vld [vmem:[#allocation10 + $0x10] sm:$0xff]
    %v1202 = vld [vmem:[#allocation10 + $0x18] sm:$0xff]
    %v1203 = vld [vmem:[#allocation10 + $0x20] sm:$0xff]
    %v1204 = vld [vmem:[#allocation10 + $0x28] sm:$0xff]
    %v1205 = vld [vmem:[#allocation10 + $0x30] sm:$0xff]
    %v1206 = vld [vmem:[#allocation10 + $0x38] sm:$0xff]
    %v1207 = vld [vmem:[#allocation10 + $0x40] sm:$0xff]
    %v1208 = vld [vmem:[#allocation10 + $0x48] sm:$0xff]
    %v1209 = vld [vmem:[#allocation10 + $0x50] sm:$0xff]
    %v1210 = vld [vmem:[#allocation10 + $0x58] sm:$0xff]
    %v1211 = vld [vmem:[#allocation10 + $0x60] sm:$0xff]
    %v1212 = vld [vmem:[#allocation10 + $0x68] sm:$0xff]
    %v1213 = vld [vmem:[#allocation10 + $0x70] sm:$0xff]
    %v1214 = vld [vmem:[#allocation10 + $0x78] sm:$0xff]
    %v1215 = vld [vmem:[#allocation10 + $0x80] sm:$0xff]
    %v1216 = vld [vmem:[#allocation10 + $0x88] sm:$0xff]
    %v1217 = vld [vmem:[#allocation10 + $0x90] sm:$0xff]
    %v1218 = vld [vmem:[#allocation10 + $0x98] sm:$0xff]
    %v1219 = vld [vmem:[#allocation10 + $0xa0] sm:$0xff]
    %v1220 = vld [vmem:[#allocation10 + $0xa8] sm:$0xff]
    %v1221 = vld [vmem:[#allocation10 + $0xb0] sm:$0xff]
    %v1222 = vld [vmem:[#allocation10 + $0xb8] sm:$0xff]
    %v1223 = vld [vmem:[#allocation10 + $0xc0] sm:$0xff]
    %v1224 = vld [vmem:[#allocation10 + $0xc8] sm:$0xff]
    %v1225 = vld [vmem:[#allocation10 + $0xd0] sm:$0xff]
    %v1226 = vld [vmem:[#allocation10 + $0xd8] sm:$0xff]
    %v1227 = vld [vmem:[#allocation10 + $0xe0] sm:$0xff]
    %v1228 = vld [vmem:[#allocation10 + $0xe8] sm:$0xff]
    %v1229 = vld [vmem:[#allocation10 + $0xf0] sm:$0xff]
    %v1230 = vld [vmem:[#allocation10 + $0xf8] sm:$0xff]
    %v1231 = vld [vmem:[#allocation10 + $0x100] sm:$0xff]
    %v1232 = vld [vmem:[#allocation10 + $0x108] sm:$0xff]
    %v1233 = vld [vmem:[#allocation10 + $0x110] sm:$0xff]
    %v1234 = vld [vmem:[#allocation10 + $0x118] sm:$0xff]
    %v1235 = vld [vmem:[#allocation10 + $0x120] sm:$0xff]
    %v1236 = vld [vmem:[#allocation10 + $0x128] sm:$0xff]
    %v1237 = vld [vmem:[#allocation10 + $0x130] sm:$0xff]
    %v1238 = vld [vmem:[#allocation10 + $0x138] sm:$0xff]
    %v1239 = vld [vmem:[#allocation10 + $0x140] sm:$0xff]
    %v1240 = vld [vmem:[#allocation10 + $0x148] sm:$0xff]
    %v1241 = vld [vmem:[#allocation10 + $0x150] sm:$0xff]
    %v1242 = vld [vmem:[#allocation10 + $0x158] sm:$0xff]
    %v1243 = vld [vmem:[#allocation10 + $0x160] sm:$0xff]
    %v1244 = vld [vmem:[#allocation10 + $0x168] sm:$0xff]
    %v1245 = vld [vmem:[#allocation10 + $0x170] sm:$0xff]
    %v1246 = vld [vmem:[#allocation10 + $0x178] sm:$0xff]
    %v1247 = vld [vmem:[#allocation10 + $0x180] sm:$0xff]
    %v1248 = vld [vmem:[#allocation10 + $0x188] sm:$0xff]
    %v1249 = vld [vmem:[#allocation10 + $0x190] sm:$0xff]
    %v1250 = vld [vmem:[#allocation10 + $0x198] sm:$0xff]
    %v1251 = vld [vmem:[#allocation10 + $0x1a0] sm:$0xff]
    %v1252 = vld [vmem:[#allocation10 + $0x1a8] sm:$0xff]
    %v1253 = vld [vmem:[#allocation10 + $0x1b0] sm:$0xff]
    %v1254 = vld [vmem:[#allocation10 + $0x1b8] sm:$0xff]
    %v1255 = vld [vmem:[#allocation10 + $0x1c0] sm:$0xff]
    %v1256 = vld [vmem:[#allocation10 + $0x1c8] sm:$0xff]
    %v1257 = vld [vmem:[#allocation10 + $0x1d0] sm:$0xff]
    %v1258 = vld [vmem:[#allocation10 + $0x1d8] sm:$0xff]
    %v1259 = vld [vmem:[#allocation10 + $0x1e0] sm:$0xff]
    %v1260 = vld [vmem:[#allocation10 + $0x1e8] sm:$0xff]
    %v1261 = vld [vmem:[#allocation10 + $0x1f0] sm:$0xff]
    %v1262 = vld [vmem:[#allocation10 + $0x1f8] sm:$0xff]
    %1263 = vmatprep.subr.mxu0 %v1200
    %1264 = vmatpush1.msra.mxu0 %v1199
    %1265 = vmatprep.subr.mxu0 %v1204
    %1266 = vmatpush1.msra.mxu0 %v1203
    %1267 = vmatprep.subr.mxu0 %v1208
    %1268 = vmatpush1.msra.mxu0 %v1207
    %1269 = vmatprep.subr.mxu0 %v1212
    %1270 = vmatpush1.msra.mxu0 %v1211
    %1271 = vmatprep.subr.mxu0 %v1216
    %1272 = vmatpush1.msra.mxu0 %v1215
    %1273 = vmatprep.subr.mxu0 %v1220
    %1274 = vmatpush1.msra.mxu0 %v1219
    %1275 = vmatprep.subr.mxu0 %v1224
    %1276 = vmatpush1.msra.mxu0 %v1223
    %1277 = vmatprep.subr.mxu0 %v1228
    %1278 = vmatpush1.msra.mxu0 %v1227
    %1279 = vmatprep.subr.mxu0 %v1232
    %1280 = vmatpush1.msra.mxu0 %v1231
    %1281 = vmatprep.subr.mxu0 %v1236
    %1282 = vmatpush1.msra.mxu0 %v1235
    %1283 = vmatprep.subr.mxu0 %v1240
    %1284 = vmatpush1.msra.mxu0 %v1239
    %1285 = vmatprep.subr.mxu0 %v1244
    %1286 = vmatpush1.msra.mxu0 %v1243
    %1287 = vmatprep.subr.mxu0 %v1248
    %1288 = vmatpush1.msra.mxu0 %v1247
    %1289 = vmatprep.subr.mxu0 %v1252
    %1290 = vmatpush1.msra.mxu0 %v1251
    %1291 = vmatprep.subr.mxu0 %v1256
    %1292 = vmatpush1.msra.mxu0 %v1255
    %1293 = vmatprep.subr.mxu0 %v1260
    %1294 = vmatpush1.msra.mxu0 %v1259
    %1295 = vmatprep.subr.mxu0 0.0
    %1296 = vmatpush1.msra.mxu0 0.0
    %1297 = vmatprep.subr.mxu0 0.0
    %1298 = vmatpush1.msra.mxu0 0.0
    %1299 = vmatprep.subr.mxu0 0.0
    %1300 = vmatpush1.msra.mxu0 0.0
    %1301 = vmatprep.subr.mxu0 0.0
    %1302 = vmatpush1.msra.mxu0 0.0
    %1303 = vmatprep.subr.mxu0 0.0
    %1304 = vmatpush1.msra.mxu0 0.0
    %1305 = vmatprep.subr.mxu0 0.0
    %1306 = vmatpush1.msra.mxu0 0.0
    %1307 = vmatprep.subr.mxu0 0.0
    %1308 = vmatpush1.msra.mxu0 0.0
    %1309 = vmatprep.subr.mxu0 0.0
    %1310 = vmatpush1.msra.mxu0 0.0
    %1311 = vmatprep.subr.mxu0 0.0
    %1312 = vmatpush1.msra.mxu0 0.0
    %1313 = vmatprep.subr.mxu0 0.0
    %1314 = vmatpush1.msra.mxu0 0.0
    %1315 = vmatprep.subr.mxu0 0.0
    %1316 = vmatpush1.msra.mxu0 0.0
    %1317 = vmatprep.subr.mxu0 0.0
    %1318 = vmatpush1.msra.mxu0 0.0
    %1319 = vmatprep.subr.mxu0 0.0
    %1320 = vmatpush1.msra.mxu0 0.0
    %1321 = vmatprep.subr.mxu0 0.0
    %1322 = vmatpush1.msra.mxu0 0.0
    %1323 = vmatprep.subr.mxu0 0.0
    %1324 = vmatpush1.msra.mxu0 0.0
    %1325 = vmatprep.subr.mxu0 0.0
    %1326 = vmatpush1.msra.mxu0 0.0
    %1327 = vmatprep.mubr.f32.mxu0 0.0
    %1328 = vmatmul.mubr.f32.gmra.mrb[0].mxu0 %v1198
    %v1329 = vpop.f32.mrb[0].mxu0
    %v1330 = vadd.f32 0.0, %v1329
    %v1331 = vpop.f32.mrb[0].mxu0
    %v1332 = vadd.f32 0.0, %v1331
    %1333 = vdwg.mxu0
    %1334 = vmatprep.subr.mxu0 %v1202
    %1335 = vmatpush1.msra.mxu0 %v1201
    %1336 = vmatprep.subr.mxu0 %v1206
    %1337 = vmatpush1.msra.mxu0 %v1205
    %1338 = vmatprep.subr.mxu0 %v1210
    %1339 = vmatpush1.msra.mxu0 %v1209
    %1340 = vmatprep.subr.mxu0 %v1214
    %1341 = vmatpush1.msra.mxu0 %v1213
    %1342 = vmatprep.subr.mxu0 %v1218
    %1343 = vmatpush1.msra.mxu0 %v1217
    %1344 = vmatprep.subr.mxu0 %v1222
    %1345 = vmatpush1.msra.mxu0 %v1221
    %1346 = vmatprep.subr.mxu0 %v1226
    %1347 = vmatpush1.msra.mxu0 %v1225
    %1348 = vmatprep.subr.mxu0 %v1230
    %1349 = vmatpush1.msra.mxu0 %v1229
    %1350 = vmatprep.subr.mxu0 %v1234
    %1351 = vmatpush1.msra.mxu0 %v1233
    %1352 = vmatprep.subr.mxu0 %v1238
    %1353 = vmatpush1.msra.mxu0 %v1237
    %1354 = vmatprep.subr.mxu0 %v1242
    %1355 = vmatpush1.msra.mxu0 %v1241
    %1356 = vmatprep.subr.mxu0 %v1246
    %1357 = vmatpush1.msra.mxu0 %v1245
    %1358 = vmatprep.subr.mxu0 %v1250
    %1359 = vmatpush1.msra.mxu0 %v1249
    %1360 = vmatprep.subr.mxu0 %v1254
    %1361 = vmatpush1.msra.mxu0 %v1253
    %1362 = vmatprep.subr.mxu0 %v1258
    %1363 = vmatpush1.msra.mxu0 %v1257
    %1364 = vmatprep.subr.mxu0 %v1262
    %1365 = vmatpush1.msra.mxu0 %v1261
    %1366 = vmatprep.subr.mxu0 0.0
    %1367 = vmatpush1.msra.mxu0 0.0
    %1368 = vmatprep.subr.mxu0 0.0
    %1369 = vmatpush1.msra.mxu0 0.0
    %1370 = vmatprep.subr.mxu0 0.0
    %1371 = vmatpush1.msra.mxu0 0.0
    %1372 = vmatprep.subr.mxu0 0.0
    %1373 = vmatpush1.msra.mxu0 0.0
    %1374 = vmatprep.subr.mxu0 0.0
    %1375 = vmatpush1.msra.mxu0 0.0
    %1376 = vmatprep.subr.mxu0 0.0
    %1377 = vmatpush1.msra.mxu0 0.0
    %1378 = vmatprep.subr.mxu0 0.0
    %1379 = vmatpush1.msra.mxu0 0.0
    %1380 = vmatprep.subr.mxu0 0.0
    %1381 = vmatpush1.msra.mxu0 0.0
    %1382 = vmatprep.subr.mxu0 0.0
    %1383 = vmatpush1.msra.mxu0 0.0
    %1384 = vmatprep.subr.mxu0 0.0
    %1385 = vmatpush1.msra.mxu0 0.0
    %1386 = vmatprep.subr.mxu0 0.0
    %1387 = vmatpush1.msra.mxu0 0.0
    %1388 = vmatprep.subr.mxu0 0.0
    %1389 = vmatpush1.msra.mxu0 0.0
    %1390 = vmatprep.subr.mxu0 0.0
    %1391 = vmatpush1.msra.mxu0 0.0
    %1392 = vmatprep.subr.mxu0 0.0
    %1393 = vmatpush1.msra.mxu0 0.0
    %1394 = vmatprep.subr.mxu0 0.0
    %1395 = vmatpush1.msra.mxu0 0.0
    %1396 = vmatprep.subr.mxu0 0.0
    %1397 = vmatpush1.msra.mxu0 0.0
    %1398 = vmatprep.mubr.f32.mxu0 0.0
    %1399 = vmatmul.mubr.f32.gmra.mrb[0].mxu0 %v1198
    %v1400 = vpop.f32.mrb[0].mxu0
    %v1401 = vadd.f32 0.0, %v1400
    %v1402 = vpop.f32.mrb[0].mxu0
    %v1403 = vadd.f32 0.0, %v1402
    %1404 = vdwg.mxu0
    %v1405 = vadd.f32 %v1194, %v1330
    %v1406 = vadd.f32 %v1195, %v1332
    %v1407 = vadd.f32 %v1196, %v1401
    %v1408 = vadd.f32 %v1197, %v1403
    %v1409 = vld [vmem:[%s4] sm:$0xff]
    %v1410 = vld [vmem:[%s4 + $0x8] sm:$0xff]
    %v1411 = vld [vmem:[%s4 + $0x10] sm:$0xff]
    %v1412 = vld [vmem:[%s4 + $0x18] sm:$0xff]
    %v1413 = vadd.f32 %v1405, %v1409
    %v1414 = vadd.f32 %v1406, %v1410
    %v1415 = vadd.f32 %v1407, %v1411
    %v1416 = vadd.f32 %v1408, %v1412
    %v1417 = vld [vmem:[#allocation4] sm:$0xff]
    %v1418 = vxor.u32 %v1413, 2147483648
    %v1419 = vmul.f32 %v1418, 1.442695
    %v1420 = vpow.pop %v1419
    %v1421 = vadd.f32 %v1420, 1.0
    %v1422 = vrcp.pop %v1421
    %v1423 = vmul.f32 1.0, %v1422
    %v1424 = vxor.u32 %v1414, 2147483648
    %v1425 = vmul.f32 %v1424, 1.442695
    %v1426 = vpow.pop %v1425
    %v1427 = vadd.f32 %v1426, 1.0
    %v1428 = vrcp.pop %v1427
    %v1429 = vmul.f32 1.0, %v1428
    %v1430 = vtanh.pop %v1415
    %v1431 = vxor.u32 %v1416, 2147483648
    %v1432 = vmul.f32 %v1431, 1.442695
    %v1433 = vpow.pop %v1432
    %v1434 = vadd.f32 %v1433, 1.0
    %v1435 = vrcp.pop %v1434
    %v1436 = vmul.f32 1.0, %v1435
    %v1437 = vmul.f32 %v1429, %v1417
    %v1438 = vmul.f32 %v1423, %v1430
    %v1439 = vadd.f32 %v1437, %v1438
    %v1440 = vtanh.pop %v1439
    %v1441 = vmul.f32 %v1436, %v1440
    %1442 = vst [vmem:[#allocation3] sm:$0xff] %v1441
    %1443 = vst [vmem:[#allocation4] sm:$0xff] %v1439
    %v1444 = vld [vmem:[#allocation2 + $0x80] sm:$0xff]
    %v1445 = vld [vmem:[#allocation2 + $0x88] sm:$0xff]
    %v1446 = vld [vmem:[#allocation2 + $0x90] sm:$0xff]
    %v1447 = vld [vmem:[#allocation2 + $0x98] sm:$0xff]
    %v1448 = vld [vmem:[#allocation3] sm:$0xff]
    %v1449 = vld [vmem:[#allocation10] sm:$0xff]
    %v1450 = vld [vmem:[#allocation10 + $0x8] sm:$0xff]
    %v1451 = vld [vmem:[#allocation10 + $0x10] sm:$0xff]
    %v1452 = vld [vmem:[#allocation10 + $0x18] sm:$0xff]
    %v1453 = vld [vmem:[#allocation10 + $0x20] sm:$0xff]
    %v1454 = vld [vmem:[#allocation10 + $0x28] sm:$0xff]
    %v1455 = vld [vmem:[#allocation10 + $0x30] sm:$0xff]
    %v1456 = vld [vmem:[#allocation10 + $0x38] sm:$0xff]
    %v1457 = vld [vmem:[#allocation10 + $0x40] sm:$0xff]
    %v1458 = vld [vmem:[#allocation10 + $0x48] sm:$0xff]
    %v1459 = vld [vmem:[#allocation10 + $0x50] sm:$0xff]
    %v1460 = vld [vmem:[#allocation10 + $0x58] sm:$0xff]
    %v1461 = vld [vmem:[#allocation10 + $0x60] sm:$0xff]
    %v1462 = vld [vmem:[#allocation10 + $0x68] sm:$0xff]
    %v1463 = vld [vmem:[#allocation10 + $0x70] sm:$0xff]
    %v1464 = vld [vmem:[#allocation10 + $0x78] sm:$0xff]
    %v1465 = vld [vmem:[#allocation10 + $0x80] sm:$0xff]
    %v1466 = vld [vmem:[#allocation10 + $0x88] sm:$0xff]
    %v1467 = vld [vmem:[#allocation10 + $0x90] sm:$0xff]
    %v1468 = vld [vmem:[#allocation10 + $0x98] sm:$0xff]
    %v1469 = vld [vmem:[#allocation10 + $0xa0] sm:$0xff]
    %v1470 = vld [vmem:[#allocation10 + $0xa8] sm:$0xff]
    %v1471 = vld [vmem:[#allocation10 + $0xb0] sm:$0xff]
    %v1472 = vld [vmem:[#allocation10 + $0xb8] sm:$0xff]
    %v1473 = vld [vmem:[#allocation10 + $0xc0] sm:$0xff]
    %v1474 = vld [vmem:[#allocation10 + $0xc8] sm:$0xff]
    %v1475 = vld [vmem:[#allocation10 + $0xd0] sm:$0xff]
    %v1476 = vld [vmem:[#allocation10 + $0xd8] sm:$0xff]
    %v1477 = vld [vmem:[#allocation10 + $0xe0] sm:$0xff]
    %v1478 = vld [vmem:[#allocation10 + $0xe8] sm:$0xff]
    %v1479 = vld [vmem:[#allocation10 + $0xf0] sm:$0xff]
    %v1480 = vld [vmem:[#allocation10 + $0xf8] sm:$0xff]
    %v1481 = vld [vmem:[#allocation10 + $0x100] sm:$0xff]
    %v1482 = vld [vmem:[#allocation10 + $0x108] sm:$0xff]
    %v1483 = vld [vmem:[#allocation10 + $0x110] sm:$0xff]
    %v1484 = vld [vmem:[#allocation10 + $0x118] sm:$0xff]
    %v1485 = vld [vmem:[#allocation10 + $0x120] sm:$0xff]
    %v1486 = vld [vmem:[#allocation10 + $0x128] sm:$0xff]
    %v1487 = vld [vmem:[#allocation10 + $0x130] sm:$0xff]
    %v1488 = vld [vmem:[#allocation10 + $0x138] sm:$0xff]
    %v1489 = vld [vmem:[#allocation10 + $0x140] sm:$0xff]
    %v1490 = vld [vmem:[#allocation10 + $0x148] sm:$0xff]
    %v1491 = vld [vmem:[#allocation10 + $0x150] sm:$0xff]
    %v1492 = vld [vmem:[#allocation10 + $0x158] sm:$0xff]
    %v1493 = vld [vmem:[#allocation10 + $0x160] sm:$0xff]
    %v1494 = vld [vmem:[#allocation10 + $0x168] sm:$0xff]
    %v1495 = vld [vmem:[#allocation10 + $0x170] sm:$0xff]
    %v1496 = vld [vmem:[#allocation10 + $0x178] sm:$0xff]
    %v1497 = vld [vmem:[#allocation10 + $0x180] sm:$0xff]
    %v1498 = vld [vmem:[#allocation10 + $0x188] sm:$0xff]
    %v1499 = vld [vmem:[#allocation10 + $0x190] sm:$0xff]
    %v1500 = vld [vmem:[#allocation10 + $0x198] sm:$0xff]
    %v1501 = vld [vmem:[#allocation10 + $0x1a0] sm:$0xff]
    %v1502 = vld [vmem:[#allocation10 + $0x1a8] sm:$0xff]
    %v1503 = vld [vmem:[#allocation10 + $0x1b0] sm:$0xff]
    %v1504 = vld [vmem:[#allocation10 + $0x1b8] sm:$0xff]
    %v1505 = vld [vmem:[#allocation10 + $0x1c0] sm:$0xff]
    %v1506 = vld [vmem:[#allocation10 + $0x1c8] sm:$0xff]
    %v1507 = vld [vmem:[#allocation10 + $0x1d0] sm:$0xff]
    %v1508 = vld [vmem:[#allocation10 + $0x1d8] sm:$0xff]
    %v1509 = vld [vmem:[#allocation10 + $0x1e0] sm:$0xff]
    %v1510 = vld [vmem:[#allocation10 + $0x1e8] sm:$0xff]
    %v1511 = vld [vmem:[#allocation10 + $0x1f0] sm:$0xff]
    %v1512 = vld [vmem:[#allocation10 + $0x1f8] sm:$0xff]
    %1513 = vmatprep.subr.mxu0 %v1450
    %1514 = vmatpush1.msra.mxu0 %v1449
    %1515 = vmatprep.subr.mxu0 %v1454
    %1516 = vmatpush1.msra.mxu0 %v1453
    %1517 = vmatprep.subr.mxu0 %v1458
    %1518 = vmatpush1.msra.mxu0 %v1457
    %1519 = vmatprep.subr.mxu0 %v1462
    %1520 = vmatpush1.msra.mxu0 %v1461
    %1521 = vmatprep.subr.mxu0 %v1466
    %1522 = vmatpush1.msra.mxu0 %v1465
    %1523 = vmatprep.subr.mxu0 %v1470
    %1524 = vmatpush1.msra.mxu0 %v1469
    %1525 = vmatprep.subr.mxu0 %v1474
    %1526 = vmatpush1.msra.mxu0 %v1473
    %1527 = vmatprep.subr.mxu0 %v1478
    %1528 = vmatpush1.msra.mxu0 %v1477
    %1529 = vmatprep.subr.mxu0 %v1482
    %1530 = vmatpush1.msra.mxu0 %v1481
    %1531 = vmatprep.subr.mxu0 %v1486
    %1532 = vmatpush1.msra.mxu0 %v1485
    %1533 = vmatprep.subr.mxu0 %v1490
    %1534 = vmatpush1.msra.mxu0 %v1489
    %1535 = vmatprep.subr.mxu0 %v1494
    %1536 = vmatpush1.msra.mxu0 %v1493
    %1537 = vmatprep.subr.mxu0 %v1498
    %1538 = vmatpush1.msra.mxu0 %v1497
    %1539 = vmatprep.subr.mxu0 %v1502
    %1540 = vmatpush1.msra.mxu0 %v1501
    %1541 = vmatprep.subr.mxu0 %v1506
    %1542 = vmatpush1.msra.mxu0 %v1505
    %1543 = vmatprep.subr.mxu0 %v1510
    %1544 = vmatpush1.msra.mxu0 %v1509
    %1545 = vmatprep.subr.mxu0 0.0
    %1546 = vmatpush1.msra.mxu0 0.0
    %1547 = vmatprep.subr.mxu0 0.0
    %1548 = vmatpush1.msra.mxu0 0.0
    %1549 = vmatprep.subr.mxu0 0.0
    %1550 = vmatpush1.msra.mxu0 0.0
    %1551 = vmatprep.subr.mxu0 0.0
    %1552 = vmatpush1.msra.mxu0 0.0
    %1553 = vmatprep.subr.mxu0 0.0
    %1554 = vmatpush1.msra.mxu0 0.0
    %1555 = vmatprep.subr.mxu0 0.0
    %1556 = vmatpush1.msra.mxu0 0.0
    %1557 = vmatprep.subr.mxu0 0.0
    %1558 = vmatpush1.msra.mxu0 0.0
    %1559 = vmatprep.subr.mxu0 0.0
    %1560 = vmatpush1.msra.mxu0 0.0
    %1561 = vmatprep.subr.mxu0 0.0
    %1562 = vmatpush1.msra.mxu0 0.0
    %1563 = vmatprep.subr.mxu0 0.0
    %1564 = vmatpush1.msra.mxu0 0.0
    %1565 = vmatprep.subr.mxu0 0.0
    %1566 = vmatpush1.msra.mxu0 0.0
    %1567 = vmatprep.subr.mxu0 0.0
    %1568 = vmatpush1.msra.mxu0 0.0
    %1569 = vmatprep.subr.mxu0 0.0
    %1570 = vmatpush1.msra.mxu0 0.0
    %1571 = vmatprep.subr.mxu0 0.0
    %1572 = vmatpush1.msra.mxu0 0.0
    %1573 = vmatprep.subr.mxu0 0.0
    %1574 = vmatpush1.msra.mxu0 0.0
    %1575 = vmatprep.subr.mxu0 0.0
    %1576 = vmatpush1.msra.mxu0 0.0
    %1577 = vmatprep.mubr.f32.mxu0 0.0
    %1578 = vmatmul.mubr.f32.gmra.mrb[0].mxu0 %v1448
    %v1579 = vpop.f32.mrb[0].mxu0
    %v1580 = vadd.f32 0.0, %v1579
    %v1581 = vpop.f32.mrb[0].mxu0
    %v1582 = vadd.f32 0.0, %v1581
    %1583 = vdwg.mxu0
    %1584 = vmatprep.subr.mxu0 %v1452
    %1585 = vmatpush1.msra.mxu0 %v1451
    %1586 = vmatprep.subr.mxu0 %v1456
    %1587 = vmatpush1.msra.mxu0 %v1455
    %1588 = vmatprep.subr.mxu0 %v1460
    %1589 = vmatpush1.msra.mxu0 %v1459
    %1590 = vmatprep.subr.mxu0 %v1464
    %1591 = vmatpush1.msra.mxu0 %v1463
    %1592 = vmatprep.subr.mxu0 %v1468
    %1593 = vmatpush1.msra.mxu0 %v1467
    %1594 = vmatprep.subr.mxu0 %v1472
    %1595 = vmatpush1.msra.mxu0 %v1471
    %1596 = vmatprep.subr.mxu0 %v1476
    %1597 = vmatpush1.msra.mxu0 %v1475
    %1598 = vmatprep.subr.mxu0 %v1480
    %1599 = vmatpush1.msra.mxu0 %v1479
    %1600 = vmatprep.subr.mxu0 %v1484
    %1601 = vmatpush1.msra.mxu0 %v1483
    %1602 = vmatprep.subr.mxu0 %v1488
    %1603 = vmatpush1.msra.mxu0 %v1487
    %1604 = vmatprep.subr.mxu0 %v1492
    %1605 = vmatpush1.msra.mxu0 %v1491
    %1606 = vmatprep.subr.mxu0 %v1496
    %1607 = vmatpush1.msra.mxu0 %v1495
    %1608 = vmatprep.subr.mxu0 %v1500
    %1609 = vmatpush1.msra.mxu0 %v1499
    %1610 = vmatprep.subr.mxu0 %v1504
    %1611 = vmatpush1.msra.mxu0 %v1503
    %1612 = vmatprep.subr.mxu0 %v1508
    %1613 = vmatpush1.msra.mxu0 %v1507
    %1614 = vmatprep.subr.mxu0 %v1512
    %1615 = vmatpush1.msra.mxu0 %v1511
    %1616 = vmatprep.subr.mxu0 0.0
    %1617 = vmatpush1.msra.mxu0 0.0
    %1618 = vmatprep.subr.mxu0 0.0
    %1619 = vmatpush1.msra.mxu0 0.0
    %1620 = vmatprep.subr.mxu0 0.0
    %1621 = vmatpush1.msra.mxu0 0.0
    %1622 = vmatprep.subr.mxu0 0.0
    %1623 = vmatpush1.msra.mxu0 0.0
    %1624 = vmatprep.subr.mxu0 0.0
    %1625 = vmatpush1.msra.mxu0 0.0
    %1626 = vmatprep.subr.mxu0 0.0
    %1627 = vmatpush1.msra.mxu0 0.0
    %1628 = vmatprep.subr.mxu0 0.0
    %1629 = vmatpush1.msra.mxu0 0.0
    %1630 = vmatprep.subr.mxu0 0.0
    %1631 = vmatpush1.msra.mxu0 0.0
    %1632 = vmatprep.subr.mxu0 0.0
    %1633 = vmatpush1.msra.mxu0 0.0
    %1634 = vmatprep.subr.mxu0 0.0
    %1635 = vmatpush1.msra.mxu0 0.0
    %1636 = vmatprep.subr.mxu0 0.0
    %1637 = vmatpush1.msra.mxu0 0.0
    %1638 = vmatprep.subr.mxu0 0.0
    %1639 = vmatpush1.msra.mxu0 0.0
    %1640 = vmatprep.subr.mxu0 0.0
    %1641 = vmatpush1.msra.mxu0 0.0
    %1642 = vmatprep.subr.mxu0 0.0
    %1643 = vmatpush1.msra.mxu0 0.0
    %1644 = vmatprep.subr.mxu0 0.0
    %1645 = vmatpush1.msra.mxu0 0.0
    %1646 = vmatprep.subr.mxu0 0.0
    %1647 = vmatpush1.msra.mxu0 0.0
    %1648 = vmatprep.mubr.f32.mxu0 0.0
    %1649 = vmatmul.mubr.f32.gmra.mrb[0].mxu0 %v1448
    %v1650 = vpop.f32.mrb[0].mxu0
    %v1651 = vadd.f32 0.0, %v1650
    %v1652 = vpop.f32.mrb[0].mxu0
    %v1653 = vadd.f32 0.0, %v1652
    %1654 = vdwg.mxu0
    %v1655 = vadd.f32 %v1444, %v1580
    %v1656 = vadd.f32 %v1445, %v1582
    %v1657 = vadd.f32 %v1446, %v1651
    %v1658 = vadd.f32 %v1447, %v1653
    %v1659 = vld [vmem:[%s4] sm:$0xff]
    %v1660 = vld [vmem:[%s4 + $0x8] sm:$0xff]
    %v1661 = vld [vmem:[%s4 + $0x10] sm:$0xff]
    %v1662 = vld [vmem:[%s4 + $0x18] sm:$0xff]
    %v1663 = vadd.f32 %v1655, %v1659
    %v1664 = vadd.f32 %v1656, %v1660
    %v1665 = vadd.f32 %v1657, %v1661
    %v1666 = vadd.f32 %v1658, %v1662
    %v1667 = vld [vmem:[#allocation4] sm:$0xff]
    %v1668 = vxor.u32 %v1663, 2147483648
    %v1669 = vmul.f32 %v1668, 1.442695
    %v1670 = vpow.pop %v1669
    %v1671 = vadd.f32 %v1670, 1.0
    %v1672 = vrcp.pop %v1671
    %v1673 = vmul.f32 1.0, %v1672
    %v1674 = vxor.u32 %v1664, 2147483648
    %v1675 = vmul.f32 %v1674, 1.442695
    %v1676 = vpow.pop %v1675
    %v1677 = vadd.f32 %v1676, 1.0
    %v1678 = vrcp.pop %v1677
    %v1679 = vmul.f32 1.0, %v1678
    %v1680 = vtanh.pop %v1665
    %v1681 = vxor.u32 %v1666, 2147483648
    %v1682 = vmul.f32 %v1681, 1.442695
    %v1683 = vpow.pop %v1682
    %v1684 = vadd.f32 %v1683, 1.0
    %v1685 = vrcp.pop %v1684
    %v1686 = vmul.f32 1.0, %v1685
    %v1687 = vmul.f32 %v1679, %v1667
    %v1688 = vmul.f32 %v1673, %v1680
    %v1689 = vadd.f32 %v1687, %v1688
    %v1690 = vtanh.pop %v1689
    %v1691 = vmul.f32 %v1686, %v1690
    %1692 = vst [vmem:[#allocation3] sm:$0xff] %v1691
    %1693 = vst [vmem:[#allocation4] sm:$0xff] %v1689
    %v1694 = vld [vmem:[#allocation2 + $0xa0] sm:$0xff]
    %v1695 = vld [vmem:[#allocation2 + $0xa8] sm:$0xff]
    %v1696 = vld [vmem:[#allocation2 + $0xb0] sm:$0xff]
    %v1697 = vld [vmem:[#allocation2 + $0xb8] sm:$0xff]
    %v1698 = vld [vmem:[#allocation3] sm:$0xff]
    %v1699 = vld [vmem:[#allocation10] sm:$0xff]
    %v1700 = vld [vmem:[#allocation10 + $0x8] sm:$0xff]
    %v1701 = vld [vmem:[#allocation10 + $0x10] sm:$0xff]
    %v1702 = vld [vmem:[#allocation10 + $0x18] sm:$0xff]
    %v1703 = vld [vmem:[#allocation10 + $0x20] sm:$0xff]
    %v1704 = vld [vmem:[#allocation10 + $0x28] sm:$0xff]
    %v1705 = vld [vmem:[#allocation10 + $0x30] sm:$0xff]
    %v1706 = vld [vmem:[#allocation10 + $0x38] sm:$0xff]
    %v1707 = vld [vmem:[#allocation10 + $0x40] sm:$0xff]
    %v1708 = vld [vmem:[#allocation10 + $0x48] sm:$0xff]
    %v1709 = vld [vmem:[#allocation10 + $0x50] sm:$0xff]
    %v1710 = vld [vmem:[#allocation10 + $0x58] sm:$0xff]
    %v1711 = vld [vmem:[#allocation10 + $0x60] sm:$0xff]
    %v1712 = vld [vmem:[#allocation10 + $0x68] sm:$0xff]
    %v1713 = vld [vmem:[#allocation10 + $0x70] sm:$0xff]
    %v1714 = vld [vmem:[#allocation10 + $0x78] sm:$0xff]
    %v1715 = vld [vmem:[#allocation10 + $0x80] sm:$0xff]
    %v1716 = vld [vmem:[#allocation10 + $0x88] sm:$0xff]
    %v1717 = vld [vmem:[#allocation10 + $0x90] sm:$0xff]
    %v1718 = vld [vmem:[#allocation10 + $0x98] sm:$0xff]
    %v1719 = vld [vmem:[#allocation10 + $0xa0] sm:$0xff]
    %v1720 = vld [vmem:[#allocation10 + $0xa8] sm:$0xff]
    %v1721 = vld [vmem:[#allocation10 + $0xb0] sm:$0xff]
    %v1722 = vld [vmem:[#allocation10 + $0xb8] sm:$0xff]
    %v1723 = vld [vmem:[#allocation10 + $0xc0] sm:$0xff]
    %v1724 = vld [vmem:[#allocation10 + $0xc8] sm:$0xff]
    %v1725 = vld [vmem:[#allocation10 + $0xd0] sm:$0xff]
    %v1726 = vld [vmem:[#allocation10 + $0xd8] sm:$0xff]
    %v1727 = vld [vmem:[#allocation10 + $0xe0] sm:$0xff]
    %v1728 = vld [vmem:[#allocation10 + $0xe8] sm:$0xff]
    %v1729 = vld [vmem:[#allocation10 + $0xf0] sm:$0xff]
    %v1730 = vld [vmem:[#allocation10 + $0xf8] sm:$0xff]
    %v1731 = vld [vmem:[#allocation10 + $0x100] sm:$0xff]
    %v1732 = vld [vmem:[#allocation10 + $0x108] sm:$0xff]
    %v1733 = vld [vmem:[#allocation10 + $0x110] sm:$0xff]
    %v1734 = vld [vmem:[#allocation10 + $0x118] sm:$0xff]
    %v1735 = vld [vmem:[#allocation10 + $0x120] sm:$0xff]
    %v1736 = vld [vmem:[#allocation10 + $0x128] sm:$0xff]
    %v1737 = vld [vmem:[#allocation10 + $0x130] sm:$0xff]
    %v1738 = vld [vmem:[#allocation10 + $0x138] sm:$0xff]
    %v1739 = vld [vmem:[#allocation10 + $0x140] sm:$0xff]
    %v1740 = vld [vmem:[#allocation10 + $0x148] sm:$0xff]
    %v1741 = vld [vmem:[#allocation10 + $0x150] sm:$0xff]
    %v1742 = vld [vmem:[#allocation10 + $0x158] sm:$0xff]
    %v1743 = vld [vmem:[#allocation10 + $0x160] sm:$0xff]
    %v1744 = vld [vmem:[#allocation10 + $0x168] sm:$0xff]
    %v1745 = vld [vmem:[#allocation10 + $0x170] sm:$0xff]
    %v1746 = vld [vmem:[#allocation10 + $0x178] sm:$0xff]
    %v1747 = vld [vmem:[#allocation10 + $0x180] sm:$0xff]
    %v1748 = vld [vmem:[#allocation10 + $0x188] sm:$0xff]
    %v1749 = vld [vmem:[#allocation10 + $0x190] sm:$0xff]
    %v1750 = vld [vmem:[#allocation10 + $0x198] sm:$0xff]
    %v1751 = vld [vmem:[#allocation10 + $0x1a0] sm:$0xff]
    %v1752 = vld [vmem:[#allocation10 + $0x1a8] sm:$0xff]
    %v1753 = vld [vmem:[#allocation10 + $0x1b0] sm:$0xff]
    %v1754 = vld [vmem:[#allocation10 + $0x1b8] sm:$0xff]
    %v1755 = vld [vmem:[#allocation10 + $0x1c0] sm:$0xff]
    %v1756 = vld [vmem:[#allocation10 + $0x1c8] sm:$0xff]
    %v1757 = vld [vmem:[#allocation10 + $0x1d0] sm:$0xff]
    %v1758 = vld [vmem:[#allocation10 + $0x1d8] sm:$0xff]
    %v1759 = vld [vmem:[#allocation10 + $0x1e0] sm:$0xff]
    %v1760 = vld [vmem:[#allocation10 + $0x1e8] sm:$0xff]
    %v1761 = vld [vmem:[#allocation10 + $0x1f0] sm:$0xff]
    %v1762 = vld [vmem:[#allocation10 + $0x1f8] sm:$0xff]
    %1763 = vmatprep.subr.mxu0 %v1700
    %1764 = vmatpush1.msra.mxu0 %v1699
    %1765 = vmatprep.subr.mxu0 %v1704
    %1766 = vmatpush1.msra.mxu0 %v1703
    %1767 = vmatprep.subr.mxu0 %v1708
    %1768 = vmatpush1.msra.mxu0 %v1707
    %1769 = vmatprep.subr.mxu0 %v1712
    %1770 = vmatpush1.msra.mxu0 %v1711
    %1771 = vmatprep.subr.mxu0 %v1716
    %1772 = vmatpush1.msra.mxu0 %v1715
    %1773 = vmatprep.subr.mxu0 %v1720
    %1774 = vmatpush1.msra.mxu0 %v1719
    %1775 = vmatprep.subr.mxu0 %v1724
    %1776 = vmatpush1.msra.mxu0 %v1723
    %1777 = vmatprep.subr.mxu0 %v1728
    %1778 = vmatpush1.msra.mxu0 %v1727
    %1779 = vmatprep.subr.mxu0 %v1732
    %1780 = vmatpush1.msra.mxu0 %v1731
    %1781 = vmatprep.subr.mxu0 %v1736
    %1782 = vmatpush1.msra.mxu0 %v1735
    %1783 = vmatprep.subr.mxu0 %v1740
    %1784 = vmatpush1.msra.mxu0 %v1739
    %1785 = vmatprep.subr.mxu0 %v1744
    %1786 = vmatpush1.msra.mxu0 %v1743
    %1787 = vmatprep.subr.mxu0 %v1748
    %1788 = vmatpush1.msra.mxu0 %v1747
    %1789 = vmatprep.subr.mxu0 %v1752
    %1790 = vmatpush1.msra.mxu0 %v1751
    %1791 = vmatprep.subr.mxu0 %v1756
    %1792 = vmatpush1.msra.mxu0 %v1755
    %1793 = vmatprep.subr.mxu0 %v1760
    %1794 = vmatpush1.msra.mxu0 %v1759
    %1795 = vmatprep.subr.mxu0 0.0
    %1796 = vmatpush1.msra.mxu0 0.0
    %1797 = vmatprep.subr.mxu0 0.0
    %1798 = vmatpush1.msra.mxu0 0.0
    %1799 = vmatprep.subr.mxu0 0.0
    %1800 = vmatpush1.msra.mxu0 0.0
    %1801 = vmatprep.subr.mxu0 0.0
    %1802 = vmatpush1.msra.mxu0 0.0
    %1803 = vmatprep.subr.mxu0 0.0
    %1804 = vmatpush1.msra.mxu0 0.0
    %1805 = vmatprep.subr.mxu0 0.0
    %1806 = vmatpush1.msra.mxu0 0.0
    %1807 = vmatprep.subr.mxu0 0.0
    %1808 = vmatpush1.msra.mxu0 0.0
    %1809 = vmatprep.subr.mxu0 0.0
    %1810 = vmatpush1.msra.mxu0 0.0
    %1811 = vmatprep.subr.mxu0 0.0
    %1812 = vmatpush1.msra.mxu0 0.0
    %1813 = vmatprep.subr.mxu0 0.0
    %1814 = vmatpush1.msra.mxu0 0.0
    %1815 = vmatprep.subr.mxu0 0.0
    %1816 = vmatpush1.msra.mxu0 0.0
    %1817 = vmatprep.subr.mxu0 0.0
    %1818 = vmatpush1.msra.mxu0 0.0
    %1819 = vmatprep.subr.mxu0 0.0
    %1820 = vmatpush1.msra.mxu0 0.0
    %1821 = vmatprep.subr.mxu0 0.0
    %1822 = vmatpush1.msra.mxu0 0.0
    %1823 = vmatprep.subr.mxu0 0.0
    %1824 = vmatpush1.msra.mxu0 0.0
    %1825 = vmatprep.subr.mxu0 0.0
    %1826 = vmatpush1.msra.mxu0 0.0
    %1827 = vmatprep.mubr.f32.mxu0 0.0
    %1828 = vmatmul.mubr.f32.gmra.mrb[0].mxu0 %v1698
    %v1829 = vpop.f32.mrb[0].mxu0
    %v1830 = vadd.f32 0.0, %v1829
    %v1831 = vpop.f32.mrb[0].mxu0
    %v1832 = vadd.f32 0.0, %v1831
    %1833 = vdwg.mxu0
    %1834 = vmatprep.subr.mxu0 %v1702
    %1835 = vmatpush1.msra.mxu0 %v1701
    %1836 = vmatprep.subr.mxu0 %v1706
    %1837 = vmatpush1.msra.mxu0 %v1705
    %1838 = vmatprep.subr.mxu0 %v1710
    %1839 = vmatpush1.msra.mxu0 %v1709
    %1840 = vmatprep.subr.mxu0 %v1714
    %1841 = vmatpush1.msra.mxu0 %v1713
    %1842 = vmatprep.subr.mxu0 %v1718
    %1843 = vmatpush1.msra.mxu0 %v1717
    %1844 = vmatprep.subr.mxu0 %v1722
    %1845 = vmatpush1.msra.mxu0 %v1721
    %1846 = vmatprep.subr.mxu0 %v1726
    %1847 = vmatpush1.msra.mxu0 %v1725
    %1848 = vmatprep.subr.mxu0 %v1730
    %1849 = vmatpush1.msra.mxu0 %v1729
    %1850 = vmatprep.subr.mxu0 %v1734
    %1851 = vmatpush1.msra.mxu0 %v1733
    %1852 = vmatprep.subr.mxu0 %v1738
    %1853 = vmatpush1.msra.mxu0 %v1737
    %1854 = vmatprep.subr.mxu0 %v1742
    %1855 = vmatpush1.msra.mxu0 %v1741
    %1856 = vmatprep.subr.mxu0 %v1746
    %1857 = vmatpush1.msra.mxu0 %v1745
    %1858 = vmatprep.subr.mxu0 %v1750
    %1859 = vmatpush1.msra.mxu0 %v1749
    %1860 = vmatprep.subr.mxu0 %v1754
    %1861 = vmatpush1.msra.mxu0 %v1753
    %1862 = vmatprep.subr.mxu0 %v1758
    %1863 = vmatpush1.msra.mxu0 %v1757
    %1864 = vmatprep.subr.mxu0 %v1762
    %1865 = vmatpush1.msra.mxu0 %v1761
    %1866 = vmatprep.subr.mxu0 0.0
    %1867 = vmatpush1.msra.mxu0 0.0
    %1868 = vmatprep.subr.mxu0 0.0
    %1869 = vmatpush1.msra.mxu0 0.0
    %1870 = vmatprep.subr.mxu0 0.0
    %1871 = vmatpush1.msra.mxu0 0.0
    %1872 = vmatprep.subr.mxu0 0.0
    %1873 = vmatpush1.msra.mxu0 0.0
    %1874 = vmatprep.subr.mxu0 0.0
    %1875 = vmatpush1.msra.mxu0 0.0
    %1876 = vmatprep.subr.mxu0 0.0
    %1877 = vmatpush1.msra.mxu0 0.0
    %1878 = vmatprep.subr.mxu0 0.0
    %1879 = vmatpush1.msra.mxu0 0.0
    %1880 = vmatprep.subr.mxu0 0.0
    %1881 = vmatpush1.msra.mxu0 0.0
    %1882 = vmatprep.subr.mxu0 0.0
    %1883 = vmatpush1.msra.mxu0 0.0
    %1884 = vmatprep.subr.mxu0 0.0
    %1885 = vmatpush1.msra.mxu0 0.0
    %1886 = vmatprep.subr.mxu0 0.0
    %1887 = vmatpush1.msra.mxu0 0.0
    %1888 = vmatprep.subr.mxu0 0.0
    %1889 = vmatpush1.msra.mxu0 0.0
    %1890 = vmatprep.subr.mxu0 0.0
    %1891 = vmatpush1.msra.mxu0 0.0
    %1892 = vmatprep.subr.mxu0 0.0
    %1893 = vmatpush1.msra.mxu0 0.0
    %1894 = vmatprep.subr.mxu0 0.0
    %1895 = vmatpush1.msra.mxu0 0.0
    %1896 = vmatprep.subr.mxu0 0.0
    %1897 = vmatpush1.msra.mxu0 0.0
    %1898 = vmatprep.mubr.f32.mxu0 0.0
    %1899 = vmatmul.mubr.f32.gmra.mrb[0].mxu0 %v1698
    %v1900 = vpop.f32.mrb[0].mxu0
    %v1901 = vadd.f32 0.0, %v1900
    %v1902 = vpop.f32.mrb[0].mxu0
    %v1903 = vadd.f32 0.0, %v1902
    %1904 = vdwg.mxu0
    %v1905 = vadd.f32 %v1694, %v1830
    %v1906 = vadd.f32 %v1695, %v1832
    %v1907 = vadd.f32 %v1696, %v1901
    %v1908 = vadd.f32 %v1697, %v1903
    %v1909 = vld [vmem:[%s4] sm:$0xff]
    %v1910 = vld [vmem:[%s4 + $0x8] sm:$0xff]
    %v1911 = vld [vmem:[%s4 + $0x10] sm:$0xff]
    %v1912 = vld [vmem:[%s4 + $0x18] sm:$0xff]
    %v1913 = vadd.f32 %v1905, %v1909
    %v1914 = vadd.f32 %v1906, %v1910
    %v1915 = vadd.f32 %v1907, %v1911
    %v1916 = vadd.f32 %v1908, %v1912
    %v1917 = vld [vmem:[#allocation4] sm:$0xff]
    %v1918 = vxor.u32 %v1913, 2147483648
    %v1919 = vmul.f32 %v1918, 1.442695
    %v1920 = vpow.pop %v1919
    %v1921 = vadd.f32 %v1920, 1.0
    %v1922 = vrcp.pop %v1921
    %v1923 = vmul.f32 1.0, %v1922
    %v1924 = vxor.u32 %v1914, 2147483648
    %v1925 = vmul.f32 %v1924, 1.442695
    %v1926 = vpow.pop %v1925
    %v1927 = vadd.f32 %v1926, 1.0
    %v1928 = vrcp.pop %v1927
    %v1929 = vmul.f32 1.0, %v1928
    %v1930 = vtanh.pop %v1915
    %v1931 = vxor.u32 %v1916, 2147483648
    %v1932 = vmul.f32 %v1931, 1.442695
    %v1933 = vpow.pop %v1932
    %v1934 = vadd.f32 %v1933, 1.0
    %v1935 = vrcp.pop %v1934
    %v1936 = vmul.f32 1.0, %v1935
    %v1937 = vmul.f32 %v1929, %v1917
    %v1938 = vmul.f32 %v1923, %v1930
    %v1939 = vadd.f32 %v1937, %v1938
    %v1940 = vtanh.pop %v1939
    %v1941 = vmul.f32 %v1936, %v1940
    %1942 = vst [vmem:[#allocation3] sm:$0xff] %v1941
    %1943 = vst [vmem:[#allocation4] sm:$0xff] %v1939
    %v1944 = vld [vmem:[#allocation2 + $0xc0] sm:$0xff]
    %v1945 = vld [vmem:[#allocation2 + $0xc8] sm:$0xff]
    %v1946 = vld [vmem:[#allocation2 + $0xd0] sm:$0xff]
    %v1947 = vld [vmem:[#allocation2 + $0xd8] sm:$0xff]
    %v1948 = vld [vmem:[#allocation3] sm:$0xff]
    %v1949 = vld [vmem:[#allocation10] sm:$0xff]
    %v1950 = vld [vmem:[#allocation10 + $0x8] sm:$0xff]
    %v1951 = vld [vmem:[#allocation10 + $0x10] sm:$0xff]
    %v1952 = vld [vmem:[#allocation10 + $0x18] sm:$0xff]
    %v1953 = vld [vmem:[#allocation10 + $0x20] sm:$0xff]
    %v1954 = vld [vmem:[#allocation10 + $0x28] sm:$0xff]
    %v1955 = vld [vmem:[#allocation10 + $0x30] sm:$0xff]
    %v1956 = vld [vmem:[#allocation10 + $0x38] sm:$0xff]
    %v1957 = vld [vmem:[#allocation10 + $0x40] sm:$0xff]
    %v1958 = vld [vmem:[#allocation10 + $0x48] sm:$0xff]
    %v1959 = vld [vmem:[#allocation10 + $0x50] sm:$0xff]
    %v1960 = vld [vmem:[#allocation10 + $0x58] sm:$0xff]
    %v1961 = vld [vmem:[#allocation10 + $0x60] sm:$0xff]
    %v1962 = vld [vmem:[#allocation10 + $0x68] sm:$0xff]
    %v1963 = vld [vmem:[#allocation10 + $0x70] sm:$0xff]
    %v1964 = vld [vmem:[#allocation10 + $0x78] sm:$0xff]
    %v1965 = vld [vmem:[#allocation10 + $0x80] sm:$0xff]
    %v1966 = vld [vmem:[#allocation10 + $0x88] sm:$0xff]
    %v1967 = vld [vmem:[#allocation10 + $0x90] sm:$0xff]
    %v1968 = vld [vmem:[#allocation10 + $0x98] sm:$0xff]
    %v1969 = vld [vmem:[#allocation10 + $0xa0] sm:$0xff]
    %v1970 = vld [vmem:[#allocation10 + $0xa8] sm:$0xff]
    %v1971 = vld [vmem:[#allocation10 + $0xb0] sm:$0xff]
    %v1972 = vld [vmem:[#allocation10 + $0xb8] sm:$0xff]
    %v1973 = vld [vmem:[#allocation10 + $0xc0] sm:$0xff]
    %v1974 = vld [vmem:[#allocation10 + $0xc8] sm:$0xff]
    %v1975 = vld [vmem:[#allocation10 + $0xd0] sm:$0xff]
    %v1976 = vld [vmem:[#allocation10 + $0xd8] sm:$0xff]
    %v1977 = vld [vmem:[#allocation10 + $0xe0] sm:$0xff]
    %v1978 = vld [vmem:[#allocation10 + $0xe8] sm:$0xff]
    %v1979 = vld [vmem:[#allocation10 + $0xf0] sm:$0xff]
    %v1980 = vld [vmem:[#allocation10 + $0xf8] sm:$0xff]
    %v1981 = vld [vmem:[#allocation10 + $0x100] sm:$0xff]
    %v1982 = vld [vmem:[#allocation10 + $0x108] sm:$0xff]
    %v1983 = vld [vmem:[#allocation10 + $0x110] sm:$0xff]
    %v1984 = vld [vmem:[#allocation10 + $0x118] sm:$0xff]
    %v1985 = vld [vmem:[#allocation10 + $0x120] sm:$0xff]
    %v1986 = vld [vmem:[#allocation10 + $0x128] sm:$0xff]
    %v1987 = vld [vmem:[#allocation10 + $0x130] sm:$0xff]
    %v1988 = vld [vmem:[#allocation10 + $0x138] sm:$0xff]
    %v1989 = vld [vmem:[#allocation10 + $0x140] sm:$0xff]
    %v1990 = vld [vmem:[#allocation10 + $0x148] sm:$0xff]
    %v1991 = vld [vmem:[#allocation10 + $0x150] sm:$0xff]
    %v1992 = vld [vmem:[#allocation10 + $0x158] sm:$0xff]
    %v1993 = vld [vmem:[#allocation10 + $0x160] sm:$0xff]
    %v1994 = vld [vmem:[#allocation10 + $0x168] sm:$0xff]
    %v1995 = vld [vmem:[#allocation10 + $0x170] sm:$0xff]
    %v1996 = vld [vmem:[#allocation10 + $0x178] sm:$0xff]
    %v1997 = vld [vmem:[#allocation10 + $0x180] sm:$0xff]
    %v1998 = vld [vmem:[#allocation10 + $0x188] sm:$0xff]
    %v1999 = vld [vmem:[#allocation10 + $0x190] sm:$0xff]
    %v2000 = vld [vmem:[#allocation10 + $0x198] sm:$0xff]
    %v2001 = vld [vmem:[#allocation10 + $0x1a0] sm:$0xff]
    %v2002 = vld [vmem:[#allocation10 + $0x1a8] sm:$0xff]
    %v2003 = vld [vmem:[#allocation10 + $0x1b0] sm:$0xff]
    %v2004 = vld [vmem:[#allocation10 + $0x1b8] sm:$0xff]
    %v2005 = vld [vmem:[#allocation10 + $0x1c0] sm:$0xff]
    %v2006 = vld [vmem:[#allocation10 + $0x1c8] sm:$0xff]
    %v2007 = vld [vmem:[#allocation10 + $0x1d0] sm:$0xff]
    %v2008 = vld [vmem:[#allocation10 + $0x1d8] sm:$0xff]
    %v2009 = vld [vmem:[#allocation10 + $0x1e0] sm:$0xff]
    %v2010 = vld [vmem:[#allocation10 + $0x1e8] sm:$0xff]
    %v2011 = vld [vmem:[#allocation10 + $0x1f0] sm:$0xff]
    %v2012 = vld [vmem:[#allocation10 + $0x1f8] sm:$0xff]
    %2013 = vmatprep.subr.mxu0 %v1950
    %2014 = vmatpush1.msra.mxu0 %v1949
    %2015 = vmatprep.subr.mxu0 %v1954
    %2016 = vmatpush1.msra.mxu0 %v1953
    %2017 = vmatprep.subr.mxu0 %v1958
    %2018 = vmatpush1.msra.mxu0 %v1957
    %2019 = vmatprep.subr.mxu0 %v1962
    %2020 = vmatpush1.msra.mxu0 %v1961
    %2021 = vmatprep.subr.mxu0 %v1966
    %2022 = vmatpush1.msra.mxu0 %v1965
    %2023 = vmatprep.subr.mxu0 %v1970
    %2024 = vmatpush1.msra.mxu0 %v1969
    %2025 = vmatprep.subr.mxu0 %v1974
    %2026 = vmatpush1.msra.mxu0 %v1973
    %2027 = vmatprep.subr.mxu0 %v1978
    %2028 = vmatpush1.msra.mxu0 %v1977
    %2029 = vmatprep.subr.mxu0 %v1982
    %2030 = vmatpush1.msra.mxu0 %v1981
    %2031 = vmatprep.subr.mxu0 %v1986
    %2032 = vmatpush1.msra.mxu0 %v1985
    %2033 = vmatprep.subr.mxu0 %v1990
    %2034 = vmatpush1.msra.mxu0 %v1989
    %2035 = vmatprep.subr.mxu0 %v1994
    %2036 = vmatpush1.msra.mxu0 %v1993
    %2037 = vmatprep.subr.mxu0 %v1998
    %2038 = vmatpush1.msra.mxu0 %v1997
    %2039 = vmatprep.subr.mxu0 %v2002
    %2040 = vmatpush1.msra.mxu0 %v2001
    %2041 = vmatprep.subr.mxu0 %v2006
    %2042 = vmatpush1.msra.mxu0 %v2005
    %2043 = vmatprep.subr.mxu0 %v2010
    %2044 = vmatpush1.msra.mxu0 %v2009
    %2045 = vmatprep.subr.mxu0 0.0
    %2046 = vmatpush1.msra.mxu0 0.0
    %2047 = vmatprep.subr.mxu0 0.0
    %2048 = vmatpush1.msra.mxu0 0.0
    %2049 = vmatprep.subr.mxu0 0.0
    %2050 = vmatpush1.msra.mxu0 0.0
    %2051 = vmatprep.subr.mxu0 0.0
    %2052 = vmatpush1.msra.mxu0 0.0
    %2053 = vmatprep.subr.mxu0 0.0
    %2054 = vmatpush1.msra.mxu0 0.0
    %2055 = vmatprep.subr.mxu0 0.0
    %2056 = vmatpush1.msra.mxu0 0.0
    %2057 = vmatprep.subr.mxu0 0.0
    %2058 = vmatpush1.msra.mxu0 0.0
    %2059 = vmatprep.subr.mxu0 0.0
    %2060 = vmatpush1.msra.mxu0 0.0
    %2061 = vmatprep.subr.mxu0 0.0
    %2062 = vmatpush1.msra.mxu0 0.0
    %2063 = vmatprep.subr.mxu0 0.0
    %2064 = vmatpush1.msra.mxu0 0.0
    %2065 = vmatprep.subr.mxu0 0.0
    %2066 = vmatpush1.msra.mxu0 0.0
    %2067 = vmatprep.subr.mxu0 0.0
    %2068 = vmatpush1.msra.mxu0 0.0
    %2069 = vmatprep.subr.mxu0 0.0
    %2070 = vmatpush1.msra.mxu0 0.0
    %2071 = vmatprep.subr.mxu0 0.0
    %2072 = vmatpush1.msra.mxu0 0.0
    %2073 = vmatprep.subr.mxu0 0.0
    %2074 = vmatpush1.msra.mxu0 0.0
    %2075 = vmatprep.subr.mxu0 0.0
    %2076 = vmatpush1.msra.mxu0 0.0
    %2077 = vmatprep.mubr.f32.mxu0 0.0
    %2078 = vmatmul.mubr.f32.gmra.mrb[0].mxu0 %v1948
    %v2079 = vpop.f32.mrb[0].mxu0
    %v2080 = vadd.f32 0.0, %v2079
    %v2081 = vpop.f32.mrb[0].mxu0
    %v2082 = vadd.f32 0.0, %v2081
    %2083 = vdwg.mxu0
    %2084 = vmatprep.subr.mxu0 %v1952
    %2085 = vmatpush1.msra.mxu0 %v1951
    %2086 = vmatprep.subr.mxu0 %v1956
    %2087 = vmatpush1.msra.mxu0 %v1955
    %2088 = vmatprep.subr.mxu0 %v1960
    %2089 = vmatpush1.msra.mxu0 %v1959
    %2090 = vmatprep.subr.mxu0 %v1964
    %2091 = vmatpush1.msra.mxu0 %v1963
    %2092 = vmatprep.subr.mxu0 %v1968
    %2093 = vmatpush1.msra.mxu0 %v1967
    %2094 = vmatprep.subr.mxu0 %v1972
    %2095 = vmatpush1.msra.mxu0 %v1971
    %2096 = vmatprep.subr.mxu0 %v1976
    %2097 = vmatpush1.msra.mxu0 %v1975
    %2098 = vmatprep.subr.mxu0 %v1980
    %2099 = vmatpush1.msra.mxu0 %v1979
    %2100 = vmatprep.subr.mxu0 %v1984
    %2101 = vmatpush1.msra.mxu0 %v1983
    %2102 = vmatprep.subr.mxu0 %v1988
    %2103 = vmatpush1.msra.mxu0 %v1987
    %2104 = vmatprep.subr.mxu0 %v1992
    %2105 = vmatpush1.msra.mxu0 %v1991
    %2106 = vmatprep.subr.mxu0 %v1996
    %2107 = vmatpush1.msra.mxu0 %v1995
    %2108 = vmatprep.subr.mxu0 %v2000
    %2109 = vmatpush1.msra.mxu0 %v1999
    %2110 = vmatprep.subr.mxu0 %v2004
    %2111 = vmatpush1.msra.mxu0 %v2003
    %2112 = vmatprep.subr.mxu0 %v2008
    %2113 = vmatpush1.msra.mxu0 %v2007
    %2114 = vmatprep.subr.mxu0 %v2012
    %2115 = vmatpush1.msra.mxu0 %v2011
    %2116 = vmatprep.subr.mxu0 0.0
    %2117 = vmatpush1.msra.mxu0 0.0
    %2118 = vmatprep.subr.mxu0 0.0
    %2119 = vmatpush1.msra.mxu0 0.0
    %2120 = vmatprep.subr.mxu0 0.0
    %2121 = vmatpush1.msra.mxu0 0.0
    %2122 = vmatprep.subr.mxu0 0.0
    %2123 = vmatpush1.msra.mxu0 0.0
    %2124 = vmatprep.subr.mxu0 0.0
    %2125 = vmatpush1.msra.mxu0 0.0
    %2126 = vmatprep.subr.mxu0 0.0
    %2127 = vmatpush1.msra.mxu0 0.0
    %2128 = vmatprep.subr.mxu0 0.0
    %2129 = vmatpush1.msra.mxu0 0.0
    %2130 = vmatprep.subr.mxu0 0.0
    %2131 = vmatpush1.msra.mxu0 0.0
    %2132 = vmatprep.subr.mxu0 0.0
    %2133 = vmatpush1.msra.mxu0 0.0
    %2134 = vmatprep.subr.mxu0 0.0
    %2135 = vmatpush1.msra.mxu0 0.0
    %2136 = vmatprep.subr.mxu0 0.0
    %2137 = vmatpush1.msra.mxu0 0.0
    %2138 = vmatprep.subr.mxu0 0.0
    %2139 = vmatpush1.msra.mxu0 0.0
    %2140 = vmatprep.subr.mxu0 0.0
    %2141 = vmatpush1.msra.mxu0 0.0
    %2142 = vmatprep.subr.mxu0 0.0
    %2143 = vmatpush1.msra.mxu0 0.0
    %2144 = vmatprep.subr.mxu0 0.0
    %2145 = vmatpush1.msra.mxu0 0.0
    %2146 = vmatprep.subr.mxu0 0.0
    %2147 = vmatpush1.msra.mxu0 0.0
    %2148 = vmatprep.mubr.f32.mxu0 0.0
    %2149 = vmatmul.mubr.f32.gmra.mrb[0].mxu0 %v1948
    %v2150 = vpop.f32.mrb[0].mxu0
    %v2151 = vadd.f32 0.0, %v2150
    %v2152 = vpop.f32.mrb[0].mxu0
    %v2153 = vadd.f32 0.0, %v2152
    %2154 = vdwg.mxu0
    %v2155 = vadd.f32 %v1944, %v2080
    %v2156 = vadd.f32 %v1945, %v2082
    %v2157 = vadd.f32 %v1946, %v2151
    %v2158 = vadd.f32 %v1947, %v2153
    %v2159 = vld [vmem:[%s4] sm:$0xff]
    %v2160 = vld [vmem:[%s4 + $0x8] sm:$0xff]
    %v2161 = vld [vmem:[%s4 + $0x10] sm:$0xff]
    %v2162 = vld [vmem:[%s4 + $0x18] sm:$0xff]
    %v2163 = vadd.f32 %v2155, %v2159
    %v2164 = vadd.f32 %v2156, %v2160
    %v2165 = vadd.f32 %v2157, %v2161
    %v2166 = vadd.f32 %v2158, %v2162
    %v2167 = vld [vmem:[#allocation4] sm:$0xff]
    %v2168 = vxor.u32 %v2163, 2147483648
    %v2169 = vmul.f32 %v2168, 1.442695
    %v2170 = vpow.pop %v2169
    %v2171 = vadd.f32 %v2170, 1.0
    %v2172 = vrcp.pop %v2171
    %v2173 = vmul.f32 1.0, %v2172
    %v2174 = vxor.u32 %v2164, 2147483648
    %v2175 = vmul.f32 %v2174, 1.442695
    %v2176 = vpow.pop %v2175
    %v2177 = vadd.f32 %v2176, 1.0
    %v2178 = vrcp.pop %v2177
    %v2179 = vmul.f32 1.0, %v2178
    %v2180 = vtanh.pop %v2165
    %v2181 = vxor.u32 %v2166, 2147483648
    %v2182 = vmul.f32 %v2181, 1.442695
    %v2183 = vpow.pop %v2182
    %v2184 = vadd.f32 %v2183, 1.0
    %v2185 = vrcp.pop %v2184
    %v2186 = vmul.f32 1.0, %v2185
    %v2187 = vmul.f32 %v2179, %v2167
    %v2188 = vmul.f32 %v2173, %v2180
    %v2189 = vadd.f32 %v2187, %v2188
    %v2190 = vtanh.pop %v2189
    %v2191 = vmul.f32 %v2186, %v2190
    %2192 = vst [vmem:[#allocation3] sm:$0xff] %v2191
    %2193 = vst [vmem:[#allocation4] sm:$0xff] %v2189
    %v2194 = vld [vmem:[#allocation2 + $0xe0] sm:$0xff]
    %v2195 = vld [vmem:[#allocation2 + $0xe8] sm:$0xff]
    %v2196 = vld [vmem:[#allocation2 + $0xf0] sm:$0xff]
    %v2197 = vld [vmem:[#allocation2 + $0xf8] sm:$0xff]
    %v2198 = vld [vmem:[#allocation3] sm:$0xff]
    %v2199 = vld [vmem:[#allocation10] sm:$0xff]
    %v2200 = vld [vmem:[#allocation10 + $0x8] sm:$0xff]
    %v2201 = vld [vmem:[#allocation10 + $0x10] sm:$0xff]
    %v2202 = vld [vmem:[#allocation10 + $0x18] sm:$0xff]
    %v2203 = vld [vmem:[#allocation10 + $0x20] sm:$0xff]
    %v2204 = vld [vmem:[#allocation10 + $0x28] sm:$0xff]
    %v2205 = vld [vmem:[#allocation10 + $0x30] sm:$0xff]
    %v2206 = vld [vmem:[#allocation10 + $0x38] sm:$0xff]
    %v2207 = vld [vmem:[#allocation10 + $0x40] sm:$0xff]
    %v2208 = vld [vmem:[#allocation10 + $0x48] sm:$0xff]
    %v2209 = vld [vmem:[#allocation10 + $0x50] sm:$0xff]
    %v2210 = vld [vmem:[#allocation10 + $0x58] sm:$0xff]
    %v2211 = vld [vmem:[#allocation10 + $0x60] sm:$0xff]
    %v2212 = vld [vmem:[#allocation10 + $0x68] sm:$0xff]
    %v2213 = vld [vmem:[#allocation10 + $0x70] sm:$0xff]
    %v2214 = vld [vmem:[#allocation10 + $0x78] sm:$0xff]
    %v2215 = vld [vmem:[#allocation10 + $0x80] sm:$0xff]
    %v2216 = vld [vmem:[#allocation10 + $0x88] sm:$0xff]
    %v2217 = vld [vmem:[#allocation10 + $0x90] sm:$0xff]
    %v2218 = vld [vmem:[#allocation10 + $0x98] sm:$0xff]
    %v2219 = vld [vmem:[#allocation10 + $0xa0] sm:$0xff]
    %v2220 = vld [vmem:[#allocation10 + $0xa8] sm:$0xff]
    %v2221 = vld [vmem:[#allocation10 + $0xb0] sm:$0xff]
    %v2222 = vld [vmem:[#allocation10 + $0xb8] sm:$0xff]
    %v2223 = vld [vmem:[#allocation10 + $0xc0] sm:$0xff]
    %v2224 = vld [vmem:[#allocation10 + $0xc8] sm:$0xff]
    %v2225 = vld [vmem:[#allocation10 + $0xd0] sm:$0xff]
    %v2226 = vld [vmem:[#allocation10 + $0xd8] sm:$0xff]
    %v2227 = vld [vmem:[#allocation10 + $0xe0] sm:$0xff]
    %v2228 = vld [vmem:[#allocation10 + $0xe8] sm:$0xff]
    %v2229 = vld [vmem:[#allocation10 + $0xf0] sm:$0xff]
    %v2230 = vld [vmem:[#allocation10 + $0xf8] sm:$0xff]
    %v2231 = vld [vmem:[#allocation10 + $0x100] sm:$0xff]
    %v2232 = vld [vmem:[#allocation10 + $0x108] sm:$0xff]
    %v2233 = vld [vmem:[#allocation10 + $0x110] sm:$0xff]
    %v2234 = vld [vmem:[#allocation10 + $0x118] sm:$0xff]
    %v2235 = vld [vmem:[#allocation10 + $0x120] sm:$0xff]
    %v2236 = vld [vmem:[#allocation10 + $0x128] sm:$0xff]
    %v2237 = vld [vmem:[#allocation10 + $0x130] sm:$0xff]
    %v2238 = vld [vmem:[#allocation10 + $0x138] sm:$0xff]
    %v2239 = vld [vmem:[#allocation10 + $0x140] sm:$0xff]
    %v2240 = vld [vmem:[#allocation10 + $0x148] sm:$0xff]
    %v2241 = vld [vmem:[#allocation10 + $0x150] sm:$0xff]
    %v2242 = vld [vmem:[#allocation10 + $0x158] sm:$0xff]
    %v2243 = vld [vmem:[#allocation10 + $0x160] sm:$0xff]
    %v2244 = vld [vmem:[#allocation10 + $0x168] sm:$0xff]
    %v2245 = vld [vmem:[#allocation10 + $0x170] sm:$0xff]
    %v2246 = vld [vmem:[#allocation10 + $0x178] sm:$0xff]
    %v2247 = vld [vmem:[#allocation10 + $0x180] sm:$0xff]
    %v2248 = vld [vmem:[#allocation10 + $0x188] sm:$0xff]
    %v2249 = vld [vmem:[#allocation10 + $0x190] sm:$0xff]
    %v2250 = vld [vmem:[#allocation10 + $0x198] sm:$0xff]
    %v2251 = vld [vmem:[#allocation10 + $0x1a0] sm:$0xff]
    %v2252 = vld [vmem:[#allocation10 + $0x1a8] sm:$0xff]
    %v2253 = vld [vmem:[#allocation10 + $0x1b0] sm:$0xff]
    %v2254 = vld [vmem:[#allocation10 + $0x1b8] sm:$0xff]
    %v2255 = vld [vmem:[#allocation10 + $0x1c0] sm:$0xff]
    %v2256 = vld [vmem:[#allocation10 + $0x1c8] sm:$0xff]
    %v2257 = vld [vmem:[#allocation10 + $0x1d0] sm:$0xff]
    %v2258 = vld [vmem:[#allocation10 + $0x1d8] sm:$0xff]
    %v2259 = vld [vmem:[#allocation10 + $0x1e0] sm:$0xff]
    %v2260 = vld [vmem:[#allocation10 + $0x1e8] sm:$0xff]
    %v2261 = vld [vmem:[#allocation10 + $0x1f0] sm:$0xff]
    %v2262 = vld [vmem:[#allocation10 + $0x1f8] sm:$0xff]
    %2263 = vmatprep.subr.mxu0 %v2200
    %2264 = vmatpush1.msra.mxu0 %v2199
    %2265 = vmatprep.subr.mxu0 %v2204
    %2266 = vmatpush1.msra.mxu0 %v2203
    %2267 = vmatprep.subr.mxu0 %v2208
    %2268 = vmatpush1.msra.mxu0 %v2207
    %2269 = vmatprep.subr.mxu0 %v2212
    %2270 = vmatpush1.msra.mxu0 %v2211
    %2271 = vmatprep.subr.mxu0 %v2216
    %2272 = vmatpush1.msra.mxu0 %v2215
    %2273 = vmatprep.subr.mxu0 %v2220
    %2274 = vmatpush1.msra.mxu0 %v2219
    %2275 = vmatprep.subr.mxu0 %v2224
    %2276 = vmatpush1.msra.mxu0 %v2223
    %2277 = vmatprep.subr.mxu0 %v2228
    %2278 = vmatpush1.msra.mxu0 %v2227
    %2279 = vmatprep.subr.mxu0 %v2232
    %2280 = vmatpush1.msra.mxu0 %v2231
    %2281 = vmatprep.subr.mxu0 %v2236
    %2282 = vmatpush1.msra.mxu0 %v2235
    %2283 = vmatprep.subr.mxu0 %v2240
    %2284 = vmatpush1.msra.mxu0 %v2239
    %2285 = vmatprep.subr.mxu0 %v2244
    %2286 = vmatpush1.msra.mxu0 %v2243
    %2287 = vmatprep.subr.mxu0 %v2248
    %2288 = vmatpush1.msra.mxu0 %v2247
    %2289 = vmatprep.subr.mxu0 %v2252
    %2290 = vmatpush1.msra.mxu0 %v2251
    %2291 = vmatprep.subr.mxu0 %v2256
    %2292 = vmatpush1.msra.mxu0 %v2255
    %2293 = vmatprep.subr.mxu0 %v2260
    %2294 = vmatpush1.msra.mxu0 %v2259
    %2295 = vmatprep.subr.mxu0 0.0
    %2296 = vmatpush1.msra.mxu0 0.0
    %2297 = vmatprep.subr.mxu0 0.0
    %2298 = vmatpush1.msra.mxu0 0.0
    %2299 = vmatprep.subr.mxu0 0.0
    %2300 = vmatpush1.msra.mxu0 0.0
    %2301 = vmatprep.subr.mxu0 0.0
    %2302 = vmatpush1.msra.mxu0 0.0
    %2303 = vmatprep.subr.mxu0 0.0
    %2304 = vmatpush1.msra.mxu0 0.0
    %2305 = vmatprep.subr.mxu0 0.0
    %2306 = vmatpush1.msra.mxu0 0.0
    %2307 = vmatprep.subr.mxu0 0.0
    %2308 = vmatpush1.msra.mxu0 0.0
    %2309 = vmatprep.subr.mxu0 0.0
    %2310 = vmatpush1.msra.mxu0 0.0
    %2311 = vmatprep.subr.mxu0 0.0
    %2312 = vmatpush1.msra.mxu0 0.0
    %2313 = vmatprep.subr.mxu0 0.0
    %2314 = vmatpush1.msra.mxu0 0.0
    %2315 = vmatprep.subr.mxu0 0.0
    %2316 = vmatpush1.msra.mxu0 0.0
    %2317 = vmatprep.subr.mxu0 0.0
    %2318 = vmatpush1.msra.mxu0 0.0
    %2319 = vmatprep.subr.mxu0 0.0
    %2320 = vmatpush1.msra.mxu0 0.0
    %2321 = vmatprep.subr.mxu0 0.0
    %2322 = vmatpush1.msra.mxu0 0.0
    %2323 = vmatprep.subr.mxu0 0.0
    %2324 = vmatpush1.msra.mxu0 0.0
    %2325 = vmatprep.subr.mxu0 0.0
    %2326 = vmatpush1.msra.mxu0 0.0
    %2327 = vmatprep.mubr.f32.mxu0 0.0
    %2328 = vmatmul.mubr.f32.gmra.mrb[0].mxu0 %v2198
    %v2329 = vpop.f32.mrb[0].mxu0
    %v2330 = vadd.f32 0.0, %v2329
    %v2331 = vpop.f32.mrb[0].mxu0
    %v2332 = vadd.f32 0.0, %v2331
    %2333 = vdwg.mxu0
    %2334 = vmatprep.subr.mxu0 %v2202
    %2335 = vmatpush1.msra.mxu0 %v2201
    %2336 = vmatprep.subr.mxu0 %v2206
    %2337 = vmatpush1.msra.mxu0 %v2205
    %2338 = vmatprep.subr.mxu0 %v2210
    %2339 = vmatpush1.msra.mxu0 %v2209
    %2340 = vmatprep.subr.mxu0 %v2214
    %2341 = vmatpush1.msra.mxu0 %v2213
    %2342 = vmatprep.subr.mxu0 %v2218
    %2343 = vmatpush1.msra.mxu0 %v2217
    %2344 = vmatprep.subr.mxu0 %v2222
    %2345 = vmatpush1.msra.mxu0 %v2221
    %2346 = vmatprep.subr.mxu0 %v2226
    %2347 = vmatpush1.msra.mxu0 %v2225
    %2348 = vmatprep.subr.mxu0 %v2230
    %2349 = vmatpush1.msra.mxu0 %v2229
    %2350 = vmatprep.subr.mxu0 %v2234
    %2351 = vmatpush1.msra.mxu0 %v2233
    %2352 = vmatprep.subr.mxu0 %v2238
    %2353 = vmatpush1.msra.mxu0 %v2237
    %2354 = vmatprep.subr.mxu0 %v2242
    %2355 = vmatpush1.msra.mxu0 %v2241
    %2356 = vmatprep.subr.mxu0 %v2246
    %2357 = vmatpush1.msra.mxu0 %v2245
    %2358 = vmatprep.subr.mxu0 %v2250
    %2359 = vmatpush1.msra.mxu0 %v2249
    %2360 = vmatprep.subr.mxu0 %v2254
    %2361 = vmatpush1.msra.mxu0 %v2253
    %2362 = vmatprep.subr.mxu0 %v2258
    %2363 = vmatpush1.msra.mxu0 %v2257
    %2364 = vmatprep.subr.mxu0 %v2262
    %2365 = vmatpush1.msra.mxu0 %v2261
    %2366 = vmatprep.subr.mxu0 0.0
    %2367 = vmatpush1.msra.mxu0 0.0
    %2368 = vmatprep.subr.mxu0 0.0
    %2369 = vmatpush1.msra.mxu0 0.0
    %2370 = vmatprep.subr.mxu0 0.0
    %2371 = vmatpush1.msra.mxu0 0.0
    %2372 = vmatprep.subr.mxu0 0.0
    %2373 = vmatpush1.msra.mxu0 0.0
    %2374 = vmatprep.subr.mxu0 0.0
    %2375 = vmatpush1.msra.mxu0 0.0
    %2376 = vmatprep.subr.mxu0 0.0
    %2377 = vmatpush1.msra.mxu0 0.0
    %2378 = vmatprep.subr.mxu0 0.0
    %2379 = vmatpush1.msra.mxu0 0.0
    %2380 = vmatprep.subr.mxu0 0.0
    %2381 = vmatpush1.msra.mxu0 0.0
    %2382 = vmatprep.subr.mxu0 0.0
    %2383 = vmatpush1.msra.mxu0 0.0
    %2384 = vmatprep.subr.mxu0 0.0
    %2385 = vmatpush1.msra.mxu0 0.0
    %2386 = vmatprep.subr.mxu0 0.0
    %2387 = vmatpush1.msra.mxu0 0.0
    %2388 = vmatprep.subr.mxu0 0.0
    %2389 = vmatpush1.msra.mxu0 0.0
    %2390 = vmatprep.subr.mxu0 0.0
    %2391 = vmatpush1.msra.mxu0 0.0
    %2392 = vmatprep.subr.mxu0 0.0
    %2393 = vmatpush1.msra.mxu0 0.0
    %2394 = vmatprep.subr.mxu0 0.0
    %2395 = vmatpush1.msra.mxu0 0.0
    %2396 = vmatprep.subr.mxu0 0.0
    %2397 = vmatpush1.msra.mxu0 0.0
    %2398 = vmatprep.mubr.f32.mxu0 0.0
    %2399 = vmatmul.mubr.f32.gmra.mrb[0].mxu0 %v2198
    %v2400 = vpop.f32.mrb[0].mxu0
    %v2401 = vadd.f32 0.0, %v2400
    %v2402 = vpop.f32.mrb[0].mxu0
    %v2403 = vadd.f32 0.0, %v2402
    %2404 = vdwg.mxu0
    %v2405 = vadd.f32 %v2194, %v2330
    %v2406 = vadd.f32 %v2195, %v2332
    %v2407 = vadd.f32 %v2196, %v2401
    %v2408 = vadd.f32 %v2197, %v2403
    %v2409 = vld [vmem:[%s4] sm:$0xff]
    %v2410 = vld [vmem:[%s4 + $0x8] sm:$0xff]
    %v2411 = vld [vmem:[%s4 + $0x10] sm:$0xff]
    %v2412 = vld [vmem:[%s4 + $0x18] sm:$0xff]
    %v2413 = vadd.f32 %v2405, %v2409
    %v2414 = vadd.f32 %v2406, %v2410
    %v2415 = vadd.f32 %v2407, %v2411
    %v2416 = vadd.f32 %v2408, %v2412
    %v2417 = vld [vmem:[#allocation4] sm:$0xff]
    %v2418 = vxor.u32 %v2413, 2147483648
    %v2419 = vmul.f32 %v2418, 1.442695
    %v2420 = vpow.pop %v2419
    %v2421 = vadd.f32 %v2420, 1.0
    %v2422 = vrcp.pop %v2421
    %v2423 = vmul.f32 1.0, %v2422
    %v2424 = vxor.u32 %v2414, 2147483648
    %v2425 = vmul.f32 %v2424, 1.442695
    %v2426 = vpow.pop %v2425
    %v2427 = vadd.f32 %v2426, 1.0
    %v2428 = vrcp.pop %v2427
    %v2429 = vmul.f32 1.0, %v2428
    %v2430 = vtanh.pop %v2415
    %v2431 = vxor.u32 %v2416, 2147483648
    %v2432 = vmul.f32 %v2431, 1.442695
    %v2433 = vpow.pop %v2432
    %v2434 = vadd.f32 %v2433, 1.0
    %v2435 = vrcp.pop %v2434
    %v2436 = vmul.f32 1.0, %v2435
    %v2437 = vmul.f32 %v2429, %v2417
    %v2438 = vmul.f32 %v2423, %v2430
    %v2439 = vadd.f32 %v2437, %v2438
    %v2440 = vtanh.pop %v2439
    %v2441 = vmul.f32 %v2436, %v2440
    %2442 = vst [vmem:[#allocation3] sm:$0xff] %v2441
    %2443 = vst [vmem:[#allocation4] sm:$0xff] %v2439
    %v2444 = vld [vmem:[%s12] sm:$0xff]
    %2445 = vst [vmem:[#allocation5] sm:$0xff] %v2444
    %v2446 = vlaneseq
    %v2447 = vand.u32 %v2446, 127
    %v2448 = vld [vmem:[#allocation5] sm:$0xff]
    %v2449 = vld [vmem:[%s5] sm:$0xff]
    %v2450 = vld [vmem:[%s5 + $0x8] sm:$0xff]
    %v2451 = vld [vmem:[%s5 + $0x10] sm:$0xff]
    %v2452 = vld [vmem:[%s5 + $0x18] sm:$0xff]
    %v2453 = vld [vmem:[%s5 + $0x20] sm:$0xff]
    %v2454 = vld [vmem:[%s5 + $0x28] sm:$0xff]
    %v2455 = vld [vmem:[%s5 + $0x30] sm:$0xff]
    %v2456 = vld [vmem:[%s5 + $0x38] sm:$0xff]
    %v2457 = vld [vmem:[%s5 + $0x40] sm:$0xff]
    %v2458 = vld [vmem:[%s5 + $0x48] sm:$0xff]
    %v2459 = vld [vmem:[%s5 + $0x50] sm:$0xff]
    %v2460 = vld [vmem:[%s5 + $0x58] sm:$0xff]
    %v2461 = vld [vmem:[%s5 + $0x60] sm:$0xff]
    %v2462 = vld [vmem:[%s5 + $0x68] sm:$0xff]
    %v2463 = vld [vmem:[%s5 + $0x70] sm:$0xff]
    %v2464 = vld [vmem:[%s5 + $0x78] sm:$0xff]
    %2465 = vmatprep.subr.mxu0 0.0
    %2466 = vmatpush1.msra.mxu0 %v2449
    %2467 = vmatprep.subr.mxu0 0.0
    %2468 = vmatpush1.msra.mxu0 %v2450
    %2469 = vmatprep.subr.mxu0 0.0
    %2470 = vmatpush1.msra.mxu0 %v2451
    %2471 = vmatprep.subr.mxu0 0.0
    %2472 = vmatpush1.msra.mxu0 %v2452
    %2473 = vmatprep.subr.mxu0 0.0
    %2474 = vmatpush1.msra.mxu0 %v2453
    %2475 = vmatprep.subr.mxu0 0.0
    %2476 = vmatpush1.msra.mxu0 %v2454
    %2477 = vmatprep.subr.mxu0 0.0
    %2478 = vmatpush1.msra.mxu0 %v2455
    %2479 = vmatprep.subr.mxu0 0.0
    %2480 = vmatpush1.msra.mxu0 %v2456
    %2481 = vmatprep.subr.mxu0 0.0
    %2482 = vmatpush1.msra.mxu0 %v2457
    %2483 = vmatprep.subr.mxu0 0.0
    %2484 = vmatpush1.msra.mxu0 %v2458
    %2485 = vmatprep.subr.mxu0 0.0
    %2486 = vmatpush1.msra.mxu0 %v2459
    %2487 = vmatprep.subr.mxu0 0.0
    %2488 = vmatpush1.msra.mxu0 %v2460
    %2489 = vmatprep.subr.mxu0 0.0
    %2490 = vmatpush1.msra.mxu0 %v2461
    %2491 = vmatprep.subr.mxu0 0.0
    %2492 = vmatpush1.msra.mxu0 %v2462
    %2493 = vmatprep.subr.mxu0 0.0
    %2494 = vmatpush1.msra.mxu0 %v2463
    %2495 = vmatprep.subr.mxu0 0.0
    %2496 = vmatpush1.msra.mxu0 %v2464
    %2497 = vmatprep.subr.mxu0 0.0
    %2498 = vmatpush1.msra.mxu0 0.0
    %2499 = vmatprep.subr.mxu0 0.0
    %2500 = vmatpush1.msra.mxu0 0.0
    %2501 = vmatprep.subr.mxu0 0.0
    %2502 = vmatpush1.msra.mxu0 0.0
    %2503 = vmatprep.subr.mxu0 0.0
    %2504 = vmatpush1.msra.mxu0 0.0
    %2505 = vmatprep.subr.mxu0 0.0
    %2506 = vmatpush1.msra.mxu0 0.0
    %2507 = vmatprep.subr.mxu0 0.0
    %2508 = vmatpush1.msra.mxu0 0.0
    %2509 = vmatprep.subr.mxu0 0.0
    %2510 = vmatpush1.msra.mxu0 0.0
    %2511 = vmatprep.subr.mxu0 0.0
    %2512 = vmatpush1.msra.mxu0 0.0
    %2513 = vmatprep.subr.mxu0 0.0
    %2514 = vmatpush1.msra.mxu0 0.0
    %2515 = vmatprep.subr.mxu0 0.0
    %2516 = vmatpush1.msra.mxu0 0.0
    %2517 = vmatprep.subr.mxu0 0.0
    %2518 = vmatpush1.msra.mxu0 0.0
    %2519 = vmatprep.subr.mxu0 0.0
    %2520 = vmatpush1.msra.mxu0 0.0
    %2521 = vmatprep.subr.mxu0 0.0
    %2522 = vmatpush1.msra.mxu0 0.0
    %2523 = vmatprep.subr.mxu0 0.0
    %2524 = vmatpush1.msra.mxu0 0.0
    %2525 = vmatprep.subr.mxu0 0.0
    %2526 = vmatpush1.msra.mxu0 0.0
    %2527 = vmatprep.subr.mxu0 0.0
    %2528 = vmatpush1.msra.mxu0 0.0
    %2529 = vmatprep.mubr.f32.mxu0 0.0
    %2530 = vmatmul.mubr.f32.gmra.mrb[0].mxu0 %v2448
    %v2531 = vpop.f32.mrb[0].mxu0
    %v2532 = vadd.f32 0.0, %v2531
    %v2533 = vpop.f32.mrb[0].mxu0
    %2534 = vdwg.mxu0
    %v2535 = vld [vmem:[#allocation12] sm:$0xff]
    %v2536 = vld [vmem:[#allocation12 + $0x8] sm:$0xff]
    %v2537 = vld [vmem:[#allocation12 + $0x10] sm:$0xff]
    %v2538 = vld [vmem:[#allocation12 + $0x18] sm:$0xff]
    %v2539 = vld [vmem:[#allocation12 + $0x20] sm:$0xff]
    %v2540 = vld [vmem:[#allocation12 + $0x28] sm:$0xff]
    %v2541 = vld [vmem:[#allocation12 + $0x30] sm:$0xff]
    %v2542 = vld [vmem:[#allocation12 + $0x38] sm:$0xff]
    %v2543 = vld [vmem:[#allocation12 + $0x40] sm:$0xff]
    %v2544 = vld [vmem:[#allocation12 + $0x48] sm:$0xff]
    %v2545 = vld [vmem:[#allocation12 + $0x50] sm:$0xff]
    %v2546 = vld [vmem:[#allocation12 + $0x58] sm:$0xff]
    %v2547 = vld [vmem:[#allocation12 + $0x60] sm:$0xff]
    %v2548 = vld [vmem:[#allocation12 + $0x68] sm:$0xff]
    %v2549 = vld [vmem:[#allocation12 + $0x70] sm:$0xff]
    %v2550 = vld [vmem:[#allocation12 + $0x78] sm:$0xff]
    %v2551 = vld [vmem:[#allocation12 + $0x80] sm:$0xff]
    %v2552 = vld [vmem:[#allocation12 + $0x88] sm:$0xff]
    %v2553 = vld [vmem:[#allocation12 + $0x90] sm:$0xff]
    %v2554 = vld [vmem:[#allocation12 + $0x98] sm:$0xff]
    %v2555 = vld [vmem:[#allocation12 + $0xa0] sm:$0xff]
    %v2556 = vld [vmem:[#allocation12 + $0xa8] sm:$0xff]
    %v2557 = vld [vmem:[#allocation12 + $0xb0] sm:$0xff]
    %v2558 = vld [vmem:[#allocation12 + $0xb8] sm:$0xff]
    %v2559 = vld [vmem:[#allocation12 + $0xc0] sm:$0xff]
    %v2560 = vld [vmem:[#allocation12 + $0xc8] sm:$0xff]
    %v2561 = vld [vmem:[#allocation12 + $0xd0] sm:$0xff]
    %v2562 = vld [vmem:[#allocation12 + $0xd8] sm:$0xff]
    %v2563 = vld [vmem:[#allocation12 + $0xe0] sm:$0xff]
    %v2564 = vld [vmem:[#allocation12 + $0xe8] sm:$0xff]
    %v2565 = vld [vmem:[#allocation12 + $0xf0] sm:$0xff]
    %v2566 = vld [vmem:[#allocation12 + $0xf8] sm:$0xff]
    %v2567 = vld [vmem:[#allocation12 + $0x100] sm:$0xff]
    %v2568 = vld [vmem:[#allocation12 + $0x108] sm:$0xff]
    %v2569 = vld [vmem:[#allocation12 + $0x110] sm:$0xff]
    %v2570 = vld [vmem:[#allocation12 + $0x118] sm:$0xff]
    %v2571 = vld [vmem:[#allocation12 + $0x120] sm:$0xff]
    %v2572 = vld [vmem:[#allocation12 + $0x128] sm:$0xff]
    %v2573 = vld [vmem:[#allocation12 + $0x130] sm:$0xff]
    %v2574 = vld [vmem:[#allocation12 + $0x138] sm:$0xff]
    %v2575 = vld [vmem:[#allocation12 + $0x140] sm:$0xff]
    %v2576 = vld [vmem:[#allocation12 + $0x148] sm:$0xff]
    %v2577 = vld [vmem:[#allocation12 + $0x150] sm:$0xff]
    %v2578 = vld [vmem:[#allocation12 + $0x158] sm:$0xff]
    %v2579 = vld [vmem:[#allocation12 + $0x160] sm:$0xff]
    %v2580 = vld [vmem:[#allocation12 + $0x168] sm:$0xff]
    %v2581 = vld [vmem:[#allocation12 + $0x170] sm:$0xff]
    %v2582 = vld [vmem:[#allocation12 + $0x178] sm:$0xff]
    %v2583 = vld [vmem:[#allocation12 + $0x180] sm:$0xff]
    %v2584 = vld [vmem:[#allocation12 + $0x188] sm:$0xff]
    %v2585 = vld [vmem:[#allocation12 + $0x190] sm:$0xff]
    %v2586 = vld [vmem:[#allocation12 + $0x198] sm:$0xff]
    %v2587 = vld [vmem:[#allocation12 + $0x1a0] sm:$0xff]
    %v2588 = vld [vmem:[#allocation12 + $0x1a8] sm:$0xff]
    %v2589 = vld [vmem:[#allocation12 + $0x1b0] sm:$0xff]
    %v2590 = vld [vmem:[#allocation12 + $0x1b8] sm:$0xff]
    %v2591 = vld [vmem:[#allocation12 + $0x1c0] sm:$0xff]
    %v2592 = vld [vmem:[#allocation12 + $0x1c8] sm:$0xff]
    %v2593 = vld [vmem:[#allocation12 + $0x1d0] sm:$0xff]
    %v2594 = vld [vmem:[#allocation12 + $0x1d8] sm:$0xff]
    %v2595 = vld [vmem:[#allocation12 + $0x1e0] sm:$0xff]
    %v2596 = vld [vmem:[#allocation12 + $0x1e8] sm:$0xff]
    %v2597 = vld [vmem:[#allocation12 + $0x1f0] sm:$0xff]
    %v2598 = vld [vmem:[#allocation12 + $0x1f8] sm:$0xff]
    %v2599 = vld [vmem:[#allocation3] sm:$0xff]
    %v2600 = vld [vmem:[#allocation13] sm:$0xff]
    %v2601 = vld [vmem:[#allocation13 + $0x8] sm:$0xff]
    %v2602 = vld [vmem:[#allocation13 + $0x10] sm:$0xff]
    %v2603 = vld [vmem:[#allocation13 + $0x18] sm:$0xff]
    %v2604 = vld [vmem:[#allocation13 + $0x20] sm:$0xff]
    %v2605 = vld [vmem:[#allocation13 + $0x28] sm:$0xff]
    %v2606 = vld [vmem:[#allocation13 + $0x30] sm:$0xff]
    %v2607 = vld [vmem:[#allocation13 + $0x38] sm:$0xff]
    %v2608 = vld [vmem:[#allocation13 + $0x40] sm:$0xff]
    %v2609 = vld [vmem:[#allocation13 + $0x48] sm:$0xff]
    %v2610 = vld [vmem:[#allocation13 + $0x50] sm:$0xff]
    %v2611 = vld [vmem:[#allocation13 + $0x58] sm:$0xff]
    %v2612 = vld [vmem:[#allocation13 + $0x60] sm:$0xff]
    %v2613 = vld [vmem:[#allocation13 + $0x68] sm:$0xff]
    %v2614 = vld [vmem:[#allocation13 + $0x70] sm:$0xff]
    %v2615 = vld [vmem:[#allocation13 + $0x78] sm:$0xff]
    %v2616 = vld [vmem:[#allocation13 + $0x80] sm:$0xff]
    %v2617 = vld [vmem:[#allocation13 + $0x88] sm:$0xff]
    %v2618 = vld [vmem:[#allocation13 + $0x90] sm:$0xff]
    %v2619 = vld [vmem:[#allocation13 + $0x98] sm:$0xff]
    %v2620 = vld [vmem:[#allocation13 + $0xa0] sm:$0xff]
    %v2621 = vld [vmem:[#allocation13 + $0xa8] sm:$0xff]
    %v2622 = vld [vmem:[#allocation13 + $0xb0] sm:$0xff]
    %v2623 = vld [vmem:[#allocation13 + $0xb8] sm:$0xff]
    %v2624 = vld [vmem:[#allocation13 + $0xc0] sm:$0xff]
    %v2625 = vld [vmem:[#allocation13 + $0xc8] sm:$0xff]
    %v2626 = vld [vmem:[#allocation13 + $0xd0] sm:$0xff]
    %v2627 = vld [vmem:[#allocation13 + $0xd8] sm:$0xff]
    %v2628 = vld [vmem:[#allocation13 + $0xe0] sm:$0xff]
    %v2629 = vld [vmem:[#allocation13 + $0xe8] sm:$0xff]
    %v2630 = vld [vmem:[#allocation13 + $0xf0] sm:$0xff]
    %v2631 = vld [vmem:[#allocation13 + $0xf8] sm:$0xff]
    %v2632 = vld [vmem:[#allocation13 + $0x100] sm:$0xff]
    %v2633 = vld [vmem:[#allocation13 + $0x108] sm:$0xff]
    %v2634 = vld [vmem:[#allocation13 + $0x110] sm:$0xff]
    %v2635 = vld [vmem:[#allocation13 + $0x118] sm:$0xff]
    %v2636 = vld [vmem:[#allocation13 + $0x120] sm:$0xff]
    %v2637 = vld [vmem:[#allocation13 + $0x128] sm:$0xff]
    %v2638 = vld [vmem:[#allocation13 + $0x130] sm:$0xff]
    %v2639 = vld [vmem:[#allocation13 + $0x138] sm:$0xff]
    %v2640 = vld [vmem:[#allocation13 + $0x140] sm:$0xff]
    %v2641 = vld [vmem:[#allocation13 + $0x148] sm:$0xff]
    %v2642 = vld [vmem:[#allocation13 + $0x150] sm:$0xff]
    %v2643 = vld [vmem:[#allocation13 + $0x158] sm:$0xff]
    %v2644 = vld [vmem:[#allocation13 + $0x160] sm:$0xff]
    %v2645 = vld [vmem:[#allocation13 + $0x168] sm:$0xff]
    %v2646 = vld [vmem:[#allocation13 + $0x170] sm:$0xff]
    %v2647 = vld [vmem:[#allocation13 + $0x178] sm:$0xff]
    %v2648 = vld [vmem:[#allocation13 + $0x180] sm:$0xff]
    %v2649 = vld [vmem:[#allocation13 + $0x188] sm:$0xff]
    %v2650 = vld [vmem:[#allocation13 + $0x190] sm:$0xff]
    %v2651 = vld [vmem:[#allocation13 + $0x198] sm:$0xff]
    %v2652 = vld [vmem:[#allocation13 + $0x1a0] sm:$0xff]
    %v2653 = vld [vmem:[#allocation13 + $0x1a8] sm:$0xff]
    %v2654 = vld [vmem:[#allocation13 + $0x1b0] sm:$0xff]
    %v2655 = vld [vmem:[#allocation13 + $0x1b8] sm:$0xff]
    %v2656 = vld [vmem:[#allocation13 + $0x1c0] sm:$0xff]
    %v2657 = vld [vmem:[#allocation13 + $0x1c8] sm:$0xff]
    %v2658 = vld [vmem:[#allocation13 + $0x1d0] sm:$0xff]
    %v2659 = vld [vmem:[#allocation13 + $0x1d8] sm:$0xff]
    %v2660 = vld [vmem:[#allocation13 + $0x1e0] sm:$0xff]
    %v2661 = vld [vmem:[#allocation13 + $0x1e8] sm:$0xff]
    %v2662 = vld [vmem:[#allocation13 + $0x1f0] sm:$0xff]
    %v2663 = vld [vmem:[#allocation13 + $0x1f8] sm:$0xff]
    %2664 = vmatprep.subr.mxu0 %v2601
    %2665 = vmatpush1.msra.mxu0 %v2600
    %2666 = vmatprep.subr.mxu0 %v2605
    %2667 = vmatpush1.msra.mxu0 %v2604
    %2668 = vmatprep.subr.mxu0 %v2609
    %2669 = vmatpush1.msra.mxu0 %v2608
    %2670 = vmatprep.subr.mxu0 %v2613
    %2671 = vmatpush1.msra.mxu0 %v2612
    %2672 = vmatprep.subr.mxu0 %v2617
    %2673 = vmatpush1.msra.mxu0 %v2616
    %2674 = vmatprep.subr.mxu0 %v2621
    %2675 = vmatpush1.msra.mxu0 %v2620
    %2676 = vmatprep.subr.mxu0 %v2625
    %2677 = vmatpush1.msra.mxu0 %v2624
    %2678 = vmatprep.subr.mxu0 %v2629
    %2679 = vmatpush1.msra.mxu0 %v2628
    %2680 = vmatprep.subr.mxu0 %v2633
    %2681 = vmatpush1.msra.mxu0 %v2632
    %2682 = vmatprep.subr.mxu0 %v2637
    %2683 = vmatpush1.msra.mxu0 %v2636
    %2684 = vmatprep.subr.mxu0 %v2641
    %2685 = vmatpush1.msra.mxu0 %v2640
    %2686 = vmatprep.subr.mxu0 %v2645
    %2687 = vmatpush1.msra.mxu0 %v2644
    %2688 = vmatprep.subr.mxu0 %v2649
    %2689 = vmatpush1.msra.mxu0 %v2648
    %2690 = vmatprep.subr.mxu0 %v2653
    %2691 = vmatpush1.msra.mxu0 %v2652
    %2692 = vmatprep.subr.mxu0 %v2657
    %2693 = vmatpush1.msra.mxu0 %v2656
    %2694 = vmatprep.subr.mxu0 %v2661
    %2695 = vmatpush1.msra.mxu0 %v2660
    %2696 = vmatprep.subr.mxu0 0.0
    %2697 = vmatpush1.msra.mxu0 0.0
    %2698 = vmatprep.subr.mxu0 0.0
    %2699 = vmatpush1.msra.mxu0 0.0
    %2700 = vmatprep.subr.mxu0 0.0
    %2701 = vmatpush1.msra.mxu0 0.0
    %2702 = vmatprep.subr.mxu0 0.0
    %2703 = vmatpush1.msra.mxu0 0.0
    %2704 = vmatprep.subr.mxu0 0.0
    %2705 = vmatpush1.msra.mxu0 0.0
    %2706 = vmatprep.subr.mxu0 0.0
    %2707 = vmatpush1.msra.mxu0 0.0
    %2708 = vmatprep.subr.mxu0 0.0
    %2709 = vmatpush1.msra.mxu0 0.0
    %2710 = vmatprep.subr.mxu0 0.0
    %2711 = vmatpush1.msra.mxu0 0.0
    %2712 = vmatprep.subr.mxu0 0.0
    %2713 = vmatpush1.msra.mxu0 0.0
    %2714 = vmatprep.subr.mxu0 0.0
    %2715 = vmatpush1.msra.mxu0 0.0
    %2716 = vmatprep.subr.mxu0 0.0
    %2717 = vmatpush1.msra.mxu0 0.0
    %2718 = vmatprep.subr.mxu0 0.0
    %2719 = vmatpush1.msra.mxu0 0.0
    %2720 = vmatprep.subr.mxu0 0.0
    %2721 = vmatpush1.msra.mxu0 0.0
    %2722 = vmatprep.subr.mxu0 0.0
    %2723 = vmatpush1.msra.mxu0 0.0
    %2724 = vmatprep.subr.mxu0 0.0
    %2725 = vmatpush1.msra.mxu0 0.0
    %2726 = vmatprep.subr.mxu0 0.0
    %2727 = vmatpush1.msra.mxu0 0.0
    %2728 = vmatprep.mubr.f32.mxu0 0.0
    %2729 = vmatmul.mubr.f32.gmra.mrb[0].mxu0 %v2599
    %v2730 = vpop.f32.mrb[0].mxu0
    %v2731 = vadd.f32 0.0, %v2730
    %v2732 = vpop.f32.mrb[0].mxu0
    %v2733 = vadd.f32 0.0, %v2732
    %2734 = vdwg.mxu0
    %2735 = vmatprep.subr.mxu0 %v2603
    %2736 = vmatpush1.msra.mxu0 %v2602
    %2737 = vmatprep.subr.mxu0 %v2607
    %2738 = vmatpush1.msra.mxu0 %v2606
    %2739 = vmatprep.subr.mxu0 %v2611
    %2740 = vmatpush1.msra.mxu0 %v2610
    %2741 = vmatprep.subr.mxu0 %v2615
    %2742 = vmatpush1.msra.mxu0 %v2614
    %2743 = vmatprep.subr.mxu0 %v2619
    %2744 = vmatpush1.msra.mxu0 %v2618
    %2745 = vmatprep.subr.mxu0 %v2623
    %2746 = vmatpush1.msra.mxu0 %v2622
    %2747 = vmatprep.subr.mxu0 %v2627
    %2748 = vmatpush1.msra.mxu0 %v2626
    %2749 = vmatprep.subr.mxu0 %v2631
    %2750 = vmatpush1.msra.mxu0 %v2630
    %2751 = vmatprep.subr.mxu0 %v2635
    %2752 = vmatpush1.msra.mxu0 %v2634
    %2753 = vmatprep.subr.mxu0 %v2639
    %2754 = vmatpush1.msra.mxu0 %v2638
    %2755 = vmatprep.subr.mxu0 %v2643
    %2756 = vmatpush1.msra.mxu0 %v2642
    %2757 = vmatprep.subr.mxu0 %v2647
    %2758 = vmatpush1.msra.mxu0 %v2646
    %2759 = vmatprep.subr.mxu0 %v2651
    %2760 = vmatpush1.msra.mxu0 %v2650
    %2761 = vmatprep.subr.mxu0 %v2655
    %2762 = vmatpush1.msra.mxu0 %v2654
    %2763 = vmatprep.subr.mxu0 %v2659
    %2764 = vmatpush1.msra.mxu0 %v2658
    %2765 = vmatprep.subr.mxu0 %v2663
    %2766 = vmatpush1.msra.mxu0 %v2662
    %2767 = vmatprep.subr.mxu0 0.0
    %2768 = vmatpush1.msra.mxu0 0.0
    %2769 = vmatprep.subr.mxu0 0.0
    %2770 = vmatpush1.msra.mxu0 0.0
    %2771 = vmatprep.subr.mxu0 0.0
    %2772 = vmatpush1.msra.mxu0 0.0
    %2773 = vmatprep.subr.mxu0 0.0
    %2774 = vmatpush1.msra.mxu0 0.0
    %2775 = vmatprep.subr.mxu0 0.0
    %2776 = vmatpush1.msra.mxu0 0.0
    %2777 = vmatprep.subr.mxu0 0.0
    %2778 = vmatpush1.msra.mxu0 0.0
    %2779 = vmatprep.subr.mxu0 0.0
    %2780 = vmatpush1.msra.mxu0 0.0
    %2781 = vmatprep.subr.mxu0 0.0
    %2782 = vmatpush1.msra.mxu0 0.0
    %2783 = vmatprep.subr.mxu0 0.0
    %2784 = vmatpush1.msra.mxu0 0.0
    %2785 = vmatprep.subr.mxu0 0.0
    %2786 = vmatpush1.msra.mxu0 0.0
    %2787 = vmatprep.subr.mxu0 0.0
    %2788 = vmatpush1.msra.mxu0 0.0
    %2789 = vmatprep.subr.mxu0 0.0
    %2790 = vmatpush1.msra.mxu0 0.0
    %2791 = vmatprep.subr.mxu0 0.0
    %2792 = vmatpush1.msra.mxu0 0.0
    %2793 = vmatprep.subr.mxu0 0.0
    %2794 = vmatpush1.msra.mxu0 0.0
    %2795 = vmatprep.subr.mxu0 0.0
    %2796 = vmatpush1.msra.mxu0 0.0
    %2797 = vmatprep.subr.mxu0 0.0
    %2798 = vmatpush1.msra.mxu0 0.0
    %2799 = vmatprep.mubr.f32.mxu0 0.0
    %2800 = vmatmul.mubr.f32.gmra.mrb[0].mxu0 %v2599
    %v2801 = vpop.f32.mrb[0].mxu0
    %v2802 = vadd.f32 0.0, %v2801
    %v2803 = vpop.f32.mrb[0].mxu0
    %v2804 = vadd.f32 0.0, %v2803
    %2805 = vdwg.mxu0
    %2806 = vmatprep.subr.mxu0 %v2536
    %2807 = vmatpush1.msra.mxu0 %v2535
    %2808 = vmatprep.subr.mxu0 %v2540
    %2809 = vmatpush1.msra.mxu0 %v2539
    %2810 = vmatprep.subr.mxu0 %v2544
    %2811 = vmatpush1.msra.mxu0 %v2543
    %2812 = vmatprep.subr.mxu0 %v2548
    %2813 = vmatpush1.msra.mxu0 %v2547
    %2814 = vmatprep.subr.mxu0 %v2552
    %2815 = vmatpush1.msra.mxu0 %v2551
    %2816 = vmatprep.subr.mxu0 %v2556
    %2817 = vmatpush1.msra.mxu0 %v2555
    %2818 = vmatprep.subr.mxu0 %v2560
    %2819 = vmatpush1.msra.mxu0 %v2559
    %2820 = vmatprep.subr.mxu0 %v2564
    %2821 = vmatpush1.msra.mxu0 %v2563
    %2822 = vmatprep.subr.mxu0 %v2568
    %2823 = vmatpush1.msra.mxu0 %v2567
    %2824 = vmatprep.subr.mxu0 %v2572
    %2825 = vmatpush1.msra.mxu0 %v2571
    %2826 = vmatprep.subr.mxu0 %v2576
    %2827 = vmatpush1.msra.mxu0 %v2575
    %2828 = vmatprep.subr.mxu0 %v2580
    %2829 = vmatpush1.msra.mxu0 %v2579
    %2830 = vmatprep.subr.mxu0 %v2584
    %2831 = vmatpush1.msra.mxu0 %v2583
    %2832 = vmatprep.subr.mxu0 %v2588
    %2833 = vmatpush1.msra.mxu0 %v2587
    %2834 = vmatprep.subr.mxu0 %v2592
    %2835 = vmatpush1.msra.mxu0 %v2591
    %2836 = vmatprep.subr.mxu0 %v2596
    %2837 = vmatpush1.msra.mxu0 %v2595
    %2838 = vmatprep.subr.mxu0 0.0
    %2839 = vmatpush1.msra.mxu0 0.0
    %2840 = vmatprep.subr.mxu0 0.0
    %2841 = vmatpush1.msra.mxu0 0.0
    %2842 = vmatprep.subr.mxu0 0.0
    %2843 = vmatpush1.msra.mxu0 0.0
    %2844 = vmatprep.subr.mxu0 0.0
    %2845 = vmatpush1.msra.mxu0 0.0
    %2846 = vmatprep.subr.mxu0 0.0
    %2847 = vmatpush1.msra.mxu0 0.0
    %2848 = vmatprep.subr.mxu0 0.0
    %2849 = vmatpush1.msra.mxu0 0.0
    %2850 = vmatprep.subr.mxu0 0.0
    %2851 = vmatpush1.msra.mxu0 0.0
    %2852 = vmatprep.subr.mxu0 0.0
    %2853 = vmatpush1.msra.mxu0 0.0
    %2854 = vmatprep.subr.mxu0 0.0
    %2855 = vmatpush1.msra.mxu0 0.0
    %2856 = vmatprep.subr.mxu0 0.0
    %2857 = vmatpush1.msra.mxu0 0.0
    %2858 = vmatprep.subr.mxu0 0.0
    %2859 = vmatpush1.msra.mxu0 0.0
    %2860 = vmatprep.subr.mxu0 0.0
    %2861 = vmatpush1.msra.mxu0 0.0
    %2862 = vmatprep.subr.mxu0 0.0
    %2863 = vmatpush1.msra.mxu0 0.0
    %2864 = vmatprep.subr.mxu0 0.0
    %2865 = vmatpush1.msra.mxu0 0.0
    %2866 = vmatprep.subr.mxu0 0.0
    %2867 = vmatpush1.msra.mxu0 0.0
    %2868 = vmatprep.subr.mxu0 0.0
    %2869 = vmatpush1.msra.mxu0 0.0
    %2870 = vmatprep.mubr.f32.mxu0 0.0
    %2871 = vmatmul.mubr.f32.gmra.mrb[0].mxu0 %v2532
    %v2872 = vpop.f32.mrb[0].mxu0
    %v2873 = vadd.f32 %v2731, %v2872
    %v2874 = vpop.f32.mrb[0].mxu0
    %v2875 = vadd.f32 %v2733, %v2874
    %2876 = vdwg.mxu0
    %2877 = vmatprep.subr.mxu0 %v2538
    %2878 = vmatpush1.msra.mxu0 %v2537
    %2879 = vmatprep.subr.mxu0 %v2542
    %2880 = vmatpush1.msra.mxu0 %v2541
    %2881 = vmatprep.subr.mxu0 %v2546
    %2882 = vmatpush1.msra.mxu0 %v2545
    %2883 = vmatprep.subr.mxu0 %v2550
    %2884 = vmatpush1.msra.mxu0 %v2549
    %2885 = vmatprep.subr.mxu0 %v2554
    %2886 = vmatpush1.msra.mxu0 %v2553
    %2887 = vmatprep.subr.mxu0 %v2558
    %2888 = vmatpush1.msra.mxu0 %v2557
    %2889 = vmatprep.subr.mxu0 %v2562
    %2890 = vmatpush1.msra.mxu0 %v2561
    %2891 = vmatprep.subr.mxu0 %v2566
    %2892 = vmatpush1.msra.mxu0 %v2565
    %2893 = vmatprep.subr.mxu0 %v2570
    %2894 = vmatpush1.msra.mxu0 %v2569
    %2895 = vmatprep.subr.mxu0 %v2574
    %2896 = vmatpush1.msra.mxu0 %v2573
    %2897 = vmatprep.subr.mxu0 %v2578
    %2898 = vmatpush1.msra.mxu0 %v2577
    %2899 = vmatprep.subr.mxu0 %v2582
    %2900 = vmatpush1.msra.mxu0 %v2581
    %2901 = vmatprep.subr.mxu0 %v2586
    %2902 = vmatpush1.msra.mxu0 %v2585
    %2903 = vmatprep.subr.mxu0 %v2590
    %2904 = vmatpush1.msra.mxu0 %v2589
    %2905 = vmatprep.subr.mxu0 %v2594
    %2906 = vmatpush1.msra.mxu0 %v2593
    %2907 = vmatprep.subr.mxu0 %v2598
    %2908 = vmatpush1.msra.mxu0 %v2597
    %2909 = vmatprep.subr.mxu0 0.0
    %2910 = vmatpush1.msra.mxu0 0.0
    %2911 = vmatprep.subr.mxu0 0.0
    %2912 = vmatpush1.msra.mxu0 0.0
    %2913 = vmatprep.subr.mxu0 0.0
    %2914 = vmatpush1.msra.mxu0 0.0
    %2915 = vmatprep.subr.mxu0 0.0
    %2916 = vmatpush1.msra.mxu0 0.0
    %2917 = vmatprep.subr.mxu0 0.0
    %2918 = vmatpush1.msra.mxu0 0.0
    %2919 = vmatprep.subr.mxu0 0.0
    %2920 = vmatpush1.msra.mxu0 0.0
    %2921 = vmatprep.subr.mxu0 0.0
    %2922 = vmatpush1.msra.mxu0 0.0
    %2923 = vmatprep.subr.mxu0 0.0
    %2924 = vmatpush1.msra.mxu0 0.0
    %2925 = vmatprep.subr.mxu0 0.0
    %2926 = vmatpush1.msra.mxu0 0.0
    %2927 = vmatprep.subr.mxu0 0.0
    %2928 = vmatpush1.msra.mxu0 0.0
    %2929 = vmatprep.subr.mxu0 0.0
    %2930 = vmatpush1.msra.mxu0 0.0
    %2931 = vmatprep.subr.mxu0 0.0
    %2932 = vmatpush1.msra.mxu0 0.0
    %2933 = vmatprep.subr.mxu0 0.0
    %2934 = vmatpush1.msra.mxu0 0.0
    %2935 = vmatprep.subr.mxu0 0.0
    %2936 = vmatpush1.msra.mxu0 0.0
    %2937 = vmatprep.subr.mxu0 0.0
    %2938 = vmatpush1.msra.mxu0 0.0
    %2939 = vmatprep.subr.mxu0 0.0
    %2940 = vmatpush1.msra.mxu0 0.0
    %2941 = vmatprep.mubr.f32.mxu0 0.0
    %2942 = vmatmul.mubr.f32.gmra.mrb[0].mxu0 %v2532
    %v2943 = vpop.f32.mrb[0].mxu0
    %v2944 = vadd.f32 %v2802, %v2943
    %v2945 = vpop.f32.mrb[0].mxu0
    %v2946 = vadd.f32 %v2804, %v2945
    %2947 = vdwg.mxu0
    %v2948 = vld [vmem:[%s8] sm:$0xff]
    %v2949 = vld [vmem:[%s8 + $0x8] sm:$0xff]
    %v2950 = vld [vmem:[%s8 + $0x10] sm:$0xff]
    %v2951 = vld [vmem:[%s8 + $0x18] sm:$0xff]
    %v2952 = vadd.f32 %v2873, %v2948
    %v2953 = vadd.f32 %v2875, %v2949
    %v2954 = vadd.f32 %v2944, %v2950
    %v2955 = vadd.f32 %v2946, %v2951
    %v2956 = vld [vmem:[#allocation4] sm:$0xff]
    %v2957 = vxor.u32 %v2952, 2147483648
    %v2958 = vmul.f32 %v2957, 1.442695
    %v2959 = vpow.pop %v2958
    %v2960 = vadd.f32 %v2959, 1.0
    %v2961 = vrcp.pop %v2960
    %v2962 = vmul.f32 1.0, %v2961
    %v2963 = vxor.u32 %v2953, 2147483648
    %v2964 = vmul.f32 %v2963, 1.442695
    %v2965 = vpow.pop %v2964
    %v2966 = vadd.f32 %v2965, 1.0
    %v2967 = vrcp.pop %v2966
    %v2968 = vmul.f32 1.0, %v2967
    %v2969 = vtanh.pop %v2954
    %v2970 = vxor.u32 %v2955, 2147483648
    %v2971 = vmul.f32 %v2970, 1.442695
    %v2972 = vpow.pop %v2971
    %v2973 = vadd.f32 %v2972, 1.0
    %v2974 = vrcp.pop %v2973
    %v2975 = vmul.f32 1.0, %v2974
    %v2976 = vmul.f32 %v2968, %v2956
    %v2977 = vmul.f32 %v2962, %v2969
    %v2978 = vadd.f32 %v2976, %v2977
    %v2979 = vtanh.pop %v2978
    %v2980 = vmul.f32 %v2975, %v2979
    %2981 = vst [vmem:[#allocation3] sm:$0xff] %v2980
    %2982 = vst [vmem:[#allocation4] sm:$0xff] %v2978
    %v2983 = vld [vmem:[%s9] sm:$0xff]
    %v2984 = vld [vmem:[%s9 + $0x8] sm:$0xff]
    %v2985 = vld [vmem:[%s9 + $0x10] sm:$0xff]
    %v2986 = vld [vmem:[%s9 + $0x18] sm:$0xff]
    %v2987 = vld [vmem:[%s9 + $0x20] sm:$0xff]
    %v2988 = vld [vmem:[%s9 + $0x28] sm:$0xff]
    %v2989 = vld [vmem:[%s9 + $0x30] sm:$0xff]
    %v2990 = vld [vmem:[%s9 + $0x38] sm:$0xff]
    %v2991 = vld [vmem:[%s9 + $0x40] sm:$0xff]
    %v2992 = vld [vmem:[%s9 + $0x48] sm:$0xff]
    %v2993 = vld [vmem:[%s9 + $0x50] sm:$0xff]
    %v2994 = vld [vmem:[%s9 + $0x58] sm:$0xff]
    %v2995 = vld [vmem:[%s9 + $0x60] sm:$0xff]
    %v2996 = vld [vmem:[%s9 + $0x68] sm:$0xff]
    %v2997 = vld [vmem:[%s9 + $0x70] sm:$0xff]
    %v2998 = vld [vmem:[%s9 + $0x78] sm:$0xff]
    %v2999 = vld [vmem:[%s10] sm:$0xff]
    %3000 = vmatprep.subr.mxu0 0.0
    %3001 = vmatpush1.msra.mxu0 %v2983
    %3002 = vmatprep.subr.mxu0 0.0
    %3003 = vmatpush1.msra.mxu0 %v2984
    %3004 = vmatprep.subr.mxu0 0.0
    %3005 = vmatpush1.msra.mxu0 %v2985
    %3006 = vmatprep.subr.mxu0 0.0
    %3007 = vmatpush1.msra.mxu0 %v2986
    %3008 = vmatprep.subr.mxu0 0.0
    %3009 = vmatpush1.msra.mxu0 %v2987
    %3010 = vmatprep.subr.mxu0 0.0
    %3011 = vmatpush1.msra.mxu0 %v2988
    %3012 = vmatprep.subr.mxu0 0.0
    %3013 = vmatpush1.msra.mxu0 %v2989
    %3014 = vmatprep.subr.mxu0 0.0
    %3015 = vmatpush1.msra.mxu0 %v2990
    %3016 = vmatprep.subr.mxu0 0.0
    %3017 = vmatpush1.msra.mxu0 %v2991
    %3018 = vmatprep.subr.mxu0 0.0
    %3019 = vmatpush1.msra.mxu0 %v2992
    %3020 = vmatprep.subr.mxu0 0.0
    %3021 = vmatpush1.msra.mxu0 %v2993
    %3022 = vmatprep.subr.mxu0 0.0
    %3023 = vmatpush1.msra.mxu0 %v2994
    %3024 = vmatprep.subr.mxu0 0.0
    %3025 = vmatpush1.msra.mxu0 %v2995
    %3026 = vmatprep.subr.mxu0 0.0
    %3027 = vmatpush1.msra.mxu0 %v2996
    %3028 = vmatprep.subr.mxu0 0.0
    %3029 = vmatpush1.msra.mxu0 %v2997
    %3030 = vmatprep.subr.mxu0 0.0
    %3031 = vmatpush1.msra.mxu0 %v2998
    %3032 = vmatprep.subr.mxu0 0.0
    %3033 = vmatpush1.msra.mxu0 0.0
    %3034 = vmatprep.subr.mxu0 0.0
    %3035 = vmatpush1.msra.mxu0 0.0
    %3036 = vmatprep.subr.mxu0 0.0
    %3037 = vmatpush1.msra.mxu0 0.0
    %3038 = vmatprep.subr.mxu0 0.0
    %3039 = vmatpush1.msra.mxu0 0.0
    %3040 = vmatprep.subr.mxu0 0.0
    %3041 = vmatpush1.msra.mxu0 0.0
    %3042 = vmatprep.subr.mxu0 0.0
    %3043 = vmatpush1.msra.mxu0 0.0
    %3044 = vmatprep.subr.mxu0 0.0
    %3045 = vmatpush1.msra.mxu0 0.0
    %3046 = vmatprep.subr.mxu0 0.0
    %3047 = vmatpush1.msra.mxu0 0.0
    %3048 = vmatprep.subr.mxu0 0.0
    %3049 = vmatpush1.msra.mxu0 0.0
    %3050 = vmatprep.subr.mxu0 0.0
    %3051 = vmatpush1.msra.mxu0 0.0
    %3052 = vmatprep.subr.mxu0 0.0
    %3053 = vmatpush1.msra.mxu0 0.0
    %3054 = vmatprep.subr.mxu0 0.0
    %3055 = vmatpush1.msra.mxu0 0.0
    %3056 = vmatprep.subr.mxu0 0.0
    %3057 = vmatpush1.msra.mxu0 0.0
    %3058 = vmatprep.subr.mxu0 0.0
    %3059 = vmatpush1.msra.mxu0 0.0
    %3060 = vmatprep.subr.mxu0 0.0
    %3061 = vmatpush1.msra.mxu0 0.0
    %3062 = vmatprep.subr.mxu0 0.0
    %3063 = vmatpush1.msra.mxu0 0.0
    %3064 = vmatprep.mubr.f32.mxu0 0.0
    %3065 = vmatmul.mubr.f32.gmra.mrb[0].mxu0 %v2980
    %v3066 = vpop.f32.mrb[0].mxu0
    %v3067 = vadd.f32 %v2999, %v3066
    %v3068 = vpop.f32.mrb[0].mxu0
    %3069 = vdwg.mxu0
    %3070 = vst [vmem:[%s13] sm:$0xff] %v3067
    %s3071 = sld [smem:[#allocation6]]
    %p3072 = scmp.eq.s32.totalorder %s3071, 0
    // Predicated region
    $region74: #{chat_model_forward.1} parent=1 // pred_check
      %p3073 = pneg %p3072
    $region75: #{chat_model_forward.1} parent=1 // pred_check_branch
      %3075 = sbr.rel (%p3073) target = $region77
    $region76: #{chat_model_forward.1} parent=1 // pred_region
      %vm3076 = vcmp.lt.s32.totalorder %v2447, 64
      %v3077 = vsel %vm3076, %v3067, -1e+30
      %3078 = vmax.xlane.f32.xlu0 %v3077
      %v3079 = vpop.xlane.xlu0 %3078
      %vm3080 = vcmp.eq.f32.partialorder %v3077, %v3079
      %v3081 = vsel %vm3080, %v2447, 128
      %v3082 = vand.u32 %v3081, 65535
      %v3083 = vshra.s32 %v3081, 16
      %v3084 = vcvt.s32.f32 %v3082
      %v3085 = vcvt.s32.f32 %v3083
      %3086 = vmin.xlane.f32.xlu0 %v3085
      %v3087 = vpop.xlane.xlu0 %3086
      %vm3088 = vcmp.eq.f32.partialorder %v3085, %v3087
      %v3089 = vsel %vm3088, %v3084, inf
      %3090 = vmin.xlane.f32.xlu0 %v3089
      %v3091 = vpop.xlane.xlu0 %3090
      %v3092 = vcvt.f32.s32 %v3091
      %v3093 = vcvt.f32.s32 %v3087
      %v3094 = vshll.u32 %v3093, 16
      %v3095 = vadd.s32 %v3094, %v3092
      %vm3096 = vcmp.eq.s32.totalorder %v2447, %v3095
      %v3097 = vsel %vm3096, 1, 0
      %v3098 = vcvt.s32.f32 %v3097
      %3099 = vst [vmem:[#allocation5] sm:$0xff] %v3098
    $region77: #{chat_model_forward.1} parent=1 // pred_fallthru
      _
    %p3100 = scmp.ne.s32.totalorder %s3071, 0
    // Predicated region
    $region78: #{chat_model_forward.1} parent=1 // pred_check
      %p3101 = pneg %p3100
    $region79: #{chat_model_forward.1} parent=1 // pred_check_branch
      %3103 = sbr.rel (%p3101) target = $region81
    $region80: #{chat_model_forward.1} parent=1 // pred_region
      %v3104 = vld [vmem:[%s11] sm:$0xff]
      %3105 = vst [vmem:[#allocation5] sm:$0xff] %v3104
    $region81: #{chat_model_forward.1} parent=1 // pred_fallthru
      _
    %v3106 = vld [vmem:[#allocation5] sm:$0xff]
    %v3107 = vld [vmem:[%s5] sm:$0xff]
    %v3108 = vld [vmem:[%s5 + $0x8] sm:$0xff]
    %v3109 = vld [vmem:[%s5 + $0x10] sm:$0xff]
    %v3110 = vld [vmem:[%s5 + $0x18] sm:$0xff]
    %v3111 = vld [vmem:[%s5 + $0x20] sm:$0xff]
    %v3112 = vld [vmem:[%s5 + $0x28] sm:$0xff]
    %v3113 = vld [vmem:[%s5 + $0x30] sm:$0xff]
    %v3114 = vld [vmem:[%s5 + $0x38] sm:$0xff]
    %v3115 = vld [vmem:[%s5 + $0x40] sm:$0xff]
    %v3116 = vld [vmem:[%s5 + $0x48] sm:$0xff]
    %v3117 = vld [vmem:[%s5 + $0x50] sm:$0xff]
    %v3118 = vld [vmem:[%s5 + $0x58] sm:$0xff]
    %v3119 = vld [vmem:[%s5 + $0x60] sm:$0xff]
    %v3120 = vld [vmem:[%s5 + $0x68] sm:$0xff]
    %v3121 = vld [vmem:[%s5 + $0x70] sm:$0xff]
    %v3122 = vld [vmem:[%s5 + $0x78] sm:$0xff]
    %3123 = vmatprep.subr.mxu0 0.0
    %3124 = vmatpush1.msra.mxu0 %v3107
    %3125 = vmatprep.subr.mxu0 0.0
    %3126 = vmatpush1.msra.mxu0 %v3108
    %3127 = vmatprep.subr.mxu0 0.0
    %3128 = vmatpush1.msra.mxu0 %v3109
    %3129 = vmatprep.subr.mxu0 0.0
    %3130 = vmatpush1.msra.mxu0 %v3110
    %3131 = vmatprep.subr.mxu0 0.0
    %3132 = vmatpush1.msra.mxu0 %v3111
    %3133 = vmatprep.subr.mxu0 0.0
    %3134 = vmatpush1.msra.mxu0 %v3112
    %3135 = vmatprep.subr.mxu0 0.0
    %3136 = vmatpush1.msra.mxu0 %v3113
    %3137 = vmatprep.subr.mxu0 0.0
    %3138 = vmatpush1.msra.mxu0 %v3114
    %3139 = vmatprep.subr.mxu0 0.0
    %3140 = vmatpush1.msra.mxu0 %v3115
    %3141 = vmatprep.subr.mxu0 0.0
    %3142 = vmatpush1.msra.mxu0 %v3116
    %3143 = vmatprep.subr.mxu0 0.0
    %3144 = vmatpush1.msra.mxu0 %v3117
    %3145 = vmatprep.subr.mxu0 0.0
    %3146 = vmatpush1.msra.mxu0 %v3118
    %3147 = vmatprep.subr.mxu0 0.0
    %3148 = vmatpush1.msra.mxu0 %v3119
    %3149 = vmatprep.subr.mxu0 0.0
    %3150 = vmatpush1.msra.mxu0 %v3120
    %3151 = vmatprep.subr.mxu0 0.0
    %3152 = vmatpush1.msra.mxu0 %v3121
    %3153 = vmatprep.subr.mxu0 0.0
    %3154 = vmatpush1.msra.mxu0 %v3122
    %3155 = vmatprep.subr.mxu0 0.0
    %3156 = vmatpush1.msra.mxu0 0.0
    %3157 = vmatprep.subr.mxu0 0.0
    %3158 = vmatpush1.msra.mxu0 0.0
    %3159 = vmatprep.subr.mxu0 0.0
    %3160 = vmatpush1.msra.mxu0 0.0
    %3161 = vmatprep.subr.mxu0 0.0
    %3162 = vmatpush1.msra.mxu0 0.0
    %3163 = vmatprep.subr.mxu0 0.0
    %3164 = vmatpush1.msra.mxu0 0.0
    %3165 = vmatprep.subr.mxu0 0.0
    %3166 = vmatpush1.msra.mxu0 0.0
    %3167 = vmatprep.subr.mxu0 0.0
    %3168 = vmatpush1.msra.mxu0 0.0
    %3169 = vmatprep.subr.mxu0 0.0
    %3170 = vmatpush1.msra.mxu0 0.0
    %3171 = vmatprep.subr.mxu0 0.0
    %3172 = vmatpush1.msra.mxu0 0.0
    %3173 = vmatprep.subr.mxu0 0.0
    %3174 = vmatpush1.msra.mxu0 0.0
    %3175 = vmatprep.subr.mxu0 0.0
    %3176 = vmatpush1.msra.mxu0 0.0
    %3177 = vmatprep.subr.mxu0 0.0
    %3178 = vmatpush1.msra.mxu0 0.0
    %3179 = vmatprep.subr.mxu0 0.0
    %3180 = vmatpush1.msra.mxu0 0.0
    %3181 = vmatprep.subr.mxu0 0.0
    %3182 = vmatpush1.msra.mxu0 0.0
    %3183 = vmatprep.subr.mxu0 0.0
    %3184 = vmatpush1.msra.mxu0 0.0
    %3185 = vmatprep.subr.mxu0 0.0
    %3186 = vmatpush1.msra.mxu0 0.0
    %3187 = vmatprep.mubr.f32.mxu0 0.0
    %3188 = vmatmul.mubr.f32.gmra.mrb[0].mxu0 %v3106
    %v3189 = vpop.f32.mrb[0].mxu0
    %v3190 = vadd.f32 0.0, %v3189
    %v3191 = vpop.f32.mrb[0].mxu0
    %3192 = vdwg.mxu0
    %v3193 = vld [vmem:[#allocation12] sm:$0xff]
    %v3194 = vld [vmem:[#allocation12 + $0x8] sm:$0xff]
    %v3195 = vld [vmem:[#allocation12 + $0x10] sm:$0xff]
    %v3196 = vld [vmem:[#allocation12 + $0x18] sm:$0xff]
    %v3197 = vld [vmem:[#allocation12 + $0x20] sm:$0xff]
    %v3198 = vld [vmem:[#allocation12 + $0x28] sm:$0xff]
    %v3199 = vld [vmem:[#allocation12 + $0x30] sm:$0xff]
    %v3200 = vld [vmem:[#allocation12 + $0x38] sm:$0xff]
    %v3201 = vld [vmem:[#allocation12 + $0x40] sm:$0xff]
    %v3202 = vld [vmem:[#allocation12 + $0x48] sm:$0xff]
    %v3203 = vld [vmem:[#allocation12 + $0x50] sm:$0xff]
    %v3204 = vld [vmem:[#allocation12 + $0x58] sm:$0xff]
    %v3205 = vld [vmem:[#allocation12 + $0x60] sm:$0xff]
    %v3206 = vld [vmem:[#allocation12 + $0x68] sm:$0xff]
    %v3207 = vld [vmem:[#allocation12 + $0x70] sm:$0xff]
    %v3208 = vld [vmem:[#allocation12 + $0x78] sm:$0xff]
    %v3209 = vld [vmem:[#allocation12 + $0x80] sm:$0xff]
    %v3210 = vld [vmem:[#allocation12 + $0x88] sm:$0xff]
    %v3211 = vld [vmem:[#allocation12 + $0x90] sm:$0xff]
    %v3212 = vld [vmem:[#allocation12 + $0x98] sm:$0xff]
    %v3213 = vld [vmem:[#allocation12 + $0xa0] sm:$0xff]
    %v3214 = vld [vmem:[#allocation12 + $0xa8] sm:$0xff]
    %v3215 = vld [vmem:[#allocation12 + $0xb0] sm:$0xff]
    %v3216 = vld [vmem:[#allocation12 + $0xb8] sm:$0xff]
    %v3217 = vld [vmem:[#allocation12 + $0xc0] sm:$0xff]
    %v3218 = vld [vmem:[#allocation12 + $0xc8] sm:$0xff]
    %v3219 = vld [vmem:[#allocation12 + $0xd0] sm:$0xff]
    %v3220 = vld [vmem:[#allocation12 + $0xd8] sm:$0xff]
    %v3221 = vld [vmem:[#allocation12 + $0xe0] sm:$0xff]
    %v3222 = vld [vmem:[#allocation12 + $0xe8] sm:$0xff]
    %v3223 = vld [vmem:[#allocation12 + $0xf0] sm:$0xff]
    %v3224 = vld [vmem:[#allocation12 + $0xf8] sm:$0xff]
    %v3225 = vld [vmem:[#allocation12 + $0x100] sm:$0xff]
    %v3226 = vld [vmem:[#allocation12 + $0x108] sm:$0xff]
    %v3227 = vld [vmem:[#allocation12 + $0x110] sm:$0xff]
    %v3228 = vld [vmem:[#allocation12 + $0x118] sm:$0xff]
    %v3229 = vld [vmem:[#allocation12 + $0x120] sm:$0xff]
    %v3230 = vld [vmem:[#allocation12 + $0x128] sm:$0xff]
    %v3231 = vld [vmem:[#allocation12 + $0x130] sm:$0xff]
    %v3232 = vld [vmem:[#allocation12 + $0x138] sm:$0xff]
    %v3233 = vld [vmem:[#allocation12 + $0x140] sm:$0xff]
    %v3234 = vld [vmem:[#allocation12 + $0x148] sm:$0xff]
    %v3235 = vld [vmem:[#allocation12 + $0x150] sm:$0xff]
    %v3236 = vld [vmem:[#allocation12 + $0x158] sm:$0xff]
    %v3237 = vld [vmem:[#allocation12 + $0x160] sm:$0xff]
    %v3238 = vld [vmem:[#allocation12 + $0x168] sm:$0xff]
    %v3239 = vld [vmem:[#allocation12 + $0x170] sm:$0xff]
    %v3240 = vld [vmem:[#allocation12 + $0x178] sm:$0xff]
    %v3241 = vld [vmem:[#allocation12 + $0x180] sm:$0xff]
    %v3242 = vld [vmem:[#allocation12 + $0x188] sm:$0xff]
    %v3243 = vld [vmem:[#allocation12 + $0x190] sm:$0xff]
    %v3244 = vld [vmem:[#allocation12 + $0x198] sm:$0xff]
    %v3245 = vld [vmem:[#allocation12 + $0x1a0] sm:$0xff]
    %v3246 = vld [vmem:[#allocation12 + $0x1a8] sm:$0xff]
    %v3247 = vld [vmem:[#allocation12 + $0x1b0] sm:$0xff]
    %v3248 = vld [vmem:[#allocation12 + $0x1b8] sm:$0xff]
    %v3249 = vld [vmem:[#allocation12 + $0x1c0] sm:$0xff]
    %v3250 = vld [vmem:[#allocation12 + $0x1c8] sm:$0xff]
    %v3251 = vld [vmem:[#allocation12 + $0x1d0] sm:$0xff]
    %v3252 = vld [vmem:[#allocation12 + $0x1d8] sm:$0xff]
    %v3253 = vld [vmem:[#allocation12 + $0x1e0] sm:$0xff]
    %v3254 = vld [vmem:[#allocation12 + $0x1e8] sm:$0xff]
    %v3255 = vld [vmem:[#allocation12 + $0x1f0] sm:$0xff]
    %v3256 = vld [vmem:[#allocation12 + $0x1f8] sm:$0xff]
    %v3257 = vld [vmem:[#allocation3] sm:$0xff]
    %v3258 = vld [vmem:[#allocation13] sm:$0xff]
    %v3259 = vld [vmem:[#allocation13 + $0x8] sm:$0xff]
    %v3260 = vld [vmem:[#allocation13 + $0x10] sm:$0xff]
    %v3261 = vld [vmem:[#allocation13 + $0x18] sm:$0xff]
    %v3262 = vld [vmem:[#allocation13 + $0x20] sm:$0xff]
    %v3263 = vld [vmem:[#allocation13 + $0x28] sm:$0xff]
    %v3264 = vld [vmem:[#allocation13 + $0x30] sm:$0xff]
    %v3265 = vld [vmem:[#allocation13 + $0x38] sm:$0xff]
    %v3266 = vld [vmem:[#allocation13 + $0x40] sm:$0xff]
    %v3267 = vld [vmem:[#allocation13 + $0x48] sm:$0xff]
    %v3268 = vld [vmem:[#allocation13 + $0x50] sm:$0xff]
    %v3269 = vld [vmem:[#allocation13 + $0x58] sm:$0xff]
    %v3270 = vld [vmem:[#allocation13 + $0x60] sm:$0xff]
    %v3271 = vld [vmem:[#allocation13 + $0x68] sm:$0xff]
    %v3272 = vld [vmem:[#allocation13 + $0x70] sm:$0xff]
    %v3273 = vld [vmem:[#allocation13 + $0x78] sm:$0xff]
    %v3274 = vld [vmem:[#allocation13 + $0x80] sm:$0xff]
    %v3275 = vld [vmem:[#allocation13 + $0x88] sm:$0xff]
    %v3276 = vld [vmem:[#allocation13 + $0x90] sm:$0xff]
    %v3277 = vld [vmem:[#allocation13 + $0x98] sm:$0xff]
    %v3278 = vld [vmem:[#allocation13 + $0xa0] sm:$0xff]
    %v3279 = vld [vmem:[#allocation13 + $0xa8] sm:$0xff]
    %v3280 = vld [vmem:[#allocation13 + $0xb0] sm:$0xff]
    %v3281 = vld [vmem:[#allocation13 + $0xb8] sm:$0xff]
    %v3282 = vld [vmem:[#allocation13 + $0xc0] sm:$0xff]
    %v3283 = vld [vmem:[#allocation13 + $0xc8] sm:$0xff]
    %v3284 = vld [vmem:[#allocation13 + $0xd0] sm:$0xff]
    %v3285 = vld [vmem:[#allocation13 + $0xd8] sm:$0xff]
    %v3286 = vld [vmem:[#allocation13 + $0xe0] sm:$0xff]
    %v3287 = vld [vmem:[#allocation13 + $0xe8] sm:$0xff]
    %v3288 = vld [vmem:[#allocation13 + $0xf0] sm:$0xff]
    %v3289 = vld [vmem:[#allocation13 + $0xf8] sm:$0xff]
    %v3290 = vld [vmem:[#allocation13 + $0x100] sm:$0xff]
    %v3291 = vld [vmem:[#allocation13 + $0x108] sm:$0xff]
    %v3292 = vld [vmem:[#allocation13 + $0x110] sm:$0xff]
    %v3293 = vld [vmem:[#allocation13 + $0x118] sm:$0xff]
    %v3294 = vld [vmem:[#allocation13 + $0x120] sm:$0xff]
    %v3295 = vld [vmem:[#allocation13 + $0x128] sm:$0xff]
    %v3296 = vld [vmem:[#allocation13 + $0x130] sm:$0xff]
    %v3297 = vld [vmem:[#allocation13 + $0x138] sm:$0xff]
    %v3298 = vld [vmem:[#allocation13 + $0x140] sm:$0xff]
    %v3299 = vld [vmem:[#allocation13 + $0x148] sm:$0xff]
    %v3300 = vld [vmem:[#allocation13 + $0x150] sm:$0xff]
    %v3301 = vld [vmem:[#allocation13 + $0x158] sm:$0xff]
    %v3302 = vld [vmem:[#allocation13 + $0x160] sm:$0xff]
    %v3303 = vld [vmem:[#allocation13 + $0x168] sm:$0xff]
    %v3304 = vld [vmem:[#allocation13 + $0x170] sm:$0xff]
    %v3305 = vld [vmem:[#allocation13 + $0x178] sm:$0xff]
    %v3306 = vld [vmem:[#allocation13 + $0x180] sm:$0xff]
    %v3307 = vld [vmem:[#allocation13 + $0x188] sm:$0xff]
    %v3308 = vld [vmem:[#allocation13 + $0x190] sm:$0xff]
    %v3309 = vld [vmem:[#allocation13 + $0x198] sm:$0xff]
    %v3310 = vld [vmem:[#allocation13 + $0x1a0] sm:$0xff]
    %v3311 = vld [vmem:[#allocation13 + $0x1a8] sm:$0xff]
    %v3312 = vld [vmem:[#allocation13 + $0x1b0] sm:$0xff]
    %v3313 = vld [vmem:[#allocation13 + $0x1b8] sm:$0xff]
    %v3314 = vld [vmem:[#allocation13 + $0x1c0] sm:$0xff]
    %v3315 = vld [vmem:[#allocation13 + $0x1c8] sm:$0xff]
    %v3316 = vld [vmem:[#allocation13 + $0x1d0] sm:$0xff]
    %v3317 = vld [vmem:[#allocation13 + $0x1d8] sm:$0xff]
    %v3318 = vld [vmem:[#allocation13 + $0x1e0] sm:$0xff]
    %v3319 = vld [vmem:[#allocation13 + $0x1e8] sm:$0xff]
    %v3320 = vld [vmem:[#allocation13 + $0x1f0] sm:$0xff]
    %v3321 = vld [vmem:[#allocation13 + $0x1f8] sm:$0xff]
    %3322 = vmatprep.subr.mxu0 %v3259
    %3323 = vmatpush1.msra.mxu0 %v3258
    %3324 = vmatprep.subr.mxu0 %v3263
    %3325 = vmatpush1.msra.mxu0 %v3262
    %3326 = vmatprep.subr.mxu0 %v3267
    %3327 = vmatpush1.msra.mxu0 %v3266
    %3328 = vmatprep.subr.mxu0 %v3271
    %3329 = vmatpush1.msra.mxu0 %v3270
    %3330 = vmatprep.subr.mxu0 %v3275
    %3331 = vmatpush1.msra.mxu0 %v3274
    %3332 = vmatprep.subr.mxu0 %v3279
    %3333 = vmatpush1.msra.mxu0 %v3278
    %3334 = vmatprep.subr.mxu0 %v3283
    %3335 = vmatpush1.msra.mxu0 %v3282
    %3336 = vmatprep.subr.mxu0 %v3287
    %3337 = vmatpush1.msra.mxu0 %v3286
    %3338 = vmatprep.subr.mxu0 %v3291
    %3339 = vmatpush1.msra.mxu0 %v3290
    %3340 = vmatprep.subr.mxu0 %v3295
    %3341 = vmatpush1.msra.mxu0 %v3294
    %3342 = vmatprep.subr.mxu0 %v3299
    %3343 = vmatpush1.msra.mxu0 %v3298
    %3344 = vmatprep.subr.mxu0 %v3303
    %3345 = vmatpush1.msra.mxu0 %v3302
    %3346 = vmatprep.subr.mxu0 %v3307
    %3347 = vmatpush1.msra.mxu0 %v3306
    %3348 = vmatprep.subr.mxu0 %v3311
    %3349 = vmatpush1.msra.mxu0 %v3310
    %3350 = vmatprep.subr.mxu0 %v3315
    %3351 = vmatpush1.msra.mxu0 %v3314
    %3352 = vmatprep.subr.mxu0 %v3319
    %3353 = vmatpush1.msra.mxu0 %v3318
    %3354 = vmatprep.subr.mxu0 0.0
    %3355 = vmatpush1.msra.mxu0 0.0
    %3356 = vmatprep.subr.mxu0 0.0
    %3357 = vmatpush1.msra.mxu0 0.0
    %3358 = vmatprep.subr.mxu0 0.0
    %3359 = vmatpush1.msra.mxu0 0.0
    %3360 = vmatprep.subr.mxu0 0.0
    %3361 = vmatpush1.msra.mxu0 0.0
    %3362 = vmatprep.subr.mxu0 0.0
    %3363 = vmatpush1.msra.mxu0 0.0
    %3364 = vmatprep.subr.mxu0 0.0
    %3365 = vmatpush1.msra.mxu0 0.0
    %3366 = vmatprep.subr.mxu0 0.0
    %3367 = vmatpush1.msra.mxu0 0.0
    %3368 = vmatprep.subr.mxu0 0.0
    %3369 = vmatpush1.msra.mxu0 0.0
    %3370 = vmatprep.subr.mxu0 0.0
    %3371 = vmatpush1.msra.mxu0 0.0
    %3372 = vmatprep.subr.mxu0 0.0
    %3373 = vmatpush1.msra.mxu0 0.0
    %3374 = vmatprep.subr.mxu0 0.0
    %3375 = vmatpush1.msra.mxu0 0.0
    %3376 = vmatprep.subr.mxu0 0.0
    %3377 = vmatpush1.msra.mxu0 0.0
    %3378 = vmatprep.subr.mxu0 0.0
    %3379 = vmatpush1.msra.mxu0 0.0
    %3380 = vmatprep.subr.mxu0 0.0
    %3381 = vmatpush1.msra.mxu0 0.0
    %3382 = vmatprep.subr.mxu0 0.0
    %3383 = vmatpush1.msra.mxu0 0.0
    %3384 = vmatprep.subr.mxu0 0.0
    %3385 = vmatpush1.msra.mxu0 0.0
    %3386 = vmatprep.mubr.f32.mxu0 0.0
    %3387 = vmatmul.mubr.f32.gmra.mrb[0].mxu0 %v3257
    %v3388 = vpop.f32.mrb[0].mxu0
    %v3389 = vadd.f32 0.0, %v3388
    %v3390 = vpop.f32.mrb[0].mxu0
    %v3391 = vadd.f32 0.0, %v3390
    %3392 = vdwg.mxu0
    %3393 = vmatprep.subr.mxu0 %v3261
    %3394 = vmatpush1.msra.mxu0 %v3260
    %3395 = vmatprep.subr.mxu0 %v3265
    %3396 = vmatpush1.msra.mxu0 %v3264
    %3397 = vmatprep.subr.mxu0 %v3269
    %3398 = vmatpush1.msra.mxu0 %v3268
    %3399 = vmatprep.subr.mxu0 %v3273
    %3400 = vmatpush1.msra.mxu0 %v3272
    %3401 = vmatprep.subr.mxu0 %v3277
    %3402 = vmatpush1.msra.mxu0 %v3276
    %3403 = vmatprep.subr.mxu0 %v3281
    %3404 = vmatpush1.msra.mxu0 %v3280
    %3405 = vmatprep.subr.mxu0 %v3285
    %3406 = vmatpush1.msra.mxu0 %v3284
    %3407 = vmatprep.subr.mxu0 %v3289
    %3408 = vmatpush1.msra.mxu0 %v3288
    %3409 = vmatprep.subr.mxu0 %v3293
    %3410 = vmatpush1.msra.mxu0 %v3292
    %3411 = vmatprep.subr.mxu0 %v3297
    %3412 = vmatpush1.msra.mxu0 %v3296
    %3413 = vmatprep.subr.mxu0 %v3301
    %3414 = vmatpush1.msra.mxu0 %v3300
    %3415 = vmatprep.subr.mxu0 %v3305
    %3416 = vmatpush1.msra.mxu0 %v3304
    %3417 = vmatprep.subr.mxu0 %v3309
    %3418 = vmatpush1.msra.mxu0 %v3308
    %3419 = vmatprep.subr.mxu0 %v3313
    %3420 = vmatpush1.msra.mxu0 %v3312
    %3421 = vmatprep.subr.mxu0 %v3317
    %3422 = vmatpush1.msra.mxu0 %v3316
    %3423 = vmatprep.subr.mxu0 %v3321
    %3424 = vmatpush1.msra.mxu0 %v3320
    %3425 = vmatprep.subr.mxu0 0.0
    %3426 = vmatpush1.msra.mxu0 0.0
    %3427 = vmatprep.subr.mxu0 0.0
    %3428 = vmatpush1.msra.mxu0 0.0
    %3429 = vmatprep.subr.mxu0 0.0
    %3430 = vmatpush1.msra.mxu0 0.0
    %3431 = vmatprep.subr.mxu0 0.0
    %3432 = vmatpush1.msra.mxu0 0.0
    %3433 = vmatprep.subr.mxu0 0.0
    %3434 = vmatpush1.msra.mxu0 0.0
    %3435 = vmatprep.subr.mxu0 0.0
    %3436 = vmatpush1.msra.mxu0 0.0
    %3437 = vmatprep.subr.mxu0 0.0
    %3438 = vmatpush1.msra.mxu0 0.0
    %3439 = vmatprep.subr.mxu0 0.0
    %3440 = vmatpush1.msra.mxu0 0.0
    %3441 = vmatprep.subr.mxu0 0.0
    %3442 = vmatpush1.msra.mxu0 0.0
    %3443 = vmatprep.subr.mxu0 0.0
    %3444 = vmatpush1.msra.mxu0 0.0
    %3445 = vmatprep.subr.mxu0 0.0
    %3446 = vmatpush1.msra.mxu0 0.0
    %3447 = vmatprep.subr.mxu0 0.0
    %3448 = vmatpush1.msra.mxu0 0.0
    %3449 = vmatprep.subr.mxu0 0.0
    %3450 = vmatpush1.msra.mxu0 0.0
    %3451 = vmatprep.subr.mxu0 0.0
    %3452 = vmatpush1.msra.mxu0 0.0
    %3453 = vmatprep.subr.mxu0 0.0
    %3454 = vmatpush1.msra.mxu0 0.0
    %3455 = vmatprep.subr.mxu0 0.0
    %3456 = vmatpush1.msra.mxu0 0.0
    %3457 = vmatprep.mubr.f32.mxu0 0.0
    %3458 = vmatmul.mubr.f32.gmra.mrb[0].mxu0 %v3257
    %v3459 = vpop.f32.mrb[0].mxu0
    %v3460 = vadd.f32 0.0, %v3459
    %v3461 = vpop.f32.mrb[0].mxu0
    %v3462 = vadd.f32 0.0, %v3461
    %3463 = vdwg.mxu0
    %3464 = vmatprep.subr.mxu0 %v3194
    %3465 = vmatpush1.msra.mxu0 %v3193
    %3466 = vmatprep.subr.mxu0 %v3198
    %3467 = vmatpush1.msra.mxu0 %v3197
    %3468 = vmatprep.subr.mxu0 %v3202
    %3469 = vmatpush1.msra.mxu0 %v3201
    %3470 = vmatprep.subr.mxu0 %v3206
    %3471 = vmatpush1.msra.mxu0 %v3205
    %3472 = vmatprep.subr.mxu0 %v3210
    %3473 = vmatpush1.msra.mxu0 %v3209
    %3474 = vmatprep.subr.mxu0 %v3214
    %3475 = vmatpush1.msra.mxu0 %v3213
    %3476 = vmatprep.subr.mxu0 %v3218
    %3477 = vmatpush1.msra.mxu0 %v3217
    %3478 = vmatprep.subr.mxu0 %v3222
    %3479 = vmatpush1.msra.mxu0 %v3221
    %3480 = vmatprep.subr.mxu0 %v3226
    %3481 = vmatpush1.msra.mxu0 %v3225
    %3482 = vmatprep.subr.mxu0 %v3230
    %3483 = vmatpush1.msra.mxu0 %v3229
    %3484 = vmatprep.subr.mxu0 %v3234
    %3485 = vmatpush1.msra.mxu0 %v3233
    %3486 = vmatprep.subr.mxu0 %v3238
    %3487 = vmatpush1.msra.mxu0 %v3237
    %3488 = vmatprep.subr.mxu0 %v3242
    %3489 = vmatpush1.msra.mxu0 %v3241
    %3490 = vmatprep.subr.mxu0 %v3246
    %3491 = vmatpush1.msra.mxu0 %v3245
    %3492 = vmatprep.subr.mxu0 %v3250
    %3493 = vmatpush1.msra.mxu0 %v3249
    %3494 = vmatprep.subr.mxu0 %v3254
    %3495 = vmatpush1.msra.mxu0 %v3253
    %3496 = vmatprep.subr.mxu0 0.0
    %3497 = vmatpush1.msra.mxu0 0.0
    %3498 = vmatprep.subr.mxu0 0.0
    %3499 = vmatpush1.msra.mxu0 0.0
    %3500 = vmatprep.subr.mxu0 0.0
    %3501 = vmatpush1.msra.mxu0 0.0
    %3502 = vmatprep.subr.mxu0 0.0
    %3503 = vmatpush1.msra.mxu0 0.0
    %3504 = vmatprep.subr.mxu0 0.0
    %3505 = vmatpush1.msra.mxu0 0.0
    %3506 = vmatprep.subr.mxu0 0.0
    %3507 = vmatpush1.msra.mxu0 0.0
    %3508 = vmatprep.subr.mxu0 0.0
    %3509 = vmatpush1.msra.mxu0 0.0
    %3510 = vmatprep.subr.mxu0 0.0
    %3511 = vmatpush1.msra.mxu0 0.0
    %3512 = vmatprep.subr.mxu0 0.0
    %3513 = vmatpush1.msra.mxu0 0.0
    %3514 = vmatprep.subr.mxu0 0.0
    %3515 = vmatpush1.msra.mxu0 0.0
    %3516 = vmatprep.subr.mxu0 0.0
    %3517 = vmatpush1.msra.mxu0 0.0
    %3518 = vmatprep.subr.mxu0 0.0
    %3519 = vmatpush1.msra.mxu0 0.0
    %3520 = vmatprep.subr.mxu0 0.0
    %3521 = vmatpush1.msra.mxu0 0.0
    %3522 = vmatprep.subr.mxu0 0.0
    %3523 = vmatpush1.msra.mxu0 0.0
    %3524 = vmatprep.subr.mxu0 0.0
    %3525 = vmatpush1.msra.mxu0 0.0
    %3526 = vmatprep.subr.mxu0 0.0
    %3527 = vmatpush1.msra.mxu0 0.0
    %3528 = vmatprep.mubr.f32.mxu0 0.0
    %3529 = vmatmul.mubr.f32.gmra.mrb[0].mxu0 %v3190
    %v3530 = vpop.f32.mrb[0].mxu0
    %v3531 = vadd.f32 %v3389, %v3530
    %v3532 = vpop.f32.mrb[0].mxu0
    %v3533 = vadd.f32 %v3391, %v3532
    %3534 = vdwg.mxu0
    %3535 = vmatprep.subr.mxu0 %v3196
    %3536 = vmatpush1.msra.mxu0 %v3195
    %3537 = vmatprep.subr.mxu0 %v3200
    %3538 = vmatpush1.msra.mxu0 %v3199
    %3539 = vmatprep.subr.mxu0 %v3204
    %3540 = vmatpush1.msra.mxu0 %v3203
    %3541 = vmatprep.subr.mxu0 %v3208
    %3542 = vmatpush1.msra.mxu0 %v3207
    %3543 = vmatprep.subr.mxu0 %v3212
    %3544 = vmatpush1.msra.mxu0 %v3211
    %3545 = vmatprep.subr.mxu0 %v3216
    %3546 = vmatpush1.msra.mxu0 %v3215
    %3547 = vmatprep.subr.mxu0 %v3220
    %3548 = vmatpush1.msra.mxu0 %v3219
    %3549 = vmatprep.subr.mxu0 %v3224
    %3550 = vmatpush1.msra.mxu0 %v3223
    %3551 = vmatprep.subr.mxu0 %v3228
    %3552 = vmatpush1.msra.mxu0 %v3227
    %3553 = vmatprep.subr.mxu0 %v3232
    %3554 = vmatpush1.msra.mxu0 %v3231
    %3555 = vmatprep.subr.mxu0 %v3236
    %3556 = vmatpush1.msra.mxu0 %v3235
    %3557 = vmatprep.subr.mxu0 %v3240
    %3558 = vmatpush1.msra.mxu0 %v3239
    %3559 = vmatprep.subr.mxu0 %v3244
    %3560 = vmatpush1.msra.mxu0 %v3243
    %3561 = vmatprep.subr.mxu0 %v3248
    %3562 = vmatpush1.msra.mxu0 %v3247
    %3563 = vmatprep.subr.mxu0 %v3252
    %3564 = vmatpush1.msra.mxu0 %v3251
    %3565 = vmatprep.subr.mxu0 %v3256
    %3566 = vmatpush1.msra.mxu0 %v3255
    %3567 = vmatprep.subr.mxu0 0.0
    %3568 = vmatpush1.msra.mxu0 0.0
    %3569 = vmatprep.subr.mxu0 0.0
    %3570 = vmatpush1.msra.mxu0 0.0
    %3571 = vmatprep.subr.mxu0 0.0
    %3572 = vmatpush1.msra.mxu0 0.0
    %3573 = vmatprep.subr.mxu0 0.0
    %3574 = vmatpush1.msra.mxu0 0.0
    %3575 = vmatprep.subr.mxu0 0.0
    %3576 = vmatpush1.msra.mxu0 0.0
    %3577 = vmatprep.subr.mxu0 0.0
    %3578 = vmatpush1.msra.mxu0 0.0
    %3579 = vmatprep.subr.mxu0 0.0
    %3580 = vmatpush1.msra.mxu0 0.0
    %3581 = vmatprep.subr.mxu0 0.0
    %3582 = vmatpush1.msra.mxu0 0.0
    %3583 = vmatprep.subr.mxu0 0.0
    %3584 = vmatpush1.msra.mxu0 0.0
    %3585 = vmatprep.subr.mxu0 0.0
    %3586 = vmatpush1.msra.mxu0 0.0
    %3587 = vmatprep.subr.mxu0 0.0
    %3588 = vmatpush1.msra.mxu0 0.0
    %3589 = vmatprep.subr.mxu0 0.0
    %3590 = vmatpush1.msra.mxu0 0.0
    %3591 = vmatprep.subr.mxu0 0.0
    %3592 = vmatpush1.msra.mxu0 0.0
    %3593 = vmatprep.subr.mxu0 0.0
    %3594 = vmatpush1.msra.mxu0 0.0
    %3595 = vmatprep.subr.mxu0 0.0
    %3596 = vmatpush1.msra.mxu0 0.0
    %3597 = vmatprep.subr.mxu0 0.0
    %3598 = vmatpush1.msra.mxu0 0.0
    %3599 = vmatprep.mubr.f32.mxu0 0.0
    %3600 = vmatmul.mubr.f32.gmra.mrb[0].mxu0 %v3190
    %v3601 = vpop.f32.mrb[0].mxu0
    %v3602 = vadd.f32 %v3460, %v3601
    %v3603 = vpop.f32.mrb[0].mxu0
    %v3604 = vadd.f32 %v3462, %v3603
    %3605 = vdwg.mxu0
    %v3606 = vld [vmem:[%s8] sm:$0xff]
    %v3607 = vld [vmem:[%s8 + $0x8] sm:$0xff]
    %v3608 = vld [vmem:[%s8 + $0x10] sm:$0xff]
    %v3609 = vld [vmem:[%s8 + $0x18] sm:$0xff]
    %v3610 = vadd.f32 %v3531, %v3606
    %v3611 = vadd.f32 %v3533, %v3607
    %v3612 = vadd.f32 %v3602, %v3608
    %v3613 = vadd.f32 %v3604, %v3609
    %v3614 = vld [vmem:[#allocation4] sm:$0xff]
    %v3615 = vxor.u32 %v3610, 2147483648
    %v3616 = vmul.f32 %v3615, 1.442695
    %v3617 = vpow.pop %v3616
    %v3618 = vadd.f32 %v3617, 1.0
    %v3619 = vrcp.pop %v3618
    %v3620 = vmul.f32 1.0, %v3619
    %v3621 = vxor.u32 %v3611, 2147483648
    %v3622 = vmul.f32 %v3621, 1.442695
    %v3623 = vpow.pop %v3622
    %v3624 = vadd.f32 %v3623, 1.0
    %v3625 = vrcp.pop %v3624
    %v3626 = vmul.f32 1.0, %v3625
    %v3627 = vtanh.pop %v3612
    %v3628 = vxor.u32 %v3613, 2147483648
    %v3629 = vmul.f32 %v3628, 1.442695
    %v3630 = vpow.pop %v3629
    %v3631 = vadd.f32 %v3630, 1.0
    %v3632 = vrcp.pop %v3631
    %v3633 = vmul.f32 1.0, %v3632
    %v3634 = vmul.f32 %v3626, %v3614
    %v3635 = vmul.f32 %v3620, %v3627
    %v3636 = vadd.f32 %v3634, %v3635
    %v3637 = vtanh.pop %v3636
    %v3638 = vmul.f32 %v3633, %v3637
    %3639 = vst [vmem:[#allocation3] sm:$0xff] %v3638
    %3640 = vst [vmem:[#allocation4] sm:$0xff] %v3636
    %v3641 = vld [vmem:[%s9] sm:$0xff]
    %v3642 = vld [vmem:[%s9 + $0x8] sm:$0xff]
    %v3643 = vld [vmem:[%s9 + $0x10] sm:$0xff]
    %v3644 = vld [vmem:[%s9 + $0x18] sm:$0xff]
    %v3645 = vld [vmem:[%s9 + $0x20] sm:$0xff]
    %v3646 = vld [vmem:[%s9 + $0x28] sm:$0xff]
    %v3647 = vld [vmem:[%s9 + $0x30] sm:$0xff]
    %v3648 = vld [vmem:[%s9 + $0x38] sm:$0xff]
    %v3649 = vld [vmem:[%s9 + $0x40] sm:$0xff]
    %v3650 = vld [vmem:[%s9 + $0x48] sm:$0xff]
    %v3651 = vld [vmem:[%s9 + $0x50] sm:$0xff]
    %v3652 = vld [vmem:[%s9 + $0x58] sm:$0xff]
    %v3653 = vld [vmem:[%s9 + $0x60] sm:$0xff]
    %v3654 = vld [vmem:[%s9 + $0x68] sm:$0xff]
    %v3655 = vld [vmem:[%s9 + $0x70] sm:$0xff]
    %v3656 = vld [vmem:[%s9 + $0x78] sm:$0xff]
    %v3657 = vld [vmem:[%s10] sm:$0xff]
    %3658 = vmatprep.subr.mxu0 0.0
    %3659 = vmatpush1.msra.mxu0 %v3641
    %3660 = vmatprep.subr.mxu0 0.0
    %3661 = vmatpush1.msra.mxu0 %v3642
    %3662 = vmatprep.subr.mxu0 0.0
    %3663 = vmatpush1.msra.mxu0 %v3643
    %3664 = vmatprep.subr.mxu0 0.0
    %3665 = vmatpush1.msra.mxu0 %v3644
    %3666 = vmatprep.subr.mxu0 0.0
    %3667 = vmatpush1.msra.mxu0 %v3645
    %3668 = vmatprep.subr.mxu0 0.0
    %3669 = vmatpush1.msra.mxu0 %v3646
    %3670 = vmatprep.subr.mxu0 0.0
    %3671 = vmatpush1.msra.mxu0 %v3647
    %3672 = vmatprep.subr.mxu0 0.0
    %3673 = vmatpush1.msra.mxu0 %v3648
    %3674 = vmatprep.subr.mxu0 0.0
    %3675 = vmatpush1.msra.mxu0 %v3649
    %3676 = vmatprep.subr.mxu0 0.0
    %3677 = vmatpush1.msra.mxu0 %v3650
    %3678 = vmatprep.subr.mxu0 0.0
    %3679 = vmatpush1.msra.mxu0 %v3651
    %3680 = vmatprep.subr.mxu0 0.0
    %3681 = vmatpush1.msra.mxu0 %v3652
    %3682 = vmatprep.subr.mxu0 0.0
    %3683 = vmatpush1.msra.mxu0 %v3653
    %3684 = vmatprep.subr.mxu0 0.0
    %3685 = vmatpush1.msra.mxu0 %v3654
    %3686 = vmatprep.subr.mxu0 0.0
    %3687 = vmatpush1.msra.mxu0 %v3655
    %3688 = vmatprep.subr.mxu0 0.0
    %3689 = vmatpush1.msra.mxu0 %v3656
    %3690 = vmatprep.subr.mxu0 0.0
    %3691 = vmatpush1.msra.mxu0 0.0
    %3692 = vmatprep.subr.mxu0 0.0
    %3693 = vmatpush1.msra.mxu0 0.0
    %3694 = vmatprep.subr.mxu0 0.0
    %3695 = vmatpush1.msra.mxu0 0.0
    %3696 = vmatprep.subr.mxu0 0.0
    %3697 = vmatpush1.msra.mxu0 0.0
    %3698 = vmatprep.subr.mxu0 0.0
    %3699 = vmatpush1.msra.mxu0 0.0
    %3700 = vmatprep.subr.mxu0 0.0
    %3701 = vmatpush1.msra.mxu0 0.0
    %3702 = vmatprep.subr.mxu0 0.0
    %3703 = vmatpush1.msra.mxu0 0.0
    %3704 = vmatprep.subr.mxu0 0.0
    %3705 = vmatpush1.msra.mxu0 0.0
    %3706 = vmatprep.subr.mxu0 0.0
    %3707 = vmatpush1.msra.mxu0 0.0
    %3708 = vmatprep.subr.mxu0 0.0
    %3709 = vmatpush1.msra.mxu0 0.0
    %3710 = vmatprep.subr.mxu0 0.0
    %3711 = vmatpush1.msra.mxu0 0.0
    %3712 = vmatprep.subr.mxu0 0.0
    %3713 = vmatpush1.msra.mxu0 0.0
    %3714 = vmatprep.subr.mxu0 0.0
    %3715 = vmatpush1.msra.mxu0 0.0
    %3716 = vmatprep.subr.mxu0 0.0
    %3717 = vmatpush1.msra.mxu0 0.0
    %3718 = vmatprep.subr.mxu0 0.0
    %3719 = vmatpush1.msra.mxu0 0.0
    %3720 = vmatprep.subr.mxu0 0.0
    %3721 = vmatpush1.msra.mxu0 0.0
    %3722 = vmatprep.mubr.f32.mxu0 0.0
    %3723 = vmatmul.mubr.f32.gmra.mrb[0].mxu0 %v3638
    %v3724 = vpop.f32.mrb[0].mxu0
    %v3725 = vadd.f32 %v3657, %v3724
    %v3726 = vpop.f32.mrb[0].mxu0
    %3727 = vdwg.mxu0
    %s3728 = scalar_lea.vmem %s13, 8
    %3729 = vst [vmem:[%s3728] sm:$0xff] %v3725
    %s3730 = sld [smem:[#allocation6 + $0x1]]
    %p3731 = scmp.eq.s32.totalorder %s3730, 0
    // Predicated region
    $region82: #{chat_model_forward.1} parent=1 // pred_check
      %p3732 = pneg %p3731
    $region83: #{chat_model_forward.1} parent=1 // pred_check_branch
      %3734 = sbr.rel (%p3732) target = $region85
    $region84: #{chat_model_forward.1} parent=1 // pred_region
      %vm3735 = vcmp.lt.s32.totalorder %v2447, 64
      %v3736 = vsel %vm3735, %v3725, -1e+30
      %3737 = vmax.xlane.f32.xlu0 %v3736
      %v3738 = vpop.xlane.xlu0 %3737
      %vm3739 = vcmp.eq.f32.partialorder %v3736, %v3738
      %v3740 = vsel %vm3739, %v2447, 128
      %v3741 = vand.u32 %v3740, 65535
      %v3742 = vshra.s32 %v3740, 16
      %v3743 = vcvt.s32.f32 %v3741
      %v3744 = vcvt.s32.f32 %v3742
      %3745 = vmin.xlane.f32.xlu0 %v3744
      %v3746 = vpop.xlane.xlu0 %3745
      %vm3747 = vcmp.eq.f32.partialorder %v3744, %v3746
      %v3748 = vsel %vm3747, %v3743, inf
      %3749 = vmin.xlane.f32.xlu0 %v3748
      %v3750 = vpop.xlane.xlu0 %3749
      %v3751 = vcvt.f32.s32 %v3750
      %v3752 = vcvt.f32.s32 %v3746
      %v3753 = vshll.u32 %v3752, 16
      %v3754 = vadd.s32 %v3753, %v3751
      %vm3755 = vcmp.eq.s32.totalorder %v2447, %v3754
      %v3756 = vsel %vm3755, 1, 0
      %v3757 = vcvt.s32.f32 %v3756
      %3758 = vst [vmem:[#allocation5] sm:$0xff] %v3757
    $region85: #{chat_model_forward.1} parent=1 // pred_fallthru
      _
    %p3759 = scmp.ne.s32.totalorder %s3730, 0
    // Predicated region
    $region86: #{chat_model_forward.1} parent=1 // pred_check
      %p3760 = pneg %p3759
    $region87: #{chat_model_forward.1} parent=1 // pred_check_branch
      %3762 = sbr.rel (%p3760) target = $region89
    $region88: #{chat_model_forward.1} parent=1 // pred_region
      %s3763 = scalar_lea.vmem %s11, 8
      %v3764 = vld [vmem:[%s3763] sm:$0xff]
      %3765 = vst [vmem:[#allocation5] sm:$0xff] %v3764
    $region89: #{chat_model_forward.1} parent=1 // pred_fallthru
      _
    %v3766 = vld [vmem:[#allocation5] sm:$0xff]
    %v3767 = vld [vmem:[%s5] sm:$0xff]
    %v3768 = vld [vmem:[%s5 + $0x8] sm:$0xff]
    %v3769 = vld [vmem:[%s5 + $0x10] sm:$0xff]
    %v3770 = vld [vmem:[%s5 + $0x18] sm:$0xff]
    %v3771 = vld [vmem:[%s5 + $0x20] sm:$0xff]
    %v3772 = vld [vmem:[%s5 + $0x28] sm:$0xff]
    %v3773 = vld [vmem:[%s5 + $0x30] sm:$0xff]
    %v3774 = vld [vmem:[%s5 + $0x38] sm:$0xff]
    %v3775 = vld [vmem:[%s5 + $0x40] sm:$0xff]
    %v3776 = vld [vmem:[%s5 + $0x48] sm:$0xff]
    %v3777 = vld [vmem:[%s5 + $0x50] sm:$0xff]
    %v3778 = vld [vmem:[%s5 + $0x58] sm:$0xff]
    %v3779 = vld [vmem:[%s5 + $0x60] sm:$0xff]
    %v3780 = vld [vmem:[%s5 + $0x68] sm:$0xff]
    %v3781 = vld [vmem:[%s5 + $0x70] sm:$0xff]
    %v3782 = vld [vmem:[%s5 + $0x78] sm:$0xff]
    %3783 = vmatprep.subr.mxu0 0.0
    %3784 = vmatpush1.msra.mxu0 %v3767
    %3785 = vmatprep.subr.mxu0 0.0
    %3786 = vmatpush1.msra.mxu0 %v3768
    %3787 = vmatprep.subr.mxu0 0.0
    %3788 = vmatpush1.msra.mxu0 %v3769
    %3789 = vmatprep.subr.mxu0 0.0
    %3790 = vmatpush1.msra.mxu0 %v3770
    %3791 = vmatprep.subr.mxu0 0.0
    %3792 = vmatpush1.msra.mxu0 %v3771
    %3793 = vmatprep.subr.mxu0 0.0
    %3794 = vmatpush1.msra.mxu0 %v3772
    %3795 = vmatprep.subr.mxu0 0.0
    %3796 = vmatpush1.msra.mxu0 %v3773
    %3797 = vmatprep.subr.mxu0 0.0
    %3798 = vmatpush1.msra.mxu0 %v3774
    %3799 = vmatprep.subr.mxu0 0.0
    %3800 = vmatpush1.msra.mxu0 %v3775
    %3801 = vmatprep.subr.mxu0 0.0
    %3802 = vmatpush1.msra.mxu0 %v3776
    %3803 = vmatprep.subr.mxu0 0.0
    %3804 = vmatpush1.msra.mxu0 %v3777
    %3805 = vmatprep.subr.mxu0 0.0
    %3806 = vmatpush1.msra.mxu0 %v3778
    %3807 = vmatprep.subr.mxu0 0.0
    %3808 = vmatpush1.msra.mxu0 %v3779
    %3809 = vmatprep.subr.mxu0 0.0
    %3810 = vmatpush1.msra.mxu0 %v3780
    %3811 = vmatprep.subr.mxu0 0.0
    %3812 = vmatpush1.msra.mxu0 %v3781
    %3813 = vmatprep.subr.mxu0 0.0
    %3814 = vmatpush1.msra.mxu0 %v3782
    %3815 = vmatprep.subr.mxu0 0.0
    %3816 = vmatpush1.msra.mxu0 0.0
    %3817 = vmatprep.subr.mxu0 0.0
    %3818 = vmatpush1.msra.mxu0 0.0
    %3819 = vmatprep.subr.mxu0 0.0
    %3820 = vmatpush1.msra.mxu0 0.0
    %3821 = vmatprep.subr.mxu0 0.0
    %3822 = vmatpush1.msra.mxu0 0.0
    %3823 = vmatprep.subr.mxu0 0.0
    %3824 = vmatpush1.msra.mxu0 0.0
    %3825 = vmatprep.subr.mxu0 0.0
    %3826 = vmatpush1.msra.mxu0 0.0
    %3827 = vmatprep.subr.mxu0 0.0
    %3828 = vmatpush1.msra.mxu0 0.0
    %3829 = vmatprep.subr.mxu0 0.0
    %3830 = vmatpush1.msra.mxu0 0.0
    %3831 = vmatprep.subr.mxu0 0.0
    %3832 = vmatpush1.msra.mxu0 0.0
    %3833 = vmatprep.subr.mxu0 0.0
    %3834 = vmatpush1.msra.mxu0 0.0
    %3835 = vmatprep.subr.mxu0 0.0
    %3836 = vmatpush1.msra.mxu0 0.0
    %3837 = vmatprep.subr.mxu0 0.0
    %3838 = vmatpush1.msra.mxu0 0.0
    %3839 = vmatprep.subr.mxu0 0.0
    %3840 = vmatpush1.msra.mxu0 0.0
    %3841 = vmatprep.subr.mxu0 0.0
    %3842 = vmatpush1.msra.mxu0 0.0
    %3843 = vmatprep.subr.mxu0 0.0
    %3844 = vmatpush1.msra.mxu0 0.0
    %3845 = vmatprep.subr.mxu0 0.0
    %3846 = vmatpush1.msra.mxu0 0.0
    %3847 = vmatprep.mubr.f32.mxu0 0.0
    %3848 = vmatmul.mubr.f32.gmra.mrb[0].mxu0 %v3766
    %v3849 = vpop.f32.mrb[0].mxu0
    %v3850 = vadd.f32 0.0, %v3849
    %v3851 = vpop.f32.mrb[0].mxu0
    %3852 = vdwg.mxu0
    %v3853 = vld [vmem:[#allocation12] sm:$0xff]
    %v3854 = vld [vmem:[#allocation12 + $0x8] sm:$0xff]
    %v3855 = vld [vmem:[#allocation12 + $0x10] sm:$0xff]
    %v3856 = vld [vmem:[#allocation12 + $0x18] sm:$0xff]
    %v3857 = vld [vmem:[#allocation12 + $0x20] sm:$0xff]
    %v3858 = vld [vmem:[#allocation12 + $0x28] sm:$0xff]
    %v3859 = vld [vmem:[#allocation12 + $0x30] sm:$0xff]
    %v3860 = vld [vmem:[#allocation12 + $0x38] sm:$0xff]
    %v3861 = vld [vmem:[#allocation12 + $0x40] sm:$0xff]
    %v3862 = vld [vmem:[#allocation12 + $0x48] sm:$0xff]
    %v3863 = vld [vmem:[#allocation12 + $0x50] sm:$0xff]
    %v3864 = vld [vmem:[#allocation12 + $0x58] sm:$0xff]
    %v3865 = vld [vmem:[#allocation12 + $0x60] sm:$0xff]
    %v3866 = vld [vmem:[#allocation12 + $0x68] sm:$0xff]
    %v3867 = vld [vmem:[#allocation12 + $0x70] sm:$0xff]
    %v3868 = vld [vmem:[#allocation12 + $0x78] sm:$0xff]
    %v3869 = vld [vmem:[#allocation12 + $0x80] sm:$0xff]
    %v3870 = vld [vmem:[#allocation12 + $0x88] sm:$0xff]
    %v3871 = vld [vmem:[#allocation12 + $0x90] sm:$0xff]
    %v3872 = vld [vmem:[#allocation12 + $0x98] sm:$0xff]
    %v3873 = vld [vmem:[#allocation12 + $0xa0] sm:$0xff]
    %v3874 = vld [vmem:[#allocation12 + $0xa8] sm:$0xff]
    %v3875 = vld [vmem:[#allocation12 + $0xb0] sm:$0xff]
    %v3876 = vld [vmem:[#allocation12 + $0xb8] sm:$0xff]
    %v3877 = vld [vmem:[#allocation12 + $0xc0] sm:$0xff]
    %v3878 = vld [vmem:[#allocation12 + $0xc8] sm:$0xff]
    %v3879 = vld [vmem:[#allocation12 + $0xd0] sm:$0xff]
    %v3880 = vld [vmem:[#allocation12 + $0xd8] sm:$0xff]
    %v3881 = vld [vmem:[#allocation12 + $0xe0] sm:$0xff]
    %v3882 = vld [vmem:[#allocation12 + $0xe8] sm:$0xff]
    %v3883 = vld [vmem:[#allocation12 + $0xf0] sm:$0xff]
    %v3884 = vld [vmem:[#allocation12 + $0xf8] sm:$0xff]
    %v3885 = vld [vmem:[#allocation12 + $0x100] sm:$0xff]
    %v3886 = vld [vmem:[#allocation12 + $0x108] sm:$0xff]
    %v3887 = vld [vmem:[#allocation12 + $0x110] sm:$0xff]
    %v3888 = vld [vmem:[#allocation12 + $0x118] sm:$0xff]
    %v3889 = vld [vmem:[#allocation12 + $0x120] sm:$0xff]
    %v3890 = vld [vmem:[#allocation12 + $0x128] sm:$0xff]
    %v3891 = vld [vmem:[#allocation12 + $0x130] sm:$0xff]
    %v3892 = vld [vmem:[#allocation12 + $0x138] sm:$0xff]
    %v3893 = vld [vmem:[#allocation12 + $0x140] sm:$0xff]
    %v3894 = vld [vmem:[#allocation12 + $0x148] sm:$0xff]
    %v3895 = vld [vmem:[#allocation12 + $0x150] sm:$0xff]
    %v3896 = vld [vmem:[#allocation12 + $0x158] sm:$0xff]
    %v3897 = vld [vmem:[#allocation12 + $0x160] sm:$0xff]
    %v3898 = vld [vmem:[#allocation12 + $0x168] sm:$0xff]
    %v3899 = vld [vmem:[#allocation12 + $0x170] sm:$0xff]
    %v3900 = vld [vmem:[#allocation12 + $0x178] sm:$0xff]
    %v3901 = vld [vmem:[#allocation12 + $0x180] sm:$0xff]
    %v3902 = vld [vmem:[#allocation12 + $0x188] sm:$0xff]
    %v3903 = vld [vmem:[#allocation12 + $0x190] sm:$0xff]
    %v3904 = vld [vmem:[#allocation12 + $0x198] sm:$0xff]
    %v3905 = vld [vmem:[#allocation12 + $0x1a0] sm:$0xff]
    %v3906 = vld [vmem:[#allocation12 + $0x1a8] sm:$0xff]
    %v3907 = vld [vmem:[#allocation12 + $0x1b0] sm:$0xff]
    %v3908 = vld [vmem:[#allocation12 + $0x1b8] sm:$0xff]
    %v3909 = vld [vmem:[#allocation12 + $0x1c0] sm:$0xff]
    %v3910 = vld [vmem:[#allocation12 + $0x1c8] sm:$0xff]
    %v3911 = vld [vmem:[#allocation12 + $0x1d0] sm:$0xff]
    %v3912 = vld [vmem:[#allocation12 + $0x1d8] sm:$0xff]
    %v3913 = vld [vmem:[#allocation12 + $0x1e0] sm:$0xff]
    %v3914 = vld [vmem:[#allocation12 + $0x1e8] sm:$0xff]
    %v3915 = vld [vmem:[#allocation12 + $0x1f0] sm:$0xff]
    %v3916 = vld [vmem:[#allocation12 + $0x1f8] sm:$0xff]
    %v3917 = vld [vmem:[#allocation3] sm:$0xff]
    %v3918 = vld [vmem:[#allocation13] sm:$0xff]
    %v3919 = vld [vmem:[#allocation13 + $0x8] sm:$0xff]
    %v3920 = vld [vmem:[#allocation13 + $0x10] sm:$0xff]
    %v3921 = vld [vmem:[#allocation13 + $0x18] sm:$0xff]
    %v3922 = vld [vmem:[#allocation13 + $0x20] sm:$0xff]
    %v3923 = vld [vmem:[#allocation13 + $0x28] sm:$0xff]
    %v3924 = vld [vmem:[#allocation13 + $0x30] sm:$0xff]
    %v3925 = vld [vmem:[#allocation13 + $0x38] sm:$0xff]
    %v3926 = vld [vmem:[#allocation13 + $0x40] sm:$0xff]
    %v3927 = vld [vmem:[#allocation13 + $0x48] sm:$0xff]
    %v3928 = vld [vmem:[#allocation13 + $0x50] sm:$0xff]
    %v3929 = vld [vmem:[#allocation13 + $0x58] sm:$0xff]
    %v3930 = vld [vmem:[#allocation13 + $0x60] sm:$0xff]
    %v3931 = vld [vmem:[#allocation13 + $0x68] sm:$0xff]
    %v3932 = vld [vmem:[#allocation13 + $0x70] sm:$0xff]
    %v3933 = vld [vmem:[#allocation13 + $0x78] sm:$0xff]
    %v3934 = vld [vmem:[#allocation13 + $0x80] sm:$0xff]
    %v3935 = vld [vmem:[#allocation13 + $0x88] sm:$0xff]
    %v3936 = vld [vmem:[#allocation13 + $0x90] sm:$0xff]
    %v3937 = vld [vmem:[#allocation13 + $0x98] sm:$0xff]
    %v3938 = vld [vmem:[#allocation13 + $0xa0] sm:$0xff]
    %v3939 = vld [vmem:[#allocation13 + $0xa8] sm:$0xff]
    %v3940 = vld [vmem:[#allocation13 + $0xb0] sm:$0xff]
    %v3941 = vld [vmem:[#allocation13 + $0xb8] sm:$0xff]
    %v3942 = vld [vmem:[#allocation13 + $0xc0] sm:$0xff]
    %v3943 = vld [vmem:[#allocation13 + $0xc8] sm:$0xff]
    %v3944 = vld [vmem:[#allocation13 + $0xd0] sm:$0xff]
    %v3945 = vld [vmem:[#allocation13 + $0xd8] sm:$0xff]
    %v3946 = vld [vmem:[#allocation13 + $0xe0] sm:$0xff]
    %v3947 = vld [vmem:[#allocation13 + $0xe8] sm:$0xff]
    %v3948 = vld [vmem:[#allocation13 + $0xf0] sm:$0xff]
    %v3949 = vld [vmem:[#allocation13 + $0xf8] sm:$0xff]
    %v3950 = vld [vmem:[#allocation13 + $0x100] sm:$0xff]
    %v3951 = vld [vmem:[#allocation13 + $0x108] sm:$0xff]
    %v3952 = vld [vmem:[#allocation13 + $0x110] sm:$0xff]
    %v3953 = vld [vmem:[#allocation13 + $0x118] sm:$0xff]
    %v3954 = vld [vmem:[#allocation13 + $0x120] sm:$0xff]
    %v3955 = vld [vmem:[#allocation13 + $0x128] sm:$0xff]
    %v3956 = vld [vmem:[#allocation13 + $0x130] sm:$0xff]
    %v3957 = vld [vmem:[#allocation13 + $0x138] sm:$0xff]
    %v3958 = vld [vmem:[#allocation13 + $0x140] sm:$0xff]
    %v3959 = vld [vmem:[#allocation13 + $0x148] sm:$0xff]
    %v3960 = vld [vmem:[#allocation13 + $0x150] sm:$0xff]
    %v3961 = vld [vmem:[#allocation13 + $0x158] sm:$0xff]
    %v3962 = vld [vmem:[#allocation13 + $0x160] sm:$0xff]
    %v3963 = vld [vmem:[#allocation13 + $0x168] sm:$0xff]
    %v3964 = vld [vmem:[#allocation13 + $0x170] sm:$0xff]
    %v3965 = vld [vmem:[#allocation13 + $0x178] sm:$0xff]
    %v3966 = vld [vmem:[#allocation13 + $0x180] sm:$0xff]
    %v3967 = vld [vmem:[#allocation13 + $0x188] sm:$0xff]
    %v3968 = vld [vmem:[#allocation13 + $0x190] sm:$0xff]
    %v3969 = vld [vmem:[#allocation13 + $0x198] sm:$0xff]
    %v3970 = vld [vmem:[#allocation13 + $0x1a0] sm:$0xff]
    %v3971 = vld [vmem:[#allocation13 + $0x1a8] sm:$0xff]
    %v3972 = vld [vmem:[#allocation13 + $0x1b0] sm:$0xff]
    %v3973 = vld [vmem:[#allocation13 + $0x1b8] sm:$0xff]
    %v3974 = vld [vmem:[#allocation13 + $0x1c0] sm:$0xff]
    %v3975 = vld [vmem:[#allocation13 + $0x1c8] sm:$0xff]
    %v3976 = vld [vmem:[#allocation13 + $0x1d0] sm:$0xff]
    %v3977 = vld [vmem:[#allocation13 + $0x1d8] sm:$0xff]
    %v3978 = vld [vmem:[#allocation13 + $0x1e0] sm:$0xff]
    %v3979 = vld [vmem:[#allocation13 + $0x1e8] sm:$0xff]
    %v3980 = vld [vmem:[#allocation13 + $0x1f0] sm:$0xff]
    %v3981 = vld [vmem:[#allocation13 + $0x1f8] sm:$0xff]
    %3982 = vmatprep.subr.mxu0 %v3919
    %3983 = vmatpush1.msra.mxu0 %v3918
    %3984 = vmatprep.subr.mxu0 %v3923
    %3985 = vmatpush1.msra.mxu0 %v3922
    %3986 = vmatprep.subr.mxu0 %v3927
    %3987 = vmatpush1.msra.mxu0 %v3926
    %3988 = vmatprep.subr.mxu0 %v3931
    %3989 = vmatpush1.msra.mxu0 %v3930
    %3990 = vmatprep.subr.mxu0 %v3935
    %3991 = vmatpush1.msra.mxu0 %v3934
    %3992 = vmatprep.subr.mxu0 %v3939
    %3993 = vmatpush1.msra.mxu0 %v3938
    %3994 = vmatprep.subr.mxu0 %v3943
    %3995 = vmatpush1.msra.mxu0 %v3942
    %3996 = vmatprep.subr.mxu0 %v3947
    %3997 = vmatpush1.msra.mxu0 %v3946
    %3998 = vmatprep.subr.mxu0 %v3951
    %3999 = vmatpush1.msra.mxu0 %v3950
    %4000 = vmatprep.subr.mxu0 %v3955
    %4001 = vmatpush1.msra.mxu0 %v3954
    %4002 = vmatprep.subr.mxu0 %v3959
    %4003 = vmatpush1.msra.mxu0 %v3958
    %4004 = vmatprep.subr.mxu0 %v3963
    %4005 = vmatpush1.msra.mxu0 %v3962
    %4006 = vmatprep.subr.mxu0 %v3967
    %4007 = vmatpush1.msra.mxu0 %v3966
    %4008 = vmatprep.subr.mxu0 %v3971
    %4009 = vmatpush1.msra.mxu0 %v3970
    %4010 = vmatprep.subr.mxu0 %v3975
    %4011 = vmatpush1.msra.mxu0 %v3974
    %4012 = vmatprep.subr.mxu0 %v3979
    %4013 = vmatpush1.msra.mxu0 %v3978
    %4014 = vmatprep.subr.mxu0 0.0
    %4015 = vmatpush1.msra.mxu0 0.0
    %4016 = vmatprep.subr.mxu0 0.0
    %4017 = vmatpush1.msra.mxu0 0.0
    %4018 = vmatprep.subr.mxu0 0.0
    %4019 = vmatpush1.msra.mxu0 0.0
    %4020 = vmatprep.subr.mxu0 0.0
    %4021 = vmatpush1.msra.mxu0 0.0
    %4022 = vmatprep.subr.mxu0 0.0
    %4023 = vmatpush1.msra.mxu0 0.0
    %4024 = vmatprep.subr.mxu0 0.0
    %4025 = vmatpush1.msra.mxu0 0.0
    %4026 = vmatprep.subr.mxu0 0.0
    %4027 = vmatpush1.msra.mxu0 0.0
    %4028 = vmatprep.subr.mxu0 0.0
    %4029 = vmatpush1.msra.mxu0 0.0
    %4030 = vmatprep.subr.mxu0 0.0
    %4031 = vmatpush1.msra.mxu0 0.0
    %4032 = vmatprep.subr.mxu0 0.0
    %4033 = vmatpush1.msra.mxu0 0.0
    %4034 = vmatprep.subr.mxu0 0.0
    %4035 = vmatpush1.msra.mxu0 0.0
    %4036 = vmatprep.subr.mxu0 0.0
    %4037 = vmatpush1.msra.mxu0 0.0
    %4038 = vmatprep.subr.mxu0 0.0
    %4039 = vmatpush1.msra.mxu0 0.0
    %4040 = vmatprep.subr.mxu0 0.0
    %4041 = vmatpush1.msra.mxu0 0.0
    %4042 = vmatprep.subr.mxu0 0.0
    %4043 = vmatpush1.msra.mxu0 0.0
    %4044 = vmatprep.subr.mxu0 0.0
    %4045 = vmatpush1.msra.mxu0 0.0
    %4046 = vmatprep.mubr.f32.mxu0 0.0
    %4047 = vmatmul.mubr.f32.gmra.mrb[0].mxu0 %v3917
    %v4048 = vpop.f32.mrb[0].mxu0
    %v4049 = vadd.f32 0.0, %v4048
    %v4050 = vpop.f32.mrb[0].mxu0
    %v4051 = vadd.f32 0.0, %v4050
    %4052 = vdwg.mxu0
    %4053 = vmatprep.subr.mxu0 %v3921
    %4054 = vmatpush1.msra.mxu0 %v3920
    %4055 = vmatprep.subr.mxu0 %v3925
    %4056 = vmatpush1.msra.mxu0 %v3924
    %4057 = vmatprep.subr.mxu0 %v3929
    %4058 = vmatpush1.msra.mxu0 %v3928
    %4059 = vmatprep.subr.mxu0 %v3933
    %4060 = vmatpush1.msra.mxu0 %v3932
    %4061 = vmatprep.subr.mxu0 %v3937
    %4062 = vmatpush1.msra.mxu0 %v3936
    %4063 = vmatprep.subr.mxu0 %v3941
    %4064 = vmatpush1.msra.mxu0 %v3940
    %4065 = vmatprep.subr.mxu0 %v3945
    %4066 = vmatpush1.msra.mxu0 %v3944
    %4067 = vmatprep.subr.mxu0 %v3949
    %4068 = vmatpush1.msra.mxu0 %v3948
    %4069 = vmatprep.subr.mxu0 %v3953
    %4070 = vmatpush1.msra.mxu0 %v3952
    %4071 = vmatprep.subr.mxu0 %v3957
    %4072 = vmatpush1.msra.mxu0 %v3956
    %4073 = vmatprep.subr.mxu0 %v3961
    %4074 = vmatpush1.msra.mxu0 %v3960
    %4075 = vmatprep.subr.mxu0 %v3965
    %4076 = vmatpush1.msra.mxu0 %v3964
    %4077 = vmatprep.subr.mxu0 %v3969
    %4078 = vmatpush1.msra.mxu0 %v3968
    %4079 = vmatprep.subr.mxu0 %v3973
    %4080 = vmatpush1.msra.mxu0 %v3972
    %4081 = vmatprep.subr.mxu0 %v3977
    %4082 = vmatpush1.msra.mxu0 %v3976
    %4083 = vmatprep.subr.mxu0 %v3981
    %4084 = vmatpush1.msra.mxu0 %v3980
    %4085 = vmatprep.subr.mxu0 0.0
    %4086 = vmatpush1.msra.mxu0 0.0
    %4087 = vmatprep.subr.mxu0 0.0
    %4088 = vmatpush1.msra.mxu0 0.0
    %4089 = vmatprep.subr.mxu0 0.0
    %4090 = vmatpush1.msra.mxu0 0.0
    %4091 = vmatprep.subr.mxu0 0.0
    %4092 = vmatpush1.msra.mxu0 0.0
    %4093 = vmatprep.subr.mxu0 0.0
    %4094 = vmatpush1.msra.mxu0 0.0
    %4095 = vmatprep.subr.mxu0 0.0
    %4096 = vmatpush1.msra.mxu0 0.0
    %4097 = vmatprep.subr.mxu0 0.0
    %4098 = vmatpush1.msra.mxu0 0.0
    %4099 = vmatprep.subr.mxu0 0.0
    %4100 = vmatpush1.msra.mxu0 0.0
    %4101 = vmatprep.subr.mxu0 0.0
    %4102 = vmatpush1.msra.mxu0 0.0
    %4103 = vmatprep.subr.mxu0 0.0
    %4104 = vmatpush1.msra.mxu0 0.0
    %4105 = vmatprep.subr.mxu0 0.0
    %4106 = vmatpush1.msra.mxu0 0.0
    %4107 = vmatprep.subr.mxu0 0.0
    %4108 = vmatpush1.msra.mxu0 0.0
    %4109 = vmatprep.subr.mxu0 0.0
    %4110 = vmatpush1.msra.mxu0 0.0
    %4111 = vmatprep.subr.mxu0 0.0
    %4112 = vmatpush1.msra.mxu0 0.0
    %4113 = vmatprep.subr.mxu0 0.0
    %4114 = vmatpush1.msra.mxu0 0.0
    %4115 = vmatprep.subr.mxu0 0.0
    %4116 = vmatpush1.msra.mxu0 0.0
    %4117 = vmatprep.mubr.f32.mxu0 0.0
    %4118 = vmatmul.mubr.f32.gmra.mrb[0].mxu0 %v3917
    %v4119 = vpop.f32.mrb[0].mxu0
    %v4120 = vadd.f32 0.0, %v4119
    %v4121 = vpop.f32.mrb[0].mxu0
    %v4122 = vadd.f32 0.0, %v4121
    %4123 = vdwg.mxu0
    %4124 = vmatprep.subr.mxu0 %v3854
    %4125 = vmatpush1.msra.mxu0 %v3853
    %4126 = vmatprep.subr.mxu0 %v3858
    %4127 = vmatpush1.msra.mxu0 %v3857
    %4128 = vmatprep.subr.mxu0 %v3862
    %4129 = vmatpush1.msra.mxu0 %v3861
    %4130 = vmatprep.subr.mxu0 %v3866
    %4131 = vmatpush1.msra.mxu0 %v3865
    %4132 = vmatprep.subr.mxu0 %v3870
    %4133 = vmatpush1.msra.mxu0 %v3869
    %4134 = vmatprep.subr.mxu0 %v3874
    %4135 = vmatpush1.msra.mxu0 %v3873
    %4136 = vmatprep.subr.mxu0 %v3878
    %4137 = vmatpush1.msra.mxu0 %v3877
    %4138 = vmatprep.subr.mxu0 %v3882
    %4139 = vmatpush1.msra.mxu0 %v3881
    %4140 = vmatprep.subr.mxu0 %v3886
    %4141 = vmatpush1.msra.mxu0 %v3885
    %4142 = vmatprep.subr.mxu0 %v3890
    %4143 = vmatpush1.msra.mxu0 %v3889
    %4144 = vmatprep.subr.mxu0 %v3894
    %4145 = vmatpush1.msra.mxu0 %v3893
    %4146 = vmatprep.subr.mxu0 %v3898
    %4147 = vmatpush1.msra.mxu0 %v3897
    %4148 = vmatprep.subr.mxu0 %v3902
    %4149 = vmatpush1.msra.mxu0 %v3901
    %4150 = vmatprep.subr.mxu0 %v3906
    %4151 = vmatpush1.msra.mxu0 %v3905
    %4152 = vmatprep.subr.mxu0 %v3910
    %4153 = vmatpush1.msra.mxu0 %v3909
    %4154 = vmatprep.subr.mxu0 %v3914
    %4155 = vmatpush1.msra.mxu0 %v3913
    %4156 = vmatprep.subr.mxu0 0.0
    %4157 = vmatpush1.msra.mxu0 0.0
    %4158 = vmatprep.subr.mxu0 0.0
    %4159 = vmatpush1.msra.mxu0 0.0
    %4160 = vmatprep.subr.mxu0 0.0
    %4161 = vmatpush1.msra.mxu0 0.0
    %4162 = vmatprep.subr.mxu0 0.0
    %4163 = vmatpush1.msra.mxu0 0.0
    %4164 = vmatprep.subr.mxu0 0.0
    %4165 = vmatpush1.msra.mxu0 0.0
    %4166 = vmatprep.subr.mxu0 0.0
    %4167 = vmatpush1.msra.mxu0 0.0
    %4168 = vmatprep.subr.mxu0 0.0
    %4169 = vmatpush1.msra.mxu0 0.0
    %4170 = vmatprep.subr.mxu0 0.0
    %4171 = vmatpush1.msra.mxu0 0.0
    %4172 = vmatprep.subr.mxu0 0.0
    %4173 = vmatpush1.msra.mxu0 0.0
    %4174 = vmatprep.subr.mxu0 0.0
    %4175 = vmatpush1.msra.mxu0 0.0
    %4176 = vmatprep.subr.mxu0 0.0
    %4177 = vmatpush1.msra.mxu0 0.0
    %4178 = vmatprep.subr.mxu0 0.0
    %4179 = vmatpush1.msra.mxu0 0.0
    %4180 = vmatprep.subr.mxu0 0.0
    %4181 = vmatpush1.msra.mxu0 0.0
    %4182 = vmatprep.subr.mxu0 0.0
    %4183 = vmatpush1.msra.mxu0 0.0
    %4184 = vmatprep.subr.mxu0 0.0
    %4185 = vmatpush1.msra.mxu0 0.0
    %4186 = vmatprep.subr.mxu0 0.0
    %4187 = vmatpush1.msra.mxu0 0.0
    %4188 = vmatprep.mubr.f32.mxu0 0.0
    %4189 = vmatmul.mubr.f32.gmra.mrb[0].mxu0 %v3850
    %v4190 = vpop.f32.mrb[0].mxu0
    %v4191 = vadd.f32 %v4049, %v4190
    %v4192 = vpop.f32.mrb[0].mxu0
    %v4193 = vadd.f32 %v4051, %v4192
    %4194 = vdwg.mxu0
    %4195 = vmatprep.subr.mxu0 %v3856
    %4196 = vmatpush1.msra.mxu0 %v3855
    %4197 = vmatprep.subr.mxu0 %v3860
    %4198 = vmatpush1.msra.mxu0 %v3859
    %4199 = vmatprep.subr.mxu0 %v3864
    %4200 = vmatpush1.msra.mxu0 %v3863
    %4201 = vmatprep.subr.mxu0 %v3868
    %4202 = vmatpush1.msra.mxu0 %v3867
    %4203 = vmatprep.subr.mxu0 %v3872
    %4204 = vmatpush1.msra.mxu0 %v3871
    %4205 = vmatprep.subr.mxu0 %v3876
    %4206 = vmatpush1.msra.mxu0 %v3875
    %4207 = vmatprep.subr.mxu0 %v3880
    %4208 = vmatpush1.msra.mxu0 %v3879
    %4209 = vmatprep.subr.mxu0 %v3884
    %4210 = vmatpush1.msra.mxu0 %v3883
    %4211 = vmatprep.subr.mxu0 %v3888
    %4212 = vmatpush1.msra.mxu0 %v3887
    %4213 = vmatprep.subr.mxu0 %v3892
    %4214 = vmatpush1.msra.mxu0 %v3891
    %4215 = vmatprep.subr.mxu0 %v3896
    %4216 = vmatpush1.msra.mxu0 %v3895
    %4217 = vmatprep.subr.mxu0 %v3900
    %4218 = vmatpush1.msra.mxu0 %v3899
    %4219 = vmatprep.subr.mxu0 %v3904
    %4220 = vmatpush1.msra.mxu0 %v3903
    %4221 = vmatprep.subr.mxu0 %v3908
    %4222 = vmatpush1.msra.mxu0 %v3907
    %4223 = vmatprep.subr.mxu0 %v3912
    %4224 = vmatpush1.msra.mxu0 %v3911
    %4225 = vmatprep.subr.mxu0 %v3916
    %4226 = vmatpush1.msra.mxu0 %v3915
    %4227 = vmatprep.subr.mxu0 0.0
    %4228 = vmatpush1.msra.mxu0 0.0
    %4229 = vmatprep.subr.mxu0 0.0
    %4230 = vmatpush1.msra.mxu0 0.0
    %4231 = vmatprep.subr.mxu0 0.0
    %4232 = vmatpush1.msra.mxu0 0.0
    %4233 = vmatprep.subr.mxu0 0.0
    %4234 = vmatpush1.msra.mxu0 0.0
    %4235 = vmatprep.subr.mxu0 0.0
    %4236 = vmatpush1.msra.mxu0 0.0
    %4237 = vmatprep.subr.mxu0 0.0
    %4238 = vmatpush1.msra.mxu0 0.0
    %4239 = vmatprep.subr.mxu0 0.0
    %4240 = vmatpush1.msra.mxu0 0.0
    %4241 = vmatprep.subr.mxu0 0.0
    %4242 = vmatpush1.msra.mxu0 0.0
    %4243 = vmatprep.subr.mxu0 0.0
    %4244 = vmatpush1.msra.mxu0 0.0
    %4245 = vmatprep.subr.mxu0 0.0
    %4246 = vmatpush1.msra.mxu0 0.0
    %4247 = vmatprep.subr.mxu0 0.0
    %4248 = vmatpush1.msra.mxu0 0.0
    %4249 = vmatprep.subr.mxu0 0.0
    %4250 = vmatpush1.msra.mxu0 0.0
    %4251 = vmatprep.subr.mxu0 0.0
    %4252 = vmatpush1.msra.mxu0 0.0
    %4253 = vmatprep.subr.mxu0 0.0
    %4254 = vmatpush1.msra.mxu0 0.0
    %4255 = vmatprep.subr.mxu0 0.0
    %4256 = vmatpush1.msra.mxu0 0.0
    %4257 = vmatprep.subr.mxu0 0.0
    %4258 = vmatpush1.msra.mxu0 0.0
    %4259 = vmatprep.mubr.f32.mxu0 0.0
    %4260 = vmatmul.mubr.f32.gmra.mrb[0].mxu0 %v3850
    %v4261 = vpop.f32.mrb[0].mxu0
    %v4262 = vadd.f32 %v4120, %v4261
    %v4263 = vpop.f32.mrb[0].mxu0
    %v4264 = vadd.f32 %v4122, %v4263
    %4265 = vdwg.mxu0
    %v4266 = vld [vmem:[%s8] sm:$0xff]
    %v4267 = vld [vmem:[%s8 + $0x8] sm:$0xff]
    %v4268 = vld [vmem:[%s8 + $0x10] sm:$0xff]
    %v4269 = vld [vmem:[%s8 + $0x18] sm:$0xff]
    %v4270 = vadd.f32 %v4191, %v4266
    %v4271 = vadd.f32 %v4193, %v4267
    %v4272 = vadd.f32 %v4262, %v4268
    %v4273 = vadd.f32 %v4264, %v4269
    %v4274 = vld [vmem:[#allocation4] sm:$0xff]
    %v4275 = vxor.u32 %v4270, 2147483648
    %v4276 = vmul.f32 %v4275, 1.442695
    %v4277 = vpow.pop %v4276
    %v4278 = vadd.f32 %v4277, 1.0
    %v4279 = vrcp.pop %v4278
    %v4280 = vmul.f32 1.0, %v4279
    %v4281 = vxor.u32 %v4271, 2147483648
    %v4282 = vmul.f32 %v4281, 1.442695
    %v4283 = vpow.pop %v4282
    %v4284 = vadd.f32 %v4283, 1.0
    %v4285 = vrcp.pop %v4284
    %v4286 = vmul.f32 1.0, %v4285
    %v4287 = vtanh.pop %v4272
    %v4288 = vxor.u32 %v4273, 2147483648
    %v4289 = vmul.f32 %v4288, 1.442695
    %v4290 = vpow.pop %v4289
    %v4291 = vadd.f32 %v4290, 1.0
    %v4292 = vrcp.pop %v4291
    %v4293 = vmul.f32 1.0, %v4292
    %v4294 = vmul.f32 %v4286, %v4274
    %v4295 = vmul.f32 %v4280, %v4287
    %v4296 = vadd.f32 %v4294, %v4295
    %v4297 = vtanh.pop %v4296
    %v4298 = vmul.f32 %v4293, %v4297
    %4299 = vst [vmem:[#allocation3] sm:$0xff] %v4298
    %4300 = vst [vmem:[#allocation4] sm:$0xff] %v4296
    %v4301 = vld [vmem:[%s9] sm:$0xff]
    %v4302 = vld [vmem:[%s9 + $0x8] sm:$0xff]
    %v4303 = vld [vmem:[%s9 + $0x10] sm:$0xff]
    %v4304 = vld [vmem:[%s9 + $0x18] sm:$0xff]
    %v4305 = vld [vmem:[%s9 + $0x20] sm:$0xff]
    %v4306 = vld [vmem:[%s9 + $0x28] sm:$0xff]
    %v4307 = vld [vmem:[%s9 + $0x30] sm:$0xff]
    %v4308 = vld [vmem:[%s9 + $0x38] sm:$0xff]
    %v4309 = vld [vmem:[%s9 + $0x40] sm:$0xff]
    %v4310 = vld [vmem:[%s9 + $0x48] sm:$0xff]
    %v4311 = vld [vmem:[%s9 + $0x50] sm:$0xff]
    %v4312 = vld [vmem:[%s9 + $0x58] sm:$0xff]
    %v4313 = vld [vmem:[%s9 + $0x60] sm:$0xff]
    %v4314 = vld [vmem:[%s9 + $0x68] sm:$0xff]
    %v4315 = vld [vmem:[%s9 + $0x70] sm:$0xff]
    %v4316 = vld [vmem:[%s9 + $0x78] sm:$0xff]
    %v4317 = vld [vmem:[%s10] sm:$0xff]
    %4318 = vmatprep.subr.mxu0 0.0
    %4319 = vmatpush1.msra.mxu0 %v4301
    %4320 = vmatprep.subr.mxu0 0.0
    %4321 = vmatpush1.msra.mxu0 %v4302
    %4322 = vmatprep.subr.mxu0 0.0
    %4323 = vmatpush1.msra.mxu0 %v4303
    %4324 = vmatprep.subr.mxu0 0.0
    %4325 = vmatpush1.msra.mxu0 %v4304
    %4326 = vmatprep.subr.mxu0 0.0
    %4327 = vmatpush1.msra.mxu0 %v4305
    %4328 = vmatprep.subr.mxu0 0.0
    %4329 = vmatpush1.msra.mxu0 %v4306
    %4330 = vmatprep.subr.mxu0 0.0
    %4331 = vmatpush1.msra.mxu0 %v4307
    %4332 = vmatprep.subr.mxu0 0.0
    %4333 = vmatpush1.msra.mxu0 %v4308
    %4334 = vmatprep.subr.mxu0 0.0
    %4335 = vmatpush1.msra.mxu0 %v4309
    %4336 = vmatprep.subr.mxu0 0.0
    %4337 = vmatpush1.msra.mxu0 %v4310
    %4338 = vmatprep.subr.mxu0 0.0
    %4339 = vmatpush1.msra.mxu0 %v4311
    %4340 = vmatprep.subr.mxu0 0.0
    %4341 = vmatpush1.msra.mxu0 %v4312
    %4342 = vmatprep.subr.mxu0 0.0
    %4343 = vmatpush1.msra.mxu0 %v4313
    %4344 = vmatprep.subr.mxu0 0.0
    %4345 = vmatpush1.msra.mxu0 %v4314
    %4346 = vmatprep.subr.mxu0 0.0
    %4347 = vmatpush1.msra.mxu0 %v4315
    %4348 = vmatprep.subr.mxu0 0.0
    %4349 = vmatpush1.msra.mxu0 %v4316
    %4350 = vmatprep.subr.mxu0 0.0
    %4351 = vmatpush1.msra.mxu0 0.0
    %4352 = vmatprep.subr.mxu0 0.0
    %4353 = vmatpush1.msra.mxu0 0.0
    %4354 = vmatprep.subr.mxu0 0.0
    %4355 = vmatpush1.msra.mxu0 0.0
    %4356 = vmatprep.subr.mxu0 0.0
    %4357 = vmatpush1.msra.mxu0 0.0
    %4358 = vmatprep.subr.mxu0 0.0
    %4359 = vmatpush1.msra.mxu0 0.0
    %4360 = vmatprep.subr.mxu0 0.0
    %4361 = vmatpush1.msra.mxu0 0.0
    %4362 = vmatprep.subr.mxu0 0.0
    %4363 = vmatpush1.msra.mxu0 0.0
    %4364 = vmatprep.subr.mxu0 0.0
    %4365 = vmatpush1.msra.mxu0 0.0
    %4366 = vmatprep.subr.mxu0 0.0
    %4367 = vmatpush1.msra.mxu0 0.0
    %4368 = vmatprep.subr.mxu0 0.0
    %4369 = vmatpush1.msra.mxu0 0.0
    %4370 = vmatprep.subr.mxu0 0.0
    %4371 = vmatpush1.msra.mxu0 0.0
    %4372 = vmatprep.subr.mxu0 0.0
    %4373 = vmatpush1.msra.mxu0 0.0
    %4374 = vmatprep.subr.mxu0 0.0
    %4375 = vmatpush1.msra.mxu0 0.0
    %4376 = vmatprep.subr.mxu0 0.0
    %4377 = vmatpush1.msra.mxu0 0.0
    %4378 = vmatprep.subr.mxu0 0.0
    %4379 = vmatpush1.msra.mxu0 0.0
    %4380 = vmatprep.subr.mxu0 0.0
    %4381 = vmatpush1.msra.mxu0 0.0
    %4382 = vmatprep.mubr.f32.mxu0 0.0
    %4383 = vmatmul.mubr.f32.gmra.mrb[0].mxu0 %v4298
    %v4384 = vpop.f32.mrb[0].mxu0
    %v4385 = vadd.f32 %v4317, %v4384
    %v4386 = vpop.f32.mrb[0].mxu0
    %4387 = vdwg.mxu0
    %s4388 = scalar_lea.vmem %s13, 16
    %4389 = vst [vmem:[%s4388] sm:$0xff] %v4385
    %s4390 = sld [smem:[#allocation6 + $0x2]]
    %p4391 = scmp.eq.s32.totalorder %s4390, 0
    // Predicated region
    $region90: #{chat_model_forward.1} parent=1 // pred_check
      %p4392 = pneg %p4391
    $region91: #{chat_model_forward.1} parent=1 // pred_check_branch
      %4394 = sbr.rel (%p4392) target = $region93
    $region92: #{chat_model_forward.1} parent=1 // pred_region
      %vm4395 = vcmp.lt.s32.totalorder %v2447, 64
      %v4396 = vsel %vm4395, %v4385, -1e+30
      %4397 = vmax.xlane.f32.xlu0 %v4396
      %v4398 = vpop.xlane.xlu0 %4397
      %vm4399 = vcmp.eq.f32.partialorder %v4396, %v4398
      %v4400 = vsel %vm4399, %v2447, 128
      %v4401 = vand.u32 %v4400, 65535
      %v4402 = vshra.s32 %v4400, 16
      %v4403 = vcvt.s32.f32 %v4401
      %v4404 = vcvt.s32.f32 %v4402
      %4405 = vmin.xlane.f32.xlu0 %v4404
      %v4406 = vpop.xlane.xlu0 %4405
      %vm4407 = vcmp.eq.f32.partialorder %v4404, %v4406
      %v4408 = vsel %vm4407, %v4403, inf
      %4409 = vmin.xlane.f32.xlu0 %v4408
      %v4410 = vpop.xlane.xlu0 %4409
      %v4411 = vcvt.f32.s32 %v4410
      %v4412 = vcvt.f32.s32 %v4406
      %v4413 = vshll.u32 %v4412, 16
      %v4414 = vadd.s32 %v4413, %v4411
      %vm4415 = vcmp.eq.s32.totalorder %v2447, %v4414
      %v4416 = vsel %vm4415, 1, 0
      %v4417 = vcvt.s32.f32 %v4416
      %4418 = vst [vmem:[#allocation5] sm:$0xff] %v4417
    $region93: #{chat_model_forward.1} parent=1 // pred_fallthru
      _
    %p4419 = scmp.ne.s32.totalorder %s4390, 0
    // Predicated region
    $region94: #{chat_model_forward.1} parent=1 // pred_check
      %p4420 = pneg %p4419
    $region95: #{chat_model_forward.1} parent=1 // pred_check_branch
      %4422 = sbr.rel (%p4420) target = $region97
    $region96: #{chat_model_forward.1} parent=1 // pred_region
      %s4423 = scalar_lea.vmem %s11, 16
      %v4424 = vld [vmem:[%s4423] sm:$0xff]
      %4425 = vst [vmem:[#allocation5] sm:$0xff] %v4424
    $region97: #{chat_model_forward.1} parent=1 // pred_fallthru
      _
    %v4426 = vld [vmem:[#allocation5] sm:$0xff]
    %v4427 = vld [vmem:[%s5] sm:$0xff]
    %v4428 = vld [vmem:[%s5 + $0x8] sm:$0xff]
    %v4429 = vld [vmem:[%s5 + $0x10] sm:$0xff]
    %v4430 = vld [vmem:[%s5 + $0x18] sm:$0xff]
    %v4431 = vld [vmem:[%s5 + $0x20] sm:$0xff]
    %v4432 = vld [vmem:[%s5 + $0x28] sm:$0xff]
    %v4433 = vld [vmem:[%s5 + $0x30] sm:$0xff]
    %v4434 = vld [vmem:[%s5 + $0x38] sm:$0xff]
    %v4435 = vld [vmem:[%s5 + $0x40] sm:$0xff]
    %v4436 = vld [vmem:[%s5 + $0x48] sm:$0xff]
    %v4437 = vld [vmem:[%s5 + $0x50] sm:$0xff]
    %v4438 = vld [vmem:[%s5 + $0x58] sm:$0xff]
    %v4439 = vld [vmem:[%s5 + $0x60] sm:$0xff]
    %v4440 = vld [vmem:[%s5 + $0x68] sm:$0xff]
    %v4441 = vld [vmem:[%s5 + $0x70] sm:$0xff]
    %v4442 = vld [vmem:[%s5 + $0x78] sm:$0xff]
    %4443 = vmatprep.subr.mxu0 0.0
    %4444 = vmatpush1.msra.mxu0 %v4427
    %4445 = vmatprep.subr.mxu0 0.0
    %4446 = vmatpush1.msra.mxu0 %v4428
    %4447 = vmatprep.subr.mxu0 0.0
    %4448 = vmatpush1.msra.mxu0 %v4429
    %4449 = vmatprep.subr.mxu0 0.0
    %4450 = vmatpush1.msra.mxu0 %v4430
    %4451 = vmatprep.subr.mxu0 0.0
    %4452 = vmatpush1.msra.mxu0 %v4431
    %4453 = vmatprep.subr.mxu0 0.0
    %4454 = vmatpush1.msra.mxu0 %v4432
    %4455 = vmatprep.subr.mxu0 0.0
    %4456 = vmatpush1.msra.mxu0 %v4433
    %4457 = vmatprep.subr.mxu0 0.0
    %4458 = vmatpush1.msra.mxu0 %v4434
    %4459 = vmatprep.subr.mxu0 0.0
    %4460 = vmatpush1.msra.mxu0 %v4435
    %4461 = vmatprep.subr.mxu0 0.0
    %4462 = vmatpush1.msra.mxu0 %v4436
    %4463 = vmatprep.subr.mxu0 0.0
    %4464 = vmatpush1.msra.mxu0 %v4437
    %4465 = vmatprep.subr.mxu0 0.0
    %4466 = vmatpush1.msra.mxu0 %v4438
    %4467 = vmatprep.subr.mxu0 0.0
    %4468 = vmatpush1.msra.mxu0 %v4439
    %4469 = vmatprep.subr.mxu0 0.0
    %4470 = vmatpush1.msra.mxu0 %v4440
    %4471 = vmatprep.subr.mxu0 0.0
    %4472 = vmatpush1.msra.mxu0 %v4441
    %4473 = vmatprep.subr.mxu0 0.0
    %4474 = vmatpush1.msra.mxu0 %v4442
    %4475 = vmatprep.subr.mxu0 0.0
    %4476 = vmatpush1.msra.mxu0 0.0
    %4477 = vmatprep.subr.mxu0 0.0
    %4478 = vmatpush1.msra.mxu0 0.0
    %4479 = vmatprep.subr.mxu0 0.0
    %4480 = vmatpush1.msra.mxu0 0.0
    %4481 = vmatprep.subr.mxu0 0.0
    %4482 = vmatpush1.msra.mxu0 0.0
    %4483 = vmatprep.subr.mxu0 0.0
    %4484 = vmatpush1.msra.mxu0 0.0
    %4485 = vmatprep.subr.mxu0 0.0
    %4486 = vmatpush1.msra.mxu0 0.0
    %4487 = vmatprep.subr.mxu0 0.0
    %4488 = vmatpush1.msra.mxu0 0.0
    %4489 = vmatprep.subr.mxu0 0.0
    %4490 = vmatpush1.msra.mxu0 0.0
    %4491 = vmatprep.subr.mxu0 0.0
    %4492 = vmatpush1.msra.mxu0 0.0
    %4493 = vmatprep.subr.mxu0 0.0
    %4494 = vmatpush1.msra.mxu0 0.0
    %4495 = vmatprep.subr.mxu0 0.0
    %4496 = vmatpush1.msra.mxu0 0.0
    %4497 = vmatprep.subr.mxu0 0.0
    %4498 = vmatpush1.msra.mxu0 0.0
    %4499 = vmatprep.subr.mxu0 0.0
    %4500 = vmatpush1.msra.mxu0 0.0
    %4501 = vmatprep.subr.mxu0 0.0
    %4502 = vmatpush1.msra.mxu0 0.0
    %4503 = vmatprep.subr.mxu0 0.0
    %4504 = vmatpush1.msra.mxu0 0.0
    %4505 = vmatprep.subr.mxu0 0.0
    %4506 = vmatpush1.msra.mxu0 0.0
    %4507 = vmatprep.mubr.f32.mxu0 0.0
    %4508 = vmatmul.mubr.f32.gmra.mrb[0].mxu0 %v4426
    %v4509 = vpop.f32.mrb[0].mxu0
    %v4510 = vadd.f32 0.0, %v4509
    %v4511 = vpop.f32.mrb[0].mxu0
    %4512 = vdwg.mxu0
    %v4513 = vld [vmem:[#allocation12] sm:$0xff]
    %v4514 = vld [vmem:[#allocation12 + $0x8] sm:$0xff]
    %v4515 = vld [vmem:[#allocation12 + $0x10] sm:$0xff]
    %v4516 = vld [vmem:[#allocation12 + $0x18] sm:$0xff]
    %v4517 = vld [vmem:[#allocation12 + $0x20] sm:$0xff]
    %v4518 = vld [vmem:[#allocation12 + $0x28] sm:$0xff]
    %v4519 = vld [vmem:[#allocation12 + $0x30] sm:$0xff]
    %v4520 = vld [vmem:[#allocation12 + $0x38] sm:$0xff]
    %v4521 = vld [vmem:[#allocation12 + $0x40] sm:$0xff]
    %v4522 = vld [vmem:[#allocation12 + $0x48] sm:$0xff]
    %v4523 = vld [vmem:[#allocation12 + $0x50] sm:$0xff]
    %v4524 = vld [vmem:[#allocation12 + $0x58] sm:$0xff]
    %v4525 = vld [vmem:[#allocation12 + $0x60] sm:$0xff]
    %v4526 = vld [vmem:[#allocation12 + $0x68] sm:$0xff]
    %v4527 = vld [vmem:[#allocation12 + $0x70] sm:$0xff]
    %v4528 = vld [vmem:[#allocation12 + $0x78] sm:$0xff]
    %v4529 = vld [vmem:[#allocation12 + $0x80] sm:$0xff]
    %v4530 = vld [vmem:[#allocation12 + $0x88] sm:$0xff]
    %v4531 = vld [vmem:[#allocation12 + $0x90] sm:$0xff]
    %v4532 = vld [vmem:[#allocation12 + $0x98] sm:$0xff]
    %v4533 = vld [vmem:[#allocation12 + $0xa0] sm:$0xff]
    %v4534 = vld [vmem:[#allocation12 + $0xa8] sm:$0xff]
    %v4535 = vld [vmem:[#allocation12 + $0xb0] sm:$0xff]
    %v4536 = vld [vmem:[#allocation12 + $0xb8] sm:$0xff]
    %v4537 = vld [vmem:[#allocation12 + $0xc0] sm:$0xff]
    %v4538 = vld [vmem:[#allocation12 + $0xc8] sm:$0xff]
    %v4539 = vld [vmem:[#allocation12 + $0xd0] sm:$0xff]
    %v4540 = vld [vmem:[#allocation12 + $0xd8] sm:$0xff]
    %v4541 = vld [vmem:[#allocation12 + $0xe0] sm:$0xff]
    %v4542 = vld [vmem:[#allocation12 + $0xe8] sm:$0xff]
    %v4543 = vld [vmem:[#allocation12 + $0xf0] sm:$0xff]
    %v4544 = vld [vmem:[#allocation12 + $0xf8] sm:$0xff]
    %v4545 = vld [vmem:[#allocation12 + $0x100] sm:$0xff]
    %v4546 = vld [vmem:[#allocation12 + $0x108] sm:$0xff]
    %v4547 = vld [vmem:[#allocation12 + $0x110] sm:$0xff]
    %v4548 = vld [vmem:[#allocation12 + $0x118] sm:$0xff]
    %v4549 = vld [vmem:[#allocation12 + $0x120] sm:$0xff]
    %v4550 = vld [vmem:[#allocation12 + $0x128] sm:$0xff]
    %v4551 = vld [vmem:[#allocation12 + $0x130] sm:$0xff]
    %v4552 = vld [vmem:[#allocation12 + $0x138] sm:$0xff]
    %v4553 = vld [vmem:[#allocation12 + $0x140] sm:$0xff]
    %v4554 = vld [vmem:[#allocation12 + $0x148] sm:$0xff]
    %v4555 = vld [vmem:[#allocation12 + $0x150] sm:$0xff]
    %v4556 = vld [vmem:[#allocation12 + $0x158] sm:$0xff]
    %v4557 = vld [vmem:[#allocation12 + $0x160] sm:$0xff]
    %v4558 = vld [vmem:[#allocation12 + $0x168] sm:$0xff]
    %v4559 = vld [vmem:[#allocation12 + $0x170] sm:$0xff]
    %v4560 = vld [vmem:[#allocation12 + $0x178] sm:$0xff]
    %v4561 = vld [vmem:[#allocation12 + $0x180] sm:$0xff]
    %v4562 = vld [vmem:[#allocation12 + $0x188] sm:$0xff]
    %v4563 = vld [vmem:[#allocation12 + $0x190] sm:$0xff]
    %v4564 = vld [vmem:[#allocation12 + $0x198] sm:$0xff]
    %v4565 = vld [vmem:[#allocation12 + $0x1a0] sm:$0xff]
    %v4566 = vld [vmem:[#allocation12 + $0x1a8] sm:$0xff]
    %v4567 = vld [vmem:[#allocation12 + $0x1b0] sm:$0xff]
    %v4568 = vld [vmem:[#allocation12 + $0x1b8] sm:$0xff]
    %v4569 = vld [vmem:[#allocation12 + $0x1c0] sm:$0xff]
    %v4570 = vld [vmem:[#allocation12 + $0x1c8] sm:$0xff]
    %v4571 = vld [vmem:[#allocation12 + $0x1d0] sm:$0xff]
    %v4572 = vld [vmem:[#allocation12 + $0x1d8] sm:$0xff]
    %v4573 = vld [vmem:[#allocation12 + $0x1e0] sm:$0xff]
    %v4574 = vld [vmem:[#allocation12 + $0x1e8] sm:$0xff]
    %v4575 = vld [vmem:[#allocation12 + $0x1f0] sm:$0xff]
    %v4576 = vld [vmem:[#allocation12 + $0x1f8] sm:$0xff]
    %v4577 = vld [vmem:[#allocation3] sm:$0xff]
    %v4578 = vld [vmem:[#allocation13] sm:$0xff]
    %v4579 = vld [vmem:[#allocation13 + $0x8] sm:$0xff]
    %v4580 = vld [vmem:[#allocation13 + $0x10] sm:$0xff]
    %v4581 = vld [vmem:[#allocation13 + $0x18] sm:$0xff]
    %v4582 = vld [vmem:[#allocation13 + $0x20] sm:$0xff]
    %v4583 = vld [vmem:[#allocation13 + $0x28] sm:$0xff]
    %v4584 = vld [vmem:[#allocation13 + $0x30] sm:$0xff]
    %v4585 = vld [vmem:[#allocation13 + $0x38] sm:$0xff]
    %v4586 = vld [vmem:[#allocation13 + $0x40] sm:$0xff]
    %v4587 = vld [vmem:[#allocation13 + $0x48] sm:$0xff]
    %v4588 = vld [vmem:[#allocation13 + $0x50] sm:$0xff]
    %v4589 = vld [vmem:[#allocation13 + $0x58] sm:$0xff]
    %v4590 = vld [vmem:[#allocation13 + $0x60] sm:$0xff]
    %v4591 = vld [vmem:[#allocation13 + $0x68] sm:$0xff]
    %v4592 = vld [vmem:[#allocation13 + $0x70] sm:$0xff]
    %v4593 = vld [vmem:[#allocation13 + $0x78] sm:$0xff]
    %v4594 = vld [vmem:[#allocation13 + $0x80] sm:$0xff]
    %v4595 = vld [vmem:[#allocation13 + $0x88] sm:$0xff]
    %v4596 = vld [vmem:[#allocation13 + $0x90] sm:$0xff]
    %v4597 = vld [vmem:[#allocation13 + $0x98] sm:$0xff]
    %v4598 = vld [vmem:[#allocation13 + $0xa0] sm:$0xff]
    %v4599 = vld [vmem:[#allocation13 + $0xa8] sm:$0xff]
    %v4600 = vld [vmem:[#allocation13 + $0xb0] sm:$0xff]
    %v4601 = vld [vmem:[#allocation13 + $0xb8] sm:$0xff]
    %v4602 = vld [vmem:[#allocation13 + $0xc0] sm:$0xff]
    %v4603 = vld [vmem:[#allocation13 + $0xc8] sm:$0xff]
    %v4604 = vld [vmem:[#allocation13 + $0xd0] sm:$0xff]
    %v4605 = vld [vmem:[#allocation13 + $0xd8] sm:$0xff]
    %v4606 = vld [vmem:[#allocation13 + $0xe0] sm:$0xff]
    %v4607 = vld [vmem:[#allocation13 + $0xe8] sm:$0xff]
    %v4608 = vld [vmem:[#allocation13 + $0xf0] sm:$0xff]
    %v4609 = vld [vmem:[#allocation13 + $0xf8] sm:$0xff]
    %v4610 = vld [vmem:[#allocation13 + $0x100] sm:$0xff]
    %v4611 = vld [vmem:[#allocation13 + $0x108] sm:$0xff]
    %v4612 = vld [vmem:[#allocation13 + $0x110] sm:$0xff]
    %v4613 = vld [vmem:[#allocation13 + $0x118] sm:$0xff]
    %v4614 = vld [vmem:[#allocation13 + $0x120] sm:$0xff]
    %v4615 = vld [vmem:[#allocation13 + $0x128] sm:$0xff]
    %v4616 = vld [vmem:[#allocation13 + $0x130] sm:$0xff]
    %v4617 = vld [vmem:[#allocation13 + $0x138] sm:$0xff]
    %v4618 = vld [vmem:[#allocation13 + $0x140] sm:$0xff]
    %v4619 = vld [vmem:[#allocation13 + $0x148] sm:$0xff]
    %v4620 = vld [vmem:[#allocation13 + $0x150] sm:$0xff]
    %v4621 = vld [vmem:[#allocation13 + $0x158] sm:$0xff]
    %v4622 = vld [vmem:[#allocation13 + $0x160] sm:$0xff]
    %v4623 = vld [vmem:[#allocation13 + $0x168] sm:$0xff]
    %v4624 = vld [vmem:[#allocation13 + $0x170] sm:$0xff]
    %v4625 = vld [vmem:[#allocation13 + $0x178] sm:$0xff]
    %v4626 = vld [vmem:[#allocation13 + $0x180] sm:$0xff]
    %v4627 = vld [vmem:[#allocation13 + $0x188] sm:$0xff]
    %v4628 = vld [vmem:[#allocation13 + $0x190] sm:$0xff]
    %v4629 = vld [vmem:[#allocation13 + $0x198] sm:$0xff]
    %v4630 = vld [vmem:[#allocation13 + $0x1a0] sm:$0xff]
    %v4631 = vld [vmem:[#allocation13 + $0x1a8] sm:$0xff]
    %v4632 = vld [vmem:[#allocation13 + $0x1b0] sm:$0xff]
    %v4633 = vld [vmem:[#allocation13 + $0x1b8] sm:$0xff]
    %v4634 = vld [vmem:[#allocation13 + $0x1c0] sm:$0xff]
    %v4635 = vld [vmem:[#allocation13 + $0x1c8] sm:$0xff]
    %v4636 = vld [vmem:[#allocation13 + $0x1d0] sm:$0xff]
    %v4637 = vld [vmem:[#allocation13 + $0x1d8] sm:$0xff]
    %v4638 = vld [vmem:[#allocation13 + $0x1e0] sm:$0xff]
    %v4639 = vld [vmem:[#allocation13 + $0x1e8] sm:$0xff]
    %v4640 = vld [vmem:[#allocation13 + $0x1f0] sm:$0xff]
    %v4641 = vld [vmem:[#allocation13 + $0x1f8] sm:$0xff]
    %4642 = vmatprep.subr.mxu0 %v4579
    %4643 = vmatpush1.msra.mxu0 %v4578
    %4644 = vmatprep.subr.mxu0 %v4583
    %4645 = vmatpush1.msra.mxu0 %v4582
    %4646 = vmatprep.subr.mxu0 %v4587
    %4647 = vmatpush1.msra.mxu0 %v4586
    %4648 = vmatprep.subr.mxu0 %v4591
    %4649 = vmatpush1.msra.mxu0 %v4590
    %4650 = vmatprep.subr.mxu0 %v4595
    %4651 = vmatpush1.msra.mxu0 %v4594
    %4652 = vmatprep.subr.mxu0 %v4599
    %4653 = vmatpush1.msra.mxu0 %v4598
    %4654 = vmatprep.subr.mxu0 %v4603
    %4655 = vmatpush1.msra.mxu0 %v4602
    %4656 = vmatprep.subr.mxu0 %v4607
    %4657 = vmatpush1.msra.mxu0 %v4606
    %4658 = vmatprep.subr.mxu0 %v4611
    %4659 = vmatpush1.msra.mxu0 %v4610
    %4660 = vmatprep.subr.mxu0 %v4615
    %4661 = vmatpush1.msra.mxu0 %v4614
    %4662 = vmatprep.subr.mxu0 %v4619
    %4663 = vmatpush1.msra.mxu0 %v4618
    %4664 = vmatprep.subr.mxu0 %v4623
    %4665 = vmatpush1.msra.mxu0 %v4622
    %4666 = vmatprep.subr.mxu0 %v4627
    %4667 = vmatpush1.msra.mxu0 %v4626
    %4668 = vmatprep.subr.mxu0 %v4631
    %4669 = vmatpush1.msra.mxu0 %v4630
    %4670 = vmatprep.subr.mxu0 %v4635
    %4671 = vmatpush1.msra.mxu0 %v4634
    %4672 = vmatprep.subr.mxu0 %v4639
    %4673 = vmatpush1.msra.mxu0 %v4638
    %4674 = vmatprep.subr.mxu0 0.0
    %4675 = vmatpush1.msra.mxu0 0.0
    %4676 = vmatprep.subr.mxu0 0.0
    %4677 = vmatpush1.msra.mxu0 0.0
    %4678 = vmatprep.subr.mxu0 0.0
    %4679 = vmatpush1.msra.mxu0 0.0
    %4680 = vmatprep.subr.mxu0 0.0
    %4681 = vmatpush1.msra.mxu0 0.0
    %4682 = vmatprep.subr.mxu0 0.0
    %4683 = vmatpush1.msra.mxu0 0.0
    %4684 = vmatprep.subr.mxu0 0.0
    %4685 = vmatpush1.msra.mxu0 0.0
    %4686 = vmatprep.subr.mxu0 0.0
    %4687 = vmatpush1.msra.mxu0 0.0
    %4688 = vmatprep.subr.mxu0 0.0
    %4689 = vmatpush1.msra.mxu0 0.0
    %4690 = vmatprep.subr.mxu0 0.0
    %4691 = vmatpush1.msra.mxu0 0.0
    %4692 = vmatprep.subr.mxu0 0.0
    %4693 = vmatpush1.msra.mxu0 0.0
    %4694 = vmatprep.subr.mxu0 0.0
    %4695 = vmatpush1.msra.mxu0 0.0
    %4696 = vmatprep.subr.mxu0 0.0
    %4697 = vmatpush1.msra.mxu0 0.0
    %4698 = vmatprep.subr.mxu0 0.0
    %4699 = vmatpush1.msra.mxu0 0.0
    %4700 = vmatprep.subr.mxu0 0.0
    %4701 = vmatpush1.msra.mxu0 0.0
    %4702 = vmatprep.subr.mxu0 0.0
    %4703 = vmatpush1.msra.mxu0 0.0
    %4704 = vmatprep.subr.mxu0 0.0
    %4705 = vmatpush1.msra.mxu0 0.0
    %4706 = vmatprep.mubr.f32.mxu0 0.0
    %4707 = vmatmul.mubr.f32.gmra.mrb[0].mxu0 %v4577
    %v4708 = vpop.f32.mrb[0].mxu0
    %v4709 = vadd.f32 0.0, %v4708
    %v4710 = vpop.f32.mrb[0].mxu0
    %v4711 = vadd.f32 0.0, %v4710
    %4712 = vdwg.mxu0
    %4713 = vmatprep.subr.mxu0 %v4581
    %4714 = vmatpush1.msra.mxu0 %v4580
    %4715 = vmatprep.subr.mxu0 %v4585
    %4716 = vmatpush1.msra.mxu0 %v4584
    %4717 = vmatprep.subr.mxu0 %v4589
    %4718 = vmatpush1.msra.mxu0 %v4588
    %4719 = vmatprep.subr.mxu0 %v4593
    %4720 = vmatpush1.msra.mxu0 %v4592
    %4721 = vmatprep.subr.mxu0 %v4597
    %4722 = vmatpush1.msra.mxu0 %v4596
    %4723 = vmatprep.subr.mxu0 %v4601
    %4724 = vmatpush1.msra.mxu0 %v4600
    %4725 = vmatprep.subr.mxu0 %v4605
    %4726 = vmatpush1.msra.mxu0 %v4604
    %4727 = vmatprep.subr.mxu0 %v4609
    %4728 = vmatpush1.msra.mxu0 %v4608
    %4729 = vmatprep.subr.mxu0 %v4613
    %4730 = vmatpush1.msra.mxu0 %v4612
    %4731 = vmatprep.subr.mxu0 %v4617
    %4732 = vmatpush1.msra.mxu0 %v4616
    %4733 = vmatprep.subr.mxu0 %v4621
    %4734 = vmatpush1.msra.mxu0 %v4620
    %4735 = vmatprep.subr.mxu0 %v4625
    %4736 = vmatpush1.msra.mxu0 %v4624
    %4737 = vmatprep.subr.mxu0 %v4629
    %4738 = vmatpush1.msra.mxu0 %v4628
    %4739 = vmatprep.subr.mxu0 %v4633
    %4740 = vmatpush1.msra.mxu0 %v4632
    %4741 = vmatprep.subr.mxu0 %v4637
    %4742 = vmatpush1.msra.mxu0 %v4636
    %4743 = vmatprep.subr.mxu0 %v4641
    %4744 = vmatpush1.msra.mxu0 %v4640
    %4745 = vmatprep.subr.mxu0 0.0
    %4746 = vmatpush1.msra.mxu0 0.0
    %4747 = vmatprep.subr.mxu0 0.0
    %4748 = vmatpush1.msra.mxu0 0.0
    %4749 = vmatprep.subr.mxu0 0.0
    %4750 = vmatpush1.msra.mxu0 0.0
    %4751 = vmatprep.subr.mxu0 0.0
    %4752 = vmatpush1.msra.mxu0 0.0
    %4753 = vmatprep.subr.mxu0 0.0
    %4754 = vmatpush1.msra.mxu0 0.0
    %4755 = vmatprep.subr.mxu0 0.0
    %4756 = vmatpush1.msra.mxu0 0.0
    %4757 = vmatprep.subr.mxu0 0.0
    %4758 = vmatpush1.msra.mxu0 0.0
    %4759 = vmatprep.subr.mxu0 0.0
    %4760 = vmatpush1.msra.mxu0 0.0
    %4761 = vmatprep.subr.mxu0 0.0
    %4762 = vmatpush1.msra.mxu0 0.0
    %4763 = vmatprep.subr.mxu0 0.0
    %4764 = vmatpush1.msra.mxu0 0.0
    %4765 = vmatprep.subr.mxu0 0.0
    %4766 = vmatpush1.msra.mxu0 0.0
    %4767 = vmatprep.subr.mxu0 0.0
    %4768 = vmatpush1.msra.mxu0 0.0
    %4769 = vmatprep.subr.mxu0 0.0
    %4770 = vmatpush1.msra.mxu0 0.0
    %4771 = vmatprep.subr.mxu0 0.0
    %4772 = vmatpush1.msra.mxu0 0.0
    %4773 = vmatprep.subr.mxu0 0.0
    %4774 = vmatpush1.msra.mxu0 0.0
    %4775 = vmatprep.subr.mxu0 0.0
    %4776 = vmatpush1.msra.mxu0 0.0
    %4777 = vmatprep.mubr.f32.mxu0 0.0
    %4778 = vmatmul.mubr.f32.gmra.mrb[0].mxu0 %v4577
    %v4779 = vpop.f32.mrb[0].mxu0
    %v4780 = vadd.f32 0.0, %v4779
    %v4781 = vpop.f32.mrb[0].mxu0
    %v4782 = vadd.f32 0.0, %v4781
    %4783 = vdwg.mxu0
    %4784 = vmatprep.subr.mxu0 %v4514
    %4785 = vmatpush1.msra.mxu0 %v4513
    %4786 = vmatprep.subr.mxu0 %v4518
    %4787 = vmatpush1.msra.mxu0 %v4517
    %4788 = vmatprep.subr.mxu0 %v4522
    %4789 = vmatpush1.msra.mxu0 %v4521
    %4790 = vmatprep.subr.mxu0 %v4526
    %4791 = vmatpush1.msra.mxu0 %v4525
    %4792 = vmatprep.subr.mxu0 %v4530
    %4793 = vmatpush1.msra.mxu0 %v4529
    %4794 = vmatprep.subr.mxu0 %v4534
    %4795 = vmatpush1.msra.mxu0 %v4533
    %4796 = vmatprep.subr.mxu0 %v4538
    %4797 = vmatpush1.msra.mxu0 %v4537
    %4798 = vmatprep.subr.mxu0 %v4542
    %4799 = vmatpush1.msra.mxu0 %v4541
    %4800 = vmatprep.subr.mxu0 %v4546
    %4801 = vmatpush1.msra.mxu0 %v4545
    %4802 = vmatprep.subr.mxu0 %v4550
    %4803 = vmatpush1.msra.mxu0 %v4549
    %4804 = vmatprep.subr.mxu0 %v4554
    %4805 = vmatpush1.msra.mxu0 %v4553
    %4806 = vmatprep.subr.mxu0 %v4558
    %4807 = vmatpush1.msra.mxu0 %v4557
    %4808 = vmatprep.subr.mxu0 %v4562
    %4809 = vmatpush1.msra.mxu0 %v4561
    %4810 = vmatprep.subr.mxu0 %v4566
    %4811 = vmatpush1.msra.mxu0 %v4565
    %4812 = vmatprep.subr.mxu0 %v4570
    %4813 = vmatpush1.msra.mxu0 %v4569
    %4814 = vmatprep.subr.mxu0 %v4574
    %4815 = vmatpush1.msra.mxu0 %v4573
    %4816 = vmatprep.subr.mxu0 0.0
    %4817 = vmatpush1.msra.mxu0 0.0
    %4818 = vmatprep.subr.mxu0 0.0
    %4819 = vmatpush1.msra.mxu0 0.0
    %4820 = vmatprep.subr.mxu0 0.0
    %4821 = vmatpush1.msra.mxu0 0.0
    %4822 = vmatprep.subr.mxu0 0.0
    %4823 = vmatpush1.msra.mxu0 0.0
    %4824 = vmatprep.subr.mxu0 0.0
    %4825 = vmatpush1.msra.mxu0 0.0
    %4826 = vmatprep.subr.mxu0 0.0
    %4827 = vmatpush1.msra.mxu0 0.0
    %4828 = vmatprep.subr.mxu0 0.0
    %4829 = vmatpush1.msra.mxu0 0.0
    %4830 = vmatprep.subr.mxu0 0.0
    %4831 = vmatpush1.msra.mxu0 0.0
    %4832 = vmatprep.subr.mxu0 0.0
    %4833 = vmatpush1.msra.mxu0 0.0
    %4834 = vmatprep.subr.mxu0 0.0
    %4835 = vmatpush1.msra.mxu0 0.0
    %4836 = vmatprep.subr.mxu0 0.0
    %4837 = vmatpush1.msra.mxu0 0.0
    %4838 = vmatprep.subr.mxu0 0.0
    %4839 = vmatpush1.msra.mxu0 0.0
    %4840 = vmatprep.subr.mxu0 0.0
    %4841 = vmatpush1.msra.mxu0 0.0
    %4842 = vmatprep.subr.mxu0 0.0
    %4843 = vmatpush1.msra.mxu0 0.0
    %4844 = vmatprep.subr.mxu0 0.0
    %4845 = vmatpush1.msra.mxu0 0.0
    %4846 = vmatprep.subr.mxu0 0.0
    %4847 = vmatpush1.msra.mxu0 0.0
    %4848 = vmatprep.mubr.f32.mxu0 0.0
    %4849 = vmatmul.mubr.f32.gmra.mrb[0].mxu0 %v4510
    %v4850 = vpop.f32.mrb[0].mxu0
    %v4851 = vadd.f32 %v4709, %v4850
    %v4852 = vpop.f32.mrb[0].mxu0
    %v4853 = vadd.f32 %v4711, %v4852
    %4854 = vdwg.mxu0
    %4855 = vmatprep.subr.mxu0 %v4516
    %4856 = vmatpush1.msra.mxu0 %v4515
    %4857 = vmatprep.subr.mxu0 %v4520
    %4858 = vmatpush1.msra.mxu0 %v4519
    %4859 = vmatprep.subr.mxu0 %v4524
    %4860 = vmatpush1.msra.mxu0 %v4523
    %4861 = vmatprep.subr.mxu0 %v4528
    %4862 = vmatpush1.msra.mxu0 %v4527
    %4863 = vmatprep.subr.mxu0 %v4532
    %4864 = vmatpush1.msra.mxu0 %v4531
    %4865 = vmatprep.subr.mxu0 %v4536
    %4866 = vmatpush1.msra.mxu0 %v4535
    %4867 = vmatprep.subr.mxu0 %v4540
    %4868 = vmatpush1.msra.mxu0 %v4539
    %4869 = vmatprep.subr.mxu0 %v4544
    %4870 = vmatpush1.msra.mxu0 %v4543
    %4871 = vmatprep.subr.mxu0 %v4548
    %4872 = vmatpush1.msra.mxu0 %v4547
    %4873 = vmatprep.subr.mxu0 %v4552
    %4874 = vmatpush1.msra.mxu0 %v4551
    %4875 = vmatprep.subr.mxu0 %v4556
    %4876 = vmatpush1.msra.mxu0 %v4555
    %4877 = vmatprep.subr.mxu0 %v4560
    %4878 = vmatpush1.msra.mxu0 %v4559
    %4879 = vmatprep.subr.mxu0 %v4564
    %4880 = vmatpush1.msra.mxu0 %v4563
    %4881 = vmatprep.subr.mxu0 %v4568
    %4882 = vmatpush1.msra.mxu0 %v4567
    %4883 = vmatprep.subr.mxu0 %v4572
    %4884 = vmatpush1.msra.mxu0 %v4571
    %4885 = vmatprep.subr.mxu0 %v4576
    %4886 = vmatpush1.msra.mxu0 %v4575
    %4887 = vmatprep.subr.mxu0 0.0
    %4888 = vmatpush1.msra.mxu0 0.0
    %4889 = vmatprep.subr.mxu0 0.0
    %4890 = vmatpush1.msra.mxu0 0.0
    %4891 = vmatprep.subr.mxu0 0.0
    %4892 = vmatpush1.msra.mxu0 0.0
    %4893 = vmatprep.subr.mxu0 0.0
    %4894 = vmatpush1.msra.mxu0 0.0
    %4895 = vmatprep.subr.mxu0 0.0
    %4896 = vmatpush1.msra.mxu0 0.0
    %4897 = vmatprep.subr.mxu0 0.0
    %4898 = vmatpush1.msra.mxu0 0.0
    %4899 = vmatprep.subr.mxu0 0.0
    %4900 = vmatpush1.msra.mxu0 0.0
    %4901 = vmatprep.subr.mxu0 0.0
    %4902 = vmatpush1.msra.mxu0 0.0
    %4903 = vmatprep.subr.mxu0 0.0
    %4904 = vmatpush1.msra.mxu0 0.0
    %4905 = vmatprep.subr.mxu0 0.0
    %4906 = vmatpush1.msra.mxu0 0.0
    %4907 = vmatprep.subr.mxu0 0.0
    %4908 = vmatpush1.msra.mxu0 0.0
    %4909 = vmatprep.subr.mxu0 0.0
    %4910 = vmatpush1.msra.mxu0 0.0
    %4911 = vmatprep.subr.mxu0 0.0
    %4912 = vmatpush1.msra.mxu0 0.0
    %4913 = vmatprep.subr.mxu0 0.0
    %4914 = vmatpush1.msra.mxu0 0.0
    %4915 = vmatprep.subr.mxu0 0.0
    %4916 = vmatpush1.msra.mxu0 0.0
    %4917 = vmatprep.subr.mxu0 0.0
    %4918 = vmatpush1.msra.mxu0 0.0
    %4919 = vmatprep.mubr.f32.mxu0 0.0
    %4920 = vmatmul.mubr.f32.gmra.mrb[0].mxu0 %v4510
    %v4921 = vpop.f32.mrb[0].mxu0
    %v4922 = vadd.f32 %v4780, %v4921
    %v4923 = vpop.f32.mrb[0].mxu0
    %v4924 = vadd.f32 %v4782, %v4923
    %4925 = vdwg.mxu0
    %v4926 = vld [vmem:[%s8] sm:$0xff]
    %v4927 = vld [vmem:[%s8 + $0x8] sm:$0xff]
    %v4928 = vld [vmem:[%s8 + $0x10] sm:$0xff]
    %v4929 = vld [vmem:[%s8 + $0x18] sm:$0xff]
    %v4930 = vadd.f32 %v4851, %v4926
    %v4931 = vadd.f32 %v4853, %v4927
    %v4932 = vadd.f32 %v4922, %v4928
    %v4933 = vadd.f32 %v4924, %v4929
    %v4934 = vld [vmem:[#allocation4] sm:$0xff]
    %v4935 = vxor.u32 %v4930, 2147483648
    %v4936 = vmul.f32 %v4935, 1.442695
    %v4937 = vpow.pop %v4936
    %v4938 = vadd.f32 %v4937, 1.0
    %v4939 = vrcp.pop %v4938
    %v4940 = vmul.f32 1.0, %v4939
    %v4941 = vxor.u32 %v4931, 2147483648
    %v4942 = vmul.f32 %v4941, 1.442695
    %v4943 = vpow.pop %v4942
    %v4944 = vadd.f32 %v4943, 1.0
    %v4945 = vrcp.pop %v4944
    %v4946 = vmul.f32 1.0, %v4945
    %v4947 = vtanh.pop %v4932
    %v4948 = vxor.u32 %v4933, 2147483648
    %v4949 = vmul.f32 %v4948, 1.442695
    %v4950 = vpow.pop %v4949
    %v4951 = vadd.f32 %v4950, 1.0
    %v4952 = vrcp.pop %v4951
    %v4953 = vmul.f32 1.0, %v4952
    %v4954 = vmul.f32 %v4946, %v4934
    %v4955 = vmul.f32 %v4940, %v4947
    %v4956 = vadd.f32 %v4954, %v4955
    %v4957 = vtanh.pop %v4956
    %v4958 = vmul.f32 %v4953, %v4957
    %4959 = vst [vmem:[#allocation3] sm:$0xff] %v4958
    %4960 = vst [vmem:[#allocation4] sm:$0xff] %v4956
    %v4961 = vld [vmem:[%s9] sm:$0xff]
    %v4962 = vld [vmem:[%s9 + $0x8] sm:$0xff]
    %v4963 = vld [vmem:[%s9 + $0x10] sm:$0xff]
    %v4964 = vld [vmem:[%s9 + $0x18] sm:$0xff]
    %v4965 = vld [vmem:[%s9 + $0x20] sm:$0xff]
    %v4966 = vld [vmem:[%s9 + $0x28] sm:$0xff]
    %v4967 = vld [vmem:[%s9 + $0x30] sm:$0xff]
    %v4968 = vld [vmem:[%s9 + $0x38] sm:$0xff]
    %v4969 = vld [vmem:[%s9 + $0x40] sm:$0xff]
    %v4970 = vld [vmem:[%s9 + $0x48] sm:$0xff]
    %v4971 = vld [vmem:[%s9 + $0x50] sm:$0xff]
    %v4972 = vld [vmem:[%s9 + $0x58] sm:$0xff]
    %v4973 = vld [vmem:[%s9 + $0x60] sm:$0xff]
    %v4974 = vld [vmem:[%s9 + $0x68] sm:$0xff]
    %v4975 = vld [vmem:[%s9 + $0x70] sm:$0xff]
    %v4976 = vld [vmem:[%s9 + $0x78] sm:$0xff]
    %v4977 = vld [vmem:[%s10] sm:$0xff]
    %4978 = vmatprep.subr.mxu0 0.0
    %4979 = vmatpush1.msra.mxu0 %v4961
    %4980 = vmatprep.subr.mxu0 0.0
    %4981 = vmatpush1.msra.mxu0 %v4962
    %4982 = vmatprep.subr.mxu0 0.0
    %4983 = vmatpush1.msra.mxu0 %v4963
    %4984 = vmatprep.subr.mxu0 0.0
    %4985 = vmatpush1.msra.mxu0 %v4964
    %4986 = vmatprep.subr.mxu0 0.0
    %4987 = vmatpush1.msra.mxu0 %v4965
    %4988 = vmatprep.subr.mxu0 0.0
    %4989 = vmatpush1.msra.mxu0 %v4966
    %4990 = vmatprep.subr.mxu0 0.0
    %4991 = vmatpush1.msra.mxu0 %v4967
    %4992 = vmatprep.subr.mxu0 0.0
    %4993 = vmatpush1.msra.mxu0 %v4968
    %4994 = vmatprep.subr.mxu0 0.0
    %4995 = vmatpush1.msra.mxu0 %v4969
    %4996 = vmatprep.subr.mxu0 0.0
    %4997 = vmatpush1.msra.mxu0 %v4970
    %4998 = vmatprep.subr.mxu0 0.0
    %4999 = vmatpush1.msra.mxu0 %v4971
    %5000 = vmatprep.subr.mxu0 0.0
    %5001 = vmatpush1.msra.mxu0 %v4972
    %5002 = vmatprep.subr.mxu0 0.0
    %5003 = vmatpush1.msra.mxu0 %v4973
    %5004 = vmatprep.subr.mxu0 0.0
    %5005 = vmatpush1.msra.mxu0 %v4974
    %5006 = vmatprep.subr.mxu0 0.0
    %5007 = vmatpush1.msra.mxu0 %v4975
    %5008 = vmatprep.subr.mxu0 0.0
    %5009 = vmatpush1.msra.mxu0 %v4976
    %5010 = vmatprep.subr.mxu0 0.0
    %5011 = vmatpush1.msra.mxu0 0.0
    %5012 = vmatprep.subr.mxu0 0.0
    %5013 = vmatpush1.msra.mxu0 0.0
    %5014 = vmatprep.subr.mxu0 0.0
    %5015 = vmatpush1.msra.mxu0 0.0
    %5016 = vmatprep.subr.mxu0 0.0
    %5017 = vmatpush1.msra.mxu0 0.0
    %5018 = vmatprep.subr.mxu0 0.0
    %5019 = vmatpush1.msra.mxu0 0.0
    %5020 = vmatprep.subr.mxu0 0.0
    %5021 = vmatpush1.msra.mxu0 0.0
    %5022 = vmatprep.subr.mxu0 0.0
    %5023 = vmatpush1.msra.mxu0 0.0
    %5024 = vmatprep.subr.mxu0 0.0
    %5025 = vmatpush1.msra.mxu0 0.0
    %5026 = vmatprep.subr.mxu0 0.0
    %5027 = vmatpush1.msra.mxu0 0.0
    %5028 = vmatprep.subr.mxu0 0.0
    %5029 = vmatpush1.msra.mxu0 0.0
    %5030 = vmatprep.subr.mxu0 0.0
    %5031 = vmatpush1.msra.mxu0 0.0
    %5032 = vmatprep.subr.mxu0 0.0
    %5033 = vmatpush1.msra.mxu0 0.0
    %5034 = vmatprep.subr.mxu0 0.0
    %5035 = vmatpush1.msra.mxu0 0.0
    %5036 = vmatprep.subr.mxu0 0.0
    %5037 = vmatpush1.msra.mxu0 0.0
    %5038 = vmatprep.subr.mxu0 0.0
    %5039 = vmatpush1.msra.mxu0 0.0
    %5040 = vmatprep.subr.mxu0 0.0
    %5041 = vmatpush1.msra.mxu0 0.0
    %5042 = vmatprep.mubr.f32.mxu0 0.0
    %5043 = vmatmul.mubr.f32.gmra.mrb[0].mxu0 %v4958
    %v5044 = vpop.f32.mrb[0].mxu0
    %v5045 = vadd.f32 %v4977, %v5044
    %v5046 = vpop.f32.mrb[0].mxu0
    %5047 = vdwg.mxu0
    %s5048 = scalar_lea.vmem %s13, 24
    %5049 = vst [vmem:[%s5048] sm:$0xff] %v5045
    %s5050 = sld [smem:[#allocation6 + $0x3]]
    %p5051 = scmp.eq.s32.totalorder %s5050, 0
    // Predicated region
    $region98: #{chat_model_forward.1} parent=1 // pred_check
      %p5052 = pneg %p5051
    $region99: #{chat_model_forward.1} parent=1 // pred_check_branch
      %5054 = sbr.rel (%p5052) target = $region101
    $region100: #{chat_model_forward.1} parent=1 // pred_region
      %vm5055 = vcmp.lt.s32.totalorder %v2447, 64
      %v5056 = vsel %vm5055, %v5045, -1e+30
      %5057 = vmax.xlane.f32.xlu0 %v5056
      %v5058 = vpop.xlane.xlu0 %5057
      %vm5059 = vcmp.eq.f32.partialorder %v5056, %v5058
      %v5060 = vsel %vm5059, %v2447, 128
      %v5061 = vand.u32 %v5060, 65535
      %v5062 = vshra.s32 %v5060, 16
      %v5063 = vcvt.s32.f32 %v5061
      %v5064 = vcvt.s32.f32 %v5062
      %5065 = vmin.xlane.f32.xlu0 %v5064
      %v5066 = vpop.xlane.xlu0 %5065
      %vm5067 = vcmp.eq.f32.partialorder %v5064, %v5066
      %v5068 = vsel %vm5067, %v5063, inf
      %5069 = vmin.xlane.f32.xlu0 %v5068
      %v5070 = vpop.xlane.xlu0 %5069
      %v5071 = vcvt.f32.s32 %v5070
      %v5072 = vcvt.f32.s32 %v5066
      %v5073 = vshll.u32 %v5072, 16
      %v5074 = vadd.s32 %v5073, %v5071
      %vm5075 = vcmp.eq.s32.totalorder %v2447, %v5074
      %v5076 = vsel %vm5075, 1, 0
      %v5077 = vcvt.s32.f32 %v5076
      %5078 = vst [vmem:[#allocation5] sm:$0xff] %v5077
    $region101: #{chat_model_forward.1} parent=1 // pred_fallthru
      _
    %p5079 = scmp.ne.s32.totalorder %s5050, 0
    // Predicated region
    $region102: #{chat_model_forward.1} parent=1 // pred_check
      %p5080 = pneg %p5079
    $region103: #{chat_model_forward.1} parent=1 // pred_check_branch
      %5082 = sbr.rel (%p5080) target = $region105
    $region104: #{chat_model_forward.1} parent=1 // pred_region
      %s5083 = scalar_lea.vmem %s11, 24
      %v5084 = vld [vmem:[%s5083] sm:$0xff]
      %5085 = vst [vmem:[#allocation5] sm:$0xff] %v5084
    $region105: #{chat_model_forward.1} parent=1 // pred_fallthru
      _
    %v5086 = vld [vmem:[#allocation5] sm:$0xff]
    %v5087 = vld [vmem:[%s5] sm:$0xff]
    %v5088 = vld [vmem:[%s5 + $0x8] sm:$0xff]
    %v5089 = vld [vmem:[%s5 + $0x10] sm:$0xff]
    %v5090 = vld [vmem:[%s5 + $0x18] sm:$0xff]
    %v5091 = vld [vmem:[%s5 + $0x20] sm:$0xff]
    %v5092 = vld [vmem:[%s5 + $0x28] sm:$0xff]
    %v5093 = vld [vmem:[%s5 + $0x30] sm:$0xff]
    %v5094 = vld [vmem:[%s5 + $0x38] sm:$0xff]
    %v5095 = vld [vmem:[%s5 + $0x40] sm:$0xff]
    %v5096 = vld [vmem:[%s5 + $0x48] sm:$0xff]
    %v5097 = vld [vmem:[%s5 + $0x50] sm:$0xff]
    %v5098 = vld [vmem:[%s5 + $0x58] sm:$0xff]
    %v5099 = vld [vmem:[%s5 + $0x60] sm:$0xff]
    %v5100 = vld [vmem:[%s5 + $0x68] sm:$0xff]
    %v5101 = vld [vmem:[%s5 + $0x70] sm:$0xff]
    %v5102 = vld [vmem:[%s5 + $0x78] sm:$0xff]
    %5103 = vmatprep.subr.mxu0 0.0
    %5104 = vmatpush1.msra.mxu0 %v5087
    %5105 = vmatprep.subr.mxu0 0.0
    %5106 = vmatpush1.msra.mxu0 %v5088
    %5107 = vmatprep.subr.mxu0 0.0
    %5108 = vmatpush1.msra.mxu0 %v5089
    %5109 = vmatprep.subr.mxu0 0.0
    %5110 = vmatpush1.msra.mxu0 %v5090
    %5111 = vmatprep.subr.mxu0 0.0
    %5112 = vmatpush1.msra.mxu0 %v5091
    %5113 = vmatprep.subr.mxu0 0.0
    %5114 = vmatpush1.msra.mxu0 %v5092
    %5115 = vmatprep.subr.mxu0 0.0
    %5116 = vmatpush1.msra.mxu0 %v5093
    %5117 = vmatprep.subr.mxu0 0.0
    %5118 = vmatpush1.msra.mxu0 %v5094
    %5119 = vmatprep.subr.mxu0 0.0
    %5120 = vmatpush1.msra.mxu0 %v5095
    %5121 = vmatprep.subr.mxu0 0.0
    %5122 = vmatpush1.msra.mxu0 %v5096
    %5123 = vmatprep.subr.mxu0 0.0
    %5124 = vmatpush1.msra.mxu0 %v5097
    %5125 = vmatprep.subr.mxu0 0.0
    %5126 = vmatpush1.msra.mxu0 %v5098
    %5127 = vmatprep.subr.mxu0 0.0
    %5128 = vmatpush1.msra.mxu0 %v5099
    %5129 = vmatprep.subr.mxu0 0.0
    %5130 = vmatpush1.msra.mxu0 %v5100
    %5131 = vmatprep.subr.mxu0 0.0
    %5132 = vmatpush1.msra.mxu0 %v5101
    %5133 = vmatprep.subr.mxu0 0.0
    %5134 = vmatpush1.msra.mxu0 %v5102
    %5135 = vmatprep.subr.mxu0 0.0
    %5136 = vmatpush1.msra.mxu0 0.0
    %5137 = vmatprep.subr.mxu0 0.0
    %5138 = vmatpush1.msra.mxu0 0.0
    %5139 = vmatprep.subr.mxu0 0.0
    %5140 = vmatpush1.msra.mxu0 0.0
    %5141 = vmatprep.subr.mxu0 0.0
    %5142 = vmatpush1.msra.mxu0 0.0
    %5143 = vmatprep.subr.mxu0 0.0
    %5144 = vmatpush1.msra.mxu0 0.0
    %5145 = vmatprep.subr.mxu0 0.0
    %5146 = vmatpush1.msra.mxu0 0.0
    %5147 = vmatprep.subr.mxu0 0.0
    %5148 = vmatpush1.msra.mxu0 0.0
    %5149 = vmatprep.subr.mxu0 0.0
    %5150 = vmatpush1.msra.mxu0 0.0
    %5151 = vmatprep.subr.mxu0 0.0
    %5152 = vmatpush1.msra.mxu0 0.0
    %5153 = vmatprep.subr.mxu0 0.0
    %5154 = vmatpush1.msra.mxu0 0.0
    %5155 = vmatprep.subr.mxu0 0.0
    %5156 = vmatpush1.msra.mxu0 0.0
    %5157 = vmatprep.subr.mxu0 0.0
    %5158 = vmatpush1.msra.mxu0 0.0
    %5159 = vmatprep.subr.mxu0 0.0
    %5160 = vmatpush1.msra.mxu0 0.0
    %5161 = vmatprep.subr.mxu0 0.0
    %5162 = vmatpush1.msra.mxu0 0.0
    %5163 = vmatprep.subr.mxu0 0.0
    %5164 = vmatpush1.msra.mxu0 0.0
    %5165 = vmatprep.subr.mxu0 0.0
    %5166 = vmatpush1.msra.mxu0 0.0
    %5167 = vmatprep.mubr.f32.mxu0 0.0
    %5168 = vmatmul.mubr.f32.gmra.mrb[0].mxu0 %v5086
    %v5169 = vpop.f32.mrb[0].mxu0
    %v5170 = vadd.f32 0.0, %v5169
    %v5171 = vpop.f32.mrb[0].mxu0
    %5172 = vdwg.mxu0
    %v5173 = vld [vmem:[#allocation12] sm:$0xff]
    %v5174 = vld [vmem:[#allocation12 + $0x8] sm:$0xff]
    %v5175 = vld [vmem:[#allocation12 + $0x10] sm:$0xff]
    %v5176 = vld [vmem:[#allocation12 + $0x18] sm:$0xff]
    %v5177 = vld [vmem:[#allocation12 + $0x20] sm:$0xff]
    %v5178 = vld [vmem:[#allocation12 + $0x28] sm:$0xff]
    %v5179 = vld [vmem:[#allocation12 + $0x30] sm:$0xff]
    %v5180 = vld [vmem:[#allocation12 + $0x38] sm:$0xff]
    %v5181 = vld [vmem:[#allocation12 + $0x40] sm:$0xff]
    %v5182 = vld [vmem:[#allocation12 + $0x48] sm:$0xff]
    %v5183 = vld [vmem:[#allocation12 + $0x50] sm:$0xff]
    %v5184 = vld [vmem:[#allocation12 + $0x58] sm:$0xff]
    %v5185 = vld [vmem:[#allocation12 + $0x60] sm:$0xff]
    %v5186 = vld [vmem:[#allocation12 + $0x68] sm:$0xff]
    %v5187 = vld [vmem:[#allocation12 + $0x70] sm:$0xff]
    %v5188 = vld [vmem:[#allocation12 + $0x78] sm:$0xff]
    %v5189 = vld [vmem:[#allocation12 + $0x80] sm:$0xff]
    %v5190 = vld [vmem:[#allocation12 + $0x88] sm:$0xff]
    %v5191 = vld [vmem:[#allocation12 + $0x90] sm:$0xff]
    %v5192 = vld [vmem:[#allocation12 + $0x98] sm:$0xff]
    %v5193 = vld [vmem:[#allocation12 + $0xa0] sm:$0xff]
    %v5194 = vld [vmem:[#allocation12 + $0xa8] sm:$0xff]
    %v5195 = vld [vmem:[#allocation12 + $0xb0] sm:$0xff]
    %v5196 = vld [vmem:[#allocation12 + $0xb8] sm:$0xff]
    %v5197 = vld [vmem:[#allocation12 + $0xc0] sm:$0xff]
    %v5198 = vld [vmem:[#allocation12 + $0xc8] sm:$0xff]
    %v5199 = vld [vmem:[#allocation12 + $0xd0] sm:$0xff]
    %v5200 = vld [vmem:[#allocation12 + $0xd8] sm:$0xff]
    %v5201 = vld [vmem:[#allocation12 + $0xe0] sm:$0xff]
    %v5202 = vld [vmem:[#allocation12 + $0xe8] sm:$0xff]
    %v5203 = vld [vmem:[#allocation12 + $0xf0] sm:$0xff]
    %v5204 = vld [vmem:[#allocation12 + $0xf8] sm:$0xff]
    %v5205 = vld [vmem:[#allocation12 + $0x100] sm:$0xff]
    %v5206 = vld [vmem:[#allocation12 + $0x108] sm:$0xff]
    %v5207 = vld [vmem:[#allocation12 + $0x110] sm:$0xff]
    %v5208 = vld [vmem:[#allocation12 + $0x118] sm:$0xff]
    %v5209 = vld [vmem:[#allocation12 + $0x120] sm:$0xff]
    %v5210 = vld [vmem:[#allocation12 + $0x128] sm:$0xff]
    %v5211 = vld [vmem:[#allocation12 + $0x130] sm:$0xff]
    %v5212 = vld [vmem:[#allocation12 + $0x138] sm:$0xff]
    %v5213 = vld [vmem:[#allocation12 + $0x140] sm:$0xff]
    %v5214 = vld [vmem:[#allocation12 + $0x148] sm:$0xff]
    %v5215 = vld [vmem:[#allocation12 + $0x150] sm:$0xff]
    %v5216 = vld [vmem:[#allocation12 + $0x158] sm:$0xff]
    %v5217 = vld [vmem:[#allocation12 + $0x160] sm:$0xff]
    %v5218 = vld [vmem:[#allocation12 + $0x168] sm:$0xff]
    %v5219 = vld [vmem:[#allocation12 + $0x170] sm:$0xff]
    %v5220 = vld [vmem:[#allocation12 + $0x178] sm:$0xff]
    %v5221 = vld [vmem:[#allocation12 + $0x180] sm:$0xff]
    %v5222 = vld [vmem:[#allocation12 + $0x188] sm:$0xff]
    %v5223 = vld [vmem:[#allocation12 + $0x190] sm:$0xff]
    %v5224 = vld [vmem:[#allocation12 + $0x198] sm:$0xff]
    %v5225 = vld [vmem:[#allocation12 + $0x1a0] sm:$0xff]
    %v5226 = vld [vmem:[#allocation12 + $0x1a8] sm:$0xff]
    %v5227 = vld [vmem:[#allocation12 + $0x1b0] sm:$0xff]
    %v5228 = vld [vmem:[#allocation12 + $0x1b8] sm:$0xff]
    %v5229 = vld [vmem:[#allocation12 + $0x1c0] sm:$0xff]
    %v5230 = vld [vmem:[#allocation12 + $0x1c8] sm:$0xff]
    %v5231 = vld [vmem:[#allocation12 + $0x1d0] sm:$0xff]
    %v5232 = vld [vmem:[#allocation12 + $0x1d8] sm:$0xff]
    %v5233 = vld [vmem:[#allocation12 + $0x1e0] sm:$0xff]
    %v5234 = vld [vmem:[#allocation12 + $0x1e8] sm:$0xff]
    %v5235 = vld [vmem:[#allocation12 + $0x1f0] sm:$0xff]
    %v5236 = vld [vmem:[#allocation12 + $0x1f8] sm:$0xff]
    %v5237 = vld [vmem:[#allocation3] sm:$0xff]
    %v5238 = vld [vmem:[#allocation13] sm:$0xff]
    %v5239 = vld [vmem:[#allocation13 + $0x8] sm:$0xff]
    %v5240 = vld [vmem:[#allocation13 + $0x10] sm:$0xff]
    %v5241 = vld [vmem:[#allocation13 + $0x18] sm:$0xff]
    %v5242 = vld [vmem:[#allocation13 + $0x20] sm:$0xff]
    %v5243 = vld [vmem:[#allocation13 + $0x28] sm:$0xff]
    %v5244 = vld [vmem:[#allocation13 + $0x30] sm:$0xff]
    %v5245 = vld [vmem:[#allocation13 + $0x38] sm:$0xff]
    %v5246 = vld [vmem:[#allocation13 + $0x40] sm:$0xff]
    %v5247 = vld [vmem:[#allocation13 + $0x48] sm:$0xff]
    %v5248 = vld [vmem:[#allocation13 + $0x50] sm:$0xff]
    %v5249 = vld [vmem:[#allocation13 + $0x58] sm:$0xff]
    %v5250 = vld [vmem:[#allocation13 + $0x60] sm:$0xff]
    %v5251 = vld [vmem:[#allocation13 + $0x68] sm:$0xff]
    %v5252 = vld [vmem:[#allocation13 + $0x70] sm:$0xff]
    %v5253 = vld [vmem:[#allocation13 + $0x78] sm:$0xff]
    %v5254 = vld [vmem:[#allocation13 + $0x80] sm:$0xff]
    %v5255 = vld [vmem:[#allocation13 + $0x88] sm:$0xff]
    %v5256 = vld [vmem:[#allocation13 + $0x90] sm:$0xff]
    %v5257 = vld [vmem:[#allocation13 + $0x98] sm:$0xff]
    %v5258 = vld [vmem:[#allocation13 + $0xa0] sm:$0xff]
    %v5259 = vld [vmem:[#allocation13 + $0xa8] sm:$0xff]
    %v5260 = vld [vmem:[#allocation13 + $0xb0] sm:$0xff]
    %v5261 = vld [vmem:[#allocation13 + $0xb8] sm:$0xff]
    %v5262 = vld [vmem:[#allocation13 + $0xc0] sm:$0xff]
    %v5263 = vld [vmem:[#allocation13 + $0xc8] sm:$0xff]
    %v5264 = vld [vmem:[#allocation13 + $0xd0] sm:$0xff]
    %v5265 = vld [vmem:[#allocation13 + $0xd8] sm:$0xff]
    %v5266 = vld [vmem:[#allocation13 + $0xe0] sm:$0xff]
    %v5267 = vld [vmem:[#allocation13 + $0xe8] sm:$0xff]
    %v5268 = vld [vmem:[#allocation13 + $0xf0] sm:$0xff]
    %v5269 = vld [vmem:[#allocation13 + $0xf8] sm:$0xff]
    %v5270 = vld [vmem:[#allocation13 + $0x100] sm:$0xff]
    %v5271 = vld [vmem:[#allocation13 + $0x108] sm:$0xff]
    %v5272 = vld [vmem:[#allocation13 + $0x110] sm:$0xff]
    %v5273 = vld [vmem:[#allocation13 + $0x118] sm:$0xff]
    %v5274 = vld [vmem:[#allocation13 + $0x120] sm:$0xff]
    %v5275 = vld [vmem:[#allocation13 + $0x128] sm:$0xff]
    %v5276 = vld [vmem:[#allocation13 + $0x130] sm:$0xff]
    %v5277 = vld [vmem:[#allocation13 + $0x138] sm:$0xff]
    %v5278 = vld [vmem:[#allocation13 + $0x140] sm:$0xff]
    %v5279 = vld [vmem:[#allocation13 + $0x148] sm:$0xff]
    %v5280 = vld [vmem:[#allocation13 + $0x150] sm:$0xff]
    %v5281 = vld [vmem:[#allocation13 + $0x158] sm:$0xff]
    %v5282 = vld [vmem:[#allocation13 + $0x160] sm:$0xff]
    %v5283 = vld [vmem:[#allocation13 + $0x168] sm:$0xff]
    %v5284 = vld [vmem:[#allocation13 + $0x170] sm:$0xff]
    %v5285 = vld [vmem:[#allocation13 + $0x178] sm:$0xff]
    %v5286 = vld [vmem:[#allocation13 + $0x180] sm:$0xff]
    %v5287 = vld [vmem:[#allocation13 + $0x188] sm:$0xff]
    %v5288 = vld [vmem:[#allocation13 + $0x190] sm:$0xff]
    %v5289 = vld [vmem:[#allocation13 + $0x198] sm:$0xff]
    %v5290 = vld [vmem:[#allocation13 + $0x1a0] sm:$0xff]
    %v5291 = vld [vmem:[#allocation13 + $0x1a8] sm:$0xff]
    %v5292 = vld [vmem:[#allocation13 + $0x1b0] sm:$0xff]
    %v5293 = vld [vmem:[#allocation13 + $0x1b8] sm:$0xff]
    %v5294 = vld [vmem:[#allocation13 + $0x1c0] sm:$0xff]
    %v5295 = vld [vmem:[#allocation13 + $0x1c8] sm:$0xff]
    %v5296 = vld [vmem:[#allocation13 + $0x1d0] sm:$0xff]
    %v5297 = vld [vmem:[#allocation13 + $0x1d8] sm:$0xff]
    %v5298 = vld [vmem:[#allocation13 + $0x1e0] sm:$0xff]
    %v5299 = vld [vmem:[#allocation13 + $0x1e8] sm:$0xff]
    %v5300 = vld [vmem:[#allocation13 + $0x1f0] sm:$0xff]
    %v5301 = vld [vmem:[#allocation13 + $0x1f8] sm:$0xff]
    %5302 = vmatprep.subr.mxu0 %v5239
    %5303 = vmatpush1.msra.mxu0 %v5238
    %5304 = vmatprep.subr.mxu0 %v5243
    %5305 = vmatpush1.msra.mxu0 %v5242
    %5306 = vmatprep.subr.mxu0 %v5247
    %5307 = vmatpush1.msra.mxu0 %v5246
    %5308 = vmatprep.subr.mxu0 %v5251
    %5309 = vmatpush1.msra.mxu0 %v5250
    %5310 = vmatprep.subr.mxu0 %v5255
    %5311 = vmatpush1.msra.mxu0 %v5254
    %5312 = vmatprep.subr.mxu0 %v5259
    %5313 = vmatpush1.msra.mxu0 %v5258
    %5314 = vmatprep.subr.mxu0 %v5263
    %5315 = vmatpush1.msra.mxu0 %v5262
    %5316 = vmatprep.subr.mxu0 %v5267
    %5317 = vmatpush1.msra.mxu0 %v5266
    %5318 = vmatprep.subr.mxu0 %v5271
    %5319 = vmatpush1.msra.mxu0 %v5270
    %5320 = vmatprep.subr.mxu0 %v5275
    %5321 = vmatpush1.msra.mxu0 %v5274
    %5322 = vmatprep.subr.mxu0 %v5279
    %5323 = vmatpush1.msra.mxu0 %v5278
    %5324 = vmatprep.subr.mxu0 %v5283
    %5325 = vmatpush1.msra.mxu0 %v5282
    %5326 = vmatprep.subr.mxu0 %v5287
    %5327 = vmatpush1.msra.mxu0 %v5286
    %5328 = vmatprep.subr.mxu0 %v5291
    %5329 = vmatpush1.msra.mxu0 %v5290
    %5330 = vmatprep.subr.mxu0 %v5295
    %5331 = vmatpush1.msra.mxu0 %v5294
    %5332 = vmatprep.subr.mxu0 %v5299
    %5333 = vmatpush1.msra.mxu0 %v5298
    %5334 = vmatprep.subr.mxu0 0.0
    %5335 = vmatpush1.msra.mxu0 0.0
    %5336 = vmatprep.subr.mxu0 0.0
    %5337 = vmatpush1.msra.mxu0 0.0
    %5338 = vmatprep.subr.mxu0 0.0
    %5339 = vmatpush1.msra.mxu0 0.0
    %5340 = vmatprep.subr.mxu0 0.0
    %5341 = vmatpush1.msra.mxu0 0.0
    %5342 = vmatprep.subr.mxu0 0.0
    %5343 = vmatpush1.msra.mxu0 0.0
    %5344 = vmatprep.subr.mxu0 0.0
    %5345 = vmatpush1.msra.mxu0 0.0
    %5346 = vmatprep.subr.mxu0 0.0
    %5347 = vmatpush1.msra.mxu0 0.0
    %5348 = vmatprep.subr.mxu0 0.0
    %5349 = vmatpush1.msra.mxu0 0.0
    %5350 = vmatprep.subr.mxu0 0.0
    %5351 = vmatpush1.msra.mxu0 0.0
    %5352 = vmatprep.subr.mxu0 0.0
    %5353 = vmatpush1.msra.mxu0 0.0
    %5354 = vmatprep.subr.mxu0 0.0
    %5355 = vmatpush1.msra.mxu0 0.0
    %5356 = vmatprep.subr.mxu0 0.0
    %5357 = vmatpush1.msra.mxu0 0.0
    %5358 = vmatprep.subr.mxu0 0.0
    %5359 = vmatpush1.msra.mxu0 0.0
    %5360 = vmatprep.subr.mxu0 0.0
    %5361 = vmatpush1.msra.mxu0 0.0
    %5362 = vmatprep.subr.mxu0 0.0
    %5363 = vmatpush1.msra.mxu0 0.0
    %5364 = vmatprep.subr.mxu0 0.0
    %5365 = vmatpush1.msra.mxu0 0.0
    %5366 = vmatprep.mubr.f32.mxu0 0.0
    %5367 = vmatmul.mubr.f32.gmra.mrb[0].mxu0 %v5237
    %v5368 = vpop.f32.mrb[0].mxu0
    %v5369 = vadd.f32 0.0, %v5368
    %v5370 = vpop.f32.mrb[0].mxu0
    %v5371 = vadd.f32 0.0, %v5370
    %5372 = vdwg.mxu0
    %5373 = vmatprep.subr.mxu0 %v5241
    %5374 = vmatpush1.msra.mxu0 %v5240
    %5375 = vmatprep.subr.mxu0 %v5245
    %5376 = vmatpush1.msra.mxu0 %v5244
    %5377 = vmatprep.subr.mxu0 %v5249
    %5378 = vmatpush1.msra.mxu0 %v5248
    %5379 = vmatprep.subr.mxu0 %v5253
    %5380 = vmatpush1.msra.mxu0 %v5252
    %5381 = vmatprep.subr.mxu0 %v5257
    %5382 = vmatpush1.msra.mxu0 %v5256
    %5383 = vmatprep.subr.mxu0 %v5261
    %5384 = vmatpush1.msra.mxu0 %v5260
    %5385 = vmatprep.subr.mxu0 %v5265
    %5386 = vmatpush1.msra.mxu0 %v5264
    %5387 = vmatprep.subr.mxu0 %v5269
    %5388 = vmatpush1.msra.mxu0 %v5268
    %5389 = vmatprep.subr.mxu0 %v5273
    %5390 = vmatpush1.msra.mxu0 %v5272
    %5391 = vmatprep.subr.mxu0 %v5277
    %5392 = vmatpush1.msra.mxu0 %v5276
    %5393 = vmatprep.subr.mxu0 %v5281
    %5394 = vmatpush1.msra.mxu0 %v5280
    %5395 = vmatprep.subr.mxu0 %v5285
    %5396 = vmatpush1.msra.mxu0 %v5284
    %5397 = vmatprep.subr.mxu0 %v5289
    %5398 = vmatpush1.msra.mxu0 %v5288
    %5399 = vmatprep.subr.mxu0 %v5293
    %5400 = vmatpush1.msra.mxu0 %v5292
    %5401 = vmatprep.subr.mxu0 %v5297
    %5402 = vmatpush1.msra.mxu0 %v5296
    %5403 = vmatprep.subr.mxu0 %v5301
    %5404 = vmatpush1.msra.mxu0 %v5300
    %5405 = vmatprep.subr.mxu0 0.0
    %5406 = vmatpush1.msra.mxu0 0.0
    %5407 = vmatprep.subr.mxu0 0.0
    %5408 = vmatpush1.msra.mxu0 0.0
    %5409 = vmatprep.subr.mxu0 0.0
    %5410 = vmatpush1.msra.mxu0 0.0
    %5411 = vmatprep.subr.mxu0 0.0
    %5412 = vmatpush1.msra.mxu0 0.0
    %5413 = vmatprep.subr.mxu0 0.0
    %5414 = vmatpush1.msra.mxu0 0.0
    %5415 = vmatprep.subr.mxu0 0.0
    %5416 = vmatpush1.msra.mxu0 0.0
    %5417 = vmatprep.subr.mxu0 0.0
    %5418 = vmatpush1.msra.mxu0 0.0
    %5419 = vmatprep.subr.mxu0 0.0
    %5420 = vmatpush1.msra.mxu0 0.0
    %5421 = vmatprep.subr.mxu0 0.0
    %5422 = vmatpush1.msra.mxu0 0.0
    %5423 = vmatprep.subr.mxu0 0.0
    %5424 = vmatpush1.msra.mxu0 0.0
    %5425 = vmatprep.subr.mxu0 0.0
    %5426 = vmatpush1.msra.mxu0 0.0
    %5427 = vmatprep.subr.mxu0 0.0
    %5428 = vmatpush1.msra.mxu0 0.0
    %5429 = vmatprep.subr.mxu0 0.0
    %5430 = vmatpush1.msra.mxu0 0.0
    %5431 = vmatprep.subr.mxu0 0.0
    %5432 = vmatpush1.msra.mxu0 0.0
    %5433 = vmatprep.subr.mxu0 0.0
    %5434 = vmatpush1.msra.mxu0 0.0
    %5435 = vmatprep.subr.mxu0 0.0
    %5436 = vmatpush1.msra.mxu0 0.0
    %5437 = vmatprep.mubr.f32.mxu0 0.0
    %5438 = vmatmul.mubr.f32.gmra.mrb[0].mxu0 %v5237
    %v5439 = vpop.f32.mrb[0].mxu0
    %v5440 = vadd.f32 0.0, %v5439
    %v5441 = vpop.f32.mrb[0].mxu0
    %v5442 = vadd.f32 0.0, %v5441
    %5443 = vdwg.mxu0
    %5444 = vmatprep.subr.mxu0 %v5174
    %5445 = vmatpush1.msra.mxu0 %v5173
    %5446 = vmatprep.subr.mxu0 %v5178
    %5447 = vmatpush1.msra.mxu0 %v5177
    %5448 = vmatprep.subr.mxu0 %v5182
    %5449 = vmatpush1.msra.mxu0 %v5181
    %5450 = vmatprep.subr.mxu0 %v5186
    %5451 = vmatpush1.msra.mxu0 %v5185
    %5452 = vmatprep.subr.mxu0 %v5190
    %5453 = vmatpush1.msra.mxu0 %v5189
    %5454 = vmatprep.subr.mxu0 %v5194
    %5455 = vmatpush1.msra.mxu0 %v5193
    %5456 = vmatprep.subr.mxu0 %v5198
    %5457 = vmatpush1.msra.mxu0 %v5197
    %5458 = vmatprep.subr.mxu0 %v5202
    %5459 = vmatpush1.msra.mxu0 %v5201
    %5460 = vmatprep.subr.mxu0 %v5206
    %5461 = vmatpush1.msra.mxu0 %v5205
    %5462 = vmatprep.subr.mxu0 %v5210
    %5463 = vmatpush1.msra.mxu0 %v5209
    %5464 = vmatprep.subr.mxu0 %v5214
    %5465 = vmatpush1.msra.mxu0 %v5213
    %5466 = vmatprep.subr.mxu0 %v5218
    %5467 = vmatpush1.msra.mxu0 %v5217
    %5468 = vmatprep.subr.mxu0 %v5222
    %5469 = vmatpush1.msra.mxu0 %v5221
    %5470 = vmatprep.subr.mxu0 %v5226
    %5471 = vmatpush1.msra.mxu0 %v5225
    %5472 = vmatprep.subr.mxu0 %v5230
    %5473 = vmatpush1.msra.mxu0 %v5229
    %5474 = vmatprep.subr.mxu0 %v5234
    %5475 = vmatpush1.msra.mxu0 %v5233
    %5476 = vmatprep.subr.mxu0 0.0
    %5477 = vmatpush1.msra.mxu0 0.0
    %5478 = vmatprep.subr.mxu0 0.0
    %5479 = vmatpush1.msra.mxu0 0.0
    %5480 = vmatprep.subr.mxu0 0.0
    %5481 = vmatpush1.msra.mxu0 0.0
    %5482 = vmatprep.subr.mxu0 0.0
    %5483 = vmatpush1.msra.mxu0 0.0
    %5484 = vmatprep.subr.mxu0 0.0
    %5485 = vmatpush1.msra.mxu0 0.0
    %5486 = vmatprep.subr.mxu0 0.0
    %5487 = vmatpush1.msra.mxu0 0.0
    %5488 = vmatprep.subr.mxu0 0.0
    %5489 = vmatpush1.msra.mxu0 0.0
    %5490 = vmatprep.subr.mxu0 0.0
    %5491 = vmatpush1.msra.mxu0 0.0
    %5492 = vmatprep.subr.mxu0 0.0
    %5493 = vmatpush1.msra.mxu0 0.0
    %5494 = vmatprep.subr.mxu0 0.0
    %5495 = vmatpush1.msra.mxu0 0.0
    %5496 = vmatprep.subr.mxu0 0.0
    %5497 = vmatpush1.msra.mxu0 0.0
    %5498 = vmatprep.subr.mxu0 0.0
    %5499 = vmatpush1.msra.mxu0 0.0
    %5500 = vmatprep.subr.mxu0 0.0
    %5501 = vmatpush1.msra.mxu0 0.0
    %5502 = vmatprep.subr.mxu0 0.0
    %5503 = vmatpush1.msra.mxu0 0.0
    %5504 = vmatprep.subr.mxu0 0.0
    %5505 = vmatpush1.msra.mxu0 0.0
    %5506 = vmatprep.subr.mxu0 0.0
    %5507 = vmatpush1.msra.mxu0 0.0
    %5508 = vmatprep.mubr.f32.mxu0 0.0
    %5509 = vmatmul.mubr.f32.gmra.mrb[0].mxu0 %v5170
    %v5510 = vpop.f32.mrb[0].mxu0
    %v5511 = vadd.f32 %v5369, %v5510
    %v5512 = vpop.f32.mrb[0].mxu0
    %v5513 = vadd.f32 %v5371, %v5512
    %5514 = vdwg.mxu0
    %5515 = vmatprep.subr.mxu0 %v5176
    %5516 = vmatpush1.msra.mxu0 %v5175
    %5517 = vmatprep.subr.mxu0 %v5180
    %5518 = vmatpush1.msra.mxu0 %v5179
    %5519 = vmatprep.subr.mxu0 %v5184
    %5520 = vmatpush1.msra.mxu0 %v5183
    %5521 = vmatprep.subr.mxu0 %v5188
    %5522 = vmatpush1.msra.mxu0 %v5187
    %5523 = vmatprep.subr.mxu0 %v5192
    %5524 = vmatpush1.msra.mxu0 %v5191
    %5525 = vmatprep.subr.mxu0 %v5196
    %5526 = vmatpush1.msra.mxu0 %v5195
    %5527 = vmatprep.subr.mxu0 %v5200
    %5528 = vmatpush1.msra.mxu0 %v5199
    %5529 = vmatprep.subr.mxu0 %v5204
    %5530 = vmatpush1.msra.mxu0 %v5203
    %5531 = vmatprep.subr.mxu0 %v5208
    %5532 = vmatpush1.msra.mxu0 %v5207
    %5533 = vmatprep.subr.mxu0 %v5212
    %5534 = vmatpush1.msra.mxu0 %v5211
    %5535 = vmatprep.subr.mxu0 %v5216
    %5536 = vmatpush1.msra.mxu0 %v5215
    %5537 = vmatprep.subr.mxu0 %v5220
    %5538 = vmatpush1.msra.mxu0 %v5219
    %5539 = vmatprep.subr.mxu0 %v5224
    %5540 = vmatpush1.msra.mxu0 %v5223
    %5541 = vmatprep.subr.mxu0 %v5228
    %5542 = vmatpush1.msra.mxu0 %v5227
    %5543 = vmatprep.subr.mxu0 %v5232
    %5544 = vmatpush1.msra.mxu0 %v5231
    %5545 = vmatprep.subr.mxu0 %v5236
    %5546 = vmatpush1.msra.mxu0 %v5235
    %5547 = vmatprep.subr.mxu0 0.0
    %5548 = vmatpush1.msra.mxu0 0.0
    %5549 = vmatprep.subr.mxu0 0.0
    %5550 = vmatpush1.msra.mxu0 0.0
    %5551 = vmatprep.subr.mxu0 0.0
    %5552 = vmatpush1.msra.mxu0 0.0
    %5553 = vmatprep.subr.mxu0 0.0
    %5554 = vmatpush1.msra.mxu0 0.0
    %5555 = vmatprep.subr.mxu0 0.0
    %5556 = vmatpush1.msra.mxu0 0.0
    %5557 = vmatprep.subr.mxu0 0.0
    %5558 = vmatpush1.msra.mxu0 0.0
    %5559 = vmatprep.subr.mxu0 0.0
    %5560 = vmatpush1.msra.mxu0 0.0
    %5561 = vmatprep.subr.mxu0 0.0
    %5562 = vmatpush1.msra.mxu0 0.0
    %5563 = vmatprep.subr.mxu0 0.0
    %5564 = vmatpush1.msra.mxu0 0.0
    %5565 = vmatprep.subr.mxu0 0.0
    %5566 = vmatpush1.msra.mxu0 0.0
    %5567 = vmatprep.subr.mxu0 0.0
    %5568 = vmatpush1.msra.mxu0 0.0
    %5569 = vmatprep.subr.mxu0 0.0
    %5570 = vmatpush1.msra.mxu0 0.0
    %5571 = vmatprep.subr.mxu0 0.0
    %5572 = vmatpush1.msra.mxu0 0.0
    %5573 = vmatprep.subr.mxu0 0.0
    %5574 = vmatpush1.msra.mxu0 0.0
    %5575 = vmatprep.subr.mxu0 0.0
    %5576 = vmatpush1.msra.mxu0 0.0
    %5577 = vmatprep.subr.mxu0 0.0
    %5578 = vmatpush1.msra.mxu0 0.0
    %5579 = vmatprep.mubr.f32.mxu0 0.0
    %5580 = vmatmul.mubr.f32.gmra.mrb[0].mxu0 %v5170
    %v5581 = vpop.f32.mrb[0].mxu0
    %v5582 = vadd.f32 %v5440, %v5581
    %v5583 = vpop.f32.mrb[0].mxu0
    %v5584 = vadd.f32 %v5442, %v5583
    %5585 = vdwg.mxu0
    %v5586 = vld [vmem:[%s8] sm:$0xff]
    %v5587 = vld [vmem:[%s8 + $0x8] sm:$0xff]
    %v5588 = vld [vmem:[%s8 + $0x10] sm:$0xff]
    %v5589 = vld [vmem:[%s8 + $0x18] sm:$0xff]
    %v5590 = vadd.f32 %v5511, %v5586
    %v5591 = vadd.f32 %v5513, %v5587
    %v5592 = vadd.f32 %v5582, %v5588
    %v5593 = vadd.f32 %v5584, %v5589
    %v5594 = vld [vmem:[#allocation4] sm:$0xff]
    %v5595 = vxor.u32 %v5590, 2147483648
    %v5596 = vmul.f32 %v5595, 1.442695
    %v5597 = vpow.pop %v5596
    %v5598 = vadd.f32 %v5597, 1.0
    %v5599 = vrcp.pop %v5598
    %v5600 = vmul.f32 1.0, %v5599
    %v5601 = vxor.u32 %v5591, 2147483648
    %v5602 = vmul.f32 %v5601, 1.442695
    %v5603 = vpow.pop %v5602
    %v5604 = vadd.f32 %v5603, 1.0
    %v5605 = vrcp.pop %v5604
    %v5606 = vmul.f32 1.0, %v5605
    %v5607 = vtanh.pop %v5592
    %v5608 = vxor.u32 %v5593, 2147483648
    %v5609 = vmul.f32 %v5608, 1.442695
    %v5610 = vpow.pop %v5609
    %v5611 = vadd.f32 %v5610, 1.0
    %v5612 = vrcp.pop %v5611
    %v5613 = vmul.f32 1.0, %v5612
    %v5614 = vmul.f32 %v5606, %v5594
    %v5615 = vmul.f32 %v5600, %v5607
    %v5616 = vadd.f32 %v5614, %v5615
    %v5617 = vtanh.pop %v5616
    %v5618 = vmul.f32 %v5613, %v5617
    %5619 = vst [vmem:[#allocation3] sm:$0xff] %v5618
    %5620 = vst [vmem:[#allocation4] sm:$0xff] %v5616
    %v5621 = vld [vmem:[%s9] sm:$0xff]
    %v5622 = vld [vmem:[%s9 + $0x8] sm:$0xff]
    %v5623 = vld [vmem:[%s9 + $0x10] sm:$0xff]
    %v5624 = vld [vmem:[%s9 + $0x18] sm:$0xff]
    %v5625 = vld [vmem:[%s9 + $0x20] sm:$0xff]
    %v5626 = vld [vmem:[%s9 + $0x28] sm:$0xff]
    %v5627 = vld [vmem:[%s9 + $0x30] sm:$0xff]
    %v5628 = vld [vmem:[%s9 + $0x38] sm:$0xff]
    %v5629 = vld [vmem:[%s9 + $0x40] sm:$0xff]
    %v5630 = vld [vmem:[%s9 + $0x48] sm:$0xff]
    %v5631 = vld [vmem:[%s9 + $0x50] sm:$0xff]
    %v5632 = vld [vmem:[%s9 + $0x58] sm:$0xff]
    %v5633 = vld [vmem:[%s9 + $0x60] sm:$0xff]
    %v5634 = vld [vmem:[%s9 + $0x68] sm:$0xff]
    %v5635 = vld [vmem:[%s9 + $0x70] sm:$0xff]
    %v5636 = vld [vmem:[%s9 + $0x78] sm:$0xff]
    %v5637 = vld [vmem:[%s10] sm:$0xff]
    %5638 = vmatprep.subr.mxu0 0.0
    %5639 = vmatpush1.msra.mxu0 %v5621
    %5640 = vmatprep.subr.mxu0 0.0
    %5641 = vmatpush1.msra.mxu0 %v5622
    %5642 = vmatprep.subr.mxu0 0.0
    %5643 = vmatpush1.msra.mxu0 %v5623
    %5644 = vmatprep.subr.mxu0 0.0
    %5645 = vmatpush1.msra.mxu0 %v5624
    %5646 = vmatprep.subr.mxu0 0.0
    %5647 = vmatpush1.msra.mxu0 %v5625
    %5648 = vmatprep.subr.mxu0 0.0
    %5649 = vmatpush1.msra.mxu0 %v5626
    %5650 = vmatprep.subr.mxu0 0.0
    %5651 = vmatpush1.msra.mxu0 %v5627
    %5652 = vmatprep.subr.mxu0 0.0
    %5653 = vmatpush1.msra.mxu0 %v5628
    %5654 = vmatprep.subr.mxu0 0.0
    %5655 = vmatpush1.msra.mxu0 %v5629
    %5656 = vmatprep.subr.mxu0 0.0
    %5657 = vmatpush1.msra.mxu0 %v5630
    %5658 = vmatprep.subr.mxu0 0.0
    %5659 = vmatpush1.msra.mxu0 %v5631
    %5660 = vmatprep.subr.mxu0 0.0
    %5661 = vmatpush1.msra.mxu0 %v5632
    %5662 = vmatprep.subr.mxu0 0.0
    %5663 = vmatpush1.msra.mxu0 %v5633
    %5664 = vmatprep.subr.mxu0 0.0
    %5665 = vmatpush1.msra.mxu0 %v5634
    %5666 = vmatprep.subr.mxu0 0.0
    %5667 = vmatpush1.msra.mxu0 %v5635
    %5668 = vmatprep.subr.mxu0 0.0
    %5669 = vmatpush1.msra.mxu0 %v5636
    %5670 = vmatprep.subr.mxu0 0.0
    %5671 = vmatpush1.msra.mxu0 0.0
    %5672 = vmatprep.subr.mxu0 0.0
    %5673 = vmatpush1.msra.mxu0 0.0
    %5674 = vmatprep.subr.mxu0 0.0
    %5675 = vmatpush1.msra.mxu0 0.0
    %5676 = vmatprep.subr.mxu0 0.0
    %5677 = vmatpush1.msra.mxu0 0.0
    %5678 = vmatprep.subr.mxu0 0.0
    %5679 = vmatpush1.msra.mxu0 0.0
    %5680 = vmatprep.subr.mxu0 0.0
    %5681 = vmatpush1.msra.mxu0 0.0
    %5682 = vmatprep.subr.mxu0 0.0
    %5683 = vmatpush1.msra.mxu0 0.0
    %5684 = vmatprep.subr.mxu0 0.0
    %5685 = vmatpush1.msra.mxu0 0.0
    %5686 = vmatprep.subr.mxu0 0.0
    %5687 = vmatpush1.msra.mxu0 0.0
    %5688 = vmatprep.subr.mxu0 0.0
    %5689 = vmatpush1.msra.mxu0 0.0
    %5690 = vmatprep.subr.mxu0 0.0
    %5691 = vmatpush1.msra.mxu0 0.0
    %5692 = vmatprep.subr.mxu0 0.0
    %5693 = vmatpush1.msra.mxu0 0.0
    %5694 = vmatprep.subr.mxu0 0.0
    %5695 = vmatpush1.msra.mxu0 0.0
    %5696 = vmatprep.subr.mxu0 0.0
    %5697 = vmatpush1.msra.mxu0 0.0
    %5698 = vmatprep.subr.mxu0 0.0
    %5699 = vmatpush1.msra.mxu0 0.0
    %5700 = vmatprep.subr.mxu0 0.0
    %5701 = vmatpush1.msra.mxu0 0.0
    %5702 = vmatprep.mubr.f32.mxu0 0.0
    %5703 = vmatmul.mubr.f32.gmra.mrb[0].mxu0 %v5618
    %v5704 = vpop.f32.mrb[0].mxu0
    %v5705 = vadd.f32 %v5637, %v5704
    %v5706 = vpop.f32.mrb[0].mxu0
    %5707 = vdwg.mxu0
    %s5708 = scalar_lea.vmem %s13, 32
    %5709 = vst [vmem:[%s5708] sm:$0xff] %v5705
    %s5710 = sld [smem:[#allocation6 + $0x4]]
    %p5711 = scmp.eq.s32.totalorder %s5710, 0
    // Predicated region
    $region106: #{chat_model_forward.1} parent=1 // pred_check
      %p5712 = pneg %p5711
    $region107: #{chat_model_forward.1} parent=1 // pred_check_branch
      %5714 = sbr.rel (%p5712) target = $region109
    $region108: #{chat_model_forward.1} parent=1 // pred_region
      %vm5715 = vcmp.lt.s32.totalorder %v2447, 64
      %v5716 = vsel %vm5715, %v5705, -1e+30
      %5717 = vmax.xlane.f32.xlu0 %v5716
      %v5718 = vpop.xlane.xlu0 %5717
      %vm5719 = vcmp.eq.f32.partialorder %v5716, %v5718
      %v5720 = vsel %vm5719, %v2447, 128
      %v5721 = vand.u32 %v5720, 65535
      %v5722 = vshra.s32 %v5720, 16
      %v5723 = vcvt.s32.f32 %v5721
      %v5724 = vcvt.s32.f32 %v5722
      %5725 = vmin.xlane.f32.xlu0 %v5724
      %v5726 = vpop.xlane.xlu0 %5725
      %vm5727 = vcmp.eq.f32.partialorder %v5724, %v5726
      %v5728 = vsel %vm5727, %v5723, inf
      %5729 = vmin.xlane.f32.xlu0 %v5728
      %v5730 = vpop.xlane.xlu0 %5729
      %v5731 = vcvt.f32.s32 %v5730
      %v5732 = vcvt.f32.s32 %v5726
      %v5733 = vshll.u32 %v5732, 16
      %v5734 = vadd.s32 %v5733, %v5731
      %vm5735 = vcmp.eq.s32.totalorder %v2447, %v5734
      %v5736 = vsel %vm5735, 1, 0
      %v5737 = vcvt.s32.f32 %v5736
      %5738 = vst [vmem:[#allocation5] sm:$0xff] %v5737
    $region109: #{chat_model_forward.1} parent=1 // pred_fallthru
      _
    %p5739 = scmp.ne.s32.totalorder %s5710, 0
    // Predicated region
    $region110: #{chat_model_forward.1} parent=1 // pred_check
      %p5740 = pneg %p5739
    $region111: #{chat_model_forward.1} parent=1 // pred_check_branch
      %5742 = sbr.rel (%p5740) target = $region113
    $region112: #{chat_model_forward.1} parent=1 // pred_region
      %s5743 = scalar_lea.vmem %s11, 32
      %v5744 = vld [vmem:[%s5743] sm:$0xff]
      %5745 = vst [vmem:[#allocation5] sm:$0xff] %v5744
    $region113: #{chat_model_forward.1} parent=1 // pred_fallthru
      _
    %v5746 = vld [vmem:[#allocation5] sm:$0xff]
    %v5747 = vld [vmem:[%s5] sm:$0xff]
    %v5748 = vld [vmem:[%s5 + $0x8] sm:$0xff]
    %v5749 = vld [vmem:[%s5 + $0x10] sm:$0xff]
    %v5750 = vld [vmem:[%s5 + $0x18] sm:$0xff]
    %v5751 = vld [vmem:[%s5 + $0x20] sm:$0xff]
    %v5752 = vld [vmem:[%s5 + $0x28] sm:$0xff]
    %v5753 = vld [vmem:[%s5 + $0x30] sm:$0xff]
    %v5754 = vld [vmem:[%s5 + $0x38] sm:$0xff]
    %v5755 = vld [vmem:[%s5 + $0x40] sm:$0xff]
    %v5756 = vld [vmem:[%s5 + $0x48] sm:$0xff]
    %v5757 = vld [vmem:[%s5 + $0x50] sm:$0xff]
    %v5758 = vld [vmem:[%s5 + $0x58] sm:$0xff]
    %v5759 = vld [vmem:[%s5 + $0x60] sm:$0xff]
    %v5760 = vld [vmem:[%s5 + $0x68] sm:$0xff]
    %v5761 = vld [vmem:[%s5 + $0x70] sm:$0xff]
    %v5762 = vld [vmem:[%s5 + $0x78] sm:$0xff]
    %5763 = vmatprep.subr.mxu0 0.0
    %5764 = vmatpush1.msra.mxu0 %v5747
    %5765 = vmatprep.subr.mxu0 0.0
    %5766 = vmatpush1.msra.mxu0 %v5748
    %5767 = vmatprep.subr.mxu0 0.0
    %5768 = vmatpush1.msra.mxu0 %v5749
    %5769 = vmatprep.subr.mxu0 0.0
    %5770 = vmatpush1.msra.mxu0 %v5750
    %5771 = vmatprep.subr.mxu0 0.0
    %5772 = vmatpush1.msra.mxu0 %v5751
    %5773 = vmatprep.subr.mxu0 0.0
    %5774 = vmatpush1.msra.mxu0 %v5752
    %5775 = vmatprep.subr.mxu0 0.0
    %5776 = vmatpush1.msra.mxu0 %v5753
    %5777 = vmatprep.subr.mxu0 0.0
    %5778 = vmatpush1.msra.mxu0 %v5754
    %5779 = vmatprep.subr.mxu0 0.0
    %5780 = vmatpush1.msra.mxu0 %v5755
    %5781 = vmatprep.subr.mxu0 0.0
    %5782 = vmatpush1.msra.mxu0 %v5756
    %5783 = vmatprep.subr.mxu0 0.0
    %5784 = vmatpush1.msra.mxu0 %v5757
    %5785 = vmatprep.subr.mxu0 0.0
    %5786 = vmatpush1.msra.mxu0 %v5758
    %5787 = vmatprep.subr.mxu0 0.0
    %5788 = vmatpush1.msra.mxu0 %v5759
    %5789 = vmatprep.subr.mxu0 0.0
    %5790 = vmatpush1.msra.mxu0 %v5760
    %5791 = vmatprep.subr.mxu0 0.0
    %5792 = vmatpush1.msra.mxu0 %v5761
    %5793 = vmatprep.subr.mxu0 0.0
    %5794 = vmatpush1.msra.mxu0 %v5762
    %5795 = vmatprep.subr.mxu0 0.0
    %5796 = vmatpush1.msra.mxu0 0.0
    %5797 = vmatprep.subr.mxu0 0.0
    %5798 = vmatpush1.msra.mxu0 0.0
    %5799 = vmatprep.subr.mxu0 0.0
    %5800 = vmatpush1.msra.mxu0 0.0
    %5801 = vmatprep.subr.mxu0 0.0
    %5802 = vmatpush1.msra.mxu0 0.0
    %5803 = vmatprep.subr.mxu0 0.0
    %5804 = vmatpush1.msra.mxu0 0.0
    %5805 = vmatprep.subr.mxu0 0.0
    %5806 = vmatpush1.msra.mxu0 0.0
    %5807 = vmatprep.subr.mxu0 0.0
    %5808 = vmatpush1.msra.mxu0 0.0
    %5809 = vmatprep.subr.mxu0 0.0
    %5810 = vmatpush1.msra.mxu0 0.0
    %5811 = vmatprep.subr.mxu0 0.0
    %5812 = vmatpush1.msra.mxu0 0.0
    %5813 = vmatprep.subr.mxu0 0.0
    %5814 = vmatpush1.msra.mxu0 0.0
    %5815 = vmatprep.subr.mxu0 0.0
    %5816 = vmatpush1.msra.mxu0 0.0
    %5817 = vmatprep.subr.mxu0 0.0
    %5818 = vmatpush1.msra.mxu0 0.0
    %5819 = vmatprep.subr.mxu0 0.0
    %5820 = vmatpush1.msra.mxu0 0.0
    %5821 = vmatprep.subr.mxu0 0.0
    %5822 = vmatpush1.msra.mxu0 0.0
    %5823 = vmatprep.subr.mxu0 0.0
    %5824 = vmatpush1.msra.mxu0 0.0
    %5825 = vmatprep.subr.mxu0 0.0
    %5826 = vmatpush1.msra.mxu0 0.0
    %5827 = vmatprep.mubr.f32.mxu0 0.0
    %5828 = vmatmul.mubr.f32.gmra.mrb[0].mxu0 %v5746
    %v5829 = vpop.f32.mrb[0].mxu0
    %v5830 = vadd.f32 0.0, %v5829
    %v5831 = vpop.f32.mrb[0].mxu0
    %5832 = vdwg.mxu0
    %v5833 = vld [vmem:[#allocation12] sm:$0xff]
    %v5834 = vld [vmem:[#allocation12 + $0x8] sm:$0xff]
    %v5835 = vld [vmem:[#allocation12 + $0x10] sm:$0xff]
    %v5836 = vld [vmem:[#allocation12 + $0x18] sm:$0xff]
    %v5837 = vld [vmem:[#allocation12 + $0x20] sm:$0xff]
    %v5838 = vld [vmem:[#allocation12 + $0x28] sm:$0xff]
    %v5839 = vld [vmem:[#allocation12 + $0x30] sm:$0xff]
    %v5840 = vld [vmem:[#allocation12 + $0x38] sm:$0xff]
    %v5841 = vld [vmem:[#allocation12 + $0x40] sm:$0xff]
    %v5842 = vld [vmem:[#allocation12 + $0x48] sm:$0xff]
    %v5843 = vld [vmem:[#allocation12 + $0x50] sm:$0xff]
    %v5844 = vld [vmem:[#allocation12 + $0x58] sm:$0xff]
    %v5845 = vld [vmem:[#allocation12 + $0x60] sm:$0xff]
    %v5846 = vld [vmem:[#allocation12 + $0x68] sm:$0xff]
    %v5847 = vld [vmem:[#allocation12 + $0x70] sm:$0xff]
    %v5848 = vld [vmem:[#allocation12 + $0x78] sm:$0xff]
    %v5849 = vld [vmem:[#allocation12 + $0x80] sm:$0xff]
    %v5850 = vld [vmem:[#allocation12 + $0x88] sm:$0xff]
    %v5851 = vld [vmem:[#allocation12 + $0x90] sm:$0xff]
    %v5852 = vld [vmem:[#allocation12 + $0x98] sm:$0xff]
    %v5853 = vld [vmem:[#allocation12 + $0xa0] sm:$0xff]
    %v5854 = vld [vmem:[#allocation12 + $0xa8] sm:$0xff]
    %v5855 = vld [vmem:[#allocation12 + $0xb0] sm:$0xff]
    %v5856 = vld [vmem:[#allocation12 + $0xb8] sm:$0xff]
    %v5857 = vld [vmem:[#allocation12 + $0xc0] sm:$0xff]
    %v5858 = vld [vmem:[#allocation12 + $0xc8] sm:$0xff]
    %v5859 = vld [vmem:[#allocation12 + $0xd0] sm:$0xff]
    %v5860 = vld [vmem:[#allocation12 + $0xd8] sm:$0xff]
    %v5861 = vld [vmem:[#allocation12 + $0xe0] sm:$0xff]
    %v5862 = vld [vmem:[#allocation12 + $0xe8] sm:$0xff]
    %v5863 = vld [vmem:[#allocation12 + $0xf0] sm:$0xff]
    %v5864 = vld [vmem:[#allocation12 + $0xf8] sm:$0xff]
    %v5865 = vld [vmem:[#allocation12 + $0x100] sm:$0xff]
    %v5866 = vld [vmem:[#allocation12 + $0x108] sm:$0xff]
    %v5867 = vld [vmem:[#allocation12 + $0x110] sm:$0xff]
    %v5868 = vld [vmem:[#allocation12 + $0x118] sm:$0xff]
    %v5869 = vld [vmem:[#allocation12 + $0x120] sm:$0xff]
    %v5870 = vld [vmem:[#allocation12 + $0x128] sm:$0xff]
    %v5871 = vld [vmem:[#allocation12 + $0x130] sm:$0xff]
    %v5872 = vld [vmem:[#allocation12 + $0x138] sm:$0xff]
    %v5873 = vld [vmem:[#allocation12 + $0x140] sm:$0xff]
    %v5874 = vld [vmem:[#allocation12 + $0x148] sm:$0xff]
    %v5875 = vld [vmem:[#allocation12 + $0x150] sm:$0xff]
    %v5876 = vld [vmem:[#allocation12 + $0x158] sm:$0xff]
    %v5877 = vld [vmem:[#allocation12 + $0x160] sm:$0xff]
    %v5878 = vld [vmem:[#allocation12 + $0x168] sm:$0xff]
    %v5879 = vld [vmem:[#allocation12 + $0x170] sm:$0xff]
    %v5880 = vld [vmem:[#allocation12 + $0x178] sm:$0xff]
    %v5881 = vld [vmem:[#allocation12 + $0x180] sm:$0xff]
    %v5882 = vld [vmem:[#allocation12 + $0x188] sm:$0xff]
    %v5883 = vld [vmem:[#allocation12 + $0x190] sm:$0xff]
    %v5884 = vld [vmem:[#allocation12 + $0x198] sm:$0xff]
    %v5885 = vld [vmem:[#allocation12 + $0x1a0] sm:$0xff]
    %v5886 = vld [vmem:[#allocation12 + $0x1a8] sm:$0xff]
    %v5887 = vld [vmem:[#allocation12 + $0x1b0] sm:$0xff]
    %v5888 = vld [vmem:[#allocation12 + $0x1b8] sm:$0xff]
    %v5889 = vld [vmem:[#allocation12 + $0x1c0] sm:$0xff]
    %v5890 = vld [vmem:[#allocation12 + $0x1c8] sm:$0xff]
    %v5891 = vld [vmem:[#allocation12 + $0x1d0] sm:$0xff]
    %v5892 = vld [vmem:[#allocation12 + $0x1d8] sm:$0xff]
    %v5893 = vld [vmem:[#allocation12 + $0x1e0] sm:$0xff]
    %v5894 = vld [vmem:[#allocation12 + $0x1e8] sm:$0xff]
    %v5895 = vld [vmem:[#allocation12 + $0x1f0] sm:$0xff]
    %v5896 = vld [vmem:[#allocation12 + $0x1f8] sm:$0xff]
    %v5897 = vld [vmem:[#allocation3] sm:$0xff]
    %v5898 = vld [vmem:[#allocation13] sm:$0xff]
    %v5899 = vld [vmem:[#allocation13 + $0x8] sm:$0xff]
    %v5900 = vld [vmem:[#allocation13 + $0x10] sm:$0xff]
    %v5901 = vld [vmem:[#allocation13 + $0x18] sm:$0xff]
    %v5902 = vld [vmem:[#allocation13 + $0x20] sm:$0xff]
    %v5903 = vld [vmem:[#allocation13 + $0x28] sm:$0xff]
    %v5904 = vld [vmem:[#allocation13 + $0x30] sm:$0xff]
    %v5905 = vld [vmem:[#allocation13 + $0x38] sm:$0xff]
    %v5906 = vld [vmem:[#allocation13 + $0x40] sm:$0xff]
    %v5907 = vld [vmem:[#allocation13 + $0x48] sm:$0xff]
    %v5908 = vld [vmem:[#allocation13 + $0x50] sm:$0xff]
    %v5909 = vld [vmem:[#allocation13 + $0x58] sm:$0xff]
    %v5910 = vld [vmem:[#allocation13 + $0x60] sm:$0xff]
    %v5911 = vld [vmem:[#allocation13 + $0x68] sm:$0xff]
    %v5912 = vld [vmem:[#allocation13 + $0x70] sm:$0xff]
    %v5913 = vld [vmem:[#allocation13 + $0x78] sm:$0xff]
    %v5914 = vld [vmem:[#allocation13 + $0x80] sm:$0xff]
    %v5915 = vld [vmem:[#allocation13 + $0x88] sm:$0xff]
    %v5916 = vld [vmem:[#allocation13 + $0x90] sm:$0xff]
    %v5917 = vld [vmem:[#allocation13 + $0x98] sm:$0xff]
    %v5918 = vld [vmem:[#allocation13 + $0xa0] sm:$0xff]
    %v5919 = vld [vmem:[#allocation13 + $0xa8] sm:$0xff]
    %v5920 = vld [vmem:[#allocation13 + $0xb0] sm:$0xff]
    %v5921 = vld [vmem:[#allocation13 + $0xb8] sm:$0xff]
    %v5922 = vld [vmem:[#allocation13 + $0xc0] sm:$0xff]
    %v5923 = vld [vmem:[#allocation13 + $0xc8] sm:$0xff]
    %v5924 = vld [vmem:[#allocation13 + $0xd0] sm:$0xff]
    %v5925 = vld [vmem:[#allocation13 + $0xd8] sm:$0xff]
    %v5926 = vld [vmem:[#allocation13 + $0xe0] sm:$0xff]
    %v5927 = vld [vmem:[#allocation13 + $0xe8] sm:$0xff]
    %v5928 = vld [vmem:[#allocation13 + $0xf0] sm:$0xff]
    %v5929 = vld [vmem:[#allocation13 + $0xf8] sm:$0xff]
    %v5930 = vld [vmem:[#allocation13 + $0x100] sm:$0xff]
    %v5931 = vld [vmem:[#allocation13 + $0x108] sm:$0xff]
    %v5932 = vld [vmem:[#allocation13 + $0x110] sm:$0xff]
    %v5933 = vld [vmem:[#allocation13 + $0x118] sm:$0xff]
    %v5934 = vld [vmem:[#allocation13 + $0x120] sm:$0xff]
    %v5935 = vld [vmem:[#allocation13 + $0x128] sm:$0xff]
    %v5936 = vld [vmem:[#allocation13 + $0x130] sm:$0xff]
    %v5937 = vld [vmem:[#allocation13 + $0x138] sm:$0xff]
    %v5938 = vld [vmem:[#allocation13 + $0x140] sm:$0xff]
    %v5939 = vld [vmem:[#allocation13 + $0x148] sm:$0xff]
    %v5940 = vld [vmem:[#allocation13 + $0x150] sm:$0xff]
    %v5941 = vld [vmem:[#allocation13 + $0x158] sm:$0xff]
    %v5942 = vld [vmem:[#allocation13 + $0x160] sm:$0xff]
    %v5943 = vld [vmem:[#allocation13 + $0x168] sm:$0xff]
    %v5944 = vld [vmem:[#allocation13 + $0x170] sm:$0xff]
    %v5945 = vld [vmem:[#allocation13 + $0x178] sm:$0xff]
    %v5946 = vld [vmem:[#allocation13 + $0x180] sm:$0xff]
    %v5947 = vld [vmem:[#allocation13 + $0x188] sm:$0xff]
    %v5948 = vld [vmem:[#allocation13 + $0x190] sm:$0xff]
    %v5949 = vld [vmem:[#allocation13 + $0x198] sm:$0xff]
    %v5950 = vld [vmem:[#allocation13 + $0x1a0] sm:$0xff]
    %v5951 = vld [vmem:[#allocation13 + $0x1a8] sm:$0xff]
    %v5952 = vld [vmem:[#allocation13 + $0x1b0] sm:$0xff]
    %v5953 = vld [vmem:[#allocation13 + $0x1b8] sm:$0xff]
    %v5954 = vld [vmem:[#allocation13 + $0x1c0] sm:$0xff]
    %v5955 = vld [vmem:[#allocation13 + $0x1c8] sm:$0xff]
    %v5956 = vld [vmem:[#allocation13 + $0x1d0] sm:$0xff]
    %v5957 = vld [vmem:[#allocation13 + $0x1d8] sm:$0xff]
    %v5958 = vld [vmem:[#allocation13 + $0x1e0] sm:$0xff]
    %v5959 = vld [vmem:[#allocation13 + $0x1e8] sm:$0xff]
    %v5960 = vld [vmem:[#allocation13 + $0x1f0] sm:$0xff]
    %v5961 = vld [vmem:[#allocation13 + $0x1f8] sm:$0xff]
    %5962 = vmatprep.subr.mxu0 %v5899
    %5963 = vmatpush1.msra.mxu0 %v5898
    %5964 = vmatprep.subr.mxu0 %v5903
    %5965 = vmatpush1.msra.mxu0 %v5902
    %5966 = vmatprep.subr.mxu0 %v5907
    %5967 = vmatpush1.msra.mxu0 %v5906
    %5968 = vmatprep.subr.mxu0 %v5911
    %5969 = vmatpush1.msra.mxu0 %v5910
    %5970 = vmatprep.subr.mxu0 %v5915
    %5971 = vmatpush1.msra.mxu0 %v5914
    %5972 = vmatprep.subr.mxu0 %v5919
    %5973 = vmatpush1.msra.mxu0 %v5918
    %5974 = vmatprep.subr.mxu0 %v5923
    %5975 = vmatpush1.msra.mxu0 %v5922
    %5976 = vmatprep.subr.mxu0 %v5927
    %5977 = vmatpush1.msra.mxu0 %v5926
    %5978 = vmatprep.subr.mxu0 %v5931
    %5979 = vmatpush1.msra.mxu0 %v5930
    %5980 = vmatprep.subr.mxu0 %v5935
    %5981 = vmatpush1.msra.mxu0 %v5934
    %5982 = vmatprep.subr.mxu0 %v5939
    %5983 = vmatpush1.msra.mxu0 %v5938
    %5984 = vmatprep.subr.mxu0 %v5943
    %5985 = vmatpush1.msra.mxu0 %v5942
    %5986 = vmatprep.subr.mxu0 %v5947
    %5987 = vmatpush1.msra.mxu0 %v5946
    %5988 = vmatprep.subr.mxu0 %v5951
    %5989 = vmatpush1.msra.mxu0 %v5950
    %5990 = vmatprep.subr.mxu0 %v5955
    %5991 = vmatpush1.msra.mxu0 %v5954
    %5992 = vmatprep.subr.mxu0 %v5959
    %5993 = vmatpush1.msra.mxu0 %v5958
    %5994 = vmatprep.subr.mxu0 0.0
    %5995 = vmatpush1.msra.mxu0 0.0
    %5996 = vmatprep.subr.mxu0 0.0
    %5997 = vmatpush1.msra.mxu0 0.0
    %5998 = vmatprep.subr.mxu0 0.0
    %5999 = vmatpush1.msra.mxu0 0.0
    %6000 = vmatprep.subr.mxu0 0.0
    %6001 = vmatpush1.msra.mxu0 0.0
    %6002 = vmatprep.subr.mxu0 0.0
    %6003 = vmatpush1.msra.mxu0 0.0
    %6004 = vmatprep.subr.mxu0 0.0
    %6005 = vmatpush1.msra.mxu0 0.0
    %6006 = vmatprep.subr.mxu0 0.0
    %6007 = vmatpush1.msra.mxu0 0.0
    %6008 = vmatprep.subr.mxu0 0.0
    %6009 = vmatpush1.msra.mxu0 0.0
    %6010 = vmatprep.subr.mxu0 0.0
    %6011 = vmatpush1.msra.mxu0 0.0
    %6012 = vmatprep.subr.mxu0 0.0
    %6013 = vmatpush1.msra.mxu0 0.0
    %6014 = vmatprep.subr.mxu0 0.0
    %6015 = vmatpush1.msra.mxu0 0.0
    %6016 = vmatprep.subr.mxu0 0.0
    %6017 = vmatpush1.msra.mxu0 0.0
    %6018 = vmatprep.subr.mxu0 0.0
    %6019 = vmatpush1.msra.mxu0 0.0
    %6020 = vmatprep.subr.mxu0 0.0
    %6021 = vmatpush1.msra.mxu0 0.0
    %6022 = vmatprep.subr.mxu0 0.0
    %6023 = vmatpush1.msra.mxu0 0.0
    %6024 = vmatprep.subr.mxu0 0.0
    %6025 = vmatpush1.msra.mxu0 0.0
    %6026 = vmatprep.mubr.f32.mxu0 0.0
    %6027 = vmatmul.mubr.f32.gmra.mrb[0].mxu0 %v5897
    %v6028 = vpop.f32.mrb[0].mxu0
    %v6029 = vadd.f32 0.0, %v6028
    %v6030 = vpop.f32.mrb[0].mxu0
    %v6031 = vadd.f32 0.0, %v6030
    %6032 = vdwg.mxu0
    %6033 = vmatprep.subr.mxu0 %v5901
    %6034 = vmatpush1.msra.mxu0 %v5900
    %6035 = vmatprep.subr.mxu0 %v5905
    %6036 = vmatpush1.msra.mxu0 %v5904
    %6037 = vmatprep.subr.mxu0 %v5909
    %6038 = vmatpush1.msra.mxu0 %v5908
    %6039 = vmatprep.subr.mxu0 %v5913
    %6040 = vmatpush1.msra.mxu0 %v5912
    %6041 = vmatprep.subr.mxu0 %v5917
    %6042 = vmatpush1.msra.mxu0 %v5916
    %6043 = vmatprep.subr.mxu0 %v5921
    %6044 = vmatpush1.msra.mxu0 %v5920
    %6045 = vmatprep.subr.mxu0 %v5925
    %6046 = vmatpush1.msra.mxu0 %v5924
    %6047 = vmatprep.subr.mxu0 %v5929
    %6048 = vmatpush1.msra.mxu0 %v5928
    %6049 = vmatprep.subr.mxu0 %v5933
    %6050 = vmatpush1.msra.mxu0 %v5932
    %6051 = vmatprep.subr.mxu0 %v5937
    %6052 = vmatpush1.msra.mxu0 %v5936
    %6053 = vmatprep.subr.mxu0 %v5941
    %6054 = vmatpush1.msra.mxu0 %v5940
    %6055 = vmatprep.subr.mxu0 %v5945
    %6056 = vmatpush1.msra.mxu0 %v5944
    %6057 = vmatprep.subr.mxu0 %v5949
    %6058 = vmatpush1.msra.mxu0 %v5948
    %6059 = vmatprep.subr.mxu0 %v5953
    %6060 = vmatpush1.msra.mxu0 %v5952
    %6061 = vmatprep.subr.mxu0 %v5957
    %6062 = vmatpush1.msra.mxu0 %v5956
    %6063 = vmatprep.subr.mxu0 %v5961
    %6064 = vmatpush1.msra.mxu0 %v5960
    %6065 = vmatprep.subr.mxu0 0.0
    %6066 = vmatpush1.msra.mxu0 0.0
    %6067 = vmatprep.subr.mxu0 0.0
    %6068 = vmatpush1.msra.mxu0 0.0
    %6069 = vmatprep.subr.mxu0 0.0
    %6070 = vmatpush1.msra.mxu0 0.0
    %6071 = vmatprep.subr.mxu0 0.0
    %6072 = vmatpush1.msra.mxu0 0.0
    %6073 = vmatprep.subr.mxu0 0.0
    %6074 = vmatpush1.msra.mxu0 0.0
    %6075 = vmatprep.subr.mxu0 0.0
    %6076 = vmatpush1.msra.mxu0 0.0
    %6077 = vmatprep.subr.mxu0 0.0
    %6078 = vmatpush1.msra.mxu0 0.0
    %6079 = vmatprep.subr.mxu0 0.0
    %6080 = vmatpush1.msra.mxu0 0.0
    %6081 = vmatprep.subr.mxu0 0.0
    %6082 = vmatpush1.msra.mxu0 0.0
    %6083 = vmatprep.subr.mxu0 0.0
    %6084 = vmatpush1.msra.mxu0 0.0
    %6085 = vmatprep.subr.mxu0 0.0
    %6086 = vmatpush1.msra.mxu0 0.0
    %6087 = vmatprep.subr.mxu0 0.0
    %6088 = vmatpush1.msra.mxu0 0.0
    %6089 = vmatprep.subr.mxu0 0.0
    %6090 = vmatpush1.msra.mxu0 0.0
    %6091 = vmatprep.subr.mxu0 0.0
    %6092 = vmatpush1.msra.mxu0 0.0
    %6093 = vmatprep.subr.mxu0 0.0
    %6094 = vmatpush1.msra.mxu0 0.0
    %6095 = vmatprep.subr.mxu0 0.0
    %6096 = vmatpush1.msra.mxu0 0.0
    %6097 = vmatprep.mubr.f32.mxu0 0.0
    %6098 = vmatmul.mubr.f32.gmra.mrb[0].mxu0 %v5897
    %v6099 = vpop.f32.mrb[0].mxu0
    %v6100 = vadd.f32 0.0, %v6099
    %v6101 = vpop.f32.mrb[0].mxu0
    %v6102 = vadd.f32 0.0, %v6101
    %6103 = vdwg.mxu0
    %6104 = vmatprep.subr.mxu0 %v5834
    %6105 = vmatpush1.msra.mxu0 %v5833
    %6106 = vmatprep.subr.mxu0 %v5838
    %6107 = vmatpush1.msra.mxu0 %v5837
    %6108 = vmatprep.subr.mxu0 %v5842
    %6109 = vmatpush1.msra.mxu0 %v5841
    %6110 = vmatprep.subr.mxu0 %v5846
    %6111 = vmatpush1.msra.mxu0 %v5845
    %6112 = vmatprep.subr.mxu0 %v5850
    %6113 = vmatpush1.msra.mxu0 %v5849
    %6114 = vmatprep.subr.mxu0 %v5854
    %6115 = vmatpush1.msra.mxu0 %v5853
    %6116 = vmatprep.subr.mxu0 %v5858
    %6117 = vmatpush1.msra.mxu0 %v5857
    %6118 = vmatprep.subr.mxu0 %v5862
    %6119 = vmatpush1.msra.mxu0 %v5861
    %6120 = vmatprep.subr.mxu0 %v5866
    %6121 = vmatpush1.msra.mxu0 %v5865
    %6122 = vmatprep.subr.mxu0 %v5870
    %6123 = vmatpush1.msra.mxu0 %v5869
    %6124 = vmatprep.subr.mxu0 %v5874
    %6125 = vmatpush1.msra.mxu0 %v5873
    %6126 = vmatprep.subr.mxu0 %v5878
    %6127 = vmatpush1.msra.mxu0 %v5877
    %6128 = vmatprep.subr.mxu0 %v5882
    %6129 = vmatpush1.msra.mxu0 %v5881
    %6130 = vmatprep.subr.mxu0 %v5886
    %6131 = vmatpush1.msra.mxu0 %v5885
    %6132 = vmatprep.subr.mxu0 %v5890
    %6133 = vmatpush1.msra.mxu0 %v5889
    %6134 = vmatprep.subr.mxu0 %v5894
    %6135 = vmatpush1.msra.mxu0 %v5893
    %6136 = vmatprep.subr.mxu0 0.0
    %6137 = vmatpush1.msra.mxu0 0.0
    %6138 = vmatprep.subr.mxu0 0.0
    %6139 = vmatpush1.msra.mxu0 0.0
    %6140 = vmatprep.subr.mxu0 0.0
    %6141 = vmatpush1.msra.mxu0 0.0
    %6142 = vmatprep.subr.mxu0 0.0
    %6143 = vmatpush1.msra.mxu0 0.0
    %6144 = vmatprep.subr.mxu0 0.0
    %6145 = vmatpush1.msra.mxu0 0.0
    %6146 = vmatprep.subr.mxu0 0.0
    %6147 = vmatpush1.msra.mxu0 0.0
    %6148 = vmatprep.subr.mxu0 0.0
    %6149 = vmatpush1.msra.mxu0 0.0
    %6150 = vmatprep.subr.mxu0 0.0
    %6151 = vmatpush1.msra.mxu0 0.0
    %6152 = vmatprep.subr.mxu0 0.0
    %6153 = vmatpush1.msra.mxu0 0.0
    %6154 = vmatprep.subr.mxu0 0.0
    %6155 = vmatpush1.msra.mxu0 0.0
    %6156 = vmatprep.subr.mxu0 0.0
    %6157 = vmatpush1.msra.mxu0 0.0
    %6158 = vmatprep.subr.mxu0 0.0
    %6159 = vmatpush1.msra.mxu0 0.0
    %6160 = vmatprep.subr.mxu0 0.0
    %6161 = vmatpush1.msra.mxu0 0.0
    %6162 = vmatprep.subr.mxu0 0.0
    %6163 = vmatpush1.msra.mxu0 0.0
    %6164 = vmatprep.subr.mxu0 0.0
    %6165 = vmatpush1.msra.mxu0 0.0
    %6166 = vmatprep.subr.mxu0 0.0
    %6167 = vmatpush1.msra.mxu0 0.0
    %6168 = vmatprep.mubr.f32.mxu0 0.0
    %6169 = vmatmul.mubr.f32.gmra.mrb[0].mxu0 %v5830
    %v6170 = vpop.f32.mrb[0].mxu0
    %v6171 = vadd.f32 %v6029, %v6170
    %v6172 = vpop.f32.mrb[0].mxu0
    %v6173 = vadd.f32 %v6031, %v6172
    %6174 = vdwg.mxu0
    %6175 = vmatprep.subr.mxu0 %v5836
    %6176 = vmatpush1.msra.mxu0 %v5835
    %6177 = vmatprep.subr.mxu0 %v5840
    %6178 = vmatpush1.msra.mxu0 %v5839
    %6179 = vmatprep.subr.mxu0 %v5844
    %6180 = vmatpush1.msra.mxu0 %v5843
    %6181 = vmatprep.subr.mxu0 %v5848
    %6182 = vmatpush1.msra.mxu0 %v5847
    %6183 = vmatprep.subr.mxu0 %v5852
    %6184 = vmatpush1.msra.mxu0 %v5851
    %6185 = vmatprep.subr.mxu0 %v5856
    %6186 = vmatpush1.msra.mxu0 %v5855
    %6187 = vmatprep.subr.mxu0 %v5860
    %6188 = vmatpush1.msra.mxu0 %v5859
    %6189 = vmatprep.subr.mxu0 %v5864
    %6190 = vmatpush1.msra.mxu0 %v5863
    %6191 = vmatprep.subr.mxu0 %v5868
    %6192 = vmatpush1.msra.mxu0 %v5867
    %6193 = vmatprep.subr.mxu0 %v5872
    %6194 = vmatpush1.msra.mxu0 %v5871
    %6195 = vmatprep.subr.mxu0 %v5876
    %6196 = vmatpush1.msra.mxu0 %v5875
    %6197 = vmatprep.subr.mxu0 %v5880
    %6198 = vmatpush1.msra.mxu0 %v5879
    %6199 = vmatprep.subr.mxu0 %v5884
    %6200 = vmatpush1.msra.mxu0 %v5883
    %6201 = vmatprep.subr.mxu0 %v5888
    %6202 = vmatpush1.msra.mxu0 %v5887
    %6203 = vmatprep.subr.mxu0 %v5892
    %6204 = vmatpush1.msra.mxu0 %v5891
    %6205 = vmatprep.subr.mxu0 %v5896
    %6206 = vmatpush1.msra.mxu0 %v5895
    %6207 = vmatprep.subr.mxu0 0.0
    %6208 = vmatpush1.msra.mxu0 0.0
    %6209 = vmatprep.subr.mxu0 0.0
    %6210 = vmatpush1.msra.mxu0 0.0
    %6211 = vmatprep.subr.mxu0 0.0
    %6212 = vmatpush1.msra.mxu0 0.0
    %6213 = vmatprep.subr.mxu0 0.0
    %6214 = vmatpush1.msra.mxu0 0.0
    %6215 = vmatprep.subr.mxu0 0.0
    %6216 = vmatpush1.msra.mxu0 0.0
    %6217 = vmatprep.subr.mxu0 0.0
    %6218 = vmatpush1.msra.mxu0 0.0
    %6219 = vmatprep.subr.mxu0 0.0
    %6220 = vmatpush1.msra.mxu0 0.0
    %6221 = vmatprep.subr.mxu0 0.0
    %6222 = vmatpush1.msra.mxu0 0.0
    %6223 = vmatprep.subr.mxu0 0.0
    %6224 = vmatpush1.msra.mxu0 0.0
    %6225 = vmatprep.subr.mxu0 0.0
    %6226 = vmatpush1.msra.mxu0 0.0
    %6227 = vmatprep.subr.mxu0 0.0
    %6228 = vmatpush1.msra.mxu0 0.0
    %6229 = vmatprep.subr.mxu0 0.0
    %6230 = vmatpush1.msra.mxu0 0.0
    %6231 = vmatprep.subr.mxu0 0.0
    %6232 = vmatpush1.msra.mxu0 0.0
    %6233 = vmatprep.subr.mxu0 0.0
    %6234 = vmatpush1.msra.mxu0 0.0
    %6235 = vmatprep.subr.mxu0 0.0
    %6236 = vmatpush1.msra.mxu0 0.0
    %6237 = vmatprep.subr.mxu0 0.0
    %6238 = vmatpush1.msra.mxu0 0.0
    %6239 = vmatprep.mubr.f32.mxu0 0.0
    %6240 = vmatmul.mubr.f32.gmra.mrb[0].mxu0 %v5830
    %v6241 = vpop.f32.mrb[0].mxu0
    %v6242 = vadd.f32 %v6100, %v6241
    %v6243 = vpop.f32.mrb[0].mxu0
    %v6244 = vadd.f32 %v6102, %v6243
    %6245 = vdwg.mxu0
    %v6246 = vld [vmem:[%s8] sm:$0xff]
    %v6247 = vld [vmem:[%s8 + $0x8] sm:$0xff]
    %v6248 = vld [vmem:[%s8 + $0x10] sm:$0xff]
    %v6249 = vld [vmem:[%s8 + $0x18] sm:$0xff]
    %v6250 = vadd.f32 %v6171, %v6246
    %v6251 = vadd.f32 %v6173, %v6247
    %v6252 = vadd.f32 %v6242, %v6248
    %v6253 = vadd.f32 %v6244, %v6249
    %v6254 = vld [vmem:[#allocation4] sm:$0xff]
    %v6255 = vxor.u32 %v6250, 2147483648
    %v6256 = vmul.f32 %v6255, 1.442695
    %v6257 = vpow.pop %v6256
    %v6258 = vadd.f32 %v6257, 1.0
    %v6259 = vrcp.pop %v6258
    %v6260 = vmul.f32 1.0, %v6259
    %v6261 = vxor.u32 %v6251, 2147483648
    %v6262 = vmul.f32 %v6261, 1.442695
    %v6263 = vpow.pop %v6262
    %v6264 = vadd.f32 %v6263, 1.0
    %v6265 = vrcp.pop %v6264
    %v6266 = vmul.f32 1.0, %v6265
    %v6267 = vtanh.pop %v6252
    %v6268 = vxor.u32 %v6253, 2147483648
    %v6269 = vmul.f32 %v6268, 1.442695
    %v6270 = vpow.pop %v6269
    %v6271 = vadd.f32 %v6270, 1.0
    %v6272 = vrcp.pop %v6271
    %v6273 = vmul.f32 1.0, %v6272
    %v6274 = vmul.f32 %v6266, %v6254
    %v6275 = vmul.f32 %v6260, %v6267
    %v6276 = vadd.f32 %v6274, %v6275
    %v6277 = vtanh.pop %v6276
    %v6278 = vmul.f32 %v6273, %v6277
    %6279 = vst [vmem:[#allocation3] sm:$0xff] %v6278
    %6280 = vst [vmem:[#allocation4] sm:$0xff] %v6276
    %v6281 = vld [vmem:[%s9] sm:$0xff]
    %v6282 = vld [vmem:[%s9 + $0x8] sm:$0xff]
    %v6283 = vld [vmem:[%s9 + $0x10] sm:$0xff]
    %v6284 = vld [vmem:[%s9 + $0x18] sm:$0xff]
    %v6285 = vld [vmem:[%s9 + $0x20] sm:$0xff]
    %v6286 = vld [vmem:[%s9 + $0x28] sm:$0xff]
    %v6287 = vld [vmem:[%s9 + $0x30] sm:$0xff]
    %v6288 = vld [vmem:[%s9 + $0x38] sm:$0xff]
    %v6289 = vld [vmem:[%s9 + $0x40] sm:$0xff]
    %v6290 = vld [vmem:[%s9 + $0x48] sm:$0xff]
    %v6291 = vld [vmem:[%s9 + $0x50] sm:$0xff]
    %v6292 = vld [vmem:[%s9 + $0x58] sm:$0xff]
    %v6293 = vld [vmem:[%s9 + $0x60] sm:$0xff]
    %v6294 = vld [vmem:[%s9 + $0x68] sm:$0xff]
    %v6295 = vld [vmem:[%s9 + $0x70] sm:$0xff]
    %v6296 = vld [vmem:[%s9 + $0x78] sm:$0xff]
    %v6297 = vld [vmem:[%s10] sm:$0xff]
    %6298 = vmatprep.subr.mxu0 0.0
    %6299 = vmatpush1.msra.mxu0 %v6281
    %6300 = vmatprep.subr.mxu0 0.0
    %6301 = vmatpush1.msra.mxu0 %v6282
    %6302 = vmatprep.subr.mxu0 0.0
    %6303 = vmatpush1.msra.mxu0 %v6283
    %6304 = vmatprep.subr.mxu0 0.0
    %6305 = vmatpush1.msra.mxu0 %v6284
    %6306 = vmatprep.subr.mxu0 0.0
    %6307 = vmatpush1.msra.mxu0 %v6285
    %6308 = vmatprep.subr.mxu0 0.0
    %6309 = vmatpush1.msra.mxu0 %v6286
    %6310 = vmatprep.subr.mxu0 0.0
    %6311 = vmatpush1.msra.mxu0 %v6287
    %6312 = vmatprep.subr.mxu0 0.0
    %6313 = vmatpush1.msra.mxu0 %v6288
    %6314 = vmatprep.subr.mxu0 0.0
    %6315 = vmatpush1.msra.mxu0 %v6289
    %6316 = vmatprep.subr.mxu0 0.0
    %6317 = vmatpush1.msra.mxu0 %v6290
    %6318 = vmatprep.subr.mxu0 0.0
    %6319 = vmatpush1.msra.mxu0 %v6291
    %6320 = vmatprep.subr.mxu0 0.0
    %6321 = vmatpush1.msra.mxu0 %v6292
    %6322 = vmatprep.subr.mxu0 0.0
    %6323 = vmatpush1.msra.mxu0 %v6293
    %6324 = vmatprep.subr.mxu0 0.0
    %6325 = vmatpush1.msra.mxu0 %v6294
    %6326 = vmatprep.subr.mxu0 0.0
    %6327 = vmatpush1.msra.mxu0 %v6295
    %6328 = vmatprep.subr.mxu0 0.0
    %6329 = vmatpush1.msra.mxu0 %v6296
    %6330 = vmatprep.subr.mxu0 0.0
    %6331 = vmatpush1.msra.mxu0 0.0
    %6332 = vmatprep.subr.mxu0 0.0
    %6333 = vmatpush1.msra.mxu0 0.0
    %6334 = vmatprep.subr.mxu0 0.0
    %6335 = vmatpush1.msra.mxu0 0.0
    %6336 = vmatprep.subr.mxu0 0.0
    %6337 = vmatpush1.msra.mxu0 0.0
    %6338 = vmatprep.subr.mxu0 0.0
    %6339 = vmatpush1.msra.mxu0 0.0
    %6340 = vmatprep.subr.mxu0 0.0
    %6341 = vmatpush1.msra.mxu0 0.0
    %6342 = vmatprep.subr.mxu0 0.0
    %6343 = vmatpush1.msra.mxu0 0.0
    %6344 = vmatprep.subr.mxu0 0.0
    %6345 = vmatpush1.msra.mxu0 0.0
    %6346 = vmatprep.subr.mxu0 0.0
    %6347 = vmatpush1.msra.mxu0 0.0
    %6348 = vmatprep.subr.mxu0 0.0
    %6349 = vmatpush1.msra.mxu0 0.0
    %6350 = vmatprep.subr.mxu0 0.0
    %6351 = vmatpush1.msra.mxu0 0.0
    %6352 = vmatprep.subr.mxu0 0.0
    %6353 = vmatpush1.msra.mxu0 0.0
    %6354 = vmatprep.subr.mxu0 0.0
    %6355 = vmatpush1.msra.mxu0 0.0
    %6356 = vmatprep.subr.mxu0 0.0
    %6357 = vmatpush1.msra.mxu0 0.0
    %6358 = vmatprep.subr.mxu0 0.0
    %6359 = vmatpush1.msra.mxu0 0.0
    %6360 = vmatprep.subr.mxu0 0.0
    %6361 = vmatpush1.msra.mxu0 0.0
    %6362 = vmatprep.mubr.f32.mxu0 0.0
    %6363 = vmatmul.mubr.f32.gmra.mrb[0].mxu0 %v6278
    %v6364 = vpop.f32.mrb[0].mxu0
    %v6365 = vadd.f32 %v6297, %v6364
    %v6366 = vpop.f32.mrb[0].mxu0
    %6367 = vdwg.mxu0
    %s6368 = scalar_lea.vmem %s13, 40
    %6369 = vst [vmem:[%s6368] sm:$0xff] %v6365
    %s6370 = sld [smem:[#allocation6 + $0x5]]
    %p6371 = scmp.eq.s32.totalorder %s6370, 0
    // Predicated region
    $region114: #{chat_model_forward.1} parent=1 // pred_check
      %p6372 = pneg %p6371
    $region115: #{chat_model_forward.1} parent=1 // pred_check_branch
      %6374 = sbr.rel (%p6372) target = $region117
    $region116: #{chat_model_forward.1} parent=1 // pred_region
      %vm6375 = vcmp.lt.s32.totalorder %v2447, 64
      %v6376 = vsel %vm6375, %v6365, -1e+30
      %6377 = vmax.xlane.f32.xlu0 %v6376
      %v6378 = vpop.xlane.xlu0 %6377
      %vm6379 = vcmp.eq.f32.partialorder %v6376, %v6378
      %v6380 = vsel %vm6379, %v2447, 128
      %v6381 = vand.u32 %v6380, 65535
      %v6382 = vshra.s32 %v6380, 16
      %v6383 = vcvt.s32.f32 %v6381
      %v6384 = vcvt.s32.f32 %v6382
      %6385 = vmin.xlane.f32.xlu0 %v6384
      %v6386 = vpop.xlane.xlu0 %6385
      %vm6387 = vcmp.eq.f32.partialorder %v6384, %v6386
      %v6388 = vsel %vm6387, %v6383, inf
      %6389 = vmin.xlane.f32.xlu0 %v6388
      %v6390 = vpop.xlane.xlu0 %6389
      %v6391 = vcvt.f32.s32 %v6390
      %v6392 = vcvt.f32.s32 %v6386
      %v6393 = vshll.u32 %v6392, 16
      %v6394 = vadd.s32 %v6393, %v6391
      %vm6395 = vcmp.eq.s32.totalorder %v2447, %v6394
      %v6396 = vsel %vm6395, 1, 0
      %v6397 = vcvt.s32.f32 %v6396
      %6398 = vst [vmem:[#allocation5] sm:$0xff] %v6397
    $region117: #{chat_model_forward.1} parent=1 // pred_fallthru
      _
    %p6399 = scmp.ne.s32.totalorder %s6370, 0
    // Predicated region
    $region118: #{chat_model_forward.1} parent=1 // pred_check
      %p6400 = pneg %p6399
    $region119: #{chat_model_forward.1} parent=1 // pred_check_branch
      %6402 = sbr.rel (%p6400) target = $region121
    $region120: #{chat_model_forward.1} parent=1 // pred_region
      %s6403 = scalar_lea.vmem %s11, 40
      %v6404 = vld [vmem:[%s6403] sm:$0xff]
      %6405 = vst [vmem:[#allocation5] sm:$0xff] %v6404
    $region121: #{chat_model_forward.1} parent=1 // pred_fallthru
      _
    %v6406 = vld [vmem:[#allocation5] sm:$0xff]
    %v6407 = vld [vmem:[%s5] sm:$0xff]
    %v6408 = vld [vmem:[%s5 + $0x8] sm:$0xff]
    %v6409 = vld [vmem:[%s5 + $0x10] sm:$0xff]
    %v6410 = vld [vmem:[%s5 + $0x18] sm:$0xff]
    %v6411 = vld [vmem:[%s5 + $0x20] sm:$0xff]
    %v6412 = vld [vmem:[%s5 + $0x28] sm:$0xff]
    %v6413 = vld [vmem:[%s5 + $0x30] sm:$0xff]
    %v6414 = vld [vmem:[%s5 + $0x38] sm:$0xff]
    %v6415 = vld [vmem:[%s5 + $0x40] sm:$0xff]
    %v6416 = vld [vmem:[%s5 + $0x48] sm:$0xff]
    %v6417 = vld [vmem:[%s5 + $0x50] sm:$0xff]
    %v6418 = vld [vmem:[%s5 + $0x58] sm:$0xff]
    %v6419 = vld [vmem:[%s5 + $0x60] sm:$0xff]
    %v6420 = vld [vmem:[%s5 + $0x68] sm:$0xff]
    %v6421 = vld [vmem:[%s5 + $0x70] sm:$0xff]
    %v6422 = vld [vmem:[%s5 + $0x78] sm:$0xff]
    %6423 = vmatprep.subr.mxu0 0.0
    %6424 = vmatpush1.msra.mxu0 %v6407
    %6425 = vmatprep.subr.mxu0 0.0
    %6426 = vmatpush1.msra.mxu0 %v6408
    %6427 = vmatprep.subr.mxu0 0.0
    %6428 = vmatpush1.msra.mxu0 %v6409
    %6429 = vmatprep.subr.mxu0 0.0
    %6430 = vmatpush1.msra.mxu0 %v6410
    %6431 = vmatprep.subr.mxu0 0.0
    %6432 = vmatpush1.msra.mxu0 %v6411
    %6433 = vmatprep.subr.mxu0 0.0
    %6434 = vmatpush1.msra.mxu0 %v6412
    %6435 = vmatprep.subr.mxu0 0.0
    %6436 = vmatpush1.msra.mxu0 %v6413
    %6437 = vmatprep.subr.mxu0 0.0
    %6438 = vmatpush1.msra.mxu0 %v6414
    %6439 = vmatprep.subr.mxu0 0.0
    %6440 = vmatpush1.msra.mxu0 %v6415
    %6441 = vmatprep.subr.mxu0 0.0
    %6442 = vmatpush1.msra.mxu0 %v6416
    %6443 = vmatprep.subr.mxu0 0.0
    %6444 = vmatpush1.msra.mxu0 %v6417
    %6445 = vmatprep.subr.mxu0 0.0
    %6446 = vmatpush1.msra.mxu0 %v6418
    %6447 = vmatprep.subr.mxu0 0.0
    %6448 = vmatpush1.msra.mxu0 %v6419
    %6449 = vmatprep.subr.mxu0 0.0
    %6450 = vmatpush1.msra.mxu0 %v6420
    %6451 = vmatprep.subr.mxu0 0.0
    %6452 = vmatpush1.msra.mxu0 %v6421
    %6453 = vmatprep.subr.mxu0 0.0
    %6454 = vmatpush1.msra.mxu0 %v6422
    %6455 = vmatprep.subr.mxu0 0.0
    %6456 = vmatpush1.msra.mxu0 0.0
    %6457 = vmatprep.subr.mxu0 0.0
    %6458 = vmatpush1.msra.mxu0 0.0
    %6459 = vmatprep.subr.mxu0 0.0
    %6460 = vmatpush1.msra.mxu0 0.0
    %6461 = vmatprep.subr.mxu0 0.0
    %6462 = vmatpush1.msra.mxu0 0.0
    %6463 = vmatprep.subr.mxu0 0.0
    %6464 = vmatpush1.msra.mxu0 0.0
    %6465 = vmatprep.subr.mxu0 0.0
    %6466 = vmatpush1.msra.mxu0 0.0
    %6467 = vmatprep.subr.mxu0 0.0
    %6468 = vmatpush1.msra.mxu0 0.0
    %6469 = vmatprep.subr.mxu0 0.0
    %6470 = vmatpush1.msra.mxu0 0.0
    %6471 = vmatprep.subr.mxu0 0.0
    %6472 = vmatpush1.msra.mxu0 0.0
    %6473 = vmatprep.subr.mxu0 0.0
    %6474 = vmatpush1.msra.mxu0 0.0
    %6475 = vmatprep.subr.mxu0 0.0
    %6476 = vmatpush1.msra.mxu0 0.0
    %6477 = vmatprep.subr.mxu0 0.0
    %6478 = vmatpush1.msra.mxu0 0.0
    %6479 = vmatprep.subr.mxu0 0.0
    %6480 = vmatpush1.msra.mxu0 0.0
    %6481 = vmatprep.subr.mxu0 0.0
    %6482 = vmatpush1.msra.mxu0 0.0
    %6483 = vmatprep.subr.mxu0 0.0
    %6484 = vmatpush1.msra.mxu0 0.0
    %6485 = vmatprep.subr.mxu0 0.0
    %6486 = vmatpush1.msra.mxu0 0.0
    %6487 = vmatprep.mubr.f32.mxu0 0.0
    %6488 = vmatmul.mubr.f32.gmra.mrb[0].mxu0 %v6406
    %v6489 = vpop.f32.mrb[0].mxu0
    %v6490 = vadd.f32 0.0, %v6489
    %v6491 = vpop.f32.mrb[0].mxu0
    %6492 = vdwg.mxu0
    %v6493 = vld [vmem:[#allocation12] sm:$0xff]
    %v6494 = vld [vmem:[#allocation12 + $0x8] sm:$0xff]
    %v6495 = vld [vmem:[#allocation12 + $0x10] sm:$0xff]
    %v6496 = vld [vmem:[#allocation12 + $0x18] sm:$0xff]
    %v6497 = vld [vmem:[#allocation12 + $0x20] sm:$0xff]
    %v6498 = vld [vmem:[#allocation12 + $0x28] sm:$0xff]
    %v6499 = vld [vmem:[#allocation12 + $0x30] sm:$0xff]
    %v6500 = vld [vmem:[#allocation12 + $0x38] sm:$0xff]
    %v6501 = vld [vmem:[#allocation12 + $0x40] sm:$0xff]
    %v6502 = vld [vmem:[#allocation12 + $0x48] sm:$0xff]
    %v6503 = vld [vmem:[#allocation12 + $0x50] sm:$0xff]
    %v6504 = vld [vmem:[#allocation12 + $0x58] sm:$0xff]
    %v6505 = vld [vmem:[#allocation12 + $0x60] sm:$0xff]
    %v6506 = vld [vmem:[#allocation12 + $0x68] sm:$0xff]
    %v6507 = vld [vmem:[#allocation12 + $0x70] sm:$0xff]
    %v6508 = vld [vmem:[#allocation12 + $0x78] sm:$0xff]
    %v6509 = vld [vmem:[#allocation12 + $0x80] sm:$0xff]
    %v6510 = vld [vmem:[#allocation12 + $0x88] sm:$0xff]
    %v6511 = vld [vmem:[#allocation12 + $0x90] sm:$0xff]
    %v6512 = vld [vmem:[#allocation12 + $0x98] sm:$0xff]
    %v6513 = vld [vmem:[#allocation12 + $0xa0] sm:$0xff]
    %v6514 = vld [vmem:[#allocation12 + $0xa8] sm:$0xff]
    %v6515 = vld [vmem:[#allocation12 + $0xb0] sm:$0xff]
    %v6516 = vld [vmem:[#allocation12 + $0xb8] sm:$0xff]
    %v6517 = vld [vmem:[#allocation12 + $0xc0] sm:$0xff]
    %v6518 = vld [vmem:[#allocation12 + $0xc8] sm:$0xff]
    %v6519 = vld [vmem:[#allocation12 + $0xd0] sm:$0xff]
    %v6520 = vld [vmem:[#allocation12 + $0xd8] sm:$0xff]
    %v6521 = vld [vmem:[#allocation12 + $0xe0] sm:$0xff]
    %v6522 = vld [vmem:[#allocation12 + $0xe8] sm:$0xff]
    %v6523 = vld [vmem:[#allocation12 + $0xf0] sm:$0xff]
    %v6524 = vld [vmem:[#allocation12 + $0xf8] sm:$0xff]
    %v6525 = vld [vmem:[#allocation12 + $0x100] sm:$0xff]
    %v6526 = vld [vmem:[#allocation12 + $0x108] sm:$0xff]
    %v6527 = vld [vmem:[#allocation12 + $0x110] sm:$0xff]
    %v6528 = vld [vmem:[#allocation12 + $0x118] sm:$0xff]
    %v6529 = vld [vmem:[#allocation12 + $0x120] sm:$0xff]
    %v6530 = vld [vmem:[#allocation12 + $0x128] sm:$0xff]
    %v6531 = vld [vmem:[#allocation12 + $0x130] sm:$0xff]
    %v6532 = vld [vmem:[#allocation12 + $0x138] sm:$0xff]
    %v6533 = vld [vmem:[#allocation12 + $0x140] sm:$0xff]
    %v6534 = vld [vmem:[#allocation12 + $0x148] sm:$0xff]
    %v6535 = vld [vmem:[#allocation12 + $0x150] sm:$0xff]
    %v6536 = vld [vmem:[#allocation12 + $0x158] sm:$0xff]
    %v6537 = vld [vmem:[#allocation12 + $0x160] sm:$0xff]
    %v6538 = vld [vmem:[#allocation12 + $0x168] sm:$0xff]
    %v6539 = vld [vmem:[#allocation12 + $0x170] sm:$0xff]
    %v6540 = vld [vmem:[#allocation12 + $0x178] sm:$0xff]
    %v6541 = vld [vmem:[#allocation12 + $0x180] sm:$0xff]
    %v6542 = vld [vmem:[#allocation12 + $0x188] sm:$0xff]
    %v6543 = vld [vmem:[#allocation12 + $0x190] sm:$0xff]
    %v6544 = vld [vmem:[#allocation12 + $0x198] sm:$0xff]
    %v6545 = vld [vmem:[#allocation12 + $0x1a0] sm:$0xff]
    %v6546 = vld [vmem:[#allocation12 + $0x1a8] sm:$0xff]
    %v6547 = vld [vmem:[#allocation12 + $0x1b0] sm:$0xff]
    %v6548 = vld [vmem:[#allocation12 + $0x1b8] sm:$0xff]
    %v6549 = vld [vmem:[#allocation12 + $0x1c0] sm:$0xff]
    %v6550 = vld [vmem:[#allocation12 + $0x1c8] sm:$0xff]
    %v6551 = vld [vmem:[#allocation12 + $0x1d0] sm:$0xff]
    %v6552 = vld [vmem:[#allocation12 + $0x1d8] sm:$0xff]
    %v6553 = vld [vmem:[#allocation12 + $0x1e0] sm:$0xff]
    %v6554 = vld [vmem:[#allocation12 + $0x1e8] sm:$0xff]
    %v6555 = vld [vmem:[#allocation12 + $0x1f0] sm:$0xff]
    %v6556 = vld [vmem:[#allocation12 + $0x1f8] sm:$0xff]
    %v6557 = vld [vmem:[#allocation3] sm:$0xff]
    %v6558 = vld [vmem:[#allocation13] sm:$0xff]
    %v6559 = vld [vmem:[#allocation13 + $0x8] sm:$0xff]
    %v6560 = vld [vmem:[#allocation13 + $0x10] sm:$0xff]
    %v6561 = vld [vmem:[#allocation13 + $0x18] sm:$0xff]
    %v6562 = vld [vmem:[#allocation13 + $0x20] sm:$0xff]
    %v6563 = vld [vmem:[#allocation13 + $0x28] sm:$0xff]
    %v6564 = vld [vmem:[#allocation13 + $0x30] sm:$0xff]
    %v6565 = vld [vmem:[#allocation13 + $0x38] sm:$0xff]
    %v6566 = vld [vmem:[#allocation13 + $0x40] sm:$0xff]
    %v6567 = vld [vmem:[#allocation13 + $0x48] sm:$0xff]
    %v6568 = vld [vmem:[#allocation13 + $0x50] sm:$0xff]
    %v6569 = vld [vmem:[#allocation13 + $0x58] sm:$0xff]
    %v6570 = vld [vmem:[#allocation13 + $0x60] sm:$0xff]
    %v6571 = vld [vmem:[#allocation13 + $0x68] sm:$0xff]
    %v6572 = vld [vmem:[#allocation13 + $0x70] sm:$0xff]
    %v6573 = vld [vmem:[#allocation13 + $0x78] sm:$0xff]
    %v6574 = vld [vmem:[#allocation13 + $0x80] sm:$0xff]
    %v6575 = vld [vmem:[#allocation13 + $0x88] sm:$0xff]
    %v6576 = vld [vmem:[#allocation13 + $0x90] sm:$0xff]
    %v6577 = vld [vmem:[#allocation13 + $0x98] sm:$0xff]
    %v6578 = vld [vmem:[#allocation13 + $0xa0] sm:$0xff]
    %v6579 = vld [vmem:[#allocation13 + $0xa8] sm:$0xff]
    %v6580 = vld [vmem:[#allocation13 + $0xb0] sm:$0xff]
    %v6581 = vld [vmem:[#allocation13 + $0xb8] sm:$0xff]
    %v6582 = vld [vmem:[#allocation13 + $0xc0] sm:$0xff]
    %v6583 = vld [vmem:[#allocation13 + $0xc8] sm:$0xff]
    %v6584 = vld [vmem:[#allocation13 + $0xd0] sm:$0xff]
    %v6585 = vld [vmem:[#allocation13 + $0xd8] sm:$0xff]
    %v6586 = vld [vmem:[#allocation13 + $0xe0] sm:$0xff]
    %v6587 = vld [vmem:[#allocation13 + $0xe8] sm:$0xff]
    %v6588 = vld [vmem:[#allocation13 + $0xf0] sm:$0xff]
    %v6589 = vld [vmem:[#allocation13 + $0xf8] sm:$0xff]
    %v6590 = vld [vmem:[#allocation13 + $0x100] sm:$0xff]
    %v6591 = vld [vmem:[#allocation13 + $0x108] sm:$0xff]
    %v6592 = vld [vmem:[#allocation13 + $0x110] sm:$0xff]
    %v6593 = vld [vmem:[#allocation13 + $0x118] sm:$0xff]
    %v6594 = vld [vmem:[#allocation13 + $0x120] sm:$0xff]
    %v6595 = vld [vmem:[#allocation13 + $0x128] sm:$0xff]
    %v6596 = vld [vmem:[#allocation13 + $0x130] sm:$0xff]
    %v6597 = vld [vmem:[#allocation13 + $0x138] sm:$0xff]
    %v6598 = vld [vmem:[#allocation13 + $0x140] sm:$0xff]
    %v6599 = vld [vmem:[#allocation13 + $0x148] sm:$0xff]
    %v6600 = vld [vmem:[#allocation13 + $0x150] sm:$0xff]
    %v6601 = vld [vmem:[#allocation13 + $0x158] sm:$0xff]
    %v6602 = vld [vmem:[#allocation13 + $0x160] sm:$0xff]
    %v6603 = vld [vmem:[#allocation13 + $0x168] sm:$0xff]
    %v6604 = vld [vmem:[#allocation13 + $0x170] sm:$0xff]
    %v6605 = vld [vmem:[#allocation13 + $0x178] sm:$0xff]
    %v6606 = vld [vmem:[#allocation13 + $0x180] sm:$0xff]
    %v6607 = vld [vmem:[#allocation13 + $0x188] sm:$0xff]
    %v6608 = vld [vmem:[#allocation13 + $0x190] sm:$0xff]
    %v6609 = vld [vmem:[#allocation13 + $0x198] sm:$0xff]
    %v6610 = vld [vmem:[#allocation13 + $0x1a0] sm:$0xff]
    %v6611 = vld [vmem:[#allocation13 + $0x1a8] sm:$0xff]
    %v6612 = vld [vmem:[#allocation13 + $0x1b0] sm:$0xff]
    %v6613 = vld [vmem:[#allocation13 + $0x1b8] sm:$0xff]
    %v6614 = vld [vmem:[#allocation13 + $0x1c0] sm:$0xff]
    %v6615 = vld [vmem:[#allocation13 + $0x1c8] sm:$0xff]
    %v6616 = vld [vmem:[#allocation13 + $0x1d0] sm:$0xff]
    %v6617 = vld [vmem:[#allocation13 + $0x1d8] sm:$0xff]
    %v6618 = vld [vmem:[#allocation13 + $0x1e0] sm:$0xff]
    %v6619 = vld [vmem:[#allocation13 + $0x1e8] sm:$0xff]
    %v6620 = vld [vmem:[#allocation13 + $0x1f0] sm:$0xff]
    %v6621 = vld [vmem:[#allocation13 + $0x1f8] sm:$0xff]
    %6622 = vmatprep.subr.mxu0 %v6559
    %6623 = vmatpush1.msra.mxu0 %v6558
    %6624 = vmatprep.subr.mxu0 %v6563
    %6625 = vmatpush1.msra.mxu0 %v6562
    %6626 = vmatprep.subr.mxu0 %v6567
    %6627 = vmatpush1.msra.mxu0 %v6566
    %6628 = vmatprep.subr.mxu0 %v6571
    %6629 = vmatpush1.msra.mxu0 %v6570
    %6630 = vmatprep.subr.mxu0 %v6575
    %6631 = vmatpush1.msra.mxu0 %v6574
    %6632 = vmatprep.subr.mxu0 %v6579
    %6633 = vmatpush1.msra.mxu0 %v6578
    %6634 = vmatprep.subr.mxu0 %v6583
    %6635 = vmatpush1.msra.mxu0 %v6582
    %6636 = vmatprep.subr.mxu0 %v6587
    %6637 = vmatpush1.msra.mxu0 %v6586
    %6638 = vmatprep.subr.mxu0 %v6591
    %6639 = vmatpush1.msra.mxu0 %v6590
    %6640 = vmatprep.subr.mxu0 %v6595
    %6641 = vmatpush1.msra.mxu0 %v6594
    %6642 = vmatprep.subr.mxu0 %v6599
    %6643 = vmatpush1.msra.mxu0 %v6598
    %6644 = vmatprep.subr.mxu0 %v6603
    %6645 = vmatpush1.msra.mxu0 %v6602
    %6646 = vmatprep.subr.mxu0 %v6607
    %6647 = vmatpush1.msra.mxu0 %v6606
    %6648 = vmatprep.subr.mxu0 %v6611
    %6649 = vmatpush1.msra.mxu0 %v6610
    %6650 = vmatprep.subr.mxu0 %v6615
    %6651 = vmatpush1.msra.mxu0 %v6614
    %6652 = vmatprep.subr.mxu0 %v6619
    %6653 = vmatpush1.msra.mxu0 %v6618
    %6654 = vmatprep.subr.mxu0 0.0
    %6655 = vmatpush1.msra.mxu0 0.0
    %6656 = vmatprep.subr.mxu0 0.0
    %6657 = vmatpush1.msra.mxu0 0.0
    %6658 = vmatprep.subr.mxu0 0.0
    %6659 = vmatpush1.msra.mxu0 0.0
    %6660 = vmatprep.subr.mxu0 0.0
    %6661 = vmatpush1.msra.mxu0 0.0
    %6662 = vmatprep.subr.mxu0 0.0
    %6663 = vmatpush1.msra.mxu0 0.0
    %6664 = vmatprep.subr.mxu0 0.0
    %6665 = vmatpush1.msra.mxu0 0.0
    %6666 = vmatprep.subr.mxu0 0.0
    %6667 = vmatpush1.msra.mxu0 0.0
    %6668 = vmatprep.subr.mxu0 0.0
    %6669 = vmatpush1.msra.mxu0 0.0
    %6670 = vmatprep.subr.mxu0 0.0
    %6671 = vmatpush1.msra.mxu0 0.0
    %6672 = vmatprep.subr.mxu0 0.0
    %6673 = vmatpush1.msra.mxu0 0.0
    %6674 = vmatprep.subr.mxu0 0.0
    %6675 = vmatpush1.msra.mxu0 0.0
    %6676 = vmatprep.subr.mxu0 0.0
    %6677 = vmatpush1.msra.mxu0 0.0
    %6678 = vmatprep.subr.mxu0 0.0
    %6679 = vmatpush1.msra.mxu0 0.0
    %6680 = vmatprep.subr.mxu0 0.0
    %6681 = vmatpush1.msra.mxu0 0.0
    %6682 = vmatprep.subr.mxu0 0.0
    %6683 = vmatpush1.msra.mxu0 0.0
    %6684 = vmatprep.subr.mxu0 0.0
    %6685 = vmatpush1.msra.mxu0 0.0
    %6686 = vmatprep.mubr.f32.mxu0 0.0
    %6687 = vmatmul.mubr.f32.gmra.mrb[0].mxu0 %v6557
    %v6688 = vpop.f32.mrb[0].mxu0
    %v6689 = vadd.f32 0.0, %v6688
    %v6690 = vpop.f32.mrb[0].mxu0
    %v6691 = vadd.f32 0.0, %v6690
    %6692 = vdwg.mxu0
    %6693 = vmatprep.subr.mxu0 %v6561
    %6694 = vmatpush1.msra.mxu0 %v6560
    %6695 = vmatprep.subr.mxu0 %v6565
    %6696 = vmatpush1.msra.mxu0 %v6564
    %6697 = vmatprep.subr.mxu0 %v6569
    %6698 = vmatpush1.msra.mxu0 %v6568
    %6699 = vmatprep.subr.mxu0 %v6573
    %6700 = vmatpush1.msra.mxu0 %v6572
    %6701 = vmatprep.subr.mxu0 %v6577
    %6702 = vmatpush1.msra.mxu0 %v6576
    %6703 = vmatprep.subr.mxu0 %v6581
    %6704 = vmatpush1.msra.mxu0 %v6580
    %6705 = vmatprep.subr.mxu0 %v6585
    %6706 = vmatpush1.msra.mxu0 %v6584
    %6707 = vmatprep.subr.mxu0 %v6589
    %6708 = vmatpush1.msra.mxu0 %v6588
    %6709 = vmatprep.subr.mxu0 %v6593
    %6710 = vmatpush1.msra.mxu0 %v6592
    %6711 = vmatprep.subr.mxu0 %v6597
    %6712 = vmatpush1.msra.mxu0 %v6596
    %6713 = vmatprep.subr.mxu0 %v6601
    %6714 = vmatpush1.msra.mxu0 %v6600
    %6715 = vmatprep.subr.mxu0 %v6605
    %6716 = vmatpush1.msra.mxu0 %v6604
    %6717 = vmatprep.subr.mxu0 %v6609
    %6718 = vmatpush1.msra.mxu0 %v6608
    %6719 = vmatprep.subr.mxu0 %v6613
    %6720 = vmatpush1.msra.mxu0 %v6612
    %6721 = vmatprep.subr.mxu0 %v6617
    %6722 = vmatpush1.msra.mxu0 %v6616
    %6723 = vmatprep.subr.mxu0 %v6621
    %6724 = vmatpush1.msra.mxu0 %v6620
    %6725 = vmatprep.subr.mxu0 0.0
    %6726 = vmatpush1.msra.mxu0 0.0
    %6727 = vmatprep.subr.mxu0 0.0
    %6728 = vmatpush1.msra.mxu0 0.0
    %6729 = vmatprep.subr.mxu0 0.0
    %6730 = vmatpush1.msra.mxu0 0.0
    %6731 = vmatprep.subr.mxu0 0.0
    %6732 = vmatpush1.msra.mxu0 0.0
    %6733 = vmatprep.subr.mxu0 0.0
    %6734 = vmatpush1.msra.mxu0 0.0
    %6735 = vmatprep.subr.mxu0 0.0
    %6736 = vmatpush1.msra.mxu0 0.0
    %6737 = vmatprep.subr.mxu0 0.0
    %6738 = vmatpush1.msra.mxu0 0.0
    %6739 = vmatprep.subr.mxu0 0.0
    %6740 = vmatpush1.msra.mxu0 0.0
    %6741 = vmatprep.subr.mxu0 0.0
    %6742 = vmatpush1.msra.mxu0 0.0
    %6743 = vmatprep.subr.mxu0 0.0
    %6744 = vmatpush1.msra.mxu0 0.0
    %6745 = vmatprep.subr.mxu0 0.0
    %6746 = vmatpush1.msra.mxu0 0.0
    %6747 = vmatprep.subr.mxu0 0.0
    %6748 = vmatpush1.msra.mxu0 0.0
    %6749 = vmatprep.subr.mxu0 0.0
    %6750 = vmatpush1.msra.mxu0 0.0
    %6751 = vmatprep.subr.mxu0 0.0
    %6752 = vmatpush1.msra.mxu0 0.0
    %6753 = vmatprep.subr.mxu0 0.0
    %6754 = vmatpush1.msra.mxu0 0.0
    %6755 = vmatprep.subr.mxu0 0.0
    %6756 = vmatpush1.msra.mxu0 0.0
    %6757 = vmatprep.mubr.f32.mxu0 0.0
    %6758 = vmatmul.mubr.f32.gmra.mrb[0].mxu0 %v6557
    %v6759 = vpop.f32.mrb[0].mxu0
    %v6760 = vadd.f32 0.0, %v6759
    %v6761 = vpop.f32.mrb[0].mxu0
    %v6762 = vadd.f32 0.0, %v6761
    %6763 = vdwg.mxu0
    %6764 = vmatprep.subr.mxu0 %v6494
    %6765 = vmatpush1.msra.mxu0 %v6493
    %6766 = vmatprep.subr.mxu0 %v6498
    %6767 = vmatpush1.msra.mxu0 %v6497
    %6768 = vmatprep.subr.mxu0 %v6502
    %6769 = vmatpush1.msra.mxu0 %v6501
    %6770 = vmatprep.subr.mxu0 %v6506
    %6771 = vmatpush1.msra.mxu0 %v6505
    %6772 = vmatprep.subr.mxu0 %v6510
    %6773 = vmatpush1.msra.mxu0 %v6509
    %6774 = vmatprep.subr.mxu0 %v6514
    %6775 = vmatpush1.msra.mxu0 %v6513
    %6776 = vmatprep.subr.mxu0 %v6518
    %6777 = vmatpush1.msra.mxu0 %v6517
    %6778 = vmatprep.subr.mxu0 %v6522
    %6779 = vmatpush1.msra.mxu0 %v6521
    %6780 = vmatprep.subr.mxu0 %v6526
    %6781 = vmatpush1.msra.mxu0 %v6525
    %6782 = vmatprep.subr.mxu0 %v6530
    %6783 = vmatpush1.msra.mxu0 %v6529
    %6784 = vmatprep.subr.mxu0 %v6534
    %6785 = vmatpush1.msra.mxu0 %v6533
    %6786 = vmatprep.subr.mxu0 %v6538
    %6787 = vmatpush1.msra.mxu0 %v6537
    %6788 = vmatprep.subr.mxu0 %v6542
    %6789 = vmatpush1.msra.mxu0 %v6541
    %6790 = vmatprep.subr.mxu0 %v6546
    %6791 = vmatpush1.msra.mxu0 %v6545
    %6792 = vmatprep.subr.mxu0 %v6550
    %6793 = vmatpush1.msra.mxu0 %v6549
    %6794 = vmatprep.subr.mxu0 %v6554
    %6795 = vmatpush1.msra.mxu0 %v6553
    %6796 = vmatprep.subr.mxu0 0.0
    %6797 = vmatpush1.msra.mxu0 0.0
    %6798 = vmatprep.subr.mxu0 0.0
    %6799 = vmatpush1.msra.mxu0 0.0
    %6800 = vmatprep.subr.mxu0 0.0
    %6801 = vmatpush1.msra.mxu0 0.0
    %6802 = vmatprep.subr.mxu0 0.0
    %6803 = vmatpush1.msra.mxu0 0.0
    %6804 = vmatprep.subr.mxu0 0.0
    %6805 = vmatpush1.msra.mxu0 0.0
    %6806 = vmatprep.subr.mxu0 0.0
    %6807 = vmatpush1.msra.mxu0 0.0
    %6808 = vmatprep.subr.mxu0 0.0
    %6809 = vmatpush1.msra.mxu0 0.0
    %6810 = vmatprep.subr.mxu0 0.0
    %6811 = vmatpush1.msra.mxu0 0.0
    %6812 = vmatprep.subr.mxu0 0.0
    %6813 = vmatpush1.msra.mxu0 0.0
    %6814 = vmatprep.subr.mxu0 0.0
    %6815 = vmatpush1.msra.mxu0 0.0
    %6816 = vmatprep.subr.mxu0 0.0
    %6817 = vmatpush1.msra.mxu0 0.0
    %6818 = vmatprep.subr.mxu0 0.0
    %6819 = vmatpush1.msra.mxu0 0.0
    %6820 = vmatprep.subr.mxu0 0.0
    %6821 = vmatpush1.msra.mxu0 0.0
    %6822 = vmatprep.subr.mxu0 0.0
    %6823 = vmatpush1.msra.mxu0 0.0
    %6824 = vmatprep.subr.mxu0 0.0
    %6825 = vmatpush1.msra.mxu0 0.0
    %6826 = vmatprep.subr.mxu0 0.0
    %6827 = vmatpush1.msra.mxu0 0.0
    %6828 = vmatprep.mubr.f32.mxu0 0.0
    %6829 = vmatmul.mubr.f32.gmra.mrb[0].mxu0 %v6490
    %v6830 = vpop.f32.mrb[0].mxu0
    %v6831 = vadd.f32 %v6689, %v6830
    %v6832 = vpop.f32.mrb[0].mxu0
    %v6833 = vadd.f32 %v6691, %v6832
    %6834 = vdwg.mxu0
    %6835 = vmatprep.subr.mxu0 %v6496
    %6836 = vmatpush1.msra.mxu0 %v6495
    %6837 = vmatprep.subr.mxu0 %v6500
    %6838 = vmatpush1.msra.mxu0 %v6499
    %6839 = vmatprep.subr.mxu0 %v6504
    %6840 = vmatpush1.msra.mxu0 %v6503
    %6841 = vmatprep.subr.mxu0 %v6508
    %6842 = vmatpush1.msra.mxu0 %v6507
    %6843 = vmatprep.subr.mxu0 %v6512
    %6844 = vmatpush1.msra.mxu0 %v6511
    %6845 = vmatprep.subr.mxu0 %v6516
    %6846 = vmatpush1.msra.mxu0 %v6515
    %6847 = vmatprep.subr.mxu0 %v6520
    %6848 = vmatpush1.msra.mxu0 %v6519
    %6849 = vmatprep.subr.mxu0 %v6524
    %6850 = vmatpush1.msra.mxu0 %v6523
    %6851 = vmatprep.subr.mxu0 %v6528
    %6852 = vmatpush1.msra.mxu0 %v6527
    %6853 = vmatprep.subr.mxu0 %v6532
    %6854 = vmatpush1.msra.mxu0 %v6531
    %6855 = vmatprep.subr.mxu0 %v6536
    %6856 = vmatpush1.msra.mxu0 %v6535
    %6857 = vmatprep.subr.mxu0 %v6540
    %6858 = vmatpush1.msra.mxu0 %v6539
    %6859 = vmatprep.subr.mxu0 %v6544
    %6860 = vmatpush1.msra.mxu0 %v6543
    %6861 = vmatprep.subr.mxu0 %v6548
    %6862 = vmatpush1.msra.mxu0 %v6547
    %6863 = vmatprep.subr.mxu0 %v6552
    %6864 = vmatpush1.msra.mxu0 %v6551
    %6865 = vmatprep.subr.mxu0 %v6556
    %6866 = vmatpush1.msra.mxu0 %v6555
    %6867 = vmatprep.subr.mxu0 0.0
    %6868 = vmatpush1.msra.mxu0 0.0
    %6869 = vmatprep.subr.mxu0 0.0
    %6870 = vmatpush1.msra.mxu0 0.0
    %6871 = vmatprep.subr.mxu0 0.0
    %6872 = vmatpush1.msra.mxu0 0.0
    %6873 = vmatprep.subr.mxu0 0.0
    %6874 = vmatpush1.msra.mxu0 0.0
    %6875 = vmatprep.subr.mxu0 0.0
    %6876 = vmatpush1.msra.mxu0 0.0
    %6877 = vmatprep.subr.mxu0 0.0
    %6878 = vmatpush1.msra.mxu0 0.0
    %6879 = vmatprep.subr.mxu0 0.0
    %6880 = vmatpush1.msra.mxu0 0.0
    %6881 = vmatprep.subr.mxu0 0.0
    %6882 = vmatpush1.msra.mxu0 0.0
    %6883 = vmatprep.subr.mxu0 0.0
    %6884 = vmatpush1.msra.mxu0 0.0
    %6885 = vmatprep.subr.mxu0 0.0
    %6886 = vmatpush1.msra.mxu0 0.0
    %6887 = vmatprep.subr.mxu0 0.0
    %6888 = vmatpush1.msra.mxu0 0.0
    %6889 = vmatprep.subr.mxu0 0.0
    %6890 = vmatpush1.msra.mxu0 0.0
    %6891 = vmatprep.subr.mxu0 0.0
    %6892 = vmatpush1.msra.mxu0 0.0
    %6893 = vmatprep.subr.mxu0 0.0
    %6894 = vmatpush1.msra.mxu0 0.0
    %6895 = vmatprep.subr.mxu0 0.0
    %6896 = vmatpush1.msra.mxu0 0.0
    %6897 = vmatprep.subr.mxu0 0.0
    %6898 = vmatpush1.msra.mxu0 0.0
    %6899 = vmatprep.mubr.f32.mxu0 0.0
    %6900 = vmatmul.mubr.f32.gmra.mrb[0].mxu0 %v6490
    %v6901 = vpop.f32.mrb[0].mxu0
    %v6902 = vadd.f32 %v6760, %v6901
    %v6903 = vpop.f32.mrb[0].mxu0
    %v6904 = vadd.f32 %v6762, %v6903
    %6905 = vdwg.mxu0
    %v6906 = vld [vmem:[%s8] sm:$0xff]
    %v6907 = vld [vmem:[%s8 + $0x8] sm:$0xff]
    %v6908 = vld [vmem:[%s8 + $0x10] sm:$0xff]
    %v6909 = vld [vmem:[%s8 + $0x18] sm:$0xff]
    %v6910 = vadd.f32 %v6831, %v6906
    %v6911 = vadd.f32 %v6833, %v6907
    %v6912 = vadd.f32 %v6902, %v6908
    %v6913 = vadd.f32 %v6904, %v6909
    %v6914 = vld [vmem:[#allocation4] sm:$0xff]
    %v6915 = vxor.u32 %v6910, 2147483648
    %v6916 = vmul.f32 %v6915, 1.442695
    %v6917 = vpow.pop %v6916
    %v6918 = vadd.f32 %v6917, 1.0
    %v6919 = vrcp.pop %v6918
    %v6920 = vmul.f32 1.0, %v6919
    %v6921 = vxor.u32 %v6911, 2147483648
    %v6922 = vmul.f32 %v6921, 1.442695
    %v6923 = vpow.pop %v6922
    %v6924 = vadd.f32 %v6923, 1.0
    %v6925 = vrcp.pop %v6924
    %v6926 = vmul.f32 1.0, %v6925
    %v6927 = vtanh.pop %v6912
    %v6928 = vxor.u32 %v6913, 2147483648
    %v6929 = vmul.f32 %v6928, 1.442695
    %v6930 = vpow.pop %v6929
    %v6931 = vadd.f32 %v6930, 1.0
    %v6932 = vrcp.pop %v6931
    %v6933 = vmul.f32 1.0, %v6932
    %v6934 = vmul.f32 %v6926, %v6914
    %v6935 = vmul.f32 %v6920, %v6927
    %v6936 = vadd.f32 %v6934, %v6935
    %v6937 = vtanh.pop %v6936
    %v6938 = vmul.f32 %v6933, %v6937
    %6939 = vst [vmem:[#allocation3] sm:$0xff] %v6938
    %6940 = vst [vmem:[#allocation4] sm:$0xff] %v6936
    %v6941 = vld [vmem:[%s9] sm:$0xff]
    %v6942 = vld [vmem:[%s9 + $0x8] sm:$0xff]
    %v6943 = vld [vmem:[%s9 + $0x10] sm:$0xff]
    %v6944 = vld [vmem:[%s9 + $0x18] sm:$0xff]
    %v6945 = vld [vmem:[%s9 + $0x20] sm:$0xff]
    %v6946 = vld [vmem:[%s9 + $0x28] sm:$0xff]
    %v6947 = vld [vmem:[%s9 + $0x30] sm:$0xff]
    %v6948 = vld [vmem:[%s9 + $0x38] sm:$0xff]
    %v6949 = vld [vmem:[%s9 + $0x40] sm:$0xff]
    %v6950 = vld [vmem:[%s9 + $0x48] sm:$0xff]
    %v6951 = vld [vmem:[%s9 + $0x50] sm:$0xff]
    %v6952 = vld [vmem:[%s9 + $0x58] sm:$0xff]
    %v6953 = vld [vmem:[%s9 + $0x60] sm:$0xff]
    %v6954 = vld [vmem:[%s9 + $0x68] sm:$0xff]
    %v6955 = vld [vmem:[%s9 + $0x70] sm:$0xff]
    %v6956 = vld [vmem:[%s9 + $0x78] sm:$0xff]
    %v6957 = vld [vmem:[%s10] sm:$0xff]
    %6958 = vmatprep.subr.mxu0 0.0
    %6959 = vmatpush1.msra.mxu0 %v6941
    %6960 = vmatprep.subr.mxu0 0.0
    %6961 = vmatpush1.msra.mxu0 %v6942
    %6962 = vmatprep.subr.mxu0 0.0
    %6963 = vmatpush1.msra.mxu0 %v6943
    %6964 = vmatprep.subr.mxu0 0.0
    %6965 = vmatpush1.msra.mxu0 %v6944
    %6966 = vmatprep.subr.mxu0 0.0
    %6967 = vmatpush1.msra.mxu0 %v6945
    %6968 = vmatprep.subr.mxu0 0.0
    %6969 = vmatpush1.msra.mxu0 %v6946
    %6970 = vmatprep.subr.mxu0 0.0
    %6971 = vmatpush1.msra.mxu0 %v6947
    %6972 = vmatprep.subr.mxu0 0.0
    %6973 = vmatpush1.msra.mxu0 %v6948
    %6974 = vmatprep.subr.mxu0 0.0
    %6975 = vmatpush1.msra.mxu0 %v6949
    %6976 = vmatprep.subr.mxu0 0.0
    %6977 = vmatpush1.msra.mxu0 %v6950
    %6978 = vmatprep.subr.mxu0 0.0
    %6979 = vmatpush1.msra.mxu0 %v6951
    %6980 = vmatprep.subr.mxu0 0.0
    %6981 = vmatpush1.msra.mxu0 %v6952
    %6982 = vmatprep.subr.mxu0 0.0
    %6983 = vmatpush1.msra.mxu0 %v6953
    %6984 = vmatprep.subr.mxu0 0.0
    %6985 = vmatpush1.msra.mxu0 %v6954
    %6986 = vmatprep.subr.mxu0 0.0
    %6987 = vmatpush1.msra.mxu0 %v6955
    %6988 = vmatprep.subr.mxu0 0.0
    %6989 = vmatpush1.msra.mxu0 %v6956
    %6990 = vmatprep.subr.mxu0 0.0
    %6991 = vmatpush1.msra.mxu0 0.0
    %6992 = vmatprep.subr.mxu0 0.0
    %6993 = vmatpush1.msra.mxu0 0.0
    %6994 = vmatprep.subr.mxu0 0.0
    %6995 = vmatpush1.msra.mxu0 0.0
    %6996 = vmatprep.subr.mxu0 0.0
    %6997 = vmatpush1.msra.mxu0 0.0
    %6998 = vmatprep.subr.mxu0 0.0
    %6999 = vmatpush1.msra.mxu0 0.0
    %7000 = vmatprep.subr.mxu0 0.0
    %7001 = vmatpush1.msra.mxu0 0.0
    %7002 = vmatprep.subr.mxu0 0.0
    %7003 = vmatpush1.msra.mxu0 0.0
    %7004 = vmatprep.subr.mxu0 0.0
    %7005 = vmatpush1.msra.mxu0 0.0
    %7006 = vmatprep.subr.mxu0 0.0
    %7007 = vmatpush1.msra.mxu0 0.0
    %7008 = vmatprep.subr.mxu0 0.0
    %7009 = vmatpush1.msra.mxu0 0.0
    %7010 = vmatprep.subr.mxu0 0.0
    %7011 = vmatpush1.msra.mxu0 0.0
    %7012 = vmatprep.subr.mxu0 0.0
    %7013 = vmatpush1.msra.mxu0 0.0
    %7014 = vmatprep.subr.mxu0 0.0
    %7015 = vmatpush1.msra.mxu0 0.0
    %7016 = vmatprep.subr.mxu0 0.0
    %7017 = vmatpush1.msra.mxu0 0.0
    %7018 = vmatprep.subr.mxu0 0.0
    %7019 = vmatpush1.msra.mxu0 0.0
    %7020 = vmatprep.subr.mxu0 0.0
    %7021 = vmatpush1.msra.mxu0 0.0
    %7022 = vmatprep.mubr.f32.mxu0 0.0
    %7023 = vmatmul.mubr.f32.gmra.mrb[0].mxu0 %v6938
    %v7024 = vpop.f32.mrb[0].mxu0
    %v7025 = vadd.f32 %v6957, %v7024
    %v7026 = vpop.f32.mrb[0].mxu0
    %7027 = vdwg.mxu0
    %s7028 = scalar_lea.vmem %s13, 48
    %7029 = vst [vmem:[%s7028] sm:$0xff] %v7025
    %s7030 = sld [smem:[#allocation6 + $0x6]]
    %p7031 = scmp.eq.s32.totalorder %s7030, 0
    // Predicated region
    $region122: #{chat_model_forward.1} parent=1 // pred_check
      %p7032 = pneg %p7031
    $region123: #{chat_model_forward.1} parent=1 // pred_check_branch
      %7034 = sbr.rel (%p7032) target = $region125
    $region124: #{chat_model_forward.1} parent=1 // pred_region
      %vm7035 = vcmp.lt.s32.totalorder %v2447, 64
      %v7036 = vsel %vm7035, %v7025, -1e+30
      %7037 = vmax.xlane.f32.xlu0 %v7036
      %v7038 = vpop.xlane.xlu0 %7037
      %vm7039 = vcmp.eq.f32.partialorder %v7036, %v7038
      %v7040 = vsel %vm7039, %v2447, 128
      %v7041 = vand.u32 %v7040, 65535
      %v7042 = vshra.s32 %v7040, 16
      %v7043 = vcvt.s32.f32 %v7041
      %v7044 = vcvt.s32.f32 %v7042
      %7045 = vmin.xlane.f32.xlu0 %v7044
      %v7046 = vpop.xlane.xlu0 %7045
      %vm7047 = vcmp.eq.f32.partialorder %v7044, %v7046
      %v7048 = vsel %vm7047, %v7043, inf
      %7049 = vmin.xlane.f32.xlu0 %v7048
      %v7050 = vpop.xlane.xlu0 %7049
      %v7051 = vcvt.f32.s32 %v7050
      %v7052 = vcvt.f32.s32 %v7046
      %v7053 = vshll.u32 %v7052, 16
      %v7054 = vadd.s32 %v7053, %v7051
      %vm7055 = vcmp.eq.s32.totalorder %v2447, %v7054
      %v7056 = vsel %vm7055, 1, 0
      %v7057 = vcvt.s32.f32 %v7056
      %7058 = vst [vmem:[#allocation5] sm:$0xff] %v7057
    $region125: #{chat_model_forward.1} parent=1 // pred_fallthru
      _
    %p7059 = scmp.ne.s32.totalorder %s7030, 0
    // Predicated region
    $region126: #{chat_model_forward.1} parent=1 // pred_check
      %p7060 = pneg %p7059
    $region127: #{chat_model_forward.1} parent=1 // pred_check_branch
      %7062 = sbr.rel (%p7060) target = $region129
    $region128: #{chat_model_forward.1} parent=1 // pred_region
      %s7063 = scalar_lea.vmem %s11, 48
      %v7064 = vld [vmem:[%s7063] sm:$0xff]
      %7065 = vst [vmem:[#allocation5] sm:$0xff] %v7064
    $region129: #{chat_model_forward.1} parent=1 // pred_fallthru
      _
    %v7066 = vld [vmem:[#allocation5] sm:$0xff]
    %v7067 = vld [vmem:[%s5] sm:$0xff]
    %v7068 = vld [vmem:[%s5 + $0x8] sm:$0xff]
    %v7069 = vld [vmem:[%s5 + $0x10] sm:$0xff]
    %v7070 = vld [vmem:[%s5 + $0x18] sm:$0xff]
    %v7071 = vld [vmem:[%s5 + $0x20] sm:$0xff]
    %v7072 = vld [vmem:[%s5 + $0x28] sm:$0xff]
    %v7073 = vld [vmem:[%s5 + $0x30] sm:$0xff]
    %v7074 = vld [vmem:[%s5 + $0x38] sm:$0xff]
    %v7075 = vld [vmem:[%s5 + $0x40] sm:$0xff]
    %v7076 = vld [vmem:[%s5 + $0x48] sm:$0xff]
    %v7077 = vld [vmem:[%s5 + $0x50] sm:$0xff]
    %v7078 = vld [vmem:[%s5 + $0x58] sm:$0xff]
    %v7079 = vld [vmem:[%s5 + $0x60] sm:$0xff]
    %v7080 = vld [vmem:[%s5 + $0x68] sm:$0xff]
    %v7081 = vld [vmem:[%s5 + $0x70] sm:$0xff]
    %v7082 = vld [vmem:[%s5 + $0x78] sm:$0xff]
    %7083 = vmatprep.subr.mxu0 0.0
    %7084 = vmatpush1.msra.mxu0 %v7067
    %7085 = vmatprep.subr.mxu0 0.0
    %7086 = vmatpush1.msra.mxu0 %v7068
    %7087 = vmatprep.subr.mxu0 0.0
    %7088 = vmatpush1.msra.mxu0 %v7069
    %7089 = vmatprep.subr.mxu0 0.0
    %7090 = vmatpush1.msra.mxu0 %v7070
    %7091 = vmatprep.subr.mxu0 0.0
    %7092 = vmatpush1.msra.mxu0 %v7071
    %7093 = vmatprep.subr.mxu0 0.0
    %7094 = vmatpush1.msra.mxu0 %v7072
    %7095 = vmatprep.subr.mxu0 0.0
    %7096 = vmatpush1.msra.mxu0 %v7073
    %7097 = vmatprep.subr.mxu0 0.0
    %7098 = vmatpush1.msra.mxu0 %v7074
    %7099 = vmatprep.subr.mxu0 0.0
    %7100 = vmatpush1.msra.mxu0 %v7075
    %7101 = vmatprep.subr.mxu0 0.0
    %7102 = vmatpush1.msra.mxu0 %v7076
    %7103 = vmatprep.subr.mxu0 0.0
    %7104 = vmatpush1.msra.mxu0 %v7077
    %7105 = vmatprep.subr.mxu0 0.0
    %7106 = vmatpush1.msra.mxu0 %v7078
    %7107 = vmatprep.subr.mxu0 0.0
    %7108 = vmatpush1.msra.mxu0 %v7079
    %7109 = vmatprep.subr.mxu0 0.0
    %7110 = vmatpush1.msra.mxu0 %v7080
    %7111 = vmatprep.subr.mxu0 0.0
    %7112 = vmatpush1.msra.mxu0 %v7081
    %7113 = vmatprep.subr.mxu0 0.0
    %7114 = vmatpush1.msra.mxu0 %v7082
    %7115 = vmatprep.subr.mxu0 0.0
    %7116 = vmatpush1.msra.mxu0 0.0
    %7117 = vmatprep.subr.mxu0 0.0
    %7118 = vmatpush1.msra.mxu0 0.0
    %7119 = vmatprep.subr.mxu0 0.0
    %7120 = vmatpush1.msra.mxu0 0.0
    %7121 = vmatprep.subr.mxu0 0.0
    %7122 = vmatpush1.msra.mxu0 0.0
    %7123 = vmatprep.subr.mxu0 0.0
    %7124 = vmatpush1.msra.mxu0 0.0
    %7125 = vmatprep.subr.mxu0 0.0
    %7126 = vmatpush1.msra.mxu0 0.0
    %7127 = vmatprep.subr.mxu0 0.0
    %7128 = vmatpush1.msra.mxu0 0.0
    %7129 = vmatprep.subr.mxu0 0.0
    %7130 = vmatpush1.msra.mxu0 0.0
    %7131 = vmatprep.subr.mxu0 0.0
    %7132 = vmatpush1.msra.mxu0 0.0
    %7133 = vmatprep.subr.mxu0 0.0
    %7134 = vmatpush1.msra.mxu0 0.0
    %7135 = vmatprep.subr.mxu0 0.0
    %7136 = vmatpush1.msra.mxu0 0.0
    %7137 = vmatprep.subr.mxu0 0.0
    %7138 = vmatpush1.msra.mxu0 0.0
    %7139 = vmatprep.subr.mxu0 0.0
    %7140 = vmatpush1.msra.mxu0 0.0
    %7141 = vmatprep.subr.mxu0 0.0
    %7142 = vmatpush1.msra.mxu0 0.0
    %7143 = vmatprep.subr.mxu0 0.0
    %7144 = vmatpush1.msra.mxu0 0.0
    %7145 = vmatprep.subr.mxu0 0.0
    %7146 = vmatpush1.msra.mxu0 0.0
    %7147 = vmatprep.mubr.f32.mxu0 0.0
    %7148 = vmatmul.mubr.f32.gmra.mrb[0].mxu0 %v7066
    %v7149 = vpop.f32.mrb[0].mxu0
    %v7150 = vadd.f32 0.0, %v7149
    %v7151 = vpop.f32.mrb[0].mxu0
    %7152 = vdwg.mxu0
    %v7153 = vld [vmem:[#allocation12] sm:$0xff]
    %v7154 = vld [vmem:[#allocation12 + $0x8] sm:$0xff]
    %v7155 = vld [vmem:[#allocation12 + $0x10] sm:$0xff]
    %v7156 = vld [vmem:[#allocation12 + $0x18] sm:$0xff]
    %v7157 = vld [vmem:[#allocation12 + $0x20] sm:$0xff]
    %v7158 = vld [vmem:[#allocation12 + $0x28] sm:$0xff]
    %v7159 = vld [vmem:[#allocation12 + $0x30] sm:$0xff]
    %v7160 = vld [vmem:[#allocation12 + $0x38] sm:$0xff]
    %v7161 = vld [vmem:[#allocation12 + $0x40] sm:$0xff]
    %v7162 = vld [vmem:[#allocation12 + $0x48] sm:$0xff]
    %v7163 = vld [vmem:[#allocation12 + $0x50] sm:$0xff]
    %v7164 = vld [vmem:[#allocation12 + $0x58] sm:$0xff]
    %v7165 = vld [vmem:[#allocation12 + $0x60] sm:$0xff]
    %v7166 = vld [vmem:[#allocation12 + $0x68] sm:$0xff]
    %v7167 = vld [vmem:[#allocation12 + $0x70] sm:$0xff]
    %v7168 = vld [vmem:[#allocation12 + $0x78] sm:$0xff]
    %v7169 = vld [vmem:[#allocation12 + $0x80] sm:$0xff]
    %v7170 = vld [vmem:[#allocation12 + $0x88] sm:$0xff]
    %v7171 = vld [vmem:[#allocation12 + $0x90] sm:$0xff]
    %v7172 = vld [vmem:[#allocation12 + $0x98] sm:$0xff]
    %v7173 = vld [vmem:[#allocation12 + $0xa0] sm:$0xff]
    %v7174 = vld [vmem:[#allocation12 + $0xa8] sm:$0xff]
    %v7175 = vld [vmem:[#allocation12 + $0xb0] sm:$0xff]
    %v7176 = vld [vmem:[#allocation12 + $0xb8] sm:$0xff]
    %v7177 = vld [vmem:[#allocation12 + $0xc0] sm:$0xff]
    %v7178 = vld [vmem:[#allocation12 + $0xc8] sm:$0xff]
    %v7179 = vld [vmem:[#allocation12 + $0xd0] sm:$0xff]
    %v7180 = vld [vmem:[#allocation12 + $0xd8] sm:$0xff]
    %v7181 = vld [vmem:[#allocation12 + $0xe0] sm:$0xff]
    %v7182 = vld [vmem:[#allocation12 + $0xe8] sm:$0xff]
    %v7183 = vld [vmem:[#allocation12 + $0xf0] sm:$0xff]
    %v7184 = vld [vmem:[#allocation12 + $0xf8] sm:$0xff]
    %v7185 = vld [vmem:[#allocation12 + $0x100] sm:$0xff]
    %v7186 = vld [vmem:[#allocation12 + $0x108] sm:$0xff]
    %v7187 = vld [vmem:[#allocation12 + $0x110] sm:$0xff]
    %v7188 = vld [vmem:[#allocation12 + $0x118] sm:$0xff]
    %v7189 = vld [vmem:[#allocation12 + $0x120] sm:$0xff]
    %v7190 = vld [vmem:[#allocation12 + $0x128] sm:$0xff]
    %v7191 = vld [vmem:[#allocation12 + $0x130] sm:$0xff]
    %v7192 = vld [vmem:[#allocation12 + $0x138] sm:$0xff]
    %v7193 = vld [vmem:[#allocation12 + $0x140] sm:$0xff]
    %v7194 = vld [vmem:[#allocation12 + $0x148] sm:$0xff]
    %v7195 = vld [vmem:[#allocation12 + $0x150] sm:$0xff]
    %v7196 = vld [vmem:[#allocation12 + $0x158] sm:$0xff]
    %v7197 = vld [vmem:[#allocation12 + $0x160] sm:$0xff]
    %v7198 = vld [vmem:[#allocation12 + $0x168] sm:$0xff]
    %v7199 = vld [vmem:[#allocation12 + $0x170] sm:$0xff]
    %v7200 = vld [vmem:[#allocation12 + $0x178] sm:$0xff]
    %v7201 = vld [vmem:[#allocation12 + $0x180] sm:$0xff]
    %v7202 = vld [vmem:[#allocation12 + $0x188] sm:$0xff]
    %v7203 = vld [vmem:[#allocation12 + $0x190] sm:$0xff]
    %v7204 = vld [vmem:[#allocation12 + $0x198] sm:$0xff]
    %v7205 = vld [vmem:[#allocation12 + $0x1a0] sm:$0xff]
    %v7206 = vld [vmem:[#allocation12 + $0x1a8] sm:$0xff]
    %v7207 = vld [vmem:[#allocation12 + $0x1b0] sm:$0xff]
    %v7208 = vld [vmem:[#allocation12 + $0x1b8] sm:$0xff]
    %v7209 = vld [vmem:[#allocation12 + $0x1c0] sm:$0xff]
    %v7210 = vld [vmem:[#allocation12 + $0x1c8] sm:$0xff]
    %v7211 = vld [vmem:[#allocation12 + $0x1d0] sm:$0xff]
    %v7212 = vld [vmem:[#allocation12 + $0x1d8] sm:$0xff]
    %v7213 = vld [vmem:[#allocation12 + $0x1e0] sm:$0xff]
    %v7214 = vld [vmem:[#allocation12 + $0x1e8] sm:$0xff]
    %v7215 = vld [vmem:[#allocation12 + $0x1f0] sm:$0xff]
    %v7216 = vld [vmem:[#allocation12 + $0x1f8] sm:$0xff]
    %v7217 = vld [vmem:[#allocation3] sm:$0xff]
    %v7218 = vld [vmem:[#allocation13] sm:$0xff]
    %v7219 = vld [vmem:[#allocation13 + $0x8] sm:$0xff]
    %v7220 = vld [vmem:[#allocation13 + $0x10] sm:$0xff]
    %v7221 = vld [vmem:[#allocation13 + $0x18] sm:$0xff]
    %v7222 = vld [vmem:[#allocation13 + $0x20] sm:$0xff]
    %v7223 = vld [vmem:[#allocation13 + $0x28] sm:$0xff]
    %v7224 = vld [vmem:[#allocation13 + $0x30] sm:$0xff]
    %v7225 = vld [vmem:[#allocation13 + $0x38] sm:$0xff]
    %v7226 = vld [vmem:[#allocation13 + $0x40] sm:$0xff]
    %v7227 = vld [vmem:[#allocation13 + $0x48] sm:$0xff]
    %v7228 = vld [vmem:[#allocation13 + $0x50] sm:$0xff]
    %v7229 = vld [vmem:[#allocation13 + $0x58] sm:$0xff]
    %v7230 = vld [vmem:[#allocation13 + $0x60] sm:$0xff]
    %v7231 = vld [vmem:[#allocation13 + $0x68] sm:$0xff]
    %v7232 = vld [vmem:[#allocation13 + $0x70] sm:$0xff]
    %v7233 = vld [vmem:[#allocation13 + $0x78] sm:$0xff]
    %v7234 = vld [vmem:[#allocation13 + $0x80] sm:$0xff]
    %v7235 = vld [vmem:[#allocation13 + $0x88] sm:$0xff]
    %v7236 = vld [vmem:[#allocation13 + $0x90] sm:$0xff]
    %v7237 = vld [vmem:[#allocation13 + $0x98] sm:$0xff]
    %v7238 = vld [vmem:[#allocation13 + $0xa0] sm:$0xff]
    %v7239 = vld [vmem:[#allocation13 + $0xa8] sm:$0xff]
    %v7240 = vld [vmem:[#allocation13 + $0xb0] sm:$0xff]
    %v7241 = vld [vmem:[#allocation13 + $0xb8] sm:$0xff]
    %v7242 = vld [vmem:[#allocation13 + $0xc0] sm:$0xff]
    %v7243 = vld [vmem:[#allocation13 + $0xc8] sm:$0xff]
    %v7244 = vld [vmem:[#allocation13 + $0xd0] sm:$0xff]
    %v7245 = vld [vmem:[#allocation13 + $0xd8] sm:$0xff]
    %v7246 = vld [vmem:[#allocation13 + $0xe0] sm:$0xff]
    %v7247 = vld [vmem:[#allocation13 + $0xe8] sm:$0xff]
    %v7248 = vld [vmem:[#allocation13 + $0xf0] sm:$0xff]
    %v7249 = vld [vmem:[#allocation13 + $0xf8] sm:$0xff]
    %v7250 = vld [vmem:[#allocation13 + $0x100] sm:$0xff]
    %v7251 = vld [vmem:[#allocation13 + $0x108] sm:$0xff]
    %v7252 = vld [vmem:[#allocation13 + $0x110] sm:$0xff]
    %v7253 = vld [vmem:[#allocation13 + $0x118] sm:$0xff]
    %v7254 = vld [vmem:[#allocation13 + $0x120] sm:$0xff]
    %v7255 = vld [vmem:[#allocation13 + $0x128] sm:$0xff]
    %v7256 = vld [vmem:[#allocation13 + $0x130] sm:$0xff]
    %v7257 = vld [vmem:[#allocation13 + $0x138] sm:$0xff]
    %v7258 = vld [vmem:[#allocation13 + $0x140] sm:$0xff]
    %v7259 = vld [vmem:[#allocation13 + $0x148] sm:$0xff]
    %v7260 = vld [vmem:[#allocation13 + $0x150] sm:$0xff]
    %v7261 = vld [vmem:[#allocation13 + $0x158] sm:$0xff]
    %v7262 = vld [vmem:[#allocation13 + $0x160] sm:$0xff]
    %v7263 = vld [vmem:[#allocation13 + $0x168] sm:$0xff]
    %v7264 = vld [vmem:[#allocation13 + $0x170] sm:$0xff]
    %v7265 = vld [vmem:[#allocation13 + $0x178] sm:$0xff]
    %v7266 = vld [vmem:[#allocation13 + $0x180] sm:$0xff]
    %v7267 = vld [vmem:[#allocation13 + $0x188] sm:$0xff]
    %v7268 = vld [vmem:[#allocation13 + $0x190] sm:$0xff]
    %v7269 = vld [vmem:[#allocation13 + $0x198] sm:$0xff]
    %v7270 = vld [vmem:[#allocation13 + $0x1a0] sm:$0xff]
    %v7271 = vld [vmem:[#allocation13 + $0x1a8] sm:$0xff]
    %v7272 = vld [vmem:[#allocation13 + $0x1b0] sm:$0xff]
    %v7273 = vld [vmem:[#allocation13 + $0x1b8] sm:$0xff]
    %v7274 = vld [vmem:[#allocation13 + $0x1c0] sm:$0xff]
    %v7275 = vld [vmem:[#allocation13 + $0x1c8] sm:$0xff]
    %v7276 = vld [vmem:[#allocation13 + $0x1d0] sm:$0xff]
    %v7277 = vld [vmem:[#allocation13 + $0x1d8] sm:$0xff]
    %v7278 = vld [vmem:[#allocation13 + $0x1e0] sm:$0xff]
    %v7279 = vld [vmem:[#allocation13 + $0x1e8] sm:$0xff]
    %v7280 = vld [vmem:[#allocation13 + $0x1f0] sm:$0xff]
    %v7281 = vld [vmem:[#allocation13 + $0x1f8] sm:$0xff]
    %7282 = vmatprep.subr.mxu0 %v7219
    %7283 = vmatpush1.msra.mxu0 %v7218
    %7284 = vmatprep.subr.mxu0 %v7223
    %7285 = vmatpush1.msra.mxu0 %v7222
    %7286 = vmatprep.subr.mxu0 %v7227
    %7287 = vmatpush1.msra.mxu0 %v7226
    %7288 = vmatprep.subr.mxu0 %v7231
    %7289 = vmatpush1.msra.mxu0 %v7230
    %7290 = vmatprep.subr.mxu0 %v7235
    %7291 = vmatpush1.msra.mxu0 %v7234
    %7292 = vmatprep.subr.mxu0 %v7239
    %7293 = vmatpush1.msra.mxu0 %v7238
    %7294 = vmatprep.subr.mxu0 %v7243
    %7295 = vmatpush1.msra.mxu0 %v7242
    %7296 = vmatprep.subr.mxu0 %v7247
    %7297 = vmatpush1.msra.mxu0 %v7246
    %7298 = vmatprep.subr.mxu0 %v7251
    %7299 = vmatpush1.msra.mxu0 %v7250
    %7300 = vmatprep.subr.mxu0 %v7255
    %7301 = vmatpush1.msra.mxu0 %v7254
    %7302 = vmatprep.subr.mxu0 %v7259
    %7303 = vmatpush1.msra.mxu0 %v7258
    %7304 = vmatprep.subr.mxu0 %v7263
    %7305 = vmatpush1.msra.mxu0 %v7262
    %7306 = vmatprep.subr.mxu0 %v7267
    %7307 = vmatpush1.msra.mxu0 %v7266
    %7308 = vmatprep.subr.mxu0 %v7271
    %7309 = vmatpush1.msra.mxu0 %v7270
    %7310 = vmatprep.subr.mxu0 %v7275
    %7311 = vmatpush1.msra.mxu0 %v7274
    %7312 = vmatprep.subr.mxu0 %v7279
    %7313 = vmatpush1.msra.mxu0 %v7278
    %7314 = vmatprep.subr.mxu0 0.0
    %7315 = vmatpush1.msra.mxu0 0.0
    %7316 = vmatprep.subr.mxu0 0.0
    %7317 = vmatpush1.msra.mxu0 0.0
    %7318 = vmatprep.subr.mxu0 0.0
    %7319 = vmatpush1.msra.mxu0 0.0
    %7320 = vmatprep.subr.mxu0 0.0
    %7321 = vmatpush1.msra.mxu0 0.0
    %7322 = vmatprep.subr.mxu0 0.0
    %7323 = vmatpush1.msra.mxu0 0.0
    %7324 = vmatprep.subr.mxu0 0.0
    %7325 = vmatpush1.msra.mxu0 0.0
    %7326 = vmatprep.subr.mxu0 0.0
    %7327 = vmatpush1.msra.mxu0 0.0
    %7328 = vmatprep.subr.mxu0 0.0
    %7329 = vmatpush1.msra.mxu0 0.0
    %7330 = vmatprep.subr.mxu0 0.0
    %7331 = vmatpush1.msra.mxu0 0.0
    %7332 = vmatprep.subr.mxu0 0.0
    %7333 = vmatpush1.msra.mxu0 0.0
    %7334 = vmatprep.subr.mxu0 0.0
    %7335 = vmatpush1.msra.mxu0 0.0
    %7336 = vmatprep.subr.mxu0 0.0
    %7337 = vmatpush1.msra.mxu0 0.0
    %7338 = vmatprep.subr.mxu0 0.0
    %7339 = vmatpush1.msra.mxu0 0.0
    %7340 = vmatprep.subr.mxu0 0.0
    %7341 = vmatpush1.msra.mxu0 0.0
    %7342 = vmatprep.subr.mxu0 0.0
    %7343 = vmatpush1.msra.mxu0 0.0
    %7344 = vmatprep.subr.mxu0 0.0
    %7345 = vmatpush1.msra.mxu0 0.0
    %7346 = vmatprep.mubr.f32.mxu0 0.0
    %7347 = vmatmul.mubr.f32.gmra.mrb[0].mxu0 %v7217
    %v7348 = vpop.f32.mrb[0].mxu0
    %v7349 = vadd.f32 0.0, %v7348
    %v7350 = vpop.f32.mrb[0].mxu0
    %v7351 = vadd.f32 0.0, %v7350
    %7352 = vdwg.mxu0
    %7353 = vmatprep.subr.mxu0 %v7221
    %7354 = vmatpush1.msra.mxu0 %v7220
    %7355 = vmatprep.subr.mxu0 %v7225
    %7356 = vmatpush1.msra.mxu0 %v7224
    %7357 = vmatprep.subr.mxu0 %v7229
    %7358 = vmatpush1.msra.mxu0 %v7228
    %7359 = vmatprep.subr.mxu0 %v7233
    %7360 = vmatpush1.msra.mxu0 %v7232
    %7361 = vmatprep.subr.mxu0 %v7237
    %7362 = vmatpush1.msra.mxu0 %v7236
    %7363 = vmatprep.subr.mxu0 %v7241
    %7364 = vmatpush1.msra.mxu0 %v7240
    %7365 = vmatprep.subr.mxu0 %v7245
    %7366 = vmatpush1.msra.mxu0 %v7244
    %7367 = vmatprep.subr.mxu0 %v7249
    %7368 = vmatpush1.msra.mxu0 %v7248
    %7369 = vmatprep.subr.mxu0 %v7253
    %7370 = vmatpush1.msra.mxu0 %v7252
    %7371 = vmatprep.subr.mxu0 %v7257
    %7372 = vmatpush1.msra.mxu0 %v7256
    %7373 = vmatprep.subr.mxu0 %v7261
    %7374 = vmatpush1.msra.mxu0 %v7260
    %7375 = vmatprep.subr.mxu0 %v7265
    %7376 = vmatpush1.msra.mxu0 %v7264
    %7377 = vmatprep.subr.mxu0 %v7269
    %7378 = vmatpush1.msra.mxu0 %v7268
    %7379 = vmatprep.subr.mxu0 %v7273
    %7380 = vmatpush1.msra.mxu0 %v7272
    %7381 = vmatprep.subr.mxu0 %v7277
    %7382 = vmatpush1.msra.mxu0 %v7276
    %7383 = vmatprep.subr.mxu0 %v7281
    %7384 = vmatpush1.msra.mxu0 %v7280
    %7385 = vmatprep.subr.mxu0 0.0
    %7386 = vmatpush1.msra.mxu0 0.0
    %7387 = vmatprep.subr.mxu0 0.0
    %7388 = vmatpush1.msra.mxu0 0.0
    %7389 = vmatprep.subr.mxu0 0.0
    %7390 = vmatpush1.msra.mxu0 0.0
    %7391 = vmatprep.subr.mxu0 0.0
    %7392 = vmatpush1.msra.mxu0 0.0
    %7393 = vmatprep.subr.mxu0 0.0
    %7394 = vmatpush1.msra.mxu0 0.0
    %7395 = vmatprep.subr.mxu0 0.0
    %7396 = vmatpush1.msra.mxu0 0.0
    %7397 = vmatprep.subr.mxu0 0.0
    %7398 = vmatpush1.msra.mxu0 0.0
    %7399 = vmatprep.subr.mxu0 0.0
    %7400 = vmatpush1.msra.mxu0 0.0
    %7401 = vmatprep.subr.mxu0 0.0
    %7402 = vmatpush1.msra.mxu0 0.0
    %7403 = vmatprep.subr.mxu0 0.0
    %7404 = vmatpush1.msra.mxu0 0.0
    %7405 = vmatprep.subr.mxu0 0.0
    %7406 = vmatpush1.msra.mxu0 0.0
    %7407 = vmatprep.subr.mxu0 0.0
    %7408 = vmatpush1.msra.mxu0 0.0
    %7409 = vmatprep.subr.mxu0 0.0
    %7410 = vmatpush1.msra.mxu0 0.0
    %7411 = vmatprep.subr.mxu0 0.0
    %7412 = vmatpush1.msra.mxu0 0.0
    %7413 = vmatprep.subr.mxu0 0.0
    %7414 = vmatpush1.msra.mxu0 0.0
    %7415 = vmatprep.subr.mxu0 0.0
    %7416 = vmatpush1.msra.mxu0 0.0
    %7417 = vmatprep.mubr.f32.mxu0 0.0
    %7418 = vmatmul.mubr.f32.gmra.mrb[0].mxu0 %v7217
    %v7419 = vpop.f32.mrb[0].mxu0
    %v7420 = vadd.f32 0.0, %v7419
    %v7421 = vpop.f32.mrb[0].mxu0
    %v7422 = vadd.f32 0.0, %v7421
    %7423 = vdwg.mxu0
    %7424 = vmatprep.subr.mxu0 %v7154
    %7425 = vmatpush1.msra.mxu0 %v7153
    %7426 = vmatprep.subr.mxu0 %v7158
    %7427 = vmatpush1.msra.mxu0 %v7157
    %7428 = vmatprep.subr.mxu0 %v7162
    %7429 = vmatpush1.msra.mxu0 %v7161
    %7430 = vmatprep.subr.mxu0 %v7166
    %7431 = vmatpush1.msra.mxu0 %v7165
    %7432 = vmatprep.subr.mxu0 %v7170
    %7433 = vmatpush1.msra.mxu0 %v7169
    %7434 = vmatprep.subr.mxu0 %v7174
    %7435 = vmatpush1.msra.mxu0 %v7173
    %7436 = vmatprep.subr.mxu0 %v7178
    %7437 = vmatpush1.msra.mxu0 %v7177
    %7438 = vmatprep.subr.mxu0 %v7182
    %7439 = vmatpush1.msra.mxu0 %v7181
    %7440 = vmatprep.subr.mxu0 %v7186
    %7441 = vmatpush1.msra.mxu0 %v7185
    %7442 = vmatprep.subr.mxu0 %v7190
    %7443 = vmatpush1.msra.mxu0 %v7189
    %7444 = vmatprep.subr.mxu0 %v7194
    %7445 = vmatpush1.msra.mxu0 %v7193
    %7446 = vmatprep.subr.mxu0 %v7198
    %7447 = vmatpush1.msra.mxu0 %v7197
    %7448 = vmatprep.subr.mxu0 %v7202
    %7449 = vmatpush1.msra.mxu0 %v7201
    %7450 = vmatprep.subr.mxu0 %v7206
    %7451 = vmatpush1.msra.mxu0 %v7205
    %7452 = vmatprep.subr.mxu0 %v7210
    %7453 = vmatpush1.msra.mxu0 %v7209
    %7454 = vmatprep.subr.mxu0 %v7214
    %7455 = vmatpush1.msra.mxu0 %v7213
    %7456 = vmatprep.subr.mxu0 0.0
    %7457 = vmatpush1.msra.mxu0 0.0
    %7458 = vmatprep.subr.mxu0 0.0
    %7459 = vmatpush1.msra.mxu0 0.0
    %7460 = vmatprep.subr.mxu0 0.0
    %7461 = vmatpush1.msra.mxu0 0.0
    %7462 = vmatprep.subr.mxu0 0.0
    %7463 = vmatpush1.msra.mxu0 0.0
    %7464 = vmatprep.subr.mxu0 0.0
    %7465 = vmatpush1.msra.mxu0 0.0
    %7466 = vmatprep.subr.mxu0 0.0
    %7467 = vmatpush1.msra.mxu0 0.0
    %7468 = vmatprep.subr.mxu0 0.0
    %7469 = vmatpush1.msra.mxu0 0.0
    %7470 = vmatprep.subr.mxu0 0.0
    %7471 = vmatpush1.msra.mxu0 0.0
    %7472 = vmatprep.subr.mxu0 0.0
    %7473 = vmatpush1.msra.mxu0 0.0
    %7474 = vmatprep.subr.mxu0 0.0
    %7475 = vmatpush1.msra.mxu0 0.0
    %7476 = vmatprep.subr.mxu0 0.0
    %7477 = vmatpush1.msra.mxu0 0.0
    %7478 = vmatprep.subr.mxu0 0.0
    %7479 = vmatpush1.msra.mxu0 0.0
    %7480 = vmatprep.subr.mxu0 0.0
    %7481 = vmatpush1.msra.mxu0 0.0
    %7482 = vmatprep.subr.mxu0 0.0
    %7483 = vmatpush1.msra.mxu0 0.0
    %7484 = vmatprep.subr.mxu0 0.0
    %7485 = vmatpush1.msra.mxu0 0.0
    %7486 = vmatprep.subr.mxu0 0.0
    %7487 = vmatpush1.msra.mxu0 0.0
    %7488 = vmatprep.mubr.f32.mxu0 0.0
    %7489 = vmatmul.mubr.f32.gmra.mrb[0].mxu0 %v7150
    %v7490 = vpop.f32.mrb[0].mxu0
    %v7491 = vadd.f32 %v7349, %v7490
    %v7492 = vpop.f32.mrb[0].mxu0
    %v7493 = vadd.f32 %v7351, %v7492
    %7494 = vdwg.mxu0
    %7495 = vmatprep.subr.mxu0 %v7156
    %7496 = vmatpush1.msra.mxu0 %v7155
    %7497 = vmatprep.subr.mxu0 %v7160
    %7498 = vmatpush1.msra.mxu0 %v7159
    %7499 = vmatprep.subr.mxu0 %v7164
    %7500 = vmatpush1.msra.mxu0 %v7163
    %7501 = vmatprep.subr.mxu0 %v7168
    %7502 = vmatpush1.msra.mxu0 %v7167
    %7503 = vmatprep.subr.mxu0 %v7172
    %7504 = vmatpush1.msra.mxu0 %v7171
    %7505 = vmatprep.subr.mxu0 %v7176
    %7506 = vmatpush1.msra.mxu0 %v7175
    %7507 = vmatprep.subr.mxu0 %v7180
    %7508 = vmatpush1.msra.mxu0 %v7179
    %7509 = vmatprep.subr.mxu0 %v7184
    %7510 = vmatpush1.msra.mxu0 %v7183
    %7511 = vmatprep.subr.mxu0 %v7188
    %7512 = vmatpush1.msra.mxu0 %v7187
    %7513 = vmatprep.subr.mxu0 %v7192
    %7514 = vmatpush1.msra.mxu0 %v7191
    %7515 = vmatprep.subr.mxu0 %v7196
    %7516 = vmatpush1.msra.mxu0 %v7195
    %7517 = vmatprep.subr.mxu0 %v7200
    %7518 = vmatpush1.msra.mxu0 %v7199
    %7519 = vmatprep.subr.mxu0 %v7204
    %7520 = vmatpush1.msra.mxu0 %v7203
    %7521 = vmatprep.subr.mxu0 %v7208
    %7522 = vmatpush1.msra.mxu0 %v7207
    %7523 = vmatprep.subr.mxu0 %v7212
    %7524 = vmatpush1.msra.mxu0 %v7211
    %7525 = vmatprep.subr.mxu0 %v7216
    %7526 = vmatpush1.msra.mxu0 %v7215
    %7527 = vmatprep.subr.mxu0 0.0
    %7528 = vmatpush1.msra.mxu0 0.0
    %7529 = vmatprep.subr.mxu0 0.0
    %7530 = vmatpush1.msra.mxu0 0.0
    %7531 = vmatprep.subr.mxu0 0.0
    %7532 = vmatpush1.msra.mxu0 0.0
    %7533 = vmatprep.subr.mxu0 0.0
    %7534 = vmatpush1.msra.mxu0 0.0
    %7535 = vmatprep.subr.mxu0 0.0
    %7536 = vmatpush1.msra.mxu0 0.0
    %7537 = vmatprep.subr.mxu0 0.0
    %7538 = vmatpush1.msra.mxu0 0.0
    %7539 = vmatprep.subr.mxu0 0.0
    %7540 = vmatpush1.msra.mxu0 0.0
    %7541 = vmatprep.subr.mxu0 0.0
    %7542 = vmatpush1.msra.mxu0 0.0
    %7543 = vmatprep.subr.mxu0 0.0
    %7544 = vmatpush1.msra.mxu0 0.0
    %7545 = vmatprep.subr.mxu0 0.0
    %7546 = vmatpush1.msra.mxu0 0.0
    %7547 = vmatprep.subr.mxu0 0.0
    %7548 = vmatpush1.msra.mxu0 0.0
    %7549 = vmatprep.subr.mxu0 0.0
    %7550 = vmatpush1.msra.mxu0 0.0
    %7551 = vmatprep.subr.mxu0 0.0
    %7552 = vmatpush1.msra.mxu0 0.0
    %7553 = vmatprep.subr.mxu0 0.0
    %7554 = vmatpush1.msra.mxu0 0.0
    %7555 = vmatprep.subr.mxu0 0.0
    %7556 = vmatpush1.msra.mxu0 0.0
    %7557 = vmatprep.subr.mxu0 0.0
    %7558 = vmatpush1.msra.mxu0 0.0
    %7559 = vmatprep.mubr.f32.mxu0 0.0
    %7560 = vmatmul.mubr.f32.gmra.mrb[0].mxu0 %v7150
    %v7561 = vpop.f32.mrb[0].mxu0
    %v7562 = vadd.f32 %v7420, %v7561
    %v7563 = vpop.f32.mrb[0].mxu0
    %v7564 = vadd.f32 %v7422, %v7563
    %7565 = vdwg.mxu0
    %v7566 = vld [vmem:[%s8] sm:$0xff]
    %v7567 = vld [vmem:[%s8 + $0x8] sm:$0xff]
    %v7568 = vld [vmem:[%s8 + $0x10] sm:$0xff]
    %v7569 = vld [vmem:[%s8 + $0x18] sm:$0xff]
    %v7570 = vadd.f32 %v7491, %v7566
    %v7571 = vadd.f32 %v7493, %v7567
    %v7572 = vadd.f32 %v7562, %v7568
    %v7573 = vadd.f32 %v7564, %v7569
    %v7574 = vld [vmem:[#allocation4] sm:$0xff]
    %v7575 = vxor.u32 %v7570, 2147483648
    %v7576 = vmul.f32 %v7575, 1.442695
    %v7577 = vpow.pop %v7576
    %v7578 = vadd.f32 %v7577, 1.0
    %v7579 = vrcp.pop %v7578
    %v7580 = vmul.f32 1.0, %v7579
    %v7581 = vxor.u32 %v7571, 2147483648
    %v7582 = vmul.f32 %v7581, 1.442695
    %v7583 = vpow.pop %v7582
    %v7584 = vadd.f32 %v7583, 1.0
    %v7585 = vrcp.pop %v7584
    %v7586 = vmul.f32 1.0, %v7585
    %v7587 = vtanh.pop %v7572
    %v7588 = vxor.u32 %v7573, 2147483648
    %v7589 = vmul.f32 %v7588, 1.442695
    %v7590 = vpow.pop %v7589
    %v7591 = vadd.f32 %v7590, 1.0
    %v7592 = vrcp.pop %v7591
    %v7593 = vmul.f32 1.0, %v7592
    %v7594 = vmul.f32 %v7586, %v7574
    %v7595 = vmul.f32 %v7580, %v7587
    %v7596 = vadd.f32 %v7594, %v7595
    %v7597 = vtanh.pop %v7596
    %v7598 = vmul.f32 %v7593, %v7597
    %7599 = vst [vmem:[#allocation3] sm:$0xff] %v7598
    %7600 = vst [vmem:[#allocation4] sm:$0xff] %v7596
    %v7601 = vld [vmem:[%s9] sm:$0xff]
    %v7602 = vld [vmem:[%s9 + $0x8] sm:$0xff]
    %v7603 = vld [vmem:[%s9 + $0x10] sm:$0xff]
    %v7604 = vld [vmem:[%s9 + $0x18] sm:$0xff]
    %v7605 = vld [vmem:[%s9 + $0x20] sm:$0xff]
    %v7606 = vld [vmem:[%s9 + $0x28] sm:$0xff]
    %v7607 = vld [vmem:[%s9 + $0x30] sm:$0xff]
    %v7608 = vld [vmem:[%s9 + $0x38] sm:$0xff]
    %v7609 = vld [vmem:[%s9 + $0x40] sm:$0xff]
    %v7610 = vld [vmem:[%s9 + $0x48] sm:$0xff]
    %v7611 = vld [vmem:[%s9 + $0x50] sm:$0xff]
    %v7612 = vld [vmem:[%s9 + $0x58] sm:$0xff]
    %v7613 = vld [vmem:[%s9 + $0x60] sm:$0xff]
    %v7614 = vld [vmem:[%s9 + $0x68] sm:$0xff]
    %v7615 = vld [vmem:[%s9 + $0x70] sm:$0xff]
    %v7616 = vld [vmem:[%s9 + $0x78] sm:$0xff]
    %v7617 = vld [vmem:[%s10] sm:$0xff]
    %7618 = vmatprep.subr.mxu0 0.0
    %7619 = vmatpush1.msra.mxu0 %v7601
    %7620 = vmatprep.subr.mxu0 0.0
    %7621 = vmatpush1.msra.mxu0 %v7602
    %7622 = vmatprep.subr.mxu0 0.0
    %7623 = vmatpush1.msra.mxu0 %v7603
    %7624 = vmatprep.subr.mxu0 0.0
    %7625 = vmatpush1.msra.mxu0 %v7604
    %7626 = vmatprep.subr.mxu0 0.0
    %7627 = vmatpush1.msra.mxu0 %v7605
    %7628 = vmatprep.subr.mxu0 0.0
    %7629 = vmatpush1.msra.mxu0 %v7606
    %7630 = vmatprep.subr.mxu0 0.0
    %7631 = vmatpush1.msra.mxu0 %v7607
    %7632 = vmatprep.subr.mxu0 0.0
    %7633 = vmatpush1.msra.mxu0 %v7608
    %7634 = vmatprep.subr.mxu0 0.0
    %7635 = vmatpush1.msra.mxu0 %v7609
    %7636 = vmatprep.subr.mxu0 0.0
    %7637 = vmatpush1.msra.mxu0 %v7610
    %7638 = vmatprep.subr.mxu0 0.0
    %7639 = vmatpush1.msra.mxu0 %v7611
    %7640 = vmatprep.subr.mxu0 0.0
    %7641 = vmatpush1.msra.mxu0 %v7612
    %7642 = vmatprep.subr.mxu0 0.0
    %7643 = vmatpush1.msra.mxu0 %v7613
    %7644 = vmatprep.subr.mxu0 0.0
    %7645 = vmatpush1.msra.mxu0 %v7614
    %7646 = vmatprep.subr.mxu0 0.0
    %7647 = vmatpush1.msra.mxu0 %v7615
    %7648 = vmatprep.subr.mxu0 0.0
    %7649 = vmatpush1.msra.mxu0 %v7616
    %7650 = vmatprep.subr.mxu0 0.0
    %7651 = vmatpush1.msra.mxu0 0.0
    %7652 = vmatprep.subr.mxu0 0.0
    %7653 = vmatpush1.msra.mxu0 0.0
    %7654 = vmatprep.subr.mxu0 0.0
    %7655 = vmatpush1.msra.mxu0 0.0
    %7656 = vmatprep.subr.mxu0 0.0
    %7657 = vmatpush1.msra.mxu0 0.0
    %7658 = vmatprep.subr.mxu0 0.0
    %7659 = vmatpush1.msra.mxu0 0.0
    %7660 = vmatprep.subr.mxu0 0.0
    %7661 = vmatpush1.msra.mxu0 0.0
    %7662 = vmatprep.subr.mxu0 0.0
    %7663 = vmatpush1.msra.mxu0 0.0
    %7664 = vmatprep.subr.mxu0 0.0
    %7665 = vmatpush1.msra.mxu0 0.0
    %7666 = vmatprep.subr.mxu0 0.0
    %7667 = vmatpush1.msra.mxu0 0.0
    %7668 = vmatprep.subr.mxu0 0.0
    %7669 = vmatpush1.msra.mxu0 0.0
    %7670 = vmatprep.subr.mxu0 0.0
    %7671 = vmatpush1.msra.mxu0 0.0
    %7672 = vmatprep.subr.mxu0 0.0
    %7673 = vmatpush1.msra.mxu0 0.0
    %7674 = vmatprep.subr.mxu0 0.0
    %7675 = vmatpush1.msra.mxu0 0.0
    %7676 = vmatprep.subr.mxu0 0.0
    %7677 = vmatpush1.msra.mxu0 0.0
    %7678 = vmatprep.subr.mxu0 0.0
    %7679 = vmatpush1.msra.mxu0 0.0
    %7680 = vmatprep.subr.mxu0 0.0
    %7681 = vmatpush1.msra.mxu0 0.0
    %7682 = vmatprep.mubr.f32.mxu0 0.0
    %7683 = vmatmul.mubr.f32.gmra.mrb[0].mxu0 %v7598
    %v7684 = vpop.f32.mrb[0].mxu0
    %v7685 = vadd.f32 %v7617, %v7684
    %v7686 = vpop.f32.mrb[0].mxu0
    %7687 = vdwg.mxu0
    %s7688 = scalar_lea.vmem %s13, 56
    %7689 = vst [vmem:[%s7688] sm:$0xff] %v7685
    %s7690 = sld [smem:[#allocation6 + $0x7]]
    %p7691 = scmp.eq.s32.totalorder %s7690, 0
    // Predicated region
    $region130: #{chat_model_forward.1} parent=1 // pred_check
      %p7692 = pneg %p7691
    $region131: #{chat_model_forward.1} parent=1 // pred_check_branch
      %7694 = sbr.rel (%p7692) target = $region133
    $region132: #{chat_model_forward.1} parent=1 // pred_region
      %vm7695 = vcmp.lt.s32.totalorder %v2447, 64
      %v7696 = vsel %vm7695, %v7685, -1e+30
      %7697 = vmax.xlane.f32.xlu0 %v7696
      %v7698 = vpop.xlane.xlu0 %7697
      %vm7699 = vcmp.eq.f32.partialorder %v7696, %v7698
      %v7700 = vsel %vm7699, %v2447, 128
      %v7701 = vand.u32 %v7700, 65535
      %v7702 = vshra.s32 %v7700, 16
      %v7703 = vcvt.s32.f32 %v7701
      %v7704 = vcvt.s32.f32 %v7702
      %7705 = vmin.xlane.f32.xlu0 %v7704
      %v7706 = vpop.xlane.xlu0 %7705
      %vm7707 = vcmp.eq.f32.partialorder %v7704, %v7706
      %v7708 = vsel %vm7707, %v7703, inf
      %7709 = vmin.xlane.f32.xlu0 %v7708
      %v7710 = vpop.xlane.xlu0 %7709
      %v7711 = vcvt.f32.s32 %v7710
      %v7712 = vcvt.f32.s32 %v7706
      %v7713 = vshll.u32 %v7712, 16
      %v7714 = vadd.s32 %v7713, %v7711
      %vm7715 = vcmp.eq.s32.totalorder %v2447, %v7714
      %v7716 = vsel %vm7715, 1, 0
      %v7717 = vcvt.s32.f32 %v7716
      %7718 = vst [vmem:[#allocation5] sm:$0xff] %v7717
    $region133: #{chat_model_forward.1} parent=1 // pred_fallthru
      _
    %p7719 = scmp.ne.s32.totalorder %s7690, 0
    // Predicated region
    $region134: #{chat_model_forward.1} parent=1 // pred_check
      %p7720 = pneg %p7719
    $region135: #{chat_model_forward.1} parent=1 // pred_check_branch
      %7722 = sbr.rel (%p7720) target = $region137
    $region136: #{chat_model_forward.1} parent=1 // pred_region
      %s7723 = scalar_lea.vmem %s11, 56
      %v7724 = vld [vmem:[%s7723] sm:$0xff]
      %7725 = vst [vmem:[#allocation5] sm:$0xff] %v7724
    $region137: #{chat_model_forward.1} parent=1 // pred_fallthru
      _
    // Predicated region
    $region138: #{chat_model_forward.1} parent=1 // pred_check
      _
    $region139: #{chat_model_forward.1} parent=1 // pred_check_branch
      %7727 = sbr.rel (0) target = $region141
    $region140: #{chat_model_forward.1} parent=1 // pred_region
      _
    $region141: #{chat_model_forward.1} parent=1 // pred_fallthru
      _
    // Predicated region
    $region142: #{chat_model_forward.1} parent=1 // pred_check
      _
    $region143: #{chat_model_forward.1} parent=1 // pred_check_branch
      %7729 = sbr.rel (0) target = $region145
    $region144: #{chat_model_forward.1} parent=1 // pred_region
      _
    $region145: #{chat_model_forward.1} parent=1 // pred_fallthru
      _
    %7730 = vsyncpa [#allocation7], 1
    %7731 = vsyncpa [#allocation11], 1
    %7732 = vsyncpa [#allocation14], 1
    %7733 = vsyncpa [#allocation8], 1

</llo_original>
